<compile_context>
chip_gen: v6e
topology: v6e:2x2x1
jax: 0.10.0
libtpu: 0.0.40
codegen_flags: <defaults>
</compile_context>

<pallas_src>
import functools

import jax
import jax.numpy as jnp
from jax.experimental import pallas as pl
from jax.experimental.pallas import tpu as pltpu


# ----------------------------------------------------------------------------
# In-kernel 3x3 "same" conv from a zero-padded VMEM scratch ref.
# Weights are pre-reshaped to (3, 3*cin, cout); per output row-tap dy we build a
# (H*W, 3*cin) patch by concatenating the three dx-shifted slices, giving three
# large-K MXU matmuls per layer (bf16 operands, f32 accumulation).
# ----------------------------------------------------------------------------
def _conv3x3_rows(pad_ref, w_ref, b_ref, H, W, cin, cout, relu):
    acc = jnp.zeros((H * W, cout), jnp.float32)
    for dy in range(3):
        w_dy = w_ref[dy]                                        # (3*cin, cout), bf16
        taps = [pad_ref[pl.ds(dy, H), pl.ds(dx, W), :].astype(w_dy.dtype)
                for dx in range(3)]                             # 3 x (H, W, cin)
        patch = jnp.concatenate(taps, axis=-1).reshape(H * W, 3 * cin)
        acc = acc + jnp.dot(patch, w_dy, preferred_element_type=jnp.float32)
    acc = acc + b_ref[...]                                      # (1, cout) broadcast
    if relu:
        acc = jnp.maximum(acc, 0.0)
    return acc                                                  # (H*W, cout) f32


# ----------------------------------------------------------------------------
# Pass 1: conv1 per image + partial BatchNorm statistics (sum, sum of squares).
# Keeps the batch grid axis "parallel" (per-image partials, reduced in wrapper).
# ----------------------------------------------------------------------------
def _conv1_stats_kernel(p1_ref, w1_ref, b1_ref, sum_ref, sq_ref):
    y = jnp.dot(p1_ref[0], w1_ref[...], preferred_element_type=jnp.float32)
    y = y + b1_ref[...]                                         # (H*W, 64)
    sum_ref[0] = jnp.sum(y, axis=0, keepdims=True)              # (1, 64)
    sq_ref[0] = jnp.sum(y * y, axis=0, keepdims=True)


def conv1_stats(p1, w1, b1):
    N, HW, K = p1.shape
    C = w1.shape[1]
    return pl.pallas_call(
        _conv1_stats_kernel,
        out_shape=(jax.ShapeDtypeStruct((N, 1, C), jnp.float32),
                   jax.ShapeDtypeStruct((N, 1, C), jnp.float32)),
        grid_spec=pltpu.PrefetchScalarGridSpec(
            num_scalar_prefetch=0,
            grid=(N,),
            in_specs=[pl.BlockSpec((1, HW, K), lambda n: (n, 0, 0)),
                      pl.BlockSpec((K, C), lambda n: (0, 0)),
                      pl.BlockSpec((1, C), lambda n: (0, 0))],
            out_specs=(pl.BlockSpec((1, 1, C), lambda n: (n, 0, 0)),
                       pl.BlockSpec((1, 1, C), lambda n: (n, 0, 0))),
        ),
        compiler_params=pltpu.CompilerParams(dimension_semantics=("parallel",)),
    )(p1, w1, b1)


# ----------------------------------------------------------------------------
# Pass 2: fused conv1 -> BN+ReLU -> conv2+ReLU -> maxpool2x2 -> conv3+ReLU -> conv4
# One image per grid step; every intermediate lives in registers / VMEM scratch.
# ----------------------------------------------------------------------------
def _fused_tail_kernel(p1_ref, w1_ref, b1_ref, sc_ref, sh_ref,
                       w2_ref, b2_ref, w3_ref, b3_ref, w4_ref, b4_ref,
                       o_ref, pa_ref, pb_ref, pc_ref, *, H, W):
    C1, C2 = 64, 128
    Ho, Wo = H // 2, W // 2

    # [0] Conv2d(1, 64, 3, p=1): im2col'd input, one (H*W, 9) @ (9, 64) matmul.
    y = jnp.dot(p1_ref[0], w1_ref[...], preferred_element_type=jnp.float32)
    y = y + b1_ref[...]
    # [1][2] BatchNorm2d(64) with batch statistics (precomputed scale/shift) + ReLU.
    y = jnp.maximum(y * sc_ref[...] + sh_ref[...], 0.0)         # (H*W, 64)

    # Zero-padded VMEM staging for conv2 (padding done in-kernel, no HBM pass).
    pa_ref[...] = jnp.zeros_like(pa_ref)
    pa_ref[pl.ds(1, H), pl.ds(1, W), :] = y.reshape(H, W, C1)

    # [3][4] Conv2d(64, 64, 3, p=1) + ReLU  (3 dots, K = 192, bf16 operands).
    y = _conv3x3_rows(pa_ref, w2_ref, b2_ref, H, W, C1, C1, relu=True)   # (H*W, 64)

    # [5] MaxPool2d(2, 2): pure in-register reshape + max (no strided ref reads).
    y = y.reshape(Ho, 2, W, C1)
    y = jnp.maximum(y[:, 0], y[:, 1])                           # (Ho, W, 64)
    y = y.reshape(Ho, Wo, 2, C1)
    y = jnp.maximum(y[:, :, 0], y[:, :, 1])                     # (Ho, Wo, 64)

    pb_ref[...] = jnp.zeros_like(pb_ref)
    pb_ref[pl.ds(1, Ho), pl.ds(1, Wo), :] = y

    # [6][7] Conv2d(64, 128, 3, p=1) + ReLU  (K = 192).
    y = _conv3x3_rows(pb_ref, w3_ref, b3_ref, Ho, Wo, C1, C2, relu=True)  # (Ho*Wo, 128)

    pc_ref[...] = jnp.zeros_like(pc_ref)
    pc_ref[pl.ds(1, Ho), pl.ds(1, Wo), :] = y.reshape(Ho, Wo, C2)

    # [8] Conv2d(128, 128, 3, p=1)  (features[1:8] stops before the next ReLU; K = 384).
    y = _conv3x3_rows(pc_ref, w4_ref, b4_ref, Ho, Wo, C2, C2, relu=False)  # (Ho*Wo, 128)

    o_ref[0] = y.astype(o_ref.dtype)                            # lane-dense (64, 128)


def fused_vgg_tail(p1, w1, b1, scale, shift, w2, b2, w3, b3, w4, b4, *, H, W):
    N, HW, K = p1.shape
    C1, C2 = 64, 128
    Ho, Wo = H // 2, W // 2

    def full(*shape):
        return pl.BlockSpec(shape, lambda n, _s=len(shape): (0,) * _s)

    kernel = functools.partial(_fused_tail_kernel, H=H, W=W)
    return pl.pallas_call(
        kernel,
        out_shape=jax.ShapeDtypeStruct((N, Ho * Wo, C2), jnp.float32),
        grid_spec=pltpu.PrefetchScalarGridSpec(
            num_scalar_prefetch=0,
            grid=(N,),
            in_specs=[
                pl.BlockSpec((1, HW, K), lambda n: (n, 0, 0)),   # im2col'd input
                full(K, C1), full(1, C1),                        # w1, b1
                full(1, C1), full(1, C1),                        # BN scale, shift
                full(3, 3 * C1, C1), full(1, C1),                # w2, b2
                full(3, 3 * C1, C2), full(1, C2),                # w3, b3
                full(3, 3 * C2, C2), full(1, C2),                # w4, b4
            ],
            out_specs=pl.BlockSpec((1, Ho * Wo, C2), lambda n: (n, 0, 0)),
            scratch_shapes=[
                pltpu.VMEM((H + 2, W + 2, C1), jnp.float32),     # padded pre-conv2
                pltpu.VMEM((Ho + 2, Wo + 2, C1), jnp.float32),   # padded pre-conv3
                pltpu.VMEM((Ho + 2, Wo + 2, C2), jnp.float32),   # padded pre-conv4
            ],
        ),
        compiler_params=pltpu.CompilerParams(dimension_semantics=("parallel",)),
    )(p1, w1, b1, scale, shift, w2, b2, w3, b3, w4, b4)


# ----------------------------------------------------------------------------
# Parameters (deterministic synthetic init; shapes follow the PyTorch module)
# ----------------------------------------------------------------------------
def init_params(key):
    ks = jax.random.split(key, 8)

    def u(k, shape, fan_in):
        bound = 1.0 / float(fan_in) ** 0.5
        return jax.random.uniform(k, shape, jnp.float32, -bound, bound)

    return {
        "w1": u(ks[0], (3, 3, 1, 64), 9 * 1),
        "b1": u(ks[1], (64,), 9 * 1),
        "gamma": jnp.ones((64,), jnp.float32),   # fresh BatchNorm2d init
        "beta": jnp.zeros((64,), jnp.float32),
        "w2": u(ks[2], (3, 3, 64, 64), 9 * 64),
        "b2": u(ks[3], (64,), 9 * 64),
        "w3": u(ks[4], (3, 3, 64, 128), 9 * 64),
        "b3": u(ks[5], (128,), 9 * 64),
        "w4": u(ks[6], (3, 3, 128, 128), 9 * 128),
        "b4": u(ks[7], (128,), 9 * 128),
    }


# ----------------------------------------------------------------------------
# Forward pass == SingleChannelVGG(feature_layer=8).forward
# ----------------------------------------------------------------------------
def single_channel_vgg_forward(x_nchw, p):
    N, _, H, W = x_nchw.shape
    Ho, Wo = H // 2, W // 2

    # NCHW with C == 1 -> (N, H, W): a reshape, no transpose/copy needed.
    x = x_nchw.reshape(N, H, W).astype(jnp.float32)

    # im2col of the tiny single-channel input (done once in the wrapper; all
    # 64/128-channel activations stay inside the kernels).
    xp = jnp.pad(x, ((0, 0), (1, 1), (1, 1)))
    p1 = jnp.stack([xp[:, dy:dy + H, dx:dx + W]
                    for dy in range(3) for dx in range(3)], axis=-1)  # (N, H, W, 9)
    p1 = p1.reshape(N, H * W, 9)

    # Weight prep: HWIO -> (3, 3*Cin, Cout), bf16 MXU operands (f32 accumulation).
    w1r = p["w1"].reshape(9, 64)
    b1r = p["b1"].reshape(1, 64)
    w2r = p["w2"].reshape(3, 3 * 64, 64).astype(jnp.bfloat16)
    b2r = p["b2"].reshape(1, 64)
    w3r = p["w3"].reshape(3, 3 * 64, 128).astype(jnp.bfloat16)
    b3r = p["b3"].reshape(1, 128)
    w4r = p["w4"].reshape(3, 3 * 128, 128).astype(jnp.bfloat16)
    b4r = p["b4"].reshape(1, 128)

    # Pass 1: per-image conv1 partial statistics (module is in its default
    # .train() state -> normalize with biased batch statistics, eps = 1e-5).
    psum, psq = conv1_stats(p1, w1r, b1r)                       # (N, 1, 64) each
    cnt = float(N * H * W)
    mean = jnp.sum(psum, axis=0) / cnt                          # (1, 64)
    ex2 = jnp.sum(psq, axis=0) / cnt
    var = jnp.maximum(ex2 - mean * mean, 0.0)
    scale = p["gamma"].reshape(1, 64) / jnp.sqrt(var + 1e-5)
    shift = p["beta"].reshape(1, 64) - mean * scale

    # Pass 2: fused conv1 -> BN+ReLU -> conv2+ReLU -> maxpool -> conv3+ReLU -> conv4.
    out = fused_vgg_tail(p1, w1r, b1r, scale, shift,
                         w2r, b2r, w3r, b3r, w4r, b4r, H=H, W=W)  # (N, Ho*Wo, 128)

    out = out.reshape(N, Ho, Wo, 128)
    return jnp.transpose(out, (0, 3, 1, 2))                     # NHWC -> NCHW


if __name__ == "__main__":
    key = jax.random.PRNGKey(0)
    k_x, k_p = jax.random.split(key)

    N, H, W = 2, 16, 16
    x = jax.random.normal(k_x, (N, 1, H, W), jnp.float32)       # single-channel input
    params = init_params(k_p)

    fwd = jax.jit(single_channel_vgg_forward)
    out = jax.block_until_ready(fwd(x, params))

    assert out.shape == (N, 128, H // 2, W // 2), out.shape
    assert out.dtype == jnp.float32
    assert bool(jnp.all(jnp.isfinite(out)))
    print("KERNEL_OK")
</pallas_src>

<mosaic_0001>
module attributes {stable_mosaic.version = 11 : i64} {
  func.func @_conv1_stats_kernel(%arg0: i32, %arg1: memref<1x256x9xf32, #tpu.memory_space<vmem>>, %arg2: memref<9x64xf32, #tpu.memory_space<vmem>>, %arg3: memref<1x64xf32, #tpu.memory_space<vmem>>, %arg4: memref<1x1x64xf32, #tpu.memory_space<vmem>>, %arg5: memref<1x1x64xf32, #tpu.memory_space<vmem>>) attributes {dimension_semantics = [#tpu.dimension_semantics<parallel>], iteration_bounds = array<i64: 2>, scalar_prefetch = 0 : i64, scratch_operands = 0 : i64, tpu.core_type = #tpu.core_type<tc>, window_params = [{transform_indices = @transform_0, window_bounds = array<i64: 1, 256, 9>}, {pipeline_mode = #tpu.pipeline_mode<synchronous>, transform_indices = @transform_1, window_bounds = array<i64: 9, 64>}, {pipeline_mode = #tpu.pipeline_mode<synchronous>, transform_indices = @transform_2, window_bounds = array<i64: 1, 64>}, {transform_indices = @transform_3, window_bounds = array<i64: 1, 1, 64>}, {transform_indices = @transform_4, window_bounds = array<i64: 1, 1, 64>}]} {
    %c0 = arith.constant 0 : index
    %c0_0 = arith.constant 0 : index
    %c0_1 = arith.constant 0 : index
    %0 = vector.load %arg1[%c0, %c0_0, %c0_1] : memref<1x256x9xf32, #tpu.memory_space<vmem>>, vector<1x256x9xf32>
    %1 = vector.shape_cast %0 : vector<1x256x9xf32> to vector<256x9xf32>
    %c0_2 = arith.constant 0 : index
    %c0_3 = arith.constant 0 : index
    %2 = vector.load %arg2[%c0_2, %c0_3] : memref<9x64xf32, #tpu.memory_space<vmem>>, vector<9x64xf32>
    %cst = arith.constant dense<0.000000e+00> : vector<256x64xf32>
    %3 = tpu.matmul %1, %2, %cst {dimension_numbers = #tpu.dot_dimension_numbers<[1], [0], [0], [1], [0, 0, 1, 1], [], []>} : vector<256x9xf32>, vector<9x64xf32>, vector<256x64xf32> -> vector<256x64xf32>
    %c0_4 = arith.constant 0 : index
    %c0_5 = arith.constant 0 : index
    %4 = vector.load %arg3[%c0_4, %c0_5] : memref<1x64xf32, #tpu.memory_space<vmem>>, vector<1x64xf32>
    %5 = vector.broadcast %4 : vector<1x64xf32> to vector<256x64xf32>
    %6 = arith.addf %3, %5 : vector<256x64xf32>
    %cst_6 = arith.constant dense<0.000000e+00> : vector<64xf32>
    %7 = vector.multi_reduction <add>, %6, %cst_6 [0] : vector<256x64xf32> to vector<64xf32>
    %8 = vector.shape_cast %7 : vector<64xf32> to vector<1x64xf32>
    %c0_7 = arith.constant 0 : index
    %c0_8 = arith.constant 0 : index
    %c0_9 = arith.constant 0 : index
    %9 = vector.load %arg4[%c0_7, %c0_8, %c0_9] : memref<1x1x64xf32, #tpu.memory_space<vmem>>, vector<1x1x64xf32>
    %10 = vector.shape_cast %9 : vector<1x1x64xf32> to vector<1x64xf32>
    %11 = vector.shape_cast %8 : vector<1x64xf32> to vector<1x1x64xf32>
    tpu.vector_store %arg4[%c0_7, %c0_8, %c0_9], %11 {strides = array<i32>} : memref<1x1x64xf32, #tpu.memory_space<vmem>>, vector<1x1x64xf32>,
    %12 = arith.mulf %6, %6 : vector<256x64xf32>
    %cst_10 = arith.constant dense<0.000000e+00> : vector<64xf32>
    %13 = vector.multi_reduction <add>, %12, %cst_10 [0] : vector<256x64xf32> to vector<64xf32>
    %14 = vector.shape_cast %13 : vector<64xf32> to vector<1x64xf32>
    %c0_11 = arith.constant 0 : index
    %c0_12 = arith.constant 0 : index
    %c0_13 = arith.constant 0 : index
    %15 = vector.load %arg5[%c0_11, %c0_12, %c0_13] : memref<1x1x64xf32, #tpu.memory_space<vmem>>, vector<1x1x64xf32>
    %16 = vector.shape_cast %15 : vector<1x1x64xf32> to vector<1x64xf32>
    %17 = vector.shape_cast %14 : vector<1x64xf32> to vector<1x1x64xf32>
    tpu.vector_store %arg5[%c0_11, %c0_12, %c0_13], %17 {strides = array<i32>} : memref<1x1x64xf32, #tpu.memory_space<vmem>>, vector<1x1x64xf32>,
    return
  }
  func.func @transform_0(%arg0: i32) -> (i32, i32, i32) {
    %c0_i32 = arith.constant 0 : i32
    %c0_i32_0 = arith.constant 0 : i32
    %c0_i32_1 = arith.constant 0 : i32
    return %arg0, %c0_i32, %c0_i32_0 : i32, i32, i32
  }
  func.func @transform_1(%arg0: i32) -> (i32, i32) {
    %c0_i32 = arith.constant 0 : i32
    %c0_i32_0 = arith.constant 0 : i32
    %c0_i32_1 = arith.constant 0 : i32
    return %c0_i32, %c0_i32_0 : i32, i32
  }
  func.func @transform_2(%arg0: i32) -> (i32, i32) {
    %c0_i32 = arith.constant 0 : i32
    %c0_i32_0 = arith.constant 0 : i32
    %c0_i32_1 = arith.constant 0 : i32
    return %c0_i32, %c0_i32_0 : i32, i32
  }
  func.func @transform_3(%arg0: i32) -> (i32, i32, i32) {
    %c0_i32 = arith.constant 0 : i32
    %c0_i32_0 = arith.constant 0 : i32
    %c0_i32_1 = arith.constant 0 : i32
    return %arg0, %c0_i32, %c0_i32_0 : i32, i32, i32
  }
  func.func @transform_4(%arg0: i32) -> (i32, i32, i32) {
    %c0_i32 = arith.constant 0 : i32
    %c0_i32_0 = arith.constant 0 : i32
    %c0_i32_1 = arith.constant 0 : i32
    return %arg0, %c0_i32, %c0_i32_0 : i32, i32, i32
  }
}

module attributes {stable_mosaic.version = 11 : i64} {
  func.func @_fused_tail_kernel(%arg0: i32, %arg1: memref<1x256x9xf32, #tpu.memory_space<vmem>>, %arg2: memref<9x64xf32, #tpu.memory_space<vmem>>, %arg3: memref<1x64xf32, #tpu.memory_space<vmem>>, %arg4: memref<1x64xf32, #tpu.memory_space<vmem>>, %arg5: memref<1x64xf32, #tpu.memory_space<vmem>>, %arg6: memref<3x192x64xbf16, #tpu.memory_space<vmem>>, %arg7: memref<1x64xf32, #tpu.memory_space<vmem>>, %arg8: memref<3x192x128xbf16, #tpu.memory_space<vmem>>, %arg9: memref<1x128xf32, #tpu.memory_space<vmem>>, %arg10: memref<3x384x128xbf16, #tpu.memory_space<vmem>>, %arg11: memref<1x128xf32, #tpu.memory_space<vmem>>, %arg12: memref<1x64x128xf32, #tpu.memory_space<vmem>>, %arg13: memref<18x18x64xf32, #tpu.memory_space<vmem>>, %arg14: memref<10x10x64xf32, #tpu.memory_space<vmem>>, %arg15: memref<10x10x128xf32, #tpu.memory_space<vmem>>) attributes {dimension_semantics = [#tpu.dimension_semantics<parallel>], iteration_bounds = array<i64: 2>, scalar_prefetch = 0 : i64, scratch_operands = 3 : i64, tpu.core_type = #tpu.core_type<tc>, window_params = [{transform_indices = @transform_0, window_bounds = array<i64: 1, 256, 9>}, {pipeline_mode = #tpu.pipeline_mode<synchronous>, transform_indices = @transform_1, window_bounds = array<i64: 9, 64>}, {pipeline_mode = #tpu.pipeline_mode<synchronous>, transform_indices = @transform_2, window_bounds = array<i64: 1, 64>}, {pipeline_mode = #tpu.pipeline_mode<synchronous>, transform_indices = @transform_3, window_bounds = array<i64: 1, 64>}, {pipeline_mode = #tpu.pipeline_mode<synchronous>, transform_indices = @transform_4, window_bounds = array<i64: 1, 64>}, {pipeline_mode = #tpu.pipeline_mode<synchronous>, transform_indices = @transform_5, window_bounds = array<i64: 3, 192, 64>}, {pipeline_mode = #tpu.pipeline_mode<synchronous>, transform_indices = @transform_6, window_bounds = array<i64: 1, 64>}, {pipeline_mode = #tpu.pipeline_mode<synchronous>, transform_indices = @transform_7, window_bounds = array<i64: 3, 192, 128>}, {pipeline_mode = #tpu.pipeline_mode<synchronous>, transform_indices = @transform_8, window_bounds = array<i64: 1, 128>}, {pipeline_mode = #tpu.pipeline_mode<synchronous>, transform_indices = @transform_9, window_bounds = array<i64: 3, 384, 128>}, {pipeline_mode = #tpu.pipeline_mode<synchronous>, transform_indices = @transform_10, window_bounds = array<i64: 1, 128>}, {transform_indices = @transform_11, window_bounds = array<i64: 1, 64, 128>}]} {
    %c0 = arith.constant 0 : index
    %c0_0 = arith.constant 0 : index
    %c0_1 = arith.constant 0 : index
    %0 = vector.load %arg1[%c0, %c0_0, %c0_1] : memref<1x256x9xf32, #tpu.memory_space<vmem>>, vector<1x256x9xf32>
    %1 = vector.shape_cast %0 : vector<1x256x9xf32> to vector<256x9xf32>
    %c0_2 = arith.constant 0 : index
    %c0_3 = arith.constant 0 : index
    %2 = vector.load %arg2[%c0_2, %c0_3] : memref<9x64xf32, #tpu.memory_space<vmem>>, vector<9x64xf32>
    %cst = arith.constant dense<0.000000e+00> : vector<256x64xf32>
    %3 = tpu.matmul %1, %2, %cst {dimension_numbers = #tpu.dot_dimension_numbers<[1], [0], [0], [1], [0, 0, 1, 1], [], []>} : vector<256x9xf32>, vector<9x64xf32>, vector<256x64xf32> -> vector<256x64xf32>
    %c0_4 = arith.constant 0 : index
    %c0_5 = arith.constant 0 : index
    %4 = vector.load %arg3[%c0_4, %c0_5] : memref<1x64xf32, #tpu.memory_space<vmem>>, vector<1x64xf32>
    %5 = vector.broadcast %4 : vector<1x64xf32> to vector<256x64xf32>
    %6 = arith.addf %3, %5 : vector<256x64xf32>
    %c0_6 = arith.constant 0 : index
    %c0_7 = arith.constant 0 : index
    %7 = vector.load %arg4[%c0_6, %c0_7] : memref<1x64xf32, #tpu.memory_space<vmem>>, vector<1x64xf32>
    %8 = vector.broadcast %7 : vector<1x64xf32> to vector<256x64xf32>
    %9 = arith.mulf %6, %8 : vector<256x64xf32>
    %c0_8 = arith.constant 0 : index
    %c0_9 = arith.constant 0 : index
    %10 = vector.load %arg5[%c0_8, %c0_9] : memref<1x64xf32, #tpu.memory_space<vmem>>, vector<1x64xf32>
    %11 = vector.broadcast %10 : vector<1x64xf32> to vector<256x64xf32>
    %12 = arith.addf %9, %11 : vector<256x64xf32>
    %cst_10 = arith.constant 0.000000e+00 : f32
    %13 = vector.broadcast %cst_10 : f32 to vector<256x64xf32>
    %14 = arith.maximumf %12, %13 : vector<256x64xf32>
    %cst_11 = arith.constant 0.000000e+00 : f32
    %15 = vector.broadcast %cst_11 : f32 to vector<18x18x64xf32>
    %c0_12 = arith.constant 0 : index
    %c0_13 = arith.constant 0 : index
    %c0_14 = arith.constant 0 : index
    %16 = vector.load %arg13[%c0_12, %c0_13, %c0_14] : memref<18x18x64xf32, #tpu.memory_space<vmem>>, vector<18x18x64xf32>
    tpu.vector_store %arg13[%c0_12, %c0_13, %c0_14], %15 {strides = array<i32>} : memref<18x18x64xf32, #tpu.memory_space<vmem>>, vector<18x18x64xf32>,
    %17 = vector.shape_cast %14 : vector<256x64xf32> to vector<16x16x64xf32>
    %c1 = arith.constant 1 : index
    %c1_15 = arith.constant 1 : index
    %c0_16 = arith.constant 0 : index
    %18 = vector.load %arg13[%c1, %c1_15, %c0_16] : memref<18x18x64xf32, #tpu.memory_space<vmem>>, vector<16x16x64xf32>
    tpu.vector_store %arg13[%c1, %c1_15, %c0_16], %17 {strides = array<i32>} : memref<18x18x64xf32, #tpu.memory_space<vmem>>, vector<16x16x64xf32>,
    %cst_17 = arith.constant 0.000000e+00 : f32
    %19 = vector.broadcast %cst_17 : f32 to vector<256x64xf32>
    %c0_18 = arith.constant 0 : index
    %c0_19 = arith.constant 0 : index
    %c0_20 = arith.constant 0 : index
    %20 = vector.load %arg6[%c0_18, %c0_19, %c0_20] : memref<3x192x64xbf16, #tpu.memory_space<vmem>>, vector<1x192x64xbf16>
    %21 = vector.shape_cast %20 : vector<1x192x64xbf16> to vector<192x64xbf16>
    %c0_21 = arith.constant 0 : index
    %c0_22 = arith.constant 0 : index
    %c0_23 = arith.constant 0 : index
    %22 = vector.load %arg13[%c0_21, %c0_22, %c0_23] : memref<18x18x64xf32, #tpu.memory_space<vmem>>, vector<16x16x64xf32>
    %23 = arith.truncf %22 : vector<16x16x64xf32> to vector<16x16x64xbf16>
    %c0_24 = arith.constant 0 : index
    %c1_25 = arith.constant 1 : index
    %c0_26 = arith.constant 0 : index
    %24 = vector.load %arg13[%c0_24, %c1_25, %c0_26] : memref<18x18x64xf32, #tpu.memory_space<vmem>>, vector<16x16x64xf32>
    %25 = arith.truncf %24 : vector<16x16x64xf32> to vector<16x16x64xbf16>
    %c0_27 = arith.constant 0 : index
    %c2 = arith.constant 2 : index
    %c0_28 = arith.constant 0 : index
    %26 = vector.load %arg13[%c0_27, %c2, %c0_28] : memref<18x18x64xf32, #tpu.memory_space<vmem>>, vector<16x16x64xf32>
    %27 = arith.truncf %26 : vector<16x16x64xf32> to vector<16x16x64xbf16>
    %28 = tpu.concatenate %23, %25, %27 in 2 : vector<16x16x64xbf16>, vector<16x16x64xbf16>, vector<16x16x64xbf16> -> vector<16x16x192xbf16>
    %29 = vector.shape_cast %28 : vector<16x16x192xbf16> to vector<256x192xbf16>
    %cst_29 = arith.constant dense<0.000000e+00> : vector<256x64xf32>
    %30 = tpu.matmul %29, %21, %cst_29 {dimension_numbers = #tpu.dot_dimension_numbers<[1], [0], [0], [1], [0, 0, 1, 1], [], []>} : vector<256x192xbf16>, vector<192x64xbf16>, vector<256x64xf32> -> vector<256x64xf32>
    %31 = arith.addf %19, %30 : vector<256x64xf32>
    %c1_30 = arith.constant 1 : index
    %c0_31 = arith.constant 0 : index
    %c0_32 = arith.constant 0 : index
    %32 = vector.load %arg6[%c1_30, %c0_31, %c0_32] : memref<3x192x64xbf16, #tpu.memory_space<vmem>>, vector<1x192x64xbf16>
    %33 = vector.shape_cast %32 : vector<1x192x64xbf16> to vector<192x64xbf16>
    %c1_33 = arith.constant 1 : index
    %c0_34 = arith.constant 0 : index
    %c0_35 = arith.constant 0 : index
    %34 = vector.load %arg13[%c1_33, %c0_34, %c0_35] : memref<18x18x64xf32, #tpu.memory_space<vmem>>, vector<16x16x64xf32>
    %35 = arith.truncf %34 : vector<16x16x64xf32> to vector<16x16x64xbf16>
    %c1_36 = arith.constant 1 : index
    %c1_37 = arith.constant 1 : index
    %c0_38 = arith.constant 0 : index
    %36 = vector.load %arg13[%c1_36, %c1_37, %c0_38] : memref<18x18x64xf32, #tpu.memory_space<vmem>>, vector<16x16x64xf32>
    %37 = arith.truncf %36 : vector<16x16x64xf32> to vector<16x16x64xbf16>
    %c1_39 = arith.constant 1 : index
    %c2_40 = arith.constant 2 : index
    %c0_41 = arith.constant 0 : index
    %38 = vector.load %arg13[%c1_39, %c2_40, %c0_41] : memref<18x18x64xf32, #tpu.memory_space<vmem>>, vector<16x16x64xf32>
    %39 = arith.truncf %38 : vector<16x16x64xf32> to vector<16x16x64xbf16>
    %40 = tpu.concatenate %35, %37, %39 in 2 : vector<16x16x64xbf16>, vector<16x16x64xbf16>, vector<16x16x64xbf16> -> vector<16x16x192xbf16>
    %41 = vector.shape_cast %40 : vector<16x16x192xbf16> to vector<256x192xbf16>
    %cst_42 = arith.constant dense<0.000000e+00> : vector<256x64xf32>
    %42 = tpu.matmul %41, %33, %cst_42 {dimension_numbers = #tpu.dot_dimension_numbers<[1], [0], [0], [1], [0, 0, 1, 1], [], []>} : vector<256x192xbf16>, vector<192x64xbf16>, vector<256x64xf32> -> vector<256x64xf32>
    %43 = arith.addf %31, %42 : vector<256x64xf32>
    %c2_43 = arith.constant 2 : index
    %c0_44 = arith.constant 0 : index
    %c0_45 = arith.constant 0 : index
    %44 = vector.load %arg6[%c2_43, %c0_44, %c0_45] : memref<3x192x64xbf16, #tpu.memory_space<vmem>>, vector<1x192x64xbf16>
    %45 = vector.shape_cast %44 : vector<1x192x64xbf16> to vector<192x64xbf16>
    %c2_46 = arith.constant 2 : index
    %c0_47 = arith.constant 0 : index
    %c0_48 = arith.constant 0 : index
    %46 = vector.load %arg13[%c2_46, %c0_47, %c0_48] : memref<18x18x64xf32, #tpu.memory_space<vmem>>, vector<16x16x64xf32>
    %47 = arith.truncf %46 : vector<16x16x64xf32> to vector<16x16x64xbf16>
    %c2_49 = arith.constant 2 : index
    %c1_50 = arith.constant 1 : index
    %c0_51 = arith.constant 0 : index
    %48 = vector.load %arg13[%c2_49, %c1_50, %c0_51] : memref<18x18x64xf32, #tpu.memory_space<vmem>>, vector<16x16x64xf32>
    %49 = arith.truncf %48 : vector<16x16x64xf32> to vector<16x16x64xbf16>
    %c2_52 = arith.constant 2 : index
    %c2_53 = arith.constant 2 : index
    %c0_54 = arith.constant 0 : index
    %50 = vector.load %arg13[%c2_52, %c2_53, %c0_54] : memref<18x18x64xf32, #tpu.memory_space<vmem>>, vector<16x16x64xf32>
    %51 = arith.truncf %50 : vector<16x16x64xf32> to vector<16x16x64xbf16>
    %52 = tpu.concatenate %47, %49, %51 in 2 : vector<16x16x64xbf16>, vector<16x16x64xbf16>, vector<16x16x64xbf16> -> vector<16x16x192xbf16>
    %53 = vector.shape_cast %52 : vector<16x16x192xbf16> to vector<256x192xbf16>
    %cst_55 = arith.constant dense<0.000000e+00> : vector<256x64xf32>
    %54 = tpu.matmul %53, %45, %cst_55 {dimension_numbers = #tpu.dot_dimension_numbers<[1], [0], [0], [1], [0, 0, 1, 1], [], []>} : vector<256x192xbf16>, vector<192x64xbf16>, vector<256x64xf32> -> vector<256x64xf32>
    %55 = arith.addf %43, %54 : vector<256x64xf32>
    %c0_56 = arith.constant 0 : index
    %c0_57 = arith.constant 0 : index
    %56 = vector.load %arg7[%c0_56, %c0_57] : memref<1x64xf32, #tpu.memory_space<vmem>>, vector<1x64xf32>
    %57 = vector.broadcast %56 : vector<1x64xf32> to vector<256x64xf32>
    %58 = arith.addf %55, %57 : vector<256x64xf32>
    %cst_58 = arith.constant 0.000000e+00 : f32
    %59 = vector.broadcast %cst_58 : f32 to vector<256x64xf32>
    %60 = arith.maximumf %58, %59 : vector<256x64xf32>
    %61 = vector.shape_cast %60 : vector<256x64xf32> to vector<8x2x16x64xf32>
    %62 = vector.extract_strided_slice %61 {offsets = [0, 0, 0, 0], sizes = [8, 1, 16, 64], strides = [1, 1, 1, 1]} : vector<8x2x16x64xf32> to vector<8x1x16x64xf32>
    %63 = vector.shape_cast %62 : vector<8x1x16x64xf32> to vector<8x16x64xf32>
    %64 = vector.extract_strided_slice %61 {offsets = [0, 1, 0, 0], sizes = [8, 1, 16, 64], strides = [1, 1, 1, 1]} : vector<8x2x16x64xf32> to vector<8x1x16x64xf32>
    %65 = vector.shape_cast %64 : vector<8x1x16x64xf32> to vector<8x16x64xf32>
    %66 = arith.maximumf %63, %65 : vector<8x16x64xf32>
    %67 = vector.shape_cast %66 : vector<8x16x64xf32> to vector<8x8x2x64xf32>
    %68 = vector.extract_strided_slice %67 {offsets = [0, 0, 0, 0], sizes = [8, 8, 1, 64], strides = [1, 1, 1, 1]} : vector<8x8x2x64xf32> to vector<8x8x1x64xf32>
    %69 = vector.shape_cast %68 : vector<8x8x1x64xf32> to vector<8x8x64xf32>
    %70 = vector.extract_strided_slice %67 {offsets = [0, 0, 1, 0], sizes = [8, 8, 1, 64], strides = [1, 1, 1, 1]} : vector<8x8x2x64xf32> to vector<8x8x1x64xf32>
    %71 = vector.shape_cast %70 : vector<8x8x1x64xf32> to vector<8x8x64xf32>
    %72 = arith.maximumf %69, %71 : vector<8x8x64xf32>
    %cst_59 = arith.constant 0.000000e+00 : f32
    %73 = vector.broadcast %cst_59 : f32 to vector<10x10x64xf32>
    %c0_60 = arith.constant 0 : index
    %c0_61 = arith.constant 0 : index
    %c0_62 = arith.constant 0 : index
    %74 = vector.load %arg14[%c0_60, %c0_61, %c0_62] : memref<10x10x64xf32, #tpu.memory_space<vmem>>, vector<10x10x64xf32>
    tpu.vector_store %arg14[%c0_60, %c0_61, %c0_62], %73 {strides = array<i32>} : memref<10x10x64xf32, #tpu.memory_space<vmem>>, vector<10x10x64xf32>,
    %c1_63 = arith.constant 1 : index
    %c1_64 = arith.constant 1 : index
    %c0_65 = arith.constant 0 : index
    %75 = vector.load %arg14[%c1_63, %c1_64, %c0_65] : memref<10x10x64xf32, #tpu.memory_space<vmem>>, vector<8x8x64xf32>
    tpu.vector_store %arg14[%c1_63, %c1_64, %c0_65], %72 {strides = array<i32>} : memref<10x10x64xf32, #tpu.memory_space<vmem>>, vector<8x8x64xf32>,
    %cst_66 = arith.constant 0.000000e+00 : f32
    %76 = vector.broadcast %cst_66 : f32 to vector<64x128xf32>
    %c0_67 = arith.constant 0 : index
    %c0_68 = arith.constant 0 : index
    %c0_69 = arith.constant 0 : index
    %77 = vector.load %arg8[%c0_67, %c0_68, %c0_69] : memref<3x192x128xbf16, #tpu.memory_space<vmem>>, vector<1x192x128xbf16>
    %78 = vector.shape_cast %77 : vector<1x192x128xbf16> to vector<192x128xbf16>
    %c0_70 = arith.constant 0 : index
    %c0_71 = arith.constant 0 : index
    %c0_72 = arith.constant 0 : index
    %79 = vector.load %arg14[%c0_70, %c0_71, %c0_72] : memref<10x10x64xf32, #tpu.memory_space<vmem>>, vector<8x8x64xf32>
    %80 = arith.truncf %79 : vector<8x8x64xf32> to vector<8x8x64xbf16>
    %c0_73 = arith.constant 0 : index
    %c1_74 = arith.constant 1 : index
    %c0_75 = arith.constant 0 : index
    %81 = vector.load %arg14[%c0_73, %c1_74, %c0_75] : memref<10x10x64xf32, #tpu.memory_space<vmem>>, vector<8x8x64xf32>
    %82 = arith.truncf %81 : vector<8x8x64xf32> to vector<8x8x64xbf16>
    %c0_76 = arith.constant 0 : index
    %c2_77 = arith.constant 2 : index
    %c0_78 = arith.constant 0 : index
    %83 = vector.load %arg14[%c0_76, %c2_77, %c0_78] : memref<10x10x64xf32, #tpu.memory_space<vmem>>, vector<8x8x64xf32>
    %84 = arith.truncf %83 : vector<8x8x64xf32> to vector<8x8x64xbf16>
    %85 = tpu.concatenate %80, %82, %84 in 2 : vector<8x8x64xbf16>, vector<8x8x64xbf16>, vector<8x8x64xbf16> -> vector<8x8x192xbf16>
    %86 = vector.shape_cast %85 : vector<8x8x192xbf16> to vector<64x192xbf16>
    %cst_79 = arith.constant dense<0.000000e+00> : vector<64x128xf32>
    %87 = tpu.matmul %86, %78, %cst_79 {dimension_numbers = #tpu.dot_dimension_numbers<[1], [0], [0], [1], [0, 0, 1, 1], [], []>} : vector<64x192xbf16>, vector<192x128xbf16>, vector<64x128xf32> -> vector<64x128xf32>
    %88 = arith.addf %76, %87 : vector<64x128xf32>
    %c1_80 = arith.constant 1 : index
    %c0_81 = arith.constant 0 : index
    %c0_82 = arith.constant 0 : index
    %89 = vector.load %arg8[%c1_80, %c0_81, %c0_82] : memref<3x192x128xbf16, #tpu.memory_space<vmem>>, vector<1x192x128xbf16>
    %90 = vector.shape_cast %89 : vector<1x192x128xbf16> to vector<192x128xbf16>
    %c1_83 = arith.constant 1 : index
    %c0_84 = arith.constant 0 : index
    %c0_85 = arith.constant 0 : index
    %91 = vector.load %arg14[%c1_83, %c0_84, %c0_85] : memref<10x10x64xf32, #tpu.memory_space<vmem>>, vector<8x8x64xf32>
    %92 = arith.truncf %91 : vector<8x8x64xf32> to vector<8x8x64xbf16>
    %c1_86 = arith.constant 1 : index
    %c1_87 = arith.constant 1 : index
    %c0_88 = arith.constant 0 : index
    %93 = vector.load %arg14[%c1_86, %c1_87, %c0_88] : memref<10x10x64xf32, #tpu.memory_space<vmem>>, vector<8x8x64xf32>
    %94 = arith.truncf %93 : vector<8x8x64xf32> to vector<8x8x64xbf16>
    %c1_89 = arith.constant 1 : index
    %c2_90 = arith.constant 2 : index
    %c0_91 = arith.constant 0 : index
    %95 = vector.load %arg14[%c1_89, %c2_90, %c0_91] : memref<10x10x64xf32, #tpu.memory_space<vmem>>, vector<8x8x64xf32>
    %96 = arith.truncf %95 : vector<8x8x64xf32> to vector<8x8x64xbf16>
    %97 = tpu.concatenate %92, %94, %96 in 2 : vector<8x8x64xbf16>, vector<8x8x64xbf16>, vector<8x8x64xbf16> -> vector<8x8x192xbf16>
    %98 = vector.shape_cast %97 : vector<8x8x192xbf16> to vector<64x192xbf16>
    %cst_92 = arith.constant dense<0.000000e+00> : vector<64x128xf32>
    %99 = tpu.matmul %98, %90, %cst_92 {dimension_numbers = #tpu.dot_dimension_numbers<[1], [0], [0], [1], [0, 0, 1, 1], [], []>} : vector<64x192xbf16>, vector<192x128xbf16>, vector<64x128xf32> -> vector<64x128xf32>
    %100 = arith.addf %88, %99 : vector<64x128xf32>
    %c2_93 = arith.constant 2 : index
    %c0_94 = arith.constant 0 : index
    %c0_95 = arith.constant 0 : index
    %101 = vector.load %arg8[%c2_93, %c0_94, %c0_95] : memref<3x192x128xbf16, #tpu.memory_space<vmem>>, vector<1x192x128xbf16>
    %102 = vector.shape_cast %101 : vector<1x192x128xbf16> to vector<192x128xbf16>
    %c2_96 = arith.constant 2 : index
    %c0_97 = arith.constant 0 : index
    %c0_98 = arith.constant 0 : index
    %103 = vector.load %arg14[%c2_96, %c0_97, %c0_98] : memref<10x10x64xf32, #tpu.memory_space<vmem>>, vector<8x8x64xf32>
    %104 = arith.truncf %103 : vector<8x8x64xf32> to vector<8x8x64xbf16>
    %c2_99 = arith.constant 2 : index
    %c1_100 = arith.constant 1 : index
    %c0_101 = arith.constant 0 : index
    %105 = vector.load %arg14[%c2_99, %c1_100, %c0_101] : memref<10x10x64xf32, #tpu.memory_space<vmem>>, vector<8x8x64xf32>
    %106 = arith.truncf %105 : vector<8x8x64xf32> to vector<8x8x64xbf16>
    %c2_102 = arith.constant 2 : index
    %c2_103 = arith.constant 2 : index
    %c0_104 = arith.constant 0 : index
    %107 = vector.load %arg14[%c2_102, %c2_103, %c0_104] : memref<10x10x64xf32, #tpu.memory_space<vmem>>, vector<8x8x64xf32>
    %108 = arith.truncf %107 : vector<8x8x64xf32> to vector<8x8x64xbf16>
    %109 = tpu.concatenate %104, %106, %108 in 2 : vector<8x8x64xbf16>, vector<8x8x64xbf16>, vector<8x8x64xbf16> -> vector<8x8x192xbf16>
    %110 = vector.shape_cast %109 : vector<8x8x192xbf16> to vector<64x192xbf16>
    %cst_105 = arith.constant dense<0.000000e+00> : vector<64x128xf32>
    %111 = tpu.matmul %110, %102, %cst_105 {dimension_numbers = #tpu.dot_dimension_numbers<[1], [0], [0], [1], [0, 0, 1, 1], [], []>} : vector<64x192xbf16>, vector<192x128xbf16>, vector<64x128xf32> -> vector<64x128xf32>
    %112 = arith.addf %100, %111 : vector<64x128xf32>
    %c0_106 = arith.constant 0 : index
    %c0_107 = arith.constant 0 : index
    %113 = vector.load %arg9[%c0_106, %c0_107] : memref<1x128xf32, #tpu.memory_space<vmem>>, vector<1x128xf32>
    %114 = vector.broadcast %113 : vector<1x128xf32> to vector<64x128xf32>
    %115 = arith.addf %112, %114 : vector<64x128xf32>
    %cst_108 = arith.constant 0.000000e+00 : f32
    %116 = vector.broadcast %cst_108 : f32 to vector<64x128xf32>
    %117 = arith.maximumf %115, %116 : vector<64x128xf32>
    %cst_109 = arith.constant 0.000000e+00 : f32
    %118 = vector.broadcast %cst_109 : f32 to vector<10x10x128xf32>
    %c0_110 = arith.constant 0 : index
    %c0_111 = arith.constant 0 : index
    %c0_112 = arith.constant 0 : index
    %119 = vector.load %arg15[%c0_110, %c0_111, %c0_112] : memref<10x10x128xf32, #tpu.memory_space<vmem>>, vector<10x10x128xf32>
    tpu.vector_store %arg15[%c0_110, %c0_111, %c0_112], %118 {strides = array<i32>} : memref<10x10x128xf32, #tpu.memory_space<vmem>>, vector<10x10x128xf32>,
    %120 = vector.shape_cast %117 : vector<64x128xf32> to vector<8x8x128xf32>
    %c1_113 = arith.constant 1 : index
    %c1_114 = arith.constant 1 : index
    %c0_115 = arith.constant 0 : index
    %121 = vector.load %arg15[%c1_113, %c1_114, %c0_115] : memref<10x10x128xf32, #tpu.memory_space<vmem>>, vector<8x8x128xf32>
    tpu.vector_store %arg15[%c1_113, %c1_114, %c0_115], %120 {strides = array<i32>} : memref<10x10x128xf32, #tpu.memory_space<vmem>>, vector<8x8x128xf32>,
    %cst_116 = arith.constant 0.000000e+00 : f32
    %122 = vector.broadcast %cst_116 : f32 to vector<64x128xf32>
    %c0_117 = arith.constant 0 : index
    %c0_118 = arith.constant 0 : index
    %c0_119 = arith.constant 0 : index
    %123 = vector.load %arg10[%c0_117, %c0_118, %c0_119] : memref<3x384x128xbf16, #tpu.memory_space<vmem>>, vector<1x384x128xbf16>
    %124 = vector.shape_cast %123 : vector<1x384x128xbf16> to vector<384x128xbf16>
    %c0_120 = arith.constant 0 : index
    %c0_121 = arith.constant 0 : index
    %c0_122 = arith.constant 0 : index
    %125 = vector.load %arg15[%c0_120, %c0_121, %c0_122] : memref<10x10x128xf32, #tpu.memory_space<vmem>>, vector<8x8x128xf32>
    %126 = arith.truncf %125 : vector<8x8x128xf32> to vector<8x8x128xbf16>
    %c0_123 = arith.constant 0 : index
    %c1_124 = arith.constant 1 : index
    %c0_125 = arith.constant 0 : index
    %127 = vector.load %arg15[%c0_123, %c1_124, %c0_125] : memref<10x10x128xf32, #tpu.memory_space<vmem>>, vector<8x8x128xf32>
    %128 = arith.truncf %127 : vector<8x8x128xf32> to vector<8x8x128xbf16>
    %c0_126 = arith.constant 0 : index
    %c2_127 = arith.constant 2 : index
    %c0_128 = arith.constant 0 : index
    %129 = vector.load %arg15[%c0_126, %c2_127, %c0_128] : memref<10x10x128xf32, #tpu.memory_space<vmem>>, vector<8x8x128xf32>
    %130 = arith.truncf %129 : vector<8x8x128xf32> to vector<8x8x128xbf16>
    %131 = tpu.concatenate %126, %128, %130 in 2 : vector<8x8x128xbf16>, vector<8x8x128xbf16>, vector<8x8x128xbf16> -> vector<8x8x384xbf16>
    %132 = vector.shape_cast %131 : vector<8x8x384xbf16> to vector<64x384xbf16>
    %cst_129 = arith.constant dense<0.000000e+00> : vector<64x128xf32>
    %133 = tpu.matmul %132, %124, %cst_129 {dimension_numbers = #tpu.dot_dimension_numbers<[1], [0], [0], [1], [0, 0, 1, 1], [], []>} : vector<64x384xbf16>, vector<384x128xbf16>, vector<64x128xf32> -> vector<64x128xf32>
    %134 = arith.addf %122, %133 : vector<64x128xf32>
    %c1_130 = arith.constant 1 : index
    %c0_131 = arith.constant 0 : index
    %c0_132 = arith.constant 0 : index
    %135 = vector.load %arg10[%c1_130, %c0_131, %c0_132] : memref<3x384x128xbf16, #tpu.memory_space<vmem>>, vector<1x384x128xbf16>
    %136 = vector.shape_cast %135 : vector<1x384x128xbf16> to vector<384x128xbf16>
    %c1_133 = arith.constant 1 : index
    %c0_134 = arith.constant 0 : index
    %c0_135 = arith.constant 0 : index
    %137 = vector.load %arg15[%c1_133, %c0_134, %c0_135] : memref<10x10x128xf32, #tpu.memory_space<vmem>>, vector<8x8x128xf32>
    %138 = arith.truncf %137 : vector<8x8x128xf32> to vector<8x8x128xbf16>
    %c1_136 = arith.constant 1 : index
    %c1_137 = arith.constant 1 : index
    %c0_138 = arith.constant 0 : index
    %139 = vector.load %arg15[%c1_136, %c1_137, %c0_138] : memref<10x10x128xf32, #tpu.memory_space<vmem>>, vector<8x8x128xf32>
    %140 = arith.truncf %139 : vector<8x8x128xf32> to vector<8x8x128xbf16>
    %c1_139 = arith.constant 1 : index
    %c2_140 = arith.constant 2 : index
    %c0_141 = arith.constant 0 : index
    %141 = vector.load %arg15[%c1_139, %c2_140, %c0_141] : memref<10x10x128xf32, #tpu.memory_space<vmem>>, vector<8x8x128xf32>
    %142 = arith.truncf %141 : vector<8x8x128xf32> to vector<8x8x128xbf16>
    %143 = tpu.concatenate %138, %140, %142 in 2 : vector<8x8x128xbf16>, vector<8x8x128xbf16>, vector<8x8x128xbf16> -> vector<8x8x384xbf16>
    %144 = vector.shape_cast %143 : vector<8x8x384xbf16> to vector<64x384xbf16>
    %cst_142 = arith.constant dense<0.000000e+00> : vector<64x128xf32>
    %145 = tpu.matmul %144, %136, %cst_142 {dimension_numbers = #tpu.dot_dimension_numbers<[1], [0], [0], [1], [0, 0, 1, 1], [], []>} : vector<64x384xbf16>, vector<384x128xbf16>, vector<64x128xf32> -> vector<64x128xf32>
    %146 = arith.addf %134, %145 : vector<64x128xf32>
    %c2_143 = arith.constant 2 : index
    %c0_144 = arith.constant 0 : index
    %c0_145 = arith.constant 0 : index
    %147 = vector.load %arg10[%c2_143, %c0_144, %c0_145] : memref<3x384x128xbf16, #tpu.memory_space<vmem>>, vector<1x384x128xbf16>
    %148 = vector.shape_cast %147 : vector<1x384x128xbf16> to vector<384x128xbf16>
    %c2_146 = arith.constant 2 : index
    %c0_147 = arith.constant 0 : index
    %c0_148 = arith.constant 0 : index
    %149 = vector.load %arg15[%c2_146, %c0_147, %c0_148] : memref<10x10x128xf32, #tpu.memory_space<vmem>>, vector<8x8x128xf32>
    %150 = arith.truncf %149 : vector<8x8x128xf32> to vector<8x8x128xbf16>
    %c2_149 = arith.constant 2 : index
    %c1_150 = arith.constant 1 : index
    %c0_151 = arith.constant 0 : index
    %151 = vector.load %arg15[%c2_149, %c1_150, %c0_151] : memref<10x10x128xf32, #tpu.memory_space<vmem>>, vector<8x8x128xf32>
    %152 = arith.truncf %151 : vector<8x8x128xf32> to vector<8x8x128xbf16>
    %c2_152 = arith.constant 2 : index
    %c2_153 = arith.constant 2 : index
    %c0_154 = arith.constant 0 : index
    %153 = vector.load %arg15[%c2_152, %c2_153, %c0_154] : memref<10x10x128xf32, #tpu.memory_space<vmem>>, vector<8x8x128xf32>
    %154 = arith.truncf %153 : vector<8x8x128xf32> to vector<8x8x128xbf16>
    %155 = tpu.concatenate %150, %152, %154 in 2 : vector<8x8x128xbf16>, vector<8x8x128xbf16>, vector<8x8x128xbf16> -> vector<8x8x384xbf16>
    %156 = vector.shape_cast %155 : vector<8x8x384xbf16> to vector<64x384xbf16>
    %cst_155 = arith.constant dense<0.000000e+00> : vector<64x128xf32>
    %157 = tpu.matmul %156, %148, %cst_155 {dimension_numbers = #tpu.dot_dimension_numbers<[1], [0], [0], [1], [0, 0, 1, 1], [], []>} : vector<64x384xbf16>, vector<384x128xbf16>, vector<64x128xf32> -> vector<64x128xf32>
    %158 = arith.addf %146, %157 : vector<64x128xf32>
    %c0_156 = arith.constant 0 : index
    %c0_157 = arith.constant 0 : index
    %159 = vector.load %arg11[%c0_156, %c0_157] : memref<1x128xf32, #tpu.memory_space<vmem>>, vector<1x128xf32>
    %160 = vector.broadcast %159 : vector<1x128xf32> to vector<64x128xf32>
    %161 = arith.addf %158, %160 : vector<64x128xf32>
    %c0_158 = arith.constant 0 : index
    %c0_159 = arith.constant 0 : index
    %c0_160 = arith.constant 0 : index
    %162 = vector.load %arg12[%c0_158, %c0_159, %c0_160] : memref<1x64x128xf32, #tpu.memory_space<vmem>>, vector<1x64x128xf32>
    %163 = vector.shape_cast %162 : vector<1x64x128xf32> to vector<64x128xf32>
    %164 = vector.shape_cast %161 : vector<64x128xf32> to vector<1x64x128xf32>
    tpu.vector_store %arg12[%c0_158, %c0_159, %c0_160], %164 {strides = array<i32>} : memref<1x64x128xf32, #tpu.memory_space<vmem>>, vector<1x64x128xf32>,
    return
  }
  func.func @transform_0(%arg0: i32) -> (i32, i32, i32) {
    %c0_i32 = arith.constant 0 : i32
    %c0_i32_0 = arith.constant 0 : i32
    %c0_i32_1 = arith.constant 0 : i32
    return %arg0, %c0_i32, %c0_i32_0 : i32, i32, i32
  }
  func.func @transform_1(%arg0: i32) -> (i32, i32) {
    %c0_i32 = arith.constant 0 : i32
    %c0_i32_0 = arith.constant 0 : i32
    %c0_i32_1 = arith.constant 0 : i32
    return %c0_i32, %c0_i32_0 : i32, i32
  }
  func.func @transform_2(%arg0: i32) -> (i32, i32) {
    %c0_i32 = arith.constant 0 : i32
    %c0_i32_0 = arith.constant 0 : i32
    %c0_i32_1 = arith.constant 0 : i32
    return %c0_i32, %c0_i32_0 : i32, i32
  }
  func.func @transform_3(%arg0: i32) -> (i32, i32) {
    %c0_i32 = arith.constant 0 : i32
    %c0_i32_0 = arith.constant 0 : i32
    %c0_i32_1 = arith.constant 0 : i32
    return %c0_i32, %c0_i32_0 : i32, i32
  }
  func.func @transform_4(%arg0: i32) -> (i32, i32) {
    %c0_i32 = arith.constant 0 : i32
    %c0_i32_0 = arith.constant 0 : i32
    %c0_i32_1 = arith.constant 0 : i32
    return %c0_i32, %c0_i32_0 : i32, i32
  }
  func.func @transform_5(%arg0: i32) -> (i32, i32, i32) {
    %c0_i32 = arith.constant 0 : i32
    %c0_i32_0 = arith.constant 0 : i32
    %c0_i32_1 = arith.constant 0 : i32
    %c0_i32_2 = arith.constant 0 : i32
    return %c0_i32, %c0_i32_0, %c0_i32_1 : i32, i32, i32
  }
  func.func @transform_6(%arg0: i32) -> (i32, i32) {
    %c0_i32 = arith.constant 0 : i32
    %c0_i32_0 = arith.constant 0 : i32
    %c0_i32_1 = arith.constant 0 : i32
    return %c0_i32, %c0_i32_0 : i32, i32
  }
  func.func @transform_7(%arg0: i32) -> (i32, i32, i32) {
    %c0_i32 = arith.constant 0 : i32
    %c0_i32_0 = arith.constant 0 : i32
    %c0_i32_1 = arith.constant 0 : i32
    %c0_i32_2 = arith.constant 0 : i32
    return %c0_i32, %c0_i32_0, %c0_i32_1 : i32, i32, i32
  }
  func.func @transform_8(%arg0: i32) -> (i32, i32) {
    %c0_i32 = arith.constant 0 : i32
    %c0_i32_0 = arith.constant 0 : i32
    %c0_i32_1 = arith.constant 0 : i32
    return %c0_i32, %c0_i32_0 : i32, i32
  }
  func.func @transform_9(%arg0: i32) -> (i32, i32, i32) {
    %c0_i32 = arith.constant 0 : i32
    %c0_i32_0 = arith.constant 0 : i32
    %c0_i32_1 = arith.constant 0 : i32
    %c0_i32_2 = arith.constant 0 : i32
    return %c0_i32, %c0_i32_0, %c0_i32_1 : i32, i32, i32
  }
  func.func @transform_10(%arg0: i32) -> (i32, i32) {
    %c0_i32 = arith.constant 0 : i32
    %c0_i32_0 = arith.constant 0 : i32
    %c0_i32_1 = arith.constant 0 : i32
    return %c0_i32, %c0_i32_0 : i32, i32
  }
  func.func @transform_11(%arg0: i32) -> (i32, i32, i32) {
    %c0_i32 = arith.constant 0 : i32
    %c0_i32_0 = arith.constant 0 : i32
    %c0_i32_1 = arith.constant 0 : i32
    return %arg0, %c0_i32, %c0_i32_0 : i32, i32, i32
  }
}

</mosaic_0001>

<llo_original>
// kernel: single_channel_vgg_forward.2
$region0: #{single_channel_vgg_forward.2}
  #allocation0 [shape = 'u32[]', space=smem, size = 0x4, offset = 0x4, fixed_abs, tag = 'smem constant byte address 0x4 - core index']
  #allocation1 [shape = 'u32[144,128]{1,0:T(1,128)}', space=vmem, size = 0x12000, scoped, tag = 'internal scratch']
  %s0 = inlined_call_operand.vmem [shape: f32[2,256,9], index: 0, kind: input, shape index: {}]
  %s1 = inlined_call_operand.vmem [shape: f32[9,64], index: 1, kind: input, shape index: {}]
  %s2 = inlined_call_operand.vmem [shape: f32[1,64], index: 2, kind: input, shape index: {}]
  %s3 = inlined_call_operand.vmem [shape: f32[2,1,64], index: 3, kind: output, shape index: {0}]
  %s4 = inlined_call_operand.vmem [shape: f32[2,1,64], index: 4, kind: output, shape index: {1}]
  %5 = xla_tuple %s3, %s4
  %s6 = sld [smem:[#allocation0]]
  $region53: #{single_channel_vgg_forward.2} parent=0
    _
  %s8 = ssub.s32 1, %s6
  %s9 = scalar_select 0, %s8, %s6
  loop: start=0, step=1, limit=4
  $region2: #{single_channel_vgg_forward.2} parent=0 // loop_pre_header
    _
  $region3: #{single_channel_vgg_forward.2} parent=0 // loop_header
    %s11 = sphi 0, %s15
    %p12 = scmp.ge.s32.totalorder %s11, 4
    %s21 = sphi 0, %s23
    %s24 = sphi 0, %s21
    %s25 = sphi 0, %s24
    %s41 = sphi 0, %s25
    %s45 = sphi 0, %s45
    %s47 = sphi 0, %s45
    %s48 = sphi 0, %s47
    %s62 = sphi 0, %s48
    %s66 = sphi 0, %s66
    %s68 = sphi 0, %s66
    %s69 = sphi 0, %s68
    %s83 = sphi 0, %s69
    %s89 = sphi 0, %s91
    %s92 = sphi 0, %s89
    %s93 = sphi 0, %s92
    %s109 = sphi 0, %s93
    %s115 = sphi 0, %s117
    %s118 = sphi 0, %s115
    %s119 = sphi 0, %s118
    %s135 = sphi 0, %s119
  $region4: #{single_channel_vgg_forward.2} parent=0 // loop_header_branch
    %14 = sbr.rel (%p12) target = $region8
  $region5: #{single_channel_vgg_forward.2} parent=0 // loop_body
    %s16 = ssub.s32 %s11, 1
    %s17 = ssub.s32 %s11, 2
    %s18 = sadd.s32 %s11, 1
    %s19 = ssub.s32 %s11, %s18
    %p20 = scmp.eq.s32.totalorder %s19, 0
    %s22 = sadd.s32 %s21, 1
    %s23 = scalar_select %p20, %s21, %s22
    %p26 = pneg %p20
    %p27 = scmp.eq.s32.totalorder %s11, 1
    %p28 = por %p26, %p27
    %p29 = scmp.ne.s32.totalorder %s21, %s24
    %p30 = scmp.eq.s32.totalorder %s11, 0
    %p31 = por %p29, %p30
    %p32 = scmp.ne.s32.totalorder %s21, %s24
    %p33 = scmp.eq.s32.totalorder %s16, 1
    %p34 = por %p32, %p33
    %p35 = scmp.ne.s32.totalorder %s24, %s25
    %p36 = scmp.eq.s32.totalorder %s16, 0
    %p37 = por %p35, %p36
    %p38 = scmp.ne.s32.totalorder %s24, %s25
    %p39 = scmp.eq.s32.totalorder %s17, 1
    %p40 = por %p38, %p39
    %p42 = scmp.ne.s32.totalorder %s25, %s41
    %p43 = scmp.eq.s32.totalorder %s17, 0
    %p44 = por %p42, %p43
    %s46 = sadd.s32 %s45, 1
    %p49 = scmp.eq.s32.totalorder %s11, 1
    %p50 = scmp.ne.s32.totalorder %s45, %s47
    %p51 = scmp.eq.s32.totalorder %s11, 0
    %p52 = por %p50, %p51
    %p53 = scmp.ne.s32.totalorder %s45, %s47
    %p54 = scmp.eq.s32.totalorder %s16, 1
    %p55 = por %p53, %p54
    %p56 = scmp.ne.s32.totalorder %s47, %s48
    %p57 = scmp.eq.s32.totalorder %s16, 0
    %p58 = por %p56, %p57
    %p59 = scmp.ne.s32.totalorder %s47, %s48
    %p60 = scmp.eq.s32.totalorder %s17, 1
    %p61 = por %p59, %p60
    %p63 = scmp.ne.s32.totalorder %s48, %s62
    %p64 = scmp.eq.s32.totalorder %s17, 0
    %p65 = por %p63, %p64
    %s67 = sadd.s32 %s66, 1
    %p70 = scmp.eq.s32.totalorder %s11, 1
    %p71 = scmp.ne.s32.totalorder %s66, %s68
    %p72 = scmp.eq.s32.totalorder %s11, 0
    %p73 = por %p71, %p72
    %p74 = scmp.ne.s32.totalorder %s66, %s68
    %p75 = scmp.eq.s32.totalorder %s16, 1
    %p76 = por %p74, %p75
    %p77 = scmp.ne.s32.totalorder %s68, %s69
    %p78 = scmp.eq.s32.totalorder %s16, 0
    %p79 = por %p77, %p78
    %p80 = scmp.ne.s32.totalorder %s68, %s69
    %p81 = scmp.eq.s32.totalorder %s17, 1
    %p82 = por %p80, %p81
    %p84 = scmp.ne.s32.totalorder %s69, %s83
    %p85 = scmp.eq.s32.totalorder %s17, 0
    %p86 = por %p84, %p85
    %s87 = ssub.s32 %s11, %s18
    %p88 = scmp.eq.s32.totalorder %s87, 0
    %s90 = sadd.s32 %s89, 1
    %s91 = scalar_select %p88, %s89, %s90
    %p94 = pneg %p88
    %p95 = scmp.eq.s32.totalorder %s11, 1
    %p96 = por %p94, %p95
    %p97 = scmp.ne.s32.totalorder %s89, %s92
    %p98 = scmp.eq.s32.totalorder %s11, 0
    %p99 = por %p97, %p98
    %p100 = scmp.ne.s32.totalorder %s89, %s92
    %p101 = scmp.eq.s32.totalorder %s16, 1
    %p102 = por %p100, %p101
    %p103 = scmp.ne.s32.totalorder %s92, %s93
    %p104 = scmp.eq.s32.totalorder %s16, 0
    %p105 = por %p103, %p104
    %p106 = scmp.ne.s32.totalorder %s92, %s93
    %p107 = scmp.eq.s32.totalorder %s17, 1
    %p108 = por %p106, %p107
    %p110 = scmp.ne.s32.totalorder %s93, %s109
    %p111 = scmp.eq.s32.totalorder %s17, 0
    %p112 = por %p110, %p111
    %s113 = ssub.s32 %s11, %s18
    %p114 = scmp.eq.s32.totalorder %s113, 0
    %s116 = sadd.s32 %s115, 1
    %s117 = scalar_select %p114, %s115, %s116
    %p120 = pneg %p114
    %p121 = scmp.eq.s32.totalorder %s11, 1
    %p122 = por %p120, %p121
    %p123 = scmp.ne.s32.totalorder %s115, %s118
    %p124 = scmp.eq.s32.totalorder %s11, 0
    %p125 = por %p123, %p124
    %p126 = scmp.ne.s32.totalorder %s115, %s118
    %p127 = scmp.eq.s32.totalorder %s16, 1
    %p128 = por %p126, %p127
    %p129 = scmp.ne.s32.totalorder %s118, %s119
    %p130 = scmp.eq.s32.totalorder %s16, 0
    %p131 = por %p129, %p130
    %p132 = scmp.ne.s32.totalorder %s118, %s119
    %p133 = scmp.eq.s32.totalorder %s17, 1
    %p134 = por %p132, %p133
    %p136 = scmp.ne.s32.totalorder %s119, %s135
    %p137 = scmp.eq.s32.totalorder %s17, 0
    %p138 = por %p136, %p137
    %p139 = scmp.le.s32.totalorder 1, %s11
    %p140 = scmp.lt.s32.totalorder %s11, 3
    %p141 = pnand %p139, %p140
    %p142 = pneg %p141
    // Predicated region
    $region9: #{single_channel_vgg_forward.2} parent=5 // pred_check
      _
    $region10: #{single_channel_vgg_forward.2} parent=5 // pred_check_branch
      %144 = sbr.rel (%p141) target = $region12
    $region11: #{single_channel_vgg_forward.2} parent=5 // pred_region
      %s145 = ssub.s32 %s11, 1
      // Predicated region
      $region13: #{single_channel_vgg_forward.2} parent=11 // pred_check
        %p146 = pneg %p58
      $region14: #{single_channel_vgg_forward.2} parent=11 // pred_check_branch
        %148 = sbr.rel (%p146) target = $region16
      $region15: #{single_channel_vgg_forward.2} parent=11 // pred_region
        _
      $region16: #{single_channel_vgg_forward.2} parent=11 // pred_fallthru
        _
      // Predicated region
      $region17: #{single_channel_vgg_forward.2} parent=11 // pred_check
        %p149 = pneg %p79
      $region18: #{single_channel_vgg_forward.2} parent=11 // pred_check_branch
        %151 = sbr.rel (%p149) target = $region20
      $region19: #{single_channel_vgg_forward.2} parent=11 // pred_region
        _
      $region20: #{single_channel_vgg_forward.2} parent=11 // pred_fallthru
        _
    $region12: #{single_channel_vgg_forward.2} parent=5 // pred_fallthru
      _
    %p152 = scmp.lt.s32.totalorder %s11, 2
    // Predicated region
    $region21: #{single_channel_vgg_forward.2} parent=5 // pred_check
      %p153 = pneg %p152
    $region22: #{single_channel_vgg_forward.2} parent=5 // pred_check_branch
      %155 = sbr.rel (%p153) target = $region24
    $region23: #{single_channel_vgg_forward.2} parent=5 // pred_region
      // Predicated region
      $region25: #{single_channel_vgg_forward.2} parent=23 // pred_check
        %p156 = pneg %p31
      $region26: #{single_channel_vgg_forward.2} parent=23 // pred_check_branch
        %158 = sbr.rel (%p156) target = $region28
      $region27: #{single_channel_vgg_forward.2} parent=23 // pred_region
        %p159 = scmp.lt.s32.totalorder %s11, 1
        %s160 = scalar_select %p159, %s11, 1
        %s161 = smul.addr %s160, 32
        %s162 = smul.addr %s161, 8
        %s163 = scalar_lea.vmem %s0, %s162
      $region28: #{single_channel_vgg_forward.2} parent=23 // pred_fallthru
        _
    $region24: #{single_channel_vgg_forward.2} parent=5 // pred_fallthru
      _
    %p164 = scmp.le.s32.totalorder 1, %s11
    %p165 = scmp.lt.s32.totalorder %s11, 3
    %p166 = pnand %p164, %p165
    %p167 = pneg %p166
    // Predicated region
    $region29: #{single_channel_vgg_forward.2} parent=5 // pred_check
      _
    $region30: #{single_channel_vgg_forward.2} parent=5 // pred_check_branch
      %169 = sbr.rel (%p166) target = $region32
    $region31: #{single_channel_vgg_forward.2} parent=5 // pred_region
      %s170 = ssub.s32 %s11, 1
      %p171 = scmp.lt.s32.totalorder %s16, 1
      %s172 = scalar_select %p171, %s16, 1
      %s173 = smul.addr %s172, 32
      %s174 = smul.addr %s173, 8
      %s175 = scalar_lea.vmem %s0, %s174
      %p176 = pneg %p37
      %p177 = pneg %p34
      %p178 = pneg %p58
      %p179 = pneg %p55
      %p180 = pneg %p79
      %p181 = pneg %p76
      %p182 = pneg %p105
      %p183 = pneg %p102
      %p184 = scmp.lt.s32.totalorder %s16, 1
      %s185 = scalar_select %p184, %s16, 1
      %s186 = scalar_lea.vmem %s3, %s185
      %p187 = pneg %p131
      %p188 = pneg %p128
      %p189 = scmp.lt.s32.totalorder %s16, 1
      %s190 = scalar_select %p189, %s16, 1
      %s191 = scalar_lea.vmem %s4, %s190
      %p192 = scmp.lt.s32.totalorder %s16, 1
      %s193 = scalar_select %p192, %s16, 1
      %s194 = smul.addr %s193, 32
      %s195 = smul.addr %s194, 8
      %s196 = scalar_lea.vmem %s0, %s195
      %p197 = scmp.lt.s32.totalorder %s16, 1
      %s198 = scalar_select %p197, %s16, 1
      %s199 = scalar_lea.vmem %s3, %s198
      %p200 = scmp.lt.s32.totalorder %s16, 1
      %s201 = scalar_select %p200, %s16, 1
      %s202 = scalar_lea.vmem %s4, %s201
      %v203 = vld [vmem:[%s196] sm:$0xff]
      %v204 = vld [vmem:[%s196 + $0x8] sm:$0xff]
      %v205 = vld [vmem:[%s196 + $0x10] sm:$0xff]
      %v206 = vld [vmem:[%s196 + $0x18] sm:$0xff]
      %v207 = vld [vmem:[%s196 + $0x20] sm:$0xff]
      %v208 = vld [vmem:[%s196 + $0x28] sm:$0xff]
      %v209 = vld [vmem:[%s196 + $0x30] sm:$0xff]
      %v210 = vld [vmem:[%s196 + $0x38] sm:$0xff]
      %v211 = vld [vmem:[%s196 + $0x40] sm:$0xff]
      %v212 = vld [vmem:[%s196 + $0x48] sm:$0xff]
      %v213 = vld [vmem:[%s196 + $0x50] sm:$0xff]
      %v214 = vld [vmem:[%s196 + $0x58] sm:$0xff]
      %v215 = vld [vmem:[%s196 + $0x60] sm:$0xff]
      %v216 = vld [vmem:[%s196 + $0x68] sm:$0xff]
      %v217 = vld [vmem:[%s196 + $0x70] sm:$0xff]
      %v218 = vld [vmem:[%s196 + $0x78] sm:$0xff]
      %v219 = vld [vmem:[%s196 + $0x80] sm:$0xff]
      %v220 = vld [vmem:[%s196 + $0x88] sm:$0xff]
      %v221 = vld [vmem:[%s196 + $0x90] sm:$0xff]
      %v222 = vld [vmem:[%s196 + $0x98] sm:$0xff]
      %v223 = vld [vmem:[%s196 + $0xa0] sm:$0xff]
      %v224 = vld [vmem:[%s196 + $0xa8] sm:$0xff]
      %v225 = vld [vmem:[%s196 + $0xb0] sm:$0xff]
      %v226 = vld [vmem:[%s196 + $0xb8] sm:$0xff]
      %v227 = vld [vmem:[%s196 + $0xc0] sm:$0xff]
      %v228 = vld [vmem:[%s196 + $0xc8] sm:$0xff]
      %v229 = vld [vmem:[%s196 + $0xd0] sm:$0xff]
      %v230 = vld [vmem:[%s196 + $0xd8] sm:$0xff]
      %v231 = vld [vmem:[%s196 + $0xe0] sm:$0xff]
      %v232 = vld [vmem:[%s196 + $0xe8] sm:$0xff]
      %v233 = vld [vmem:[%s196 + $0xf0] sm:$0xff]
      %v234 = vld [vmem:[%s196 + $0xf8] sm:$0xff]
      %v235 = vld [vmem:[%s1] sm:$0xff]
      %v236 = vld [vmem:[%s1 + $0x8] sm:$0x1]
      %v237 = vld [vmem:[%s2] sm:$0x1]
      %v239 = vlaneseq
      %v240 = vshrl.u32 %v239, 7
      %v241 = vsub.s32 0, %v240
      %v242 = vrot.slane %v237, %v241
      %vm244 = vcmask 72704
      %v246 = vsel %vm244, %v203, 0
      %v249 = vsel %vm244, %v204, 0
      %v252 = vsel %vm244, %v205, 0
      %v255 = vsel %vm244, %v206, 0
      %v258 = vsel %vm244, %v207, 0
      %v261 = vsel %vm244, %v208, 0
      %v264 = vsel %vm244, %v209, 0
      %v267 = vsel %vm244, %v210, 0
      %v270 = vsel %vm244, %v211, 0
      %v273 = vsel %vm244, %v212, 0
      %v276 = vsel %vm244, %v213, 0
      %v279 = vsel %vm244, %v214, 0
      %v282 = vsel %vm244, %v215, 0
      %v285 = vsel %vm244, %v216, 0
      %v288 = vsel %vm244, %v217, 0
      %v291 = vsel %vm244, %v218, 0
      %v294 = vsel %vm244, %v219, 0
      %v297 = vsel %vm244, %v220, 0
      %v300 = vsel %vm244, %v221, 0
      %v303 = vsel %vm244, %v222, 0
      %v306 = vsel %vm244, %v223, 0
      %v309 = vsel %vm244, %v224, 0
      %v312 = vsel %vm244, %v225, 0
      %v315 = vsel %vm244, %v226, 0
      %v318 = vsel %vm244, %v227, 0
      %v321 = vsel %vm244, %v228, 0
      %v324 = vsel %vm244, %v229, 0
      %v327 = vsel %vm244, %v230, 0
      %v330 = vsel %vm244, %v231, 0
      %v333 = vsel %vm244, %v232, 0
      %v336 = vsel %vm244, %v233, 0
      %v339 = vsel %vm244, %v234, 0
      %vm341 = vcmask 1040384
      %v343 = vsel %vm341, %v236, 0
      %345 = vmatprep.subr.mxu0 0.0
      %346 = vmatpush1.msra.mxu0 0.0
      %347 = vmatprep.subr.mxu0 0.0
      %348 = vmatpush1.msra.mxu0 0.0
      %349 = vmatprep.subr.mxu0 0.0
      %350 = vmatpush1.msra.mxu0 0.0
      %351 = vmatprep.subr.mxu0 0.0
      %352 = vmatpush1.msra.mxu0 0.0
      %353 = vmatprep.subr.mxu0 0.0
      %354 = vmatpush1.msra.mxu0 0.0
      %355 = vmatprep.subr.mxu0 0.0
      %356 = vmatpush1.msra.mxu0 0.0
      %357 = vmatprep.subr.mxu0 0.0
      %358 = vmatpush1.msra.mxu0 0.0
      %359 = vmatprep.subr.mxu0 0.0
      %360 = vmatpush1.msra.mxu0 0.0
      %361 = vmatprep.subr.mxu0 0.0
      %362 = vmatpush1.msra.mxu0 0.0
      %363 = vmatprep.subr.mxu0 0.0
      %364 = vmatpush1.msra.mxu0 0.0
      %365 = vmatprep.subr.mxu0 0.0
      %366 = vmatpush1.msra.mxu0 0.0
      %367 = vmatprep.subr.mxu0 0.0
      %368 = vmatpush1.msra.mxu0 0.0
      %369 = vmatprep.subr.mxu0 0.0
      %370 = vmatpush1.msra.mxu0 0.0
      %371 = vmatprep.subr.mxu0 0.0
      %372 = vmatpush1.msra.mxu0 0.0
      %373 = vmatprep.subr.mxu0 0.0
      %374 = vmatpush1.msra.mxu0 %v343
      %375 = vmatprep.subr.mxu0 0.0
      %376 = vmatpush1.msra.mxu0 %v235
      %377 = vmatprep.subr.mxu0 0.0
      %378 = vmatpush2.msra.mxu0 0.0
      %379 = vmatprep.subr.mxu0 0.0
      %380 = vmatpush2.msra.mxu0 0.0
      %381 = vmatprep.subr.mxu0 0.0
      %382 = vmatpush2.msra.mxu0 0.0
      %383 = vmatprep.subr.mxu0 0.0
      %384 = vmatpush2.msra.mxu0 0.0
      %385 = vmatprep.subr.mxu0 0.0
      %386 = vmatpush2.msra.mxu0 0.0
      %387 = vmatprep.subr.mxu0 0.0
      %388 = vmatpush2.msra.mxu0 0.0
      %389 = vmatprep.subr.mxu0 0.0
      %390 = vmatpush2.msra.mxu0 0.0
      %391 = vmatprep.subr.mxu0 0.0
      %392 = vmatpush2.msra.mxu0 0.0
      %393 = vmatprep.subr.mxu0 0.0
      %394 = vmatpush2.msra.mxu0 0.0
      %395 = vmatprep.subr.mxu0 0.0
      %396 = vmatpush2.msra.mxu0 0.0
      %397 = vmatprep.subr.mxu0 0.0
      %398 = vmatpush2.msra.mxu0 0.0
      %399 = vmatprep.subr.mxu0 0.0
      %400 = vmatpush2.msra.mxu0 0.0
      %401 = vmatprep.subr.mxu0 0.0
      %402 = vmatpush2.msra.mxu0 0.0
      %403 = vmatprep.subr.mxu0 0.0
      %404 = vmatpush2.msra.mxu0 0.0
      %405 = vmatprep.subr.mxu0 0.0
      %406 = vmatpush2.msra.mxu0 0.0
      %407 = vmatprep.subr.mxu0 0.0
      %408 = vmatpush2.msra.mxu0 0.0
      %409 = vmatprep.mubr.f32.mxu0 0.0
      %410 = vmatmul.mubr.f32.gmra.mxu0 %v246
      %v411 = vpop.f32.mrf.mxu0
      %v412 = vadd.f32 %v242, %v411
      %v413 = vpop.f32.mrf.mxu0
      %414 = vmatprep.mubr.f32.mxu0 0.0
      %415 = vmatmul.mubr.f32.gmra.mxu0 %v249
      %v416 = vpop.f32.mrf.mxu0
      %v417 = vadd.f32 %v242, %v416
      %v418 = vpop.f32.mrf.mxu0
      %419 = vmatprep.mubr.f32.mxu0 0.0
      %420 = vmatmul.mubr.f32.gmra.mxu0 %v252
      %v421 = vpop.f32.mrf.mxu0
      %v422 = vadd.f32 %v242, %v421
      %v423 = vpop.f32.mrf.mxu0
      %424 = vmatprep.mubr.f32.mxu0 0.0
      %425 = vmatmul.mubr.f32.gmra.mxu0 %v255
      %v426 = vpop.f32.mrf.mxu0
      %v427 = vadd.f32 %v242, %v426
      %v428 = vpop.f32.mrf.mxu0
      %429 = vmatprep.mubr.f32.mxu0 0.0
      %430 = vmatmul.mubr.f32.gmra.mxu0 %v258
      %v431 = vpop.f32.mrf.mxu0
      %v432 = vadd.f32 %v242, %v431
      %v433 = vpop.f32.mrf.mxu0
      %434 = vmatprep.mubr.f32.mxu0 0.0
      %435 = vmatmul.mubr.f32.gmra.mxu0 %v261
      %v436 = vpop.f32.mrf.mxu0
      %v437 = vadd.f32 %v242, %v436
      %v438 = vpop.f32.mrf.mxu0
      %439 = vmatprep.mubr.f32.mxu0 0.0
      %440 = vmatmul.mubr.f32.gmra.mxu0 %v264
      %v441 = vpop.f32.mrf.mxu0
      %v442 = vadd.f32 %v242, %v441
      %v443 = vpop.f32.mrf.mxu0
      %444 = vmatprep.mubr.f32.mxu0 0.0
      %445 = vmatmul.mubr.f32.gmra.mxu0 %v267
      %v446 = vpop.f32.mrf.mxu0
      %v447 = vadd.f32 %v242, %v446
      %v448 = vpop.f32.mrf.mxu0
      %449 = vmatprep.mubr.f32.mxu0 0.0
      %450 = vmatmul.mubr.f32.gmra.mxu0 %v270
      %v451 = vpop.f32.mrf.mxu0
      %v452 = vadd.f32 %v242, %v451
      %v453 = vpop.f32.mrf.mxu0
      %454 = vmatprep.mubr.f32.mxu0 0.0
      %455 = vmatmul.mubr.f32.gmra.mxu0 %v273
      %v456 = vpop.f32.mrf.mxu0
      %v457 = vadd.f32 %v242, %v456
      %v458 = vpop.f32.mrf.mxu0
      %459 = vmatprep.mubr.f32.mxu0 0.0
      %460 = vmatmul.mubr.f32.gmra.mxu0 %v276
      %v461 = vpop.f32.mrf.mxu0
      %v462 = vadd.f32 %v242, %v461
      %v463 = vpop.f32.mrf.mxu0
      %464 = vmatprep.mubr.f32.mxu0 0.0
      %465 = vmatmul.mubr.f32.gmra.mxu0 %v279
      %v466 = vpop.f32.mrf.mxu0
      %v467 = vadd.f32 %v242, %v466
      %v468 = vpop.f32.mrf.mxu0
      %469 = vmatprep.mubr.f32.mxu0 0.0
      %470 = vmatmul.mubr.f32.gmra.mxu0 %v282
      %v471 = vpop.f32.mrf.mxu0
      %v472 = vadd.f32 %v242, %v471
      %v473 = vpop.f32.mrf.mxu0
      %474 = vmatprep.mubr.f32.mxu0 0.0
      %475 = vmatmul.mubr.f32.gmra.mxu0 %v285
      %v476 = vpop.f32.mrf.mxu0
      %v477 = vadd.f32 %v242, %v476
      %v478 = vpop.f32.mrf.mxu0
      %479 = vmatprep.mubr.f32.mxu0 0.0
      %480 = vmatmul.mubr.f32.gmra.mxu0 %v288
      %v481 = vpop.f32.mrf.mxu0
      %v482 = vadd.f32 %v242, %v481
      %v483 = vpop.f32.mrf.mxu0
      %484 = vmatprep.mubr.f32.mxu0 0.0
      %485 = vmatmul.mubr.f32.gmra.mxu0 %v291
      %v486 = vpop.f32.mrf.mxu0
      %v487 = vadd.f32 %v242, %v486
      %v488 = vpop.f32.mrf.mxu0
      %489 = vmatprep.mubr.f32.mxu0 0.0
      %490 = vmatmul.mubr.f32.gmra.mxu0 %v294
      %v491 = vpop.f32.mrf.mxu0
      %v492 = vadd.f32 %v242, %v491
      %v493 = vpop.f32.mrf.mxu0
      %494 = vmatprep.mubr.f32.mxu0 0.0
      %495 = vmatmul.mubr.f32.gmra.mxu0 %v297
      %v496 = vpop.f32.mrf.mxu0
      %v497 = vadd.f32 %v242, %v496
      %v498 = vpop.f32.mrf.mxu0
      %499 = vmatprep.mubr.f32.mxu0 0.0
      %500 = vmatmul.mubr.f32.gmra.mxu0 %v300
      %v501 = vpop.f32.mrf.mxu0
      %v502 = vadd.f32 %v242, %v501
      %v503 = vpop.f32.mrf.mxu0
      %504 = vmatprep.mubr.f32.mxu0 0.0
      %505 = vmatmul.mubr.f32.gmra.mxu0 %v303
      %v506 = vpop.f32.mrf.mxu0
      %v507 = vadd.f32 %v242, %v506
      %v508 = vpop.f32.mrf.mxu0
      %509 = vmatprep.mubr.f32.mxu0 0.0
      %510 = vmatmul.mubr.f32.gmra.mxu0 %v306
      %v511 = vpop.f32.mrf.mxu0
      %v512 = vadd.f32 %v242, %v511
      %v513 = vpop.f32.mrf.mxu0
      %514 = vmatprep.mubr.f32.mxu0 0.0
      %515 = vmatmul.mubr.f32.gmra.mxu0 %v309
      %v516 = vpop.f32.mrf.mxu0
      %v517 = vadd.f32 %v242, %v516
      %v518 = vpop.f32.mrf.mxu0
      %519 = vmatprep.mubr.f32.mxu0 0.0
      %520 = vmatmul.mubr.f32.gmra.mxu0 %v312
      %v521 = vpop.f32.mrf.mxu0
      %v522 = vadd.f32 %v242, %v521
      %v523 = vpop.f32.mrf.mxu0
      %524 = vmatprep.mubr.f32.mxu0 0.0
      %525 = vmatmul.mubr.f32.gmra.mxu0 %v315
      %v526 = vpop.f32.mrf.mxu0
      %v527 = vadd.f32 %v242, %v526
      %v528 = vpop.f32.mrf.mxu0
      %529 = vmatprep.mubr.f32.mxu0 0.0
      %530 = vmatmul.mubr.f32.gmra.mxu0 %v318
      %v531 = vpop.f32.mrf.mxu0
      %v532 = vadd.f32 %v242, %v531
      %v533 = vpop.f32.mrf.mxu0
      %534 = vmatprep.mubr.f32.mxu0 0.0
      %535 = vmatmul.mubr.f32.gmra.mxu0 %v321
      %v536 = vpop.f32.mrf.mxu0
      %v537 = vadd.f32 %v242, %v536
      %v538 = vpop.f32.mrf.mxu0
      %539 = vmatprep.mubr.f32.mxu0 0.0
      %540 = vmatmul.mubr.f32.gmra.mxu0 %v324
      %v541 = vpop.f32.mrf.mxu0
      %v542 = vadd.f32 %v242, %v541
      %v543 = vpop.f32.mrf.mxu0
      %544 = vmatprep.mubr.f32.mxu0 0.0
      %545 = vmatmul.mubr.f32.gmra.mxu0 %v327
      %v546 = vpop.f32.mrf.mxu0
      %v547 = vadd.f32 %v242, %v546
      %v548 = vpop.f32.mrf.mxu0
      %549 = vmatprep.mubr.f32.mxu0 0.0
      %550 = vmatmul.mubr.f32.gmra.mxu0 %v330
      %v551 = vpop.f32.mrf.mxu0
      %v552 = vadd.f32 %v242, %v551
      %v553 = vpop.f32.mrf.mxu0
      %554 = vmatprep.mubr.f32.mxu0 0.0
      %555 = vmatmul.mubr.f32.gmra.mxu0 %v333
      %v556 = vpop.f32.mrf.mxu0
      %v557 = vadd.f32 %v242, %v556
      %v558 = vpop.f32.mrf.mxu0
      %559 = vmatprep.mubr.f32.mxu0 0.0
      %560 = vmatmul.mubr.f32.gmra.mxu0 %v336
      %v561 = vpop.f32.mrf.mxu0
      %v562 = vadd.f32 %v242, %v561
      %v563 = vpop.f32.mrf.mxu0
      %564 = vmatprep.mubr.f32.mxu0 0.0
      %565 = vmatmul.mubr.f32.gmra.mxu0 %v339
      %v566 = vpop.f32.mrf.mxu0
      %v567 = vadd.f32 %v242, %v566
      %v568 = vpop.f32.mrf.mxu0
      %569 = vdwg.mxu0
      %vm570 = vcmask 523264
      %v571 = vsel %vm570, %v412, 0.0
      %v572 = vsel %vm570, %v417, 0.0
      %v573 = vadd.f32 %v571, %v572
      %v574 = vsel %vm570, %v422, 0.0
      %v575 = vadd.f32 %v573, %v574
      %v576 = vsel %vm570, %v427, 0.0
      %v577 = vadd.f32 %v575, %v576
      %v578 = vsel %vm570, %v432, 0.0
      %v579 = vadd.f32 %v577, %v578
      %v580 = vsel %vm570, %v437, 0.0
      %v581 = vadd.f32 %v579, %v580
      %v582 = vsel %vm570, %v442, 0.0
      %v583 = vadd.f32 %v581, %v582
      %v584 = vsel %vm570, %v447, 0.0
      %v585 = vadd.f32 %v583, %v584
      %v586 = vsel %vm570, %v452, 0.0
      %v587 = vadd.f32 %v585, %v586
      %v588 = vsel %vm570, %v457, 0.0
      %v589 = vadd.f32 %v587, %v588
      %v590 = vsel %vm570, %v462, 0.0
      %v591 = vadd.f32 %v589, %v590
      %v592 = vsel %vm570, %v467, 0.0
      %v593 = vadd.f32 %v591, %v592
      %v594 = vsel %vm570, %v472, 0.0
      %v595 = vadd.f32 %v593, %v594
      %v596 = vsel %vm570, %v477, 0.0
      %v597 = vadd.f32 %v595, %v596
      %v598 = vsel %vm570, %v482, 0.0
      %v599 = vadd.f32 %v597, %v598
      %v600 = vsel %vm570, %v487, 0.0
      %v601 = vadd.f32 %v599, %v600
      %v602 = vsel %vm570, %v492, 0.0
      %v603 = vadd.f32 %v601, %v602
      %v604 = vsel %vm570, %v497, 0.0
      %v605 = vadd.f32 %v603, %v604
      %v606 = vsel %vm570, %v502, 0.0
      %v607 = vadd.f32 %v605, %v606
      %v608 = vsel %vm570, %v507, 0.0
      %v609 = vadd.f32 %v607, %v608
      %v610 = vsel %vm570, %v512, 0.0
      %v611 = vadd.f32 %v609, %v610
      %v612 = vsel %vm570, %v517, 0.0
      %v613 = vadd.f32 %v611, %v612
      %v614 = vsel %vm570, %v522, 0.0
      %v615 = vadd.f32 %v613, %v614
      %v616 = vsel %vm570, %v527, 0.0
      %v617 = vadd.f32 %v615, %v616
      %v618 = vsel %vm570, %v532, 0.0
      %v619 = vadd.f32 %v617, %v618
      %v620 = vsel %vm570, %v537, 0.0
      %v621 = vadd.f32 %v619, %v620
      %v622 = vsel %vm570, %v542, 0.0
      %v623 = vadd.f32 %v621, %v622
      %v624 = vsel %vm570, %v547, 0.0
      %v625 = vadd.f32 %v623, %v624
      %v626 = vsel %vm570, %v552, 0.0
      %v627 = vadd.f32 %v625, %v626
      %v628 = vsel %vm570, %v557, 0.0
      %v629 = vadd.f32 %v627, %v628
      %v630 = vsel %vm570, %v562, 0.0
      %v631 = vadd.f32 %v629, %v630
      %v632 = vsel %vm570, %v567, 0.0
      %v633 = vadd.f32 %v631, %v632
      %v634 = vrot.slane %v633, 4
      %v635 = vadd.f32 %v633, %v634
      %v636 = vrot.slane %v635, 2
      %v637 = vadd.f32 %v635, %v636
      %v638 = vrot.slane %v637, 1
      %v639 = vadd.f32 %v637, %v638
      %vm640 = vcmask 516096
      %641 = vst.msk [vmem:[%s199] sm:$0x1] %vm640, %v639
      %v642 = vmul.f32 %v412, %v412
      %v643 = vmul.f32 %v417, %v417
      %v644 = vmul.f32 %v422, %v422
      %v645 = vmul.f32 %v427, %v427
      %v646 = vmul.f32 %v432, %v432
      %v647 = vmul.f32 %v437, %v437
      %v648 = vmul.f32 %v442, %v442
      %v649 = vmul.f32 %v447, %v447
      %v650 = vmul.f32 %v452, %v452
      %v651 = vmul.f32 %v457, %v457
      %v652 = vmul.f32 %v462, %v462
      %v653 = vmul.f32 %v467, %v467
      %v654 = vmul.f32 %v472, %v472
      %v655 = vmul.f32 %v477, %v477
      %v656 = vmul.f32 %v482, %v482
      %v657 = vmul.f32 %v487, %v487
      %v658 = vmul.f32 %v492, %v492
      %v659 = vmul.f32 %v497, %v497
      %v660 = vmul.f32 %v502, %v502
      %v661 = vmul.f32 %v507, %v507
      %v662 = vmul.f32 %v512, %v512
      %v663 = vmul.f32 %v517, %v517
      %v664 = vmul.f32 %v522, %v522
      %v665 = vmul.f32 %v527, %v527
      %v666 = vmul.f32 %v532, %v532
      %v667 = vmul.f32 %v537, %v537
      %v668 = vmul.f32 %v542, %v542
      %v669 = vmul.f32 %v547, %v547
      %v670 = vmul.f32 %v552, %v552
      %v671 = vmul.f32 %v557, %v557
      %v672 = vmul.f32 %v562, %v562
      %v673 = vmul.f32 %v567, %v567
      %v674 = vsel %vm570, %v642, 0.0
      %v675 = vsel %vm570, %v643, 0.0
      %v676 = vadd.f32 %v674, %v675
      %v677 = vsel %vm570, %v644, 0.0
      %v678 = vadd.f32 %v676, %v677
      %v679 = vsel %vm570, %v645, 0.0
      %v680 = vadd.f32 %v678, %v679
      %v681 = vsel %vm570, %v646, 0.0
      %v682 = vadd.f32 %v680, %v681
      %v683 = vsel %vm570, %v647, 0.0
      %v684 = vadd.f32 %v682, %v683
      %v685 = vsel %vm570, %v648, 0.0
      %v686 = vadd.f32 %v684, %v685
      %v687 = vsel %vm570, %v649, 0.0
      %v688 = vadd.f32 %v686, %v687
      %v689 = vsel %vm570, %v650, 0.0
      %v690 = vadd.f32 %v688, %v689
      %v691 = vsel %vm570, %v651, 0.0
      %v692 = vadd.f32 %v690, %v691
      %v693 = vsel %vm570, %v652, 0.0
      %v694 = vadd.f32 %v692, %v693
      %v695 = vsel %vm570, %v653, 0.0
      %v696 = vadd.f32 %v694, %v695
      %v697 = vsel %vm570, %v654, 0.0
      %v698 = vadd.f32 %v696, %v697
      %v699 = vsel %vm570, %v655, 0.0
      %v700 = vadd.f32 %v698, %v699
      %v701 = vsel %vm570, %v656, 0.0
      %v702 = vadd.f32 %v700, %v701
      %v703 = vsel %vm570, %v657, 0.0
      %v704 = vadd.f32 %v702, %v703
      %v705 = vsel %vm570, %v658, 0.0
      %v706 = vadd.f32 %v704, %v705
      %v707 = vsel %vm570, %v659, 0.0
      %v708 = vadd.f32 %v706, %v707
      %v709 = vsel %vm570, %v660, 0.0
      %v710 = vadd.f32 %v708, %v709
      %v711 = vsel %vm570, %v661, 0.0
      %v712 = vadd.f32 %v710, %v711
      %v713 = vsel %vm570, %v662, 0.0
      %v714 = vadd.f32 %v712, %v713
      %v715 = vsel %vm570, %v663, 0.0
      %v716 = vadd.f32 %v714, %v715
      %v717 = vsel %vm570, %v664, 0.0
      %v718 = vadd.f32 %v716, %v717
      %v719 = vsel %vm570, %v665, 0.0
      %v720 = vadd.f32 %v718, %v719
      %v721 = vsel %vm570, %v666, 0.0
      %v722 = vadd.f32 %v720, %v721
      %v723 = vsel %vm570, %v667, 0.0
      %v724 = vadd.f32 %v722, %v723
      %v725 = vsel %vm570, %v668, 0.0
      %v726 = vadd.f32 %v724, %v725
      %v727 = vsel %vm570, %v669, 0.0
      %v728 = vadd.f32 %v726, %v727
      %v729 = vsel %vm570, %v670, 0.0
      %v730 = vadd.f32 %v728, %v729
      %v731 = vsel %vm570, %v671, 0.0
      %v732 = vadd.f32 %v730, %v731
      %v733 = vsel %vm570, %v672, 0.0
      %v734 = vadd.f32 %v732, %v733
      %v735 = vsel %vm570, %v673, 0.0
      %v736 = vadd.f32 %v734, %v735
      %v737 = vrot.slane %v736, 4
      %v738 = vadd.f32 %v736, %v737
      %v739 = vrot.slane %v738, 2
      %v740 = vadd.f32 %v738, %v739
      %v741 = vrot.slane %v740, 1
      %v742 = vadd.f32 %v740, %v741
      %743 = vst.msk [vmem:[%s202] sm:$0x1] %vm640, %v742
      %p744 = scmp.lt.s32.totalorder %s16, 1
      %s745 = scalar_select %p744, %s16, 1
      %s746 = scalar_lea.vmem %s3, %s745
      %p747 = scmp.lt.s32.totalorder %s16, 1
      %s748 = scalar_select %p747, %s16, 1
      %s749 = scalar_lea.vmem %s4, %s748
      // Predicated region
      $region33: #{single_channel_vgg_forward.2} parent=31 // pred_check
        %p750 = pneg %p102
      $region34: #{single_channel_vgg_forward.2} parent=31 // pred_check_branch
        %752 = sbr.rel (%p750) target = $region36
      $region35: #{single_channel_vgg_forward.2} parent=31 // pred_region
        _
      $region36: #{single_channel_vgg_forward.2} parent=31 // pred_fallthru
        _
      // Predicated region
      $region37: #{single_channel_vgg_forward.2} parent=31 // pred_check
        %p753 = pneg %p128
      $region38: #{single_channel_vgg_forward.2} parent=31 // pred_check_branch
        %755 = sbr.rel (%p753) target = $region40
      $region39: #{single_channel_vgg_forward.2} parent=31 // pred_region
        _
      $region40: #{single_channel_vgg_forward.2} parent=31 // pred_fallthru
        _
    $region32: #{single_channel_vgg_forward.2} parent=5 // pred_fallthru
      _
    %p756 = scmp.le.s32.totalorder 2, %s11
    // Predicated region
    $region41: #{single_channel_vgg_forward.2} parent=5 // pred_check
      %p757 = pneg %p756
    $region42: #{single_channel_vgg_forward.2} parent=5 // pred_check_branch
      %759 = sbr.rel (%p757) target = $region44
    $region43: #{single_channel_vgg_forward.2} parent=5 // pred_region
      %s760 = ssub.s32 %s11, 2
      // Predicated region
      $region45: #{single_channel_vgg_forward.2} parent=43 // pred_check
        %p761 = pneg %p108
      $region46: #{single_channel_vgg_forward.2} parent=43 // pred_check_branch
        %763 = sbr.rel (%p761) target = $region48
      $region47: #{single_channel_vgg_forward.2} parent=43 // pred_region
        %p764 = scmp.lt.s32.totalorder %s17, 1
        %s765 = scalar_select %p764, %s17, 1
        %s766 = scalar_lea.vmem %s3, %s765
      $region48: #{single_channel_vgg_forward.2} parent=43 // pred_fallthru
        _
      // Predicated region
      $region49: #{single_channel_vgg_forward.2} parent=43 // pred_check
        %p767 = pneg %p134
      $region50: #{single_channel_vgg_forward.2} parent=43 // pred_check_branch
        %769 = sbr.rel (%p767) target = $region52
      $region51: #{single_channel_vgg_forward.2} parent=43 // pred_region
        %p770 = scmp.lt.s32.totalorder %s17, 1
        %s771 = scalar_select %p770, %s17, 1
        %s772 = scalar_lea.vmem %s4, %s771
      $region52: #{single_channel_vgg_forward.2} parent=43 // pred_fallthru
        _
    $region44: #{single_channel_vgg_forward.2} parent=5 // pred_fallthru
      _
  $region6: #{single_channel_vgg_forward.2} parent=0 // loop_footer
    %s15 = sadd.s32 1, %s11
  $region7: #{single_channel_vgg_forward.2} parent=0 // loop_footer_branch
    %10 = sbr.rel target = $region3
  $region8: #{single_channel_vgg_forward.2} parent=0 // loop_exit
    _

// kernel: single_channel_vgg_forward.3
$region0: #{single_channel_vgg_forward.3}
  #allocation0 [shape = 'u32[]', space=smem, size = 0x4, offset = 0x4, fixed_abs, tag = 'smem constant byte address 0x4 - core index']
  #allocation1 [shape = 'u32[144,128]{1,0:T(1,128)}', space=vmem, size = 0x12000, scoped, tag = 'internal scratch']
  #allocation2 [shape = 'f32[18,18,64]{2,1,0:T(8,128)}', space=vmem, size = 0x36000, scoped, tag = 'scratch operand']
  #allocation3 [shape = 'f32[10,10,64]{2,1,0:T(8,128)}', space=vmem, size = 0x14000, scoped, tag = 'scratch operand']
  #allocation4 [shape = 'f32[10,10,128]{2,1,0:T(8,128)}', space=vmem, size = 0x14000, scoped, tag = 'scratch operand']
  %s0 = inlined_call_operand.vmem [shape: f32[2,256,9], index: 0, kind: input, shape index: {}]
  %s1 = inlined_call_operand.vmem [shape: f32[9,64], index: 1, kind: input, shape index: {}]
  %s2 = inlined_call_operand.vmem [shape: f32[1,64], index: 2, kind: input, shape index: {}]
  %s3 = inlined_call_operand.vmem [shape: f32[1,64], index: 3, kind: input, shape index: {}]
  %s4 = inlined_call_operand.vmem [shape: f32[1,64], index: 4, kind: input, shape index: {}]
  %s5 = inlined_call_operand.vmem [shape: bf16[3,192,64], index: 5, kind: input, shape index: {}]
  %s6 = inlined_call_operand.vmem [shape: f32[1,64], index: 6, kind: input, shape index: {}]
  %s7 = inlined_call_operand.vmem [shape: bf16[3,192,128], index: 7, kind: input, shape index: {}]
  %s8 = inlined_call_operand.vmem [shape: f32[1,128], index: 8, kind: input, shape index: {}]
  %s9 = inlined_call_operand.vmem [shape: bf16[3,384,128], index: 9, kind: input, shape index: {}]
  %s10 = inlined_call_operand.vmem [shape: f32[1,128], index: 10, kind: input, shape index: {}]
  %s11 = inlined_call_operand.hbm [shape: f32[2,64,128], index: 11, kind: output, shape index: {}]
  %s12 = sld [smem:[#allocation0]]
  $region77: #{single_channel_vgg_forward.3} parent=0
    _
  %s14 = ssub.s32 1, %s12
  %s15 = scalar_select 0, %s14, %s12
  $region1: #{single_channel_vgg_forward.3} parent=0
    #allocation5 [shape = 'u8[65536]{0}', space=vmem, size = 0x10000, scoped, tag = 'output window, operand 0']
    #allocation6 [shape = 's32[2]{0}', space=sflag, size = 0x8, scoped, tag = 'scoped memory for single_channel_vgg_forward.3']
    %16 = vsyncpa [#allocation6], 0
    %s17 = scalar_lea.sflag [#allocation6], 1
    %18 = vsyncpa %s17, 0
    loop: start=0, step=1, limit=4
    $region2: #{single_channel_vgg_forward.3} parent=1 // loop_pre_header
      _
    $region3: #{single_channel_vgg_forward.3} parent=1 // loop_header
      %s20 = sphi 0, %s24
      %p21 = scmp.ge.s32.totalorder %s20, 4
      %s30 = sphi 0, %s32
      %s33 = sphi 0, %s30
      %s34 = sphi 0, %s33
      %s50 = sphi 0, %s34
      %s54 = sphi 0, %s54
      %s56 = sphi 0, %s54
      %s57 = sphi 0, %s56
      %s71 = sphi 0, %s57
      %s75 = sphi 0, %s75
      %s77 = sphi 0, %s75
      %s78 = sphi 0, %s77
      %s92 = sphi 0, %s78
      %s96 = sphi 0, %s96
      %s98 = sphi 0, %s96
      %s99 = sphi 0, %s98
      %s113 = sphi 0, %s99
      %s117 = sphi 0, %s117
      %s119 = sphi 0, %s117
      %s120 = sphi 0, %s119
      %s134 = sphi 0, %s120
      %s138 = sphi 0, %s138
      %s140 = sphi 0, %s138
      %s141 = sphi 0, %s140
      %s155 = sphi 0, %s141
      %s159 = sphi 0, %s159
      %s161 = sphi 0, %s159
      %s162 = sphi 0, %s161
      %s176 = sphi 0, %s162
      %s180 = sphi 0, %s180
      %s182 = sphi 0, %s180
      %s183 = sphi 0, %s182
      %s197 = sphi 0, %s183
      %s201 = sphi 0, %s201
      %s203 = sphi 0, %s201
      %s204 = sphi 0, %s203
      %s218 = sphi 0, %s204
      %s222 = sphi 0, %s222
      %s224 = sphi 0, %s222
      %s225 = sphi 0, %s224
      %s239 = sphi 0, %s225
      %s243 = sphi 0, %s243
      %s245 = sphi 0, %s243
      %s246 = sphi 0, %s245
      %s260 = sphi 0, %s246
      %s266 = sphi 0, %s268
      %s269 = sphi 0, %s266
      %s270 = sphi 0, %s269
      %s286 = sphi 0, %s270
    $region4: #{single_channel_vgg_forward.3} parent=1 // loop_header_branch
      %23 = sbr.rel (%p21) target = $region8
    $region5: #{single_channel_vgg_forward.3} parent=1 // loop_body
      %s25 = ssub.s32 %s20, 1
      %s26 = ssub.s32 %s20, 2
      %s27 = sadd.s32 %s20, 1
      %s28 = ssub.s32 %s20, %s27
      %p29 = scmp.eq.s32.totalorder %s28, 0
      %s31 = sadd.s32 %s30, 1
      %s32 = scalar_select %p29, %s30, %s31
      %p35 = pneg %p29
      %p36 = scmp.eq.s32.totalorder %s20, 1
      %p37 = por %p35, %p36
      %p38 = scmp.ne.s32.totalorder %s30, %s33
      %p39 = scmp.eq.s32.totalorder %s20, 0
      %p40 = por %p38, %p39
      %p41 = scmp.ne.s32.totalorder %s30, %s33
      %p42 = scmp.eq.s32.totalorder %s25, 1
      %p43 = por %p41, %p42
      %p44 = scmp.ne.s32.totalorder %s33, %s34
      %p45 = scmp.eq.s32.totalorder %s25, 0
      %p46 = por %p44, %p45
      %p47 = scmp.ne.s32.totalorder %s33, %s34
      %p48 = scmp.eq.s32.totalorder %s26, 1
      %p49 = por %p47, %p48
      %p51 = scmp.ne.s32.totalorder %s34, %s50
      %p52 = scmp.eq.s32.totalorder %s26, 0
      %p53 = por %p51, %p52
      %s55 = sadd.s32 %s54, 1
      %p58 = scmp.eq.s32.totalorder %s20, 1
      %p59 = scmp.ne.s32.totalorder %s54, %s56
      %p60 = scmp.eq.s32.totalorder %s20, 0
      %p61 = por %p59, %p60
      %p62 = scmp.ne.s32.totalorder %s54, %s56
      %p63 = scmp.eq.s32.totalorder %s25, 1
      %p64 = por %p62, %p63
      %p65 = scmp.ne.s32.totalorder %s56, %s57
      %p66 = scmp.eq.s32.totalorder %s25, 0
      %p67 = por %p65, %p66
      %p68 = scmp.ne.s32.totalorder %s56, %s57
      %p69 = scmp.eq.s32.totalorder %s26, 1
      %p70 = por %p68, %p69
      %p72 = scmp.ne.s32.totalorder %s57, %s71
      %p73 = scmp.eq.s32.totalorder %s26, 0
      %p74 = por %p72, %p73
      %s76 = sadd.s32 %s75, 1
      %p79 = scmp.eq.s32.totalorder %s20, 1
      %p80 = scmp.ne.s32.totalorder %s75, %s77
      %p81 = scmp.eq.s32.totalorder %s20, 0
      %p82 = por %p80, %p81
      %p83 = scmp.ne.s32.totalorder %s75, %s77
      %p84 = scmp.eq.s32.totalorder %s25, 1
      %p85 = por %p83, %p84
      %p86 = scmp.ne.s32.totalorder %s77, %s78
      %p87 = scmp.eq.s32.totalorder %s25, 0
      %p88 = por %p86, %p87
      %p89 = scmp.ne.s32.totalorder %s77, %s78
      %p90 = scmp.eq.s32.totalorder %s26, 1
      %p91 = por %p89, %p90
      %p93 = scmp.ne.s32.totalorder %s78, %s92
      %p94 = scmp.eq.s32.totalorder %s26, 0
      %p95 = por %p93, %p94
      %s97 = sadd.s32 %s96, 1
      %p100 = scmp.eq.s32.totalorder %s20, 1
      %p101 = scmp.ne.s32.totalorder %s96, %s98
      %p102 = scmp.eq.s32.totalorder %s20, 0
      %p103 = por %p101, %p102
      %p104 = scmp.ne.s32.totalorder %s96, %s98
      %p105 = scmp.eq.s32.totalorder %s25, 1
      %p106 = por %p104, %p105
      %p107 = scmp.ne.s32.totalorder %s98, %s99
      %p108 = scmp.eq.s32.totalorder %s25, 0
      %p109 = por %p107, %p108
      %p110 = scmp.ne.s32.totalorder %s98, %s99
      %p111 = scmp.eq.s32.totalorder %s26, 1
      %p112 = por %p110, %p111
      %p114 = scmp.ne.s32.totalorder %s99, %s113
      %p115 = scmp.eq.s32.totalorder %s26, 0
      %p116 = por %p114, %p115
      %s118 = sadd.s32 %s117, 1
      %p121 = scmp.eq.s32.totalorder %s20, 1
      %p122 = scmp.ne.s32.totalorder %s117, %s119
      %p123 = scmp.eq.s32.totalorder %s20, 0
      %p124 = por %p122, %p123
      %p125 = scmp.ne.s32.totalorder %s117, %s119
      %p126 = scmp.eq.s32.totalorder %s25, 1
      %p127 = por %p125, %p126
      %p128 = scmp.ne.s32.totalorder %s119, %s120
      %p129 = scmp.eq.s32.totalorder %s25, 0
      %p130 = por %p128, %p129
      %p131 = scmp.ne.s32.totalorder %s119, %s120
      %p132 = scmp.eq.s32.totalorder %s26, 1
      %p133 = por %p131, %p132
      %p135 = scmp.ne.s32.totalorder %s120, %s134
      %p136 = scmp.eq.s32.totalorder %s26, 0
      %p137 = por %p135, %p136
      %s139 = sadd.s32 %s138, 1
      %p142 = scmp.eq.s32.totalorder %s20, 1
      %p143 = scmp.ne.s32.totalorder %s138, %s140
      %p144 = scmp.eq.s32.totalorder %s20, 0
      %p145 = por %p143, %p144
      %p146 = scmp.ne.s32.totalorder %s138, %s140
      %p147 = scmp.eq.s32.totalorder %s25, 1
      %p148 = por %p146, %p147
      %p149 = scmp.ne.s32.totalorder %s140, %s141
      %p150 = scmp.eq.s32.totalorder %s25, 0
      %p151 = por %p149, %p150
      %p152 = scmp.ne.s32.totalorder %s140, %s141
      %p153 = scmp.eq.s32.totalorder %s26, 1
      %p154 = por %p152, %p153
      %p156 = scmp.ne.s32.totalorder %s141, %s155
      %p157 = scmp.eq.s32.totalorder %s26, 0
      %p158 = por %p156, %p157
      %s160 = sadd.s32 %s159, 1
      %p163 = scmp.eq.s32.totalorder %s20, 1
      %p164 = scmp.ne.s32.totalorder %s159, %s161
      %p165 = scmp.eq.s32.totalorder %s20, 0
      %p166 = por %p164, %p165
      %p167 = scmp.ne.s32.totalorder %s159, %s161
      %p168 = scmp.eq.s32.totalorder %s25, 1
      %p169 = por %p167, %p168
      %p170 = scmp.ne.s32.totalorder %s161, %s162
      %p171 = scmp.eq.s32.totalorder %s25, 0
      %p172 = por %p170, %p171
      %p173 = scmp.ne.s32.totalorder %s161, %s162
      %p174 = scmp.eq.s32.totalorder %s26, 1
      %p175 = por %p173, %p174
      %p177 = scmp.ne.s32.totalorder %s162, %s176
      %p178 = scmp.eq.s32.totalorder %s26, 0
      %p179 = por %p177, %p178
      %s181 = sadd.s32 %s180, 1
      %p184 = scmp.eq.s32.totalorder %s20, 1
      %p185 = scmp.ne.s32.totalorder %s180, %s182
      %p186 = scmp.eq.s32.totalorder %s20, 0
      %p187 = por %p185, %p186
      %p188 = scmp.ne.s32.totalorder %s180, %s182
      %p189 = scmp.eq.s32.totalorder %s25, 1
      %p190 = por %p188, %p189
      %p191 = scmp.ne.s32.totalorder %s182, %s183
      %p192 = scmp.eq.s32.totalorder %s25, 0
      %p193 = por %p191, %p192
      %p194 = scmp.ne.s32.totalorder %s182, %s183
      %p195 = scmp.eq.s32.totalorder %s26, 1
      %p196 = por %p194, %p195
      %p198 = scmp.ne.s32.totalorder %s183, %s197
      %p199 = scmp.eq.s32.totalorder %s26, 0
      %p200 = por %p198, %p199
      %s202 = sadd.s32 %s201, 1
      %p205 = scmp.eq.s32.totalorder %s20, 1
      %p206 = scmp.ne.s32.totalorder %s201, %s203
      %p207 = scmp.eq.s32.totalorder %s20, 0
      %p208 = por %p206, %p207
      %p209 = scmp.ne.s32.totalorder %s201, %s203
      %p210 = scmp.eq.s32.totalorder %s25, 1
      %p211 = por %p209, %p210
      %p212 = scmp.ne.s32.totalorder %s203, %s204
      %p213 = scmp.eq.s32.totalorder %s25, 0
      %p214 = por %p212, %p213
      %p215 = scmp.ne.s32.totalorder %s203, %s204
      %p216 = scmp.eq.s32.totalorder %s26, 1
      %p217 = por %p215, %p216
      %p219 = scmp.ne.s32.totalorder %s204, %s218
      %p220 = scmp.eq.s32.totalorder %s26, 0
      %p221 = por %p219, %p220
      %s223 = sadd.s32 %s222, 1
      %p226 = scmp.eq.s32.totalorder %s20, 1
      %p227 = scmp.ne.s32.totalorder %s222, %s224
      %p228 = scmp.eq.s32.totalorder %s20, 0
      %p229 = por %p227, %p228
      %p230 = scmp.ne.s32.totalorder %s222, %s224
      %p231 = scmp.eq.s32.totalorder %s25, 1
      %p232 = por %p230, %p231
      %p233 = scmp.ne.s32.totalorder %s224, %s225
      %p234 = scmp.eq.s32.totalorder %s25, 0
      %p235 = por %p233, %p234
      %p236 = scmp.ne.s32.totalorder %s224, %s225
      %p237 = scmp.eq.s32.totalorder %s26, 1
      %p238 = por %p236, %p237
      %p240 = scmp.ne.s32.totalorder %s225, %s239
      %p241 = scmp.eq.s32.totalorder %s26, 0
      %p242 = por %p240, %p241
      %s244 = sadd.s32 %s243, 1
      %p247 = scmp.eq.s32.totalorder %s20, 1
      %p248 = scmp.ne.s32.totalorder %s243, %s245
      %p249 = scmp.eq.s32.totalorder %s20, 0
      %p250 = por %p248, %p249
      %p251 = scmp.ne.s32.totalorder %s243, %s245
      %p252 = scmp.eq.s32.totalorder %s25, 1
      %p253 = por %p251, %p252
      %p254 = scmp.ne.s32.totalorder %s245, %s246
      %p255 = scmp.eq.s32.totalorder %s25, 0
      %p256 = por %p254, %p255
      %p257 = scmp.ne.s32.totalorder %s245, %s246
      %p258 = scmp.eq.s32.totalorder %s26, 1
      %p259 = por %p257, %p258
      %p261 = scmp.ne.s32.totalorder %s246, %s260
      %p262 = scmp.eq.s32.totalorder %s26, 0
      %p263 = por %p261, %p262
      %s264 = ssub.s32 %s20, %s27
      %p265 = scmp.eq.s32.totalorder %s264, 0
      %s267 = sadd.s32 %s266, 1
      %s268 = scalar_select %p265, %s266, %s267
      %p271 = pneg %p265
      %p272 = scmp.eq.s32.totalorder %s20, 1
      %p273 = por %p271, %p272
      %p274 = scmp.ne.s32.totalorder %s266, %s269
      %p275 = scmp.eq.s32.totalorder %s20, 0
      %p276 = por %p274, %p275
      %p277 = scmp.ne.s32.totalorder %s266, %s269
      %p278 = scmp.eq.s32.totalorder %s25, 1
      %p279 = por %p277, %p278
      %p280 = scmp.ne.s32.totalorder %s269, %s270
      %p281 = scmp.eq.s32.totalorder %s25, 0
      %p282 = por %p280, %p281
      %p283 = scmp.ne.s32.totalorder %s269, %s270
      %p284 = scmp.eq.s32.totalorder %s26, 1
      %p285 = por %p283, %p284
      %p287 = scmp.ne.s32.totalorder %s270, %s286
      %p288 = scmp.eq.s32.totalorder %s26, 0
      %p289 = por %p287, %p288
      %p290 = scmp.le.s32.totalorder 1, %s20
      %p291 = scmp.lt.s32.totalorder %s20, 3
      %p292 = pnand %p290, %p291
      %p293 = pneg %p292
      // Predicated region
      $region9: #{single_channel_vgg_forward.3} parent=5 // pred_check
        _
      $region10: #{single_channel_vgg_forward.3} parent=5 // pred_check_branch
        %295 = sbr.rel (%p292) target = $region12
      $region11: #{single_channel_vgg_forward.3} parent=5 // pred_region
        %s296 = ssub.s32 %s20, 1
        // Predicated region
        $region13: #{single_channel_vgg_forward.3} parent=11 // pred_check
          %p297 = pneg %p67
        $region14: #{single_channel_vgg_forward.3} parent=11 // pred_check_branch
          %299 = sbr.rel (%p297) target = $region16
        $region15: #{single_channel_vgg_forward.3} parent=11 // pred_region
          _
        $region16: #{single_channel_vgg_forward.3} parent=11 // pred_fallthru
          _
        // Predicated region
        $region17: #{single_channel_vgg_forward.3} parent=11 // pred_check
          %p300 = pneg %p88
        $region18: #{single_channel_vgg_forward.3} parent=11 // pred_check_branch
          %302 = sbr.rel (%p300) target = $region20
        $region19: #{single_channel_vgg_forward.3} parent=11 // pred_region
          _
        $region20: #{single_channel_vgg_forward.3} parent=11 // pred_fallthru
          _
        // Predicated region
        $region21: #{single_channel_vgg_forward.3} parent=11 // pred_check
          %p303 = pneg %p109
        $region22: #{single_channel_vgg_forward.3} parent=11 // pred_check_branch
          %305 = sbr.rel (%p303) target = $region24
        $region23: #{single_channel_vgg_forward.3} parent=11 // pred_region
          _
        $region24: #{single_channel_vgg_forward.3} parent=11 // pred_fallthru
          _
        // Predicated region
        $region25: #{single_channel_vgg_forward.3} parent=11 // pred_check
          %p306 = pneg %p130
        $region26: #{single_channel_vgg_forward.3} parent=11 // pred_check_branch
          %308 = sbr.rel (%p306) target = $region28
        $region27: #{single_channel_vgg_forward.3} parent=11 // pred_region
          _
        $region28: #{single_channel_vgg_forward.3} parent=11 // pred_fallthru
          _
        // Predicated region
        $region29: #{single_channel_vgg_forward.3} parent=11 // pred_check
          %p309 = pneg %p151
        $region30: #{single_channel_vgg_forward.3} parent=11 // pred_check_branch
          %311 = sbr.rel (%p309) target = $region32
        $region31: #{single_channel_vgg_forward.3} parent=11 // pred_region
          _
        $region32: #{single_channel_vgg_forward.3} parent=11 // pred_fallthru
          _
        // Predicated region
        $region33: #{single_channel_vgg_forward.3} parent=11 // pred_check
          %p312 = pneg %p172
        $region34: #{single_channel_vgg_forward.3} parent=11 // pred_check_branch
          %314 = sbr.rel (%p312) target = $region36
        $region35: #{single_channel_vgg_forward.3} parent=11 // pred_region
          _
        $region36: #{single_channel_vgg_forward.3} parent=11 // pred_fallthru
          _
        // Predicated region
        $region37: #{single_channel_vgg_forward.3} parent=11 // pred_check
          %p315 = pneg %p193
        $region38: #{single_channel_vgg_forward.3} parent=11 // pred_check_branch
          %317 = sbr.rel (%p315) target = $region40
        $region39: #{single_channel_vgg_forward.3} parent=11 // pred_region
          _
        $region40: #{single_channel_vgg_forward.3} parent=11 // pred_fallthru
          _
        // Predicated region
        $region41: #{single_channel_vgg_forward.3} parent=11 // pred_check
          %p318 = pneg %p214
        $region42: #{single_channel_vgg_forward.3} parent=11 // pred_check_branch
          %320 = sbr.rel (%p318) target = $region44
        $region43: #{single_channel_vgg_forward.3} parent=11 // pred_region
          _
        $region44: #{single_channel_vgg_forward.3} parent=11 // pred_fallthru
          _
        // Predicated region
        $region45: #{single_channel_vgg_forward.3} parent=11 // pred_check
          %p321 = pneg %p235
        $region46: #{single_channel_vgg_forward.3} parent=11 // pred_check_branch
          %323 = sbr.rel (%p321) target = $region48
        $region47: #{single_channel_vgg_forward.3} parent=11 // pred_region
          _
        $region48: #{single_channel_vgg_forward.3} parent=11 // pred_fallthru
          _
        // Predicated region
        $region49: #{single_channel_vgg_forward.3} parent=11 // pred_check
          %p324 = pneg %p256
        $region50: #{single_channel_vgg_forward.3} parent=11 // pred_check_branch
          %326 = sbr.rel (%p324) target = $region52
        $region51: #{single_channel_vgg_forward.3} parent=11 // pred_region
          _
        $region52: #{single_channel_vgg_forward.3} parent=11 // pred_fallthru
          _
      $region12: #{single_channel_vgg_forward.3} parent=5 // pred_fallthru
        _
      %p327 = scmp.lt.s32.totalorder %s20, 2
      // Predicated region
      $region53: #{single_channel_vgg_forward.3} parent=5 // pred_check
        %p328 = pneg %p327
      $region54: #{single_channel_vgg_forward.3} parent=5 // pred_check_branch
        %330 = sbr.rel (%p328) target = $region56
      $region55: #{single_channel_vgg_forward.3} parent=5 // pred_region
        // Predicated region
        $region57: #{single_channel_vgg_forward.3} parent=55 // pred_check
          %p331 = pneg %p40
        $region58: #{single_channel_vgg_forward.3} parent=55 // pred_check_branch
          %333 = sbr.rel (%p331) target = $region60
        $region59: #{single_channel_vgg_forward.3} parent=55 // pred_region
          %p334 = scmp.lt.s32.totalorder %s20, 1
          %s335 = scalar_select %p334, %s20, 1
          %s336 = smul.addr %s335, 32
          %s337 = smul.addr %s336, 8
          %s338 = scalar_lea.vmem %s0, %s337
        $region60: #{single_channel_vgg_forward.3} parent=55 // pred_fallthru
          _
      $region56: #{single_channel_vgg_forward.3} parent=5 // pred_fallthru
        _
      %p339 = scmp.le.s32.totalorder 1, %s20
      %p340 = scmp.lt.s32.totalorder %s20, 3
      %p341 = pnand %p339, %p340
      %p342 = pneg %p341
      // Predicated region
      $region61: #{single_channel_vgg_forward.3} parent=5 // pred_check
        _
      $region62: #{single_channel_vgg_forward.3} parent=5 // pred_check_branch
        %344 = sbr.rel (%p341) target = $region64
      $region63: #{single_channel_vgg_forward.3} parent=5 // pred_region
        %s345 = ssub.s32 %s20, 1
        %p346 = scmp.lt.s32.totalorder %s25, 1
        %s347 = scalar_select %p346, %s25, 1
        %s348 = smul.addr %s347, 32
        %s349 = smul.addr %s348, 8
        %s350 = scalar_lea.vmem %s0, %s349
        %p351 = pneg %p46
        %p352 = pneg %p43
        %p353 = pneg %p67
        %p354 = pneg %p64
        %p355 = pneg %p88
        %p356 = pneg %p85
        %p357 = pneg %p109
        %p358 = pneg %p106
        %p359 = pneg %p130
        %p360 = pneg %p127
        %p361 = pneg %p151
        %p362 = pneg %p148
        %p363 = pneg %p172
        %p364 = pneg %p169
        %p365 = pneg %p193
        %p366 = pneg %p190
        %p367 = pneg %p214
        %p368 = pneg %p211
        %p369 = pneg %p235
        %p370 = pneg %p232
        %p371 = pneg %p256
        %p372 = pneg %p253
        %p373 = pneg %p282
        %p374 = pneg %p279
        %s375 = sand.u32 %s269, 1
        %s376 = scalar_lea.sflag [#allocation6], %s375
        %s377 = sand.u32 %s269, 1
        %s378 = smul.addr %s377, 64
        %s379 = scalar_lea.vmem [#allocation5], %s378
        %p380 = scmp.lt.s32.totalorder %s25, 1
        %s381 = scalar_select %p380, %s25, 1
        %s382 = smul.addr %s381, 32
        %s383 = smul.addr %s382, 8
        %s384 = scalar_lea.vmem %s0, %s383
        %v386 = vld [vmem:[%s384] sm:$0xff]
        %v387 = vld [vmem:[%s384 + $0x8] sm:$0xff]
        %v388 = vld [vmem:[%s384 + $0x10] sm:$0xff]
        %v389 = vld [vmem:[%s384 + $0x18] sm:$0xff]
        %v390 = vld [vmem:[%s384 + $0x20] sm:$0xff]
        %v391 = vld [vmem:[%s384 + $0x28] sm:$0xff]
        %v392 = vld [vmem:[%s384 + $0x30] sm:$0xff]
        %v393 = vld [vmem:[%s384 + $0x38] sm:$0xff]
        %v394 = vld [vmem:[%s384 + $0x40] sm:$0xff]
        %v395 = vld [vmem:[%s384 + $0x48] sm:$0xff]
        %v396 = vld [vmem:[%s384 + $0x50] sm:$0xff]
        %v397 = vld [vmem:[%s384 + $0x58] sm:$0xff]
        %v398 = vld [vmem:[%s384 + $0x60] sm:$0xff]
        %v399 = vld [vmem:[%s384 + $0x68] sm:$0xff]
        %v400 = vld [vmem:[%s384 + $0x70] sm:$0xff]
        %v401 = vld [vmem:[%s384 + $0x78] sm:$0xff]
        %v402 = vld [vmem:[%s384 + $0x80] sm:$0xff]
        %v403 = vld [vmem:[%s384 + $0x88] sm:$0xff]
        %v404 = vld [vmem:[%s384 + $0x90] sm:$0xff]
        %v405 = vld [vmem:[%s384 + $0x98] sm:$0xff]
        %v406 = vld [vmem:[%s384 + $0xa0] sm:$0xff]
        %v407 = vld [vmem:[%s384 + $0xa8] sm:$0xff]
        %v408 = vld [vmem:[%s384 + $0xb0] sm:$0xff]
        %v409 = vld [vmem:[%s384 + $0xb8] sm:$0xff]
        %v410 = vld [vmem:[%s384 + $0xc0] sm:$0xff]
        %v411 = vld [vmem:[%s384 + $0xc8] sm:$0xff]
        %v412 = vld [vmem:[%s384 + $0xd0] sm:$0xff]
        %v413 = vld [vmem:[%s384 + $0xd8] sm:$0xff]
        %v414 = vld [vmem:[%s384 + $0xe0] sm:$0xff]
        %v415 = vld [vmem:[%s384 + $0xe8] sm:$0xff]
        %v416 = vld [vmem:[%s384 + $0xf0] sm:$0xff]
        %v417 = vld [vmem:[%s384 + $0xf8] sm:$0xff]
        %v418 = vld [vmem:[%s1] sm:$0xff]
        %v419 = vld [vmem:[%s1 + $0x8] sm:$0x1]
        %v420 = vld [vmem:[%s2] sm:$0x1]
        %v422 = vlaneseq
        %v423 = vshrl.u32 %v422, 7
        %v424 = vsub.s32 0, %v423
        %v425 = vrot.slane %v420, %v424
        %vm427 = vcmask 72704
        %v429 = vsel %vm427, %v386, 0
        %v432 = vsel %vm427, %v387, 0
        %v435 = vsel %vm427, %v388, 0
        %v438 = vsel %vm427, %v389, 0
        %v441 = vsel %vm427, %v390, 0
        %v444 = vsel %vm427, %v391, 0
        %v447 = vsel %vm427, %v392, 0
        %v450 = vsel %vm427, %v393, 0
        %v453 = vsel %vm427, %v394, 0
        %v456 = vsel %vm427, %v395, 0
        %v459 = vsel %vm427, %v396, 0
        %v462 = vsel %vm427, %v397, 0
        %v465 = vsel %vm427, %v398, 0
        %v468 = vsel %vm427, %v399, 0
        %v471 = vsel %vm427, %v400, 0
        %v474 = vsel %vm427, %v401, 0
        %v477 = vsel %vm427, %v402, 0
        %v480 = vsel %vm427, %v403, 0
        %v483 = vsel %vm427, %v404, 0
        %v486 = vsel %vm427, %v405, 0
        %v489 = vsel %vm427, %v406, 0
        %v492 = vsel %vm427, %v407, 0
        %v495 = vsel %vm427, %v408, 0
        %v498 = vsel %vm427, %v409, 0
        %v501 = vsel %vm427, %v410, 0
        %v504 = vsel %vm427, %v411, 0
        %v507 = vsel %vm427, %v412, 0
        %v510 = vsel %vm427, %v413, 0
        %v513 = vsel %vm427, %v414, 0
        %v516 = vsel %vm427, %v415, 0
        %v519 = vsel %vm427, %v416, 0
        %v522 = vsel %vm427, %v417, 0
        %vm524 = vcmask 1040384
        %v526 = vsel %vm524, %v419, 0
        %528 = vmatprep.subr.mxu0 0.0
        %529 = vmatpush1.msra.mxu0 0.0
        %530 = vmatprep.subr.mxu0 0.0
        %531 = vmatpush1.msra.mxu0 0.0
        %532 = vmatprep.subr.mxu0 0.0
        %533 = vmatpush1.msra.mxu0 0.0
        %534 = vmatprep.subr.mxu0 0.0
        %535 = vmatpush1.msra.mxu0 0.0
        %536 = vmatprep.subr.mxu0 0.0
        %537 = vmatpush1.msra.mxu0 0.0
        %538 = vmatprep.subr.mxu0 0.0
        %539 = vmatpush1.msra.mxu0 0.0
        %540 = vmatprep.subr.mxu0 0.0
        %541 = vmatpush1.msra.mxu0 0.0
        %542 = vmatprep.subr.mxu0 0.0
        %543 = vmatpush1.msra.mxu0 0.0
        %544 = vmatprep.subr.mxu0 0.0
        %545 = vmatpush1.msra.mxu0 0.0
        %546 = vmatprep.subr.mxu0 0.0
        %547 = vmatpush1.msra.mxu0 0.0
        %548 = vmatprep.subr.mxu0 0.0
        %549 = vmatpush1.msra.mxu0 0.0
        %550 = vmatprep.subr.mxu0 0.0
        %551 = vmatpush1.msra.mxu0 0.0
        %552 = vmatprep.subr.mxu0 0.0
        %553 = vmatpush1.msra.mxu0 0.0
        %554 = vmatprep.subr.mxu0 0.0
        %555 = vmatpush1.msra.mxu0 0.0
        %556 = vmatprep.subr.mxu0 0.0
        %557 = vmatpush1.msra.mxu0 %v526
        %558 = vmatprep.subr.mxu0 0.0
        %559 = vmatpush1.msra.mxu0 %v418
        %560 = vmatprep.subr.mxu0 0.0
        %561 = vmatpush2.msra.mxu0 0.0
        %562 = vmatprep.subr.mxu0 0.0
        %563 = vmatpush2.msra.mxu0 0.0
        %564 = vmatprep.subr.mxu0 0.0
        %565 = vmatpush2.msra.mxu0 0.0
        %566 = vmatprep.subr.mxu0 0.0
        %567 = vmatpush2.msra.mxu0 0.0
        %568 = vmatprep.subr.mxu0 0.0
        %569 = vmatpush2.msra.mxu0 0.0
        %570 = vmatprep.subr.mxu0 0.0
        %571 = vmatpush2.msra.mxu0 0.0
        %572 = vmatprep.subr.mxu0 0.0
        %573 = vmatpush2.msra.mxu0 0.0
        %574 = vmatprep.subr.mxu0 0.0
        %575 = vmatpush2.msra.mxu0 0.0
        %576 = vmatprep.subr.mxu0 0.0
        %577 = vmatpush2.msra.mxu0 0.0
        %578 = vmatprep.subr.mxu0 0.0
        %579 = vmatpush2.msra.mxu0 0.0
        %580 = vmatprep.subr.mxu0 0.0
        %581 = vmatpush2.msra.mxu0 0.0
        %582 = vmatprep.subr.mxu0 0.0
        %583 = vmatpush2.msra.mxu0 0.0
        %584 = vmatprep.subr.mxu0 0.0
        %585 = vmatpush2.msra.mxu0 0.0
        %586 = vmatprep.subr.mxu0 0.0
        %587 = vmatpush2.msra.mxu0 0.0
        %588 = vmatprep.subr.mxu0 0.0
        %589 = vmatpush2.msra.mxu0 0.0
        %590 = vmatprep.subr.mxu0 0.0
        %591 = vmatpush2.msra.mxu0 0.0
        %592 = vmatprep.mubr.f32.mxu0 0.0
        %593 = vmatmul.mubr.f32.gmra.mxu0 %v429
        %v594 = vpop.f32.mrf.mxu0
        %v595 = vadd.f32 %v425, %v594
        %v596 = vpop.f32.mrf.mxu0
        %597 = vmatprep.mubr.f32.mxu0 0.0
        %598 = vmatmul.mubr.f32.gmra.mxu0 %v432
        %v599 = vpop.f32.mrf.mxu0
        %v600 = vadd.f32 %v425, %v599
        %v601 = vpop.f32.mrf.mxu0
        %602 = vmatprep.mubr.f32.mxu0 0.0
        %603 = vmatmul.mubr.f32.gmra.mxu0 %v435
        %v604 = vpop.f32.mrf.mxu0
        %v605 = vadd.f32 %v425, %v604
        %v606 = vpop.f32.mrf.mxu0
        %607 = vmatprep.mubr.f32.mxu0 0.0
        %608 = vmatmul.mubr.f32.gmra.mxu0 %v438
        %v609 = vpop.f32.mrf.mxu0
        %v610 = vadd.f32 %v425, %v609
        %v611 = vpop.f32.mrf.mxu0
        %612 = vmatprep.mubr.f32.mxu0 0.0
        %613 = vmatmul.mubr.f32.gmra.mxu0 %v441
        %v614 = vpop.f32.mrf.mxu0
        %v615 = vadd.f32 %v425, %v614
        %v616 = vpop.f32.mrf.mxu0
        %617 = vmatprep.mubr.f32.mxu0 0.0
        %618 = vmatmul.mubr.f32.gmra.mxu0 %v444
        %v619 = vpop.f32.mrf.mxu0
        %v620 = vadd.f32 %v425, %v619
        %v621 = vpop.f32.mrf.mxu0
        %622 = vmatprep.mubr.f32.mxu0 0.0
        %623 = vmatmul.mubr.f32.gmra.mxu0 %v447
        %v624 = vpop.f32.mrf.mxu0
        %v625 = vadd.f32 %v425, %v624
        %v626 = vpop.f32.mrf.mxu0
        %627 = vmatprep.mubr.f32.mxu0 0.0
        %628 = vmatmul.mubr.f32.gmra.mxu0 %v450
        %v629 = vpop.f32.mrf.mxu0
        %v630 = vadd.f32 %v425, %v629
        %v631 = vpop.f32.mrf.mxu0
        %632 = vmatprep.mubr.f32.mxu0 0.0
        %633 = vmatmul.mubr.f32.gmra.mxu0 %v453
        %v634 = vpop.f32.mrf.mxu0
        %v635 = vadd.f32 %v425, %v634
        %v636 = vpop.f32.mrf.mxu0
        %637 = vmatprep.mubr.f32.mxu0 0.0
        %638 = vmatmul.mubr.f32.gmra.mxu0 %v456
        %v639 = vpop.f32.mrf.mxu0
        %v640 = vadd.f32 %v425, %v639
        %v641 = vpop.f32.mrf.mxu0
        %642 = vmatprep.mubr.f32.mxu0 0.0
        %643 = vmatmul.mubr.f32.gmra.mxu0 %v459
        %v644 = vpop.f32.mrf.mxu0
        %v645 = vadd.f32 %v425, %v644
        %v646 = vpop.f32.mrf.mxu0
        %647 = vmatprep.mubr.f32.mxu0 0.0
        %648 = vmatmul.mubr.f32.gmra.mxu0 %v462
        %v649 = vpop.f32.mrf.mxu0
        %v650 = vadd.f32 %v425, %v649
        %v651 = vpop.f32.mrf.mxu0
        %652 = vmatprep.mubr.f32.mxu0 0.0
        %653 = vmatmul.mubr.f32.gmra.mxu0 %v465
        %v654 = vpop.f32.mrf.mxu0
        %v655 = vadd.f32 %v425, %v654
        %v656 = vpop.f32.mrf.mxu0
        %657 = vmatprep.mubr.f32.mxu0 0.0
        %658 = vmatmul.mubr.f32.gmra.mxu0 %v468
        %v659 = vpop.f32.mrf.mxu0
        %v660 = vadd.f32 %v425, %v659
        %v661 = vpop.f32.mrf.mxu0
        %662 = vmatprep.mubr.f32.mxu0 0.0
        %663 = vmatmul.mubr.f32.gmra.mxu0 %v471
        %v664 = vpop.f32.mrf.mxu0
        %v665 = vadd.f32 %v425, %v664
        %v666 = vpop.f32.mrf.mxu0
        %667 = vmatprep.mubr.f32.mxu0 0.0
        %668 = vmatmul.mubr.f32.gmra.mxu0 %v474
        %v669 = vpop.f32.mrf.mxu0
        %v670 = vadd.f32 %v425, %v669
        %v671 = vpop.f32.mrf.mxu0
        %672 = vmatprep.mubr.f32.mxu0 0.0
        %673 = vmatmul.mubr.f32.gmra.mxu0 %v477
        %v674 = vpop.f32.mrf.mxu0
        %v675 = vadd.f32 %v425, %v674
        %v676 = vpop.f32.mrf.mxu0
        %677 = vmatprep.mubr.f32.mxu0 0.0
        %678 = vmatmul.mubr.f32.gmra.mxu0 %v480
        %v679 = vpop.f32.mrf.mxu0
        %v680 = vadd.f32 %v425, %v679
        %v681 = vpop.f32.mrf.mxu0
        %682 = vmatprep.mubr.f32.mxu0 0.0
        %683 = vmatmul.mubr.f32.gmra.mxu0 %v483
        %v684 = vpop.f32.mrf.mxu0
        %v685 = vadd.f32 %v425, %v684
        %v686 = vpop.f32.mrf.mxu0
        %687 = vmatprep.mubr.f32.mxu0 0.0
        %688 = vmatmul.mubr.f32.gmra.mxu0 %v486
        %v689 = vpop.f32.mrf.mxu0
        %v690 = vadd.f32 %v425, %v689
        %v691 = vpop.f32.mrf.mxu0
        %692 = vmatprep.mubr.f32.mxu0 0.0
        %693 = vmatmul.mubr.f32.gmra.mxu0 %v489
        %v694 = vpop.f32.mrf.mxu0
        %v695 = vadd.f32 %v425, %v694
        %v696 = vpop.f32.mrf.mxu0
        %697 = vmatprep.mubr.f32.mxu0 0.0
        %698 = vmatmul.mubr.f32.gmra.mxu0 %v492
        %v699 = vpop.f32.mrf.mxu0
        %v700 = vadd.f32 %v425, %v699
        %v701 = vpop.f32.mrf.mxu0
        %702 = vmatprep.mubr.f32.mxu0 0.0
        %703 = vmatmul.mubr.f32.gmra.mxu0 %v495
        %v704 = vpop.f32.mrf.mxu0
        %v705 = vadd.f32 %v425, %v704
        %v706 = vpop.f32.mrf.mxu0
        %707 = vmatprep.mubr.f32.mxu0 0.0
        %708 = vmatmul.mubr.f32.gmra.mxu0 %v498
        %v709 = vpop.f32.mrf.mxu0
        %v710 = vadd.f32 %v425, %v709
        %v711 = vpop.f32.mrf.mxu0
        %712 = vmatprep.mubr.f32.mxu0 0.0
        %713 = vmatmul.mubr.f32.gmra.mxu0 %v501
        %v714 = vpop.f32.mrf.mxu0
        %v715 = vadd.f32 %v425, %v714
        %v716 = vpop.f32.mrf.mxu0
        %717 = vmatprep.mubr.f32.mxu0 0.0
        %718 = vmatmul.mubr.f32.gmra.mxu0 %v504
        %v719 = vpop.f32.mrf.mxu0
        %v720 = vadd.f32 %v425, %v719
        %v721 = vpop.f32.mrf.mxu0
        %722 = vmatprep.mubr.f32.mxu0 0.0
        %723 = vmatmul.mubr.f32.gmra.mxu0 %v507
        %v724 = vpop.f32.mrf.mxu0
        %v725 = vadd.f32 %v425, %v724
        %v726 = vpop.f32.mrf.mxu0
        %727 = vmatprep.mubr.f32.mxu0 0.0
        %728 = vmatmul.mubr.f32.gmra.mxu0 %v510
        %v729 = vpop.f32.mrf.mxu0
        %v730 = vadd.f32 %v425, %v729
        %v731 = vpop.f32.mrf.mxu0
        %732 = vmatprep.mubr.f32.mxu0 0.0
        %733 = vmatmul.mubr.f32.gmra.mxu0 %v513
        %v734 = vpop.f32.mrf.mxu0
        %v735 = vadd.f32 %v425, %v734
        %v736 = vpop.f32.mrf.mxu0
        %737 = vmatprep.mubr.f32.mxu0 0.0
        %738 = vmatmul.mubr.f32.gmra.mxu0 %v516
        %v739 = vpop.f32.mrf.mxu0
        %v740 = vadd.f32 %v425, %v739
        %v741 = vpop.f32.mrf.mxu0
        %742 = vmatprep.mubr.f32.mxu0 0.0
        %743 = vmatmul.mubr.f32.gmra.mxu0 %v519
        %v744 = vpop.f32.mrf.mxu0
        %v745 = vadd.f32 %v425, %v744
        %v746 = vpop.f32.mrf.mxu0
        %747 = vmatprep.mubr.f32.mxu0 0.0
        %748 = vmatmul.mubr.f32.gmra.mxu0 %v522
        %v749 = vpop.f32.mrf.mxu0
        %v750 = vadd.f32 %v425, %v749
        %v751 = vpop.f32.mrf.mxu0
        %752 = vdwg.mxu0
        %v753 = vld [vmem:[%s3] sm:$0x1]
        %v755 = vlaneseq
        %v756 = vshrl.u32 %v755, 7
        %v757 = vsub.s32 0, %v756
        %v758 = vrot.slane %v753, %v757
        %v760 = vmul.f32 %v595, %v758
        %v761 = vmul.f32 %v600, %v758
        %v762 = vmul.f32 %v605, %v758
        %v763 = vmul.f32 %v610, %v758
        %v764 = vmul.f32 %v615, %v758
        %v765 = vmul.f32 %v620, %v758
        %v766 = vmul.f32 %v625, %v758
        %v767 = vmul.f32 %v630, %v758
        %v768 = vmul.f32 %v635, %v758
        %v769 = vmul.f32 %v640, %v758
        %v770 = vmul.f32 %v645, %v758
        %v771 = vmul.f32 %v650, %v758
        %v772 = vmul.f32 %v655, %v758
        %v773 = vmul.f32 %v660, %v758
        %v774 = vmul.f32 %v665, %v758
        %v775 = vmul.f32 %v670, %v758
        %v776 = vmul.f32 %v675, %v758
        %v777 = vmul.f32 %v680, %v758
        %v778 = vmul.f32 %v685, %v758
        %v779 = vmul.f32 %v690, %v758
        %v780 = vmul.f32 %v695, %v758
        %v781 = vmul.f32 %v700, %v758
        %v782 = vmul.f32 %v705, %v758
        %v783 = vmul.f32 %v710, %v758
        %v784 = vmul.f32 %v715, %v758
        %v785 = vmul.f32 %v720, %v758
        %v786 = vmul.f32 %v725, %v758
        %v787 = vmul.f32 %v730, %v758
        %v788 = vmul.f32 %v735, %v758
        %v789 = vmul.f32 %v740, %v758
        %v790 = vmul.f32 %v745, %v758
        %v791 = vmul.f32 %v750, %v758
        %v792 = vld [vmem:[%s4] sm:$0x1]
        %v794 = vlaneseq
        %v795 = vshrl.u32 %v794, 7
        %v796 = vsub.s32 0, %v795
        %v797 = vrot.slane %v792, %v796
        %v799 = vadd.f32 %v760, %v797
        %v800 = vadd.f32 %v761, %v797
        %v801 = vadd.f32 %v762, %v797
        %v802 = vadd.f32 %v763, %v797
        %v803 = vadd.f32 %v764, %v797
        %v804 = vadd.f32 %v765, %v797
        %v805 = vadd.f32 %v766, %v797
        %v806 = vadd.f32 %v767, %v797
        %v807 = vadd.f32 %v768, %v797
        %v808 = vadd.f32 %v769, %v797
        %v809 = vadd.f32 %v770, %v797
        %v810 = vadd.f32 %v771, %v797
        %v811 = vadd.f32 %v772, %v797
        %v812 = vadd.f32 %v773, %v797
        %v813 = vadd.f32 %v774, %v797
        %v814 = vadd.f32 %v775, %v797
        %v815 = vadd.f32 %v776, %v797
        %v816 = vadd.f32 %v777, %v797
        %v817 = vadd.f32 %v778, %v797
        %v818 = vadd.f32 %v779, %v797
        %v819 = vadd.f32 %v780, %v797
        %v820 = vadd.f32 %v781, %v797
        %v821 = vadd.f32 %v782, %v797
        %v822 = vadd.f32 %v783, %v797
        %v823 = vadd.f32 %v784, %v797
        %v824 = vadd.f32 %v785, %v797
        %v825 = vadd.f32 %v786, %v797
        %v826 = vadd.f32 %v787, %v797
        %v827 = vadd.f32 %v788, %v797
        %v828 = vadd.f32 %v789, %v797
        %v829 = vadd.f32 %v790, %v797
        %v830 = vadd.f32 %v791, %v797
        %v831 = vmax.f32 %v799, 0.0
        %v832 = vmax.f32 %v800, 0.0
        %v833 = vmax.f32 %v801, 0.0
        %v834 = vmax.f32 %v802, 0.0
        %v835 = vmax.f32 %v803, 0.0
        %v836 = vmax.f32 %v804, 0.0
        %v837 = vmax.f32 %v805, 0.0
        %v838 = vmax.f32 %v806, 0.0
        %v839 = vmax.f32 %v807, 0.0
        %v840 = vmax.f32 %v808, 0.0
        %v841 = vmax.f32 %v809, 0.0
        %v842 = vmax.f32 %v810, 0.0
        %v843 = vmax.f32 %v811, 0.0
        %v844 = vmax.f32 %v812, 0.0
        %v845 = vmax.f32 %v813, 0.0
        %v846 = vmax.f32 %v814, 0.0
        %v847 = vmax.f32 %v815, 0.0
        %v848 = vmax.f32 %v816, 0.0
        %v849 = vmax.f32 %v817, 0.0
        %v850 = vmax.f32 %v818, 0.0
        %v851 = vmax.f32 %v819, 0.0
        %v852 = vmax.f32 %v820, 0.0
        %v853 = vmax.f32 %v821, 0.0
        %v854 = vmax.f32 %v822, 0.0
        %v855 = vmax.f32 %v823, 0.0
        %v856 = vmax.f32 %v824, 0.0
        %v857 = vmax.f32 %v825, 0.0
        %v858 = vmax.f32 %v826, 0.0
        %v859 = vmax.f32 %v827, 0.0
        %v860 = vmax.f32 %v828, 0.0
        %v861 = vmax.f32 %v829, 0.0
        %v862 = vmax.f32 %v830, 0.0
        %vm863 = vcmask 523264
        %864 = vst.msk [vmem:[#allocation2] sm:$0xff] %vm863, 0.0
        %865 = vst.msk [vmem:[#allocation2 + $0x8] sm:$0xff] %vm863, 0.0
        %vm866 = vcmask 517120
        %867 = vst.msk [vmem:[#allocation2 + $0x10] sm:$0x3] %vm866, 0.0
        %868 = vst.msk [vmem:[#allocation2 + $0x18] sm:$0xff] %vm863, 0.0
        %869 = vst.msk [vmem:[#allocation2 + $0x20] sm:$0xff] %vm863, 0.0
        %870 = vst.msk [vmem:[#allocation2 + $0x28] sm:$0x3] %vm866, 0.0
        %871 = vst.msk [vmem:[#allocation2 + $0x30] sm:$0xff] %vm863, 0.0
        %872 = vst.msk [vmem:[#allocation2 + $0x38] sm:$0xff] %vm863, 0.0
        %873 = vst.msk [vmem:[#allocation2 + $0x40] sm:$0x3] %vm866, 0.0
        %874 = vst.msk [vmem:[#allocation2 + $0x48] sm:$0xff] %vm863, 0.0
        %875 = vst.msk [vmem:[#allocation2 + $0x50] sm:$0xff] %vm863, 0.0
        %876 = vst.msk [vmem:[#allocation2 + $0x58] sm:$0x3] %vm866, 0.0
        %877 = vst.msk [vmem:[#allocation2 + $0x60] sm:$0xff] %vm863, 0.0
        %878 = vst.msk [vmem:[#allocation2 + $0x68] sm:$0xff] %vm863, 0.0
        %879 = vst.msk [vmem:[#allocation2 + $0x70] sm:$0x3] %vm866, 0.0
        %880 = vst.msk [vmem:[#allocation2 + $0x78] sm:$0xff] %vm863, 0.0
        %881 = vst.msk [vmem:[#allocation2 + $0x80] sm:$0xff] %vm863, 0.0
        %882 = vst.msk [vmem:[#allocation2 + $0x88] sm:$0x3] %vm866, 0.0
        %883 = vst.msk [vmem:[#allocation2 + $0x90] sm:$0xff] %vm863, 0.0
        %884 = vst.msk [vmem:[#allocation2 + $0x98] sm:$0xff] %vm863, 0.0
        %885 = vst.msk [vmem:[#allocation2 + $0xa0] sm:$0x3] %vm866, 0.0
        %886 = vst.msk [vmem:[#allocation2 + $0xa8] sm:$0xff] %vm863, 0.0
        %887 = vst.msk [vmem:[#allocation2 + $0xb0] sm:$0xff] %vm863, 0.0
        %888 = vst.msk [vmem:[#allocation2 + $0xb8] sm:$0x3] %vm866, 0.0
        %889 = vst.msk [vmem:[#allocation2 + $0xc0] sm:$0xff] %vm863, 0.0
        %890 = vst.msk [vmem:[#allocation2 + $0xc8] sm:$0xff] %vm863, 0.0
        %891 = vst.msk [vmem:[#allocation2 + $0xd0] sm:$0x3] %vm866, 0.0
        %892 = vst.msk [vmem:[#allocation2 + $0xd8] sm:$0xff] %vm863, 0.0
        %893 = vst.msk [vmem:[#allocation2 + $0xe0] sm:$0xff] %vm863, 0.0
        %894 = vst.msk [vmem:[#allocation2 + $0xe8] sm:$0x3] %vm866, 0.0
        %895 = vst.msk [vmem:[#allocation2 + $0xf0] sm:$0xff] %vm863, 0.0
        %896 = vst.msk [vmem:[#allocation2 + $0xf8] sm:$0xff] %vm863, 0.0
        %897 = vst.msk [vmem:[#allocation2 + $0x100] sm:$0x3] %vm866, 0.0
        %898 = vst.msk [vmem:[#allocation2 + $0x108] sm:$0xff] %vm863, 0.0
        %899 = vst.msk [vmem:[#allocation2 + $0x110] sm:$0xff] %vm863, 0.0
        %900 = vst.msk [vmem:[#allocation2 + $0x118] sm:$0x3] %vm866, 0.0
        %901 = vst.msk [vmem:[#allocation2 + $0x120] sm:$0xff] %vm863, 0.0
        %902 = vst.msk [vmem:[#allocation2 + $0x128] sm:$0xff] %vm863, 0.0
        %903 = vst.msk [vmem:[#allocation2 + $0x130] sm:$0x3] %vm866, 0.0
        %904 = vst.msk [vmem:[#allocation2 + $0x138] sm:$0xff] %vm863, 0.0
        %905 = vst.msk [vmem:[#allocation2 + $0x140] sm:$0xff] %vm863, 0.0
        %906 = vst.msk [vmem:[#allocation2 + $0x148] sm:$0x3] %vm866, 0.0
        %907 = vst.msk [vmem:[#allocation2 + $0x150] sm:$0xff] %vm863, 0.0
        %908 = vst.msk [vmem:[#allocation2 + $0x158] sm:$0xff] %vm863, 0.0
        %909 = vst.msk [vmem:[#allocation2 + $0x160] sm:$0x3] %vm866, 0.0
        %910 = vst.msk [vmem:[#allocation2 + $0x168] sm:$0xff] %vm863, 0.0
        %911 = vst.msk [vmem:[#allocation2 + $0x170] sm:$0xff] %vm863, 0.0
        %912 = vst.msk [vmem:[#allocation2 + $0x178] sm:$0x3] %vm866, 0.0
        %913 = vst.msk [vmem:[#allocation2 + $0x180] sm:$0xff] %vm863, 0.0
        %914 = vst.msk [vmem:[#allocation2 + $0x188] sm:$0xff] %vm863, 0.0
        %915 = vst.msk [vmem:[#allocation2 + $0x190] sm:$0x3] %vm866, 0.0
        %916 = vst.msk [vmem:[#allocation2 + $0x198] sm:$0xff] %vm863, 0.0
        %917 = vst.msk [vmem:[#allocation2 + $0x1a0] sm:$0xff] %vm863, 0.0
        %918 = vst.msk [vmem:[#allocation2 + $0x1a8] sm:$0x3] %vm866, 0.0
        %s919 = scalar_lea.vmem [#allocation2], 24
        %920 = vst.msk [vmem:[%s919 + $0x1] sm:$0xff] %vm863, %v831
        %921 = vst.msk [vmem:[%s919 + $0x9] sm:$0xff] %vm863, %v832
        %922 = vst.msk [vmem:[%s919 + $0x19] sm:$0xff] %vm863, %v833
        %923 = vst.msk [vmem:[%s919 + $0x21] sm:$0xff] %vm863, %v834
        %924 = vst.msk [vmem:[%s919 + $0x31] sm:$0xff] %vm863, %v835
        %925 = vst.msk [vmem:[%s919 + $0x39] sm:$0xff] %vm863, %v836
        %926 = vst.msk [vmem:[%s919 + $0x49] sm:$0xff] %vm863, %v837
        %927 = vst.msk [vmem:[%s919 + $0x51] sm:$0xff] %vm863, %v838
        %928 = vst.msk [vmem:[%s919 + $0x61] sm:$0xff] %vm863, %v839
        %929 = vst.msk [vmem:[%s919 + $0x69] sm:$0xff] %vm863, %v840
        %930 = vst.msk [vmem:[%s919 + $0x79] sm:$0xff] %vm863, %v841
        %931 = vst.msk [vmem:[%s919 + $0x81] sm:$0xff] %vm863, %v842
        %932 = vst.msk [vmem:[%s919 + $0x91] sm:$0xff] %vm863, %v843
        %933 = vst.msk [vmem:[%s919 + $0x99] sm:$0xff] %vm863, %v844
        %934 = vst.msk [vmem:[%s919 + $0xa9] sm:$0xff] %vm863, %v845
        %935 = vst.msk [vmem:[%s919 + $0xb1] sm:$0xff] %vm863, %v846
        %936 = vst.msk [vmem:[%s919 + $0xc1] sm:$0xff] %vm863, %v847
        %937 = vst.msk [vmem:[%s919 + $0xc9] sm:$0xff] %vm863, %v848
        %938 = vst.msk [vmem:[%s919 + $0xd9] sm:$0xff] %vm863, %v849
        %939 = vst.msk [vmem:[%s919 + $0xe1] sm:$0xff] %vm863, %v850
        %940 = vst.msk [vmem:[%s919 + $0xf1] sm:$0xff] %vm863, %v851
        %941 = vst.msk [vmem:[%s919 + $0xf9] sm:$0xff] %vm863, %v852
        %942 = vst.msk [vmem:[%s919 + $0x109] sm:$0xff] %vm863, %v853
        %943 = vst.msk [vmem:[%s919 + $0x111] sm:$0xff] %vm863, %v854
        %944 = vst.msk [vmem:[%s919 + $0x121] sm:$0xff] %vm863, %v855
        %945 = vst.msk [vmem:[%s919 + $0x129] sm:$0xff] %vm863, %v856
        %946 = vst.msk [vmem:[%s919 + $0x139] sm:$0xff] %vm863, %v857
        %947 = vst.msk [vmem:[%s919 + $0x141] sm:$0xff] %vm863, %v858
        %948 = vst.msk [vmem:[%s919 + $0x151] sm:$0xff] %vm863, %v859
        %949 = vst.msk [vmem:[%s919 + $0x159] sm:$0xff] %vm863, %v860
        %950 = vst.msk [vmem:[%s919 + $0x169] sm:$0xff] %vm863, %v861
        %951 = vst.msk [vmem:[%s919 + $0x171] sm:$0xff] %vm863, %v862
        %v952 = vld [vmem:[%s5] sm:$0xf]
        %v953 = vld [vmem:[%s5 + $0x4] sm:$0xf]
        %v954 = vld [vmem:[%s5 + $0x8] sm:$0xf]
        %v955 = vld [vmem:[%s5 + $0xc] sm:$0xf]
        %v956 = vld [vmem:[%s5 + $0x10] sm:$0xf]
        %v957 = vld [vmem:[%s5 + $0x14] sm:$0xf]
        %v958 = vld [vmem:[%s5 + $0x18] sm:$0xf]
        %v959 = vld [vmem:[%s5 + $0x1c] sm:$0xf]
        %v960 = vld [vmem:[%s5 + $0x20] sm:$0xf]
        %v961 = vld [vmem:[%s5 + $0x24] sm:$0xf]
        %v962 = vld [vmem:[%s5 + $0x28] sm:$0xf]
        %v963 = vld [vmem:[%s5 + $0x2c] sm:$0xf]
        %v964 = vld [vmem:[%s5 + $0x30] sm:$0xf]
        %v965 = vld [vmem:[%s5 + $0x34] sm:$0xf]
        %v966 = vld [vmem:[%s5 + $0x38] sm:$0xf]
        %v967 = vld [vmem:[%s5 + $0x3c] sm:$0xf]
        %v968 = vld [vmem:[%s5 + $0x40] sm:$0xf]
        %v969 = vld [vmem:[%s5 + $0x44] sm:$0xf]
        %v970 = vld [vmem:[%s5 + $0x48] sm:$0xf]
        %v971 = vld [vmem:[%s5 + $0x4c] sm:$0xf]
        %v972 = vld [vmem:[%s5 + $0x50] sm:$0xf]
        %v973 = vld [vmem:[%s5 + $0x54] sm:$0xf]
        %v974 = vld [vmem:[%s5 + $0x58] sm:$0xf]
        %v975 = vld [vmem:[%s5 + $0x5c] sm:$0xf]
        %v976 = vld [vmem:[#allocation2] sm:$0xff]
        %v977 = vld [vmem:[#allocation2 + $0x8] sm:$0xff]
        %v978 = vld [vmem:[#allocation2 + $0x18] sm:$0xff]
        %v979 = vld [vmem:[#allocation2 + $0x20] sm:$0xff]
        %v980 = vld [vmem:[#allocation2 + $0x30] sm:$0xff]
        %v981 = vld [vmem:[#allocation2 + $0x38] sm:$0xff]
        %v982 = vld [vmem:[#allocation2 + $0x48] sm:$0xff]
        %v983 = vld [vmem:[#allocation2 + $0x50] sm:$0xff]
        %v984 = vld [vmem:[#allocation2 + $0x60] sm:$0xff]
        %v985 = vld [vmem:[#allocation2 + $0x68] sm:$0xff]
        %v986 = vld [vmem:[#allocation2 + $0x78] sm:$0xff]
        %v987 = vld [vmem:[#allocation2 + $0x80] sm:$0xff]
        %v988 = vld [vmem:[#allocation2 + $0x90] sm:$0xff]
        %v989 = vld [vmem:[#allocation2 + $0x98] sm:$0xff]
        %v990 = vld [vmem:[#allocation2 + $0xa8] sm:$0xff]
        %v991 = vld [vmem:[#allocation2 + $0xb0] sm:$0xff]
        %v992 = vld [vmem:[#allocation2 + $0xc0] sm:$0xff]
        %v993 = vld [vmem:[#allocation2 + $0xc8] sm:$0xff]
        %v994 = vld [vmem:[#allocation2 + $0xd8] sm:$0xff]
        %v995 = vld [vmem:[#allocation2 + $0xe0] sm:$0xff]
        %v996 = vld [vmem:[#allocation2 + $0xf0] sm:$0xff]
        %v997 = vld [vmem:[#allocation2 + $0xf8] sm:$0xff]
        %v998 = vld [vmem:[#allocation2 + $0x108] sm:$0xff]
        %v999 = vld [vmem:[#allocation2 + $0x110] sm:$0xff]
        %v1000 = vld [vmem:[#allocation2 + $0x120] sm:$0xff]
        %v1001 = vld [vmem:[#allocation2 + $0x128] sm:$0xff]
        %v1002 = vld [vmem:[#allocation2 + $0x138] sm:$0xff]
        %v1003 = vld [vmem:[#allocation2 + $0x140] sm:$0xff]
        %v1004 = vld [vmem:[#allocation2 + $0x150] sm:$0xff]
        %v1005 = vld [vmem:[#allocation2 + $0x158] sm:$0xff]
        %v1006 = vld [vmem:[#allocation2 + $0x168] sm:$0xff]
        %v1007 = vld [vmem:[#allocation2 + $0x170] sm:$0xff]
        %v1008 = vpack.c.bf16 %v977, %v976
        %v1009 = vpack.c.bf16 %v979, %v978
        %v1010 = vpack.c.bf16 %v981, %v980
        %v1011 = vpack.c.bf16 %v983, %v982
        %v1012 = vpack.c.bf16 %v985, %v984
        %v1013 = vpack.c.bf16 %v987, %v986
        %v1014 = vpack.c.bf16 %v989, %v988
        %v1015 = vpack.c.bf16 %v991, %v990
        %v1016 = vpack.c.bf16 %v993, %v992
        %v1017 = vpack.c.bf16 %v995, %v994
        %v1018 = vpack.c.bf16 %v997, %v996
        %v1019 = vpack.c.bf16 %v999, %v998
        %v1020 = vpack.c.bf16 %v1001, %v1000
        %v1021 = vpack.c.bf16 %v1003, %v1002
        %v1022 = vpack.c.bf16 %v1005, %v1004
        %v1023 = vpack.c.bf16 %v1007, %v1006
        %v1024 = vld [vmem:[#allocation2 + $0x1] sm:$0xff]
        %v1025 = vld [vmem:[#allocation2 + $0x9] sm:$0xff]
        %v1026 = vld [vmem:[#allocation2 + $0x19] sm:$0xff]
        %v1027 = vld [vmem:[#allocation2 + $0x21] sm:$0xff]
        %v1028 = vld [vmem:[#allocation2 + $0x31] sm:$0xff]
        %v1029 = vld [vmem:[#allocation2 + $0x39] sm:$0xff]
        %v1030 = vld [vmem:[#allocation2 + $0x49] sm:$0xff]
        %v1031 = vld [vmem:[#allocation2 + $0x51] sm:$0xff]
        %v1032 = vld [vmem:[#allocation2 + $0x61] sm:$0xff]
        %v1033 = vld [vmem:[#allocation2 + $0x69] sm:$0xff]
        %v1034 = vld [vmem:[#allocation2 + $0x79] sm:$0xff]
        %v1035 = vld [vmem:[#allocation2 + $0x81] sm:$0xff]
        %v1036 = vld [vmem:[#allocation2 + $0x91] sm:$0xff]
        %v1037 = vld [vmem:[#allocation2 + $0x99] sm:$0xff]
        %v1038 = vld [vmem:[#allocation2 + $0xa9] sm:$0xff]
        %v1039 = vld [vmem:[#allocation2 + $0xb1] sm:$0xff]
        %v1040 = vld [vmem:[#allocation2 + $0xc1] sm:$0xff]
        %v1041 = vld [vmem:[#allocation2 + $0xc9] sm:$0xff]
        %v1042 = vld [vmem:[#allocation2 + $0xd9] sm:$0xff]
        %v1043 = vld [vmem:[#allocation2 + $0xe1] sm:$0xff]
        %v1044 = vld [vmem:[#allocation2 + $0xf1] sm:$0xff]
        %v1045 = vld [vmem:[#allocation2 + $0xf9] sm:$0xff]
        %v1046 = vld [vmem:[#allocation2 + $0x109] sm:$0xff]
        %v1047 = vld [vmem:[#allocation2 + $0x111] sm:$0xff]
        %v1048 = vld [vmem:[#allocation2 + $0x121] sm:$0xff]
        %v1049 = vld [vmem:[#allocation2 + $0x129] sm:$0xff]
        %v1050 = vld [vmem:[#allocation2 + $0x139] sm:$0xff]
        %v1051 = vld [vmem:[#allocation2 + $0x141] sm:$0xff]
        %v1052 = vld [vmem:[#allocation2 + $0x151] sm:$0xff]
        %v1053 = vld [vmem:[#allocation2 + $0x159] sm:$0xff]
        %v1054 = vld [vmem:[#allocation2 + $0x169] sm:$0xff]
        %v1055 = vld [vmem:[#allocation2 + $0x171] sm:$0xff]
        %v1056 = vpack.c.bf16 %v1025, %v1024
        %v1057 = vpack.c.bf16 %v1027, %v1026
        %v1058 = vpack.c.bf16 %v1029, %v1028
        %v1059 = vpack.c.bf16 %v1031, %v1030
        %v1060 = vpack.c.bf16 %v1033, %v1032
        %v1061 = vpack.c.bf16 %v1035, %v1034
        %v1062 = vpack.c.bf16 %v1037, %v1036
        %v1063 = vpack.c.bf16 %v1039, %v1038
        %v1064 = vpack.c.bf16 %v1041, %v1040
        %v1065 = vpack.c.bf16 %v1043, %v1042
        %v1066 = vpack.c.bf16 %v1045, %v1044
        %v1067 = vpack.c.bf16 %v1047, %v1046
        %v1068 = vpack.c.bf16 %v1049, %v1048
        %v1069 = vpack.c.bf16 %v1051, %v1050
        %v1070 = vpack.c.bf16 %v1053, %v1052
        %v1071 = vpack.c.bf16 %v1055, %v1054
        %v1072 = vld [vmem:[#allocation2 + $0x2] sm:$0xff]
        %v1073 = vld [vmem:[#allocation2 + $0xa] sm:$0xff]
        %v1074 = vld [vmem:[#allocation2 + $0x1a] sm:$0xff]
        %v1075 = vld [vmem:[#allocation2 + $0x22] sm:$0xff]
        %v1076 = vld [vmem:[#allocation2 + $0x32] sm:$0xff]
        %v1077 = vld [vmem:[#allocation2 + $0x3a] sm:$0xff]
        %v1078 = vld [vmem:[#allocation2 + $0x4a] sm:$0xff]
        %v1079 = vld [vmem:[#allocation2 + $0x52] sm:$0xff]
        %v1080 = vld [vmem:[#allocation2 + $0x62] sm:$0xff]
        %v1081 = vld [vmem:[#allocation2 + $0x6a] sm:$0xff]
        %v1082 = vld [vmem:[#allocation2 + $0x7a] sm:$0xff]
        %v1083 = vld [vmem:[#allocation2 + $0x82] sm:$0xff]
        %v1084 = vld [vmem:[#allocation2 + $0x92] sm:$0xff]
        %v1085 = vld [vmem:[#allocation2 + $0x9a] sm:$0xff]
        %v1086 = vld [vmem:[#allocation2 + $0xaa] sm:$0xff]
        %v1087 = vld [vmem:[#allocation2 + $0xb2] sm:$0xff]
        %v1088 = vld [vmem:[#allocation2 + $0xc2] sm:$0xff]
        %v1089 = vld [vmem:[#allocation2 + $0xca] sm:$0xff]
        %v1090 = vld [vmem:[#allocation2 + $0xda] sm:$0xff]
        %v1091 = vld [vmem:[#allocation2 + $0xe2] sm:$0xff]
        %v1092 = vld [vmem:[#allocation2 + $0xf2] sm:$0xff]
        %v1093 = vld [vmem:[#allocation2 + $0xfa] sm:$0xff]
        %v1094 = vld [vmem:[#allocation2 + $0x10a] sm:$0xff]
        %v1095 = vld [vmem:[#allocation2 + $0x112] sm:$0xff]
        %v1096 = vld [vmem:[#allocation2 + $0x122] sm:$0xff]
        %v1097 = vld [vmem:[#allocation2 + $0x12a] sm:$0xff]
        %v1098 = vld [vmem:[#allocation2 + $0x13a] sm:$0xff]
        %v1099 = vld [vmem:[#allocation2 + $0x142] sm:$0xff]
        %v1100 = vld [vmem:[#allocation2 + $0x152] sm:$0xff]
        %v1101 = vld [vmem:[#allocation2 + $0x15a] sm:$0xff]
        %v1102 = vld [vmem:[#allocation2 + $0x16a] sm:$0xff]
        %v1103 = vld [vmem:[#allocation2 + $0x172] sm:$0xff]
        %v1104 = vpack.c.bf16 %v1073, %v1072
        %v1105 = vpack.c.bf16 %v1075, %v1074
        %v1106 = vpack.c.bf16 %v1077, %v1076
        %v1107 = vpack.c.bf16 %v1079, %v1078
        %v1108 = vpack.c.bf16 %v1081, %v1080
        %v1109 = vpack.c.bf16 %v1083, %v1082
        %v1110 = vpack.c.bf16 %v1085, %v1084
        %v1111 = vpack.c.bf16 %v1087, %v1086
        %v1112 = vpack.c.bf16 %v1089, %v1088
        %v1113 = vpack.c.bf16 %v1091, %v1090
        %v1114 = vpack.c.bf16 %v1093, %v1092
        %v1115 = vpack.c.bf16 %v1095, %v1094
        %v1116 = vpack.c.bf16 %v1097, %v1096
        %v1117 = vpack.c.bf16 %v1099, %v1098
        %v1118 = vpack.c.bf16 %v1101, %v1100
        %v1119 = vpack.c.bf16 %v1103, %v1102
        %1136 = vrot.lane.b32.xlu0 %v1056, 64
        %v1137 = vpop.permute.xlu0 %1136
        %1138 = vrot.lane.b32.xlu0 %v1057, 64
        %v1139 = vpop.permute.xlu0 %1138
        %1140 = vrot.lane.b32.xlu0 %v1058, 64
        %v1141 = vpop.permute.xlu0 %1140
        %1142 = vrot.lane.b32.xlu0 %v1059, 64
        %v1143 = vpop.permute.xlu0 %1142
        %1144 = vrot.lane.b32.xlu0 %v1060, 64
        %v1145 = vpop.permute.xlu0 %1144
        %1146 = vrot.lane.b32.xlu0 %v1061, 64
        %v1147 = vpop.permute.xlu0 %1146
        %1148 = vrot.lane.b32.xlu0 %v1062, 64
        %v1149 = vpop.permute.xlu0 %1148
        %1150 = vrot.lane.b32.xlu0 %v1063, 64
        %v1151 = vpop.permute.xlu0 %1150
        %1152 = vrot.lane.b32.xlu0 %v1064, 64
        %v1153 = vpop.permute.xlu0 %1152
        %1154 = vrot.lane.b32.xlu0 %v1065, 64
        %v1155 = vpop.permute.xlu0 %1154
        %1156 = vrot.lane.b32.xlu0 %v1066, 64
        %v1157 = vpop.permute.xlu0 %1156
        %1158 = vrot.lane.b32.xlu0 %v1067, 64
        %v1159 = vpop.permute.xlu0 %1158
        %1160 = vrot.lane.b32.xlu0 %v1068, 64
        %v1161 = vpop.permute.xlu0 %1160
        %1162 = vrot.lane.b32.xlu0 %v1069, 64
        %v1163 = vpop.permute.xlu0 %1162
        %1164 = vrot.lane.b32.xlu0 %v1070, 64
        %v1165 = vpop.permute.xlu0 %1164
        %1166 = vrot.lane.b32.xlu0 %v1071, 64
        %v1167 = vpop.permute.xlu0 %1166
        %v1170 = vsel %vm863, %v1008, %v1137
        %v1174 = vsel %vm863, %v1009, %v1139
        %v1178 = vsel %vm863, %v1010, %v1141
        %v1182 = vsel %vm863, %v1011, %v1143
        %v1186 = vsel %vm863, %v1012, %v1145
        %v1190 = vsel %vm863, %v1013, %v1147
        %v1194 = vsel %vm863, %v1014, %v1149
        %v1198 = vsel %vm863, %v1015, %v1151
        %v1202 = vsel %vm863, %v1016, %v1153
        %v1206 = vsel %vm863, %v1017, %v1155
        %v1210 = vsel %vm863, %v1018, %v1157
        %v1214 = vsel %vm863, %v1019, %v1159
        %v1218 = vsel %vm863, %v1020, %v1161
        %v1222 = vsel %vm863, %v1021, %v1163
        %v1226 = vsel %vm863, %v1022, %v1165
        %v1230 = vsel %vm863, %v1023, %v1167
        %s1232 = scalar_lea.vmem %s5, 96
        %v1233 = vld [vmem:[%s1232] sm:$0xf]
        %v1234 = vld [vmem:[%s1232 + $0x4] sm:$0xf]
        %v1235 = vld [vmem:[%s1232 + $0x8] sm:$0xf]
        %v1236 = vld [vmem:[%s1232 + $0xc] sm:$0xf]
        %v1237 = vld [vmem:[%s1232 + $0x10] sm:$0xf]
        %v1238 = vld [vmem:[%s1232 + $0x14] sm:$0xf]
        %v1239 = vld [vmem:[%s1232 + $0x18] sm:$0xf]
        %v1240 = vld [vmem:[%s1232 + $0x1c] sm:$0xf]
        %v1241 = vld [vmem:[%s1232 + $0x20] sm:$0xf]
        %v1242 = vld [vmem:[%s1232 + $0x24] sm:$0xf]
        %v1243 = vld [vmem:[%s1232 + $0x28] sm:$0xf]
        %v1244 = vld [vmem:[%s1232 + $0x2c] sm:$0xf]
        %v1245 = vld [vmem:[%s1232 + $0x30] sm:$0xf]
        %v1246 = vld [vmem:[%s1232 + $0x34] sm:$0xf]
        %v1247 = vld [vmem:[%s1232 + $0x38] sm:$0xf]
        %v1248 = vld [vmem:[%s1232 + $0x3c] sm:$0xf]
        %v1249 = vld [vmem:[%s1232 + $0x40] sm:$0xf]
        %v1250 = vld [vmem:[%s1232 + $0x44] sm:$0xf]
        %v1251 = vld [vmem:[%s1232 + $0x48] sm:$0xf]
        %v1252 = vld [vmem:[%s1232 + $0x4c] sm:$0xf]
        %v1253 = vld [vmem:[%s1232 + $0x50] sm:$0xf]
        %v1254 = vld [vmem:[%s1232 + $0x54] sm:$0xf]
        %v1255 = vld [vmem:[%s1232 + $0x58] sm:$0xf]
        %v1256 = vld [vmem:[%s1232 + $0x5c] sm:$0xf]
        %v1257 = vld [vmem:[%s919] sm:$0xff]
        %v1258 = vld [vmem:[%s919 + $0x8] sm:$0xff]
        %v1259 = vld [vmem:[%s919 + $0x18] sm:$0xff]
        %v1260 = vld [vmem:[%s919 + $0x20] sm:$0xff]
        %v1261 = vld [vmem:[%s919 + $0x30] sm:$0xff]
        %v1262 = vld [vmem:[%s919 + $0x38] sm:$0xff]
        %v1263 = vld [vmem:[%s919 + $0x48] sm:$0xff]
        %v1264 = vld [vmem:[%s919 + $0x50] sm:$0xff]
        %v1265 = vld [vmem:[%s919 + $0x60] sm:$0xff]
        %v1266 = vld [vmem:[%s919 + $0x68] sm:$0xff]
        %v1267 = vld [vmem:[%s919 + $0x78] sm:$0xff]
        %v1268 = vld [vmem:[%s919 + $0x80] sm:$0xff]
        %v1269 = vld [vmem:[%s919 + $0x90] sm:$0xff]
        %v1270 = vld [vmem:[%s919 + $0x98] sm:$0xff]
        %v1271 = vld [vmem:[%s919 + $0xa8] sm:$0xff]
        %v1272 = vld [vmem:[%s919 + $0xb0] sm:$0xff]
        %v1273 = vld [vmem:[%s919 + $0xc0] sm:$0xff]
        %v1274 = vld [vmem:[%s919 + $0xc8] sm:$0xff]
        %v1275 = vld [vmem:[%s919 + $0xd8] sm:$0xff]
        %v1276 = vld [vmem:[%s919 + $0xe0] sm:$0xff]
        %v1277 = vld [vmem:[%s919 + $0xf0] sm:$0xff]
        %v1278 = vld [vmem:[%s919 + $0xf8] sm:$0xff]
        %v1279 = vld [vmem:[%s919 + $0x108] sm:$0xff]
        %v1280 = vld [vmem:[%s919 + $0x110] sm:$0xff]
        %v1281 = vld [vmem:[%s919 + $0x120] sm:$0xff]
        %v1282 = vld [vmem:[%s919 + $0x128] sm:$0xff]
        %v1283 = vld [vmem:[%s919 + $0x138] sm:$0xff]
        %v1284 = vld [vmem:[%s919 + $0x140] sm:$0xff]
        %v1285 = vld [vmem:[%s919 + $0x150] sm:$0xff]
        %v1286 = vld [vmem:[%s919 + $0x158] sm:$0xff]
        %v1287 = vld [vmem:[%s919 + $0x168] sm:$0xff]
        %v1288 = vld [vmem:[%s919 + $0x170] sm:$0xff]
        %v1289 = vpack.c.bf16 %v1258, %v1257
        %v1290 = vpack.c.bf16 %v1260, %v1259
        %v1291 = vpack.c.bf16 %v1262, %v1261
        %v1292 = vpack.c.bf16 %v1264, %v1263
        %v1293 = vpack.c.bf16 %v1266, %v1265
        %v1294 = vpack.c.bf16 %v1268, %v1267
        %v1295 = vpack.c.bf16 %v1270, %v1269
        %v1296 = vpack.c.bf16 %v1272, %v1271
        %v1297 = vpack.c.bf16 %v1274, %v1273
        %v1298 = vpack.c.bf16 %v1276, %v1275
        %v1299 = vpack.c.bf16 %v1278, %v1277
        %v1300 = vpack.c.bf16 %v1280, %v1279
        %v1301 = vpack.c.bf16 %v1282, %v1281
        %v1302 = vpack.c.bf16 %v1284, %v1283
        %v1303 = vpack.c.bf16 %v1286, %v1285
        %v1304 = vpack.c.bf16 %v1288, %v1287
        %v1305 = vld [vmem:[%s919 + $0x1] sm:$0xff]
        %v1306 = vld [vmem:[%s919 + $0x9] sm:$0xff]
        %v1307 = vld [vmem:[%s919 + $0x19] sm:$0xff]
        %v1308 = vld [vmem:[%s919 + $0x21] sm:$0xff]
        %v1309 = vld [vmem:[%s919 + $0x31] sm:$0xff]
        %v1310 = vld [vmem:[%s919 + $0x39] sm:$0xff]
        %v1311 = vld [vmem:[%s919 + $0x49] sm:$0xff]
        %v1312 = vld [vmem:[%s919 + $0x51] sm:$0xff]
        %v1313 = vld [vmem:[%s919 + $0x61] sm:$0xff]
        %v1314 = vld [vmem:[%s919 + $0x69] sm:$0xff]
        %v1315 = vld [vmem:[%s919 + $0x79] sm:$0xff]
        %v1316 = vld [vmem:[%s919 + $0x81] sm:$0xff]
        %v1317 = vld [vmem:[%s919 + $0x91] sm:$0xff]
        %v1318 = vld [vmem:[%s919 + $0x99] sm:$0xff]
        %v1319 = vld [vmem:[%s919 + $0xa9] sm:$0xff]
        %v1320 = vld [vmem:[%s919 + $0xb1] sm:$0xff]
        %v1321 = vld [vmem:[%s919 + $0xc1] sm:$0xff]
        %v1322 = vld [vmem:[%s919 + $0xc9] sm:$0xff]
        %v1323 = vld [vmem:[%s919 + $0xd9] sm:$0xff]
        %v1324 = vld [vmem:[%s919 + $0xe1] sm:$0xff]
        %v1325 = vld [vmem:[%s919 + $0xf1] sm:$0xff]
        %v1326 = vld [vmem:[%s919 + $0xf9] sm:$0xff]
        %v1327 = vld [vmem:[%s919 + $0x109] sm:$0xff]
        %v1328 = vld [vmem:[%s919 + $0x111] sm:$0xff]
        %v1329 = vld [vmem:[%s919 + $0x121] sm:$0xff]
        %v1330 = vld [vmem:[%s919 + $0x129] sm:$0xff]
        %v1331 = vld [vmem:[%s919 + $0x139] sm:$0xff]
        %v1332 = vld [vmem:[%s919 + $0x141] sm:$0xff]
        %v1333 = vld [vmem:[%s919 + $0x151] sm:$0xff]
        %v1334 = vld [vmem:[%s919 + $0x159] sm:$0xff]
        %v1335 = vld [vmem:[%s919 + $0x169] sm:$0xff]
        %v1336 = vld [vmem:[%s919 + $0x171] sm:$0xff]
        %v1337 = vpack.c.bf16 %v1306, %v1305
        %v1338 = vpack.c.bf16 %v1308, %v1307
        %v1339 = vpack.c.bf16 %v1310, %v1309
        %v1340 = vpack.c.bf16 %v1312, %v1311
        %v1341 = vpack.c.bf16 %v1314, %v1313
        %v1342 = vpack.c.bf16 %v1316, %v1315
        %v1343 = vpack.c.bf16 %v1318, %v1317
        %v1344 = vpack.c.bf16 %v1320, %v1319
        %v1345 = vpack.c.bf16 %v1322, %v1321
        %v1346 = vpack.c.bf16 %v1324, %v1323
        %v1347 = vpack.c.bf16 %v1326, %v1325
        %v1348 = vpack.c.bf16 %v1328, %v1327
        %v1349 = vpack.c.bf16 %v1330, %v1329
        %v1350 = vpack.c.bf16 %v1332, %v1331
        %v1351 = vpack.c.bf16 %v1334, %v1333
        %v1352 = vpack.c.bf16 %v1336, %v1335
        %v1353 = vld [vmem:[%s919 + $0x2] sm:$0xff]
        %v1354 = vld [vmem:[%s919 + $0xa] sm:$0xff]
        %v1355 = vld [vmem:[%s919 + $0x1a] sm:$0xff]
        %v1356 = vld [vmem:[%s919 + $0x22] sm:$0xff]
        %v1357 = vld [vmem:[%s919 + $0x32] sm:$0xff]
        %v1358 = vld [vmem:[%s919 + $0x3a] sm:$0xff]
        %v1359 = vld [vmem:[%s919 + $0x4a] sm:$0xff]
        %v1360 = vld [vmem:[%s919 + $0x52] sm:$0xff]
        %v1361 = vld [vmem:[%s919 + $0x62] sm:$0xff]
        %v1362 = vld [vmem:[%s919 + $0x6a] sm:$0xff]
        %v1363 = vld [vmem:[%s919 + $0x7a] sm:$0xff]
        %v1364 = vld [vmem:[%s919 + $0x82] sm:$0xff]
        %v1365 = vld [vmem:[%s919 + $0x92] sm:$0xff]
        %v1366 = vld [vmem:[%s919 + $0x9a] sm:$0xff]
        %v1367 = vld [vmem:[%s919 + $0xaa] sm:$0xff]
        %v1368 = vld [vmem:[%s919 + $0xb2] sm:$0xff]
        %v1369 = vld [vmem:[%s919 + $0xc2] sm:$0xff]
        %v1370 = vld [vmem:[%s919 + $0xca] sm:$0xff]
        %v1371 = vld [vmem:[%s919 + $0xda] sm:$0xff]
        %v1372 = vld [vmem:[%s919 + $0xe2] sm:$0xff]
        %v1373 = vld [vmem:[%s919 + $0xf2] sm:$0xff]
        %v1374 = vld [vmem:[%s919 + $0xfa] sm:$0xff]
        %v1375 = vld [vmem:[%s919 + $0x10a] sm:$0xff]
        %v1376 = vld [vmem:[%s919 + $0x112] sm:$0xff]
        %v1377 = vld [vmem:[%s919 + $0x122] sm:$0xff]
        %v1378 = vld [vmem:[%s919 + $0x12a] sm:$0xff]
        %v1379 = vld [vmem:[%s919 + $0x13a] sm:$0xff]
        %v1380 = vld [vmem:[%s919 + $0x142] sm:$0xff]
        %v1381 = vld [vmem:[%s919 + $0x152] sm:$0xff]
        %v1382 = vld [vmem:[%s919 + $0x15a] sm:$0xff]
        %v1383 = vld [vmem:[%s919 + $0x16a] sm:$0xff]
        %v1384 = vld [vmem:[%s919 + $0x172] sm:$0xff]
        %v1385 = vpack.c.bf16 %v1354, %v1353
        %v1386 = vpack.c.bf16 %v1356, %v1355
        %v1387 = vpack.c.bf16 %v1358, %v1357
        %v1388 = vpack.c.bf16 %v1360, %v1359
        %v1389 = vpack.c.bf16 %v1362, %v1361
        %v1390 = vpack.c.bf16 %v1364, %v1363
        %v1391 = vpack.c.bf16 %v1366, %v1365
        %v1392 = vpack.c.bf16 %v1368, %v1367
        %v1393 = vpack.c.bf16 %v1370, %v1369
        %v1394 = vpack.c.bf16 %v1372, %v1371
        %v1395 = vpack.c.bf16 %v1374, %v1373
        %v1396 = vpack.c.bf16 %v1376, %v1375
        %v1397 = vpack.c.bf16 %v1378, %v1377
        %v1398 = vpack.c.bf16 %v1380, %v1379
        %v1399 = vpack.c.bf16 %v1382, %v1381
        %v1400 = vpack.c.bf16 %v1384, %v1383
        %1417 = vrot.lane.b32.xlu0 %v1337, 64
        %v1418 = vpop.permute.xlu0 %1417
        %1419 = vrot.lane.b32.xlu0 %v1338, 64
        %v1420 = vpop.permute.xlu0 %1419
        %1421 = vrot.lane.b32.xlu0 %v1339, 64
        %v1422 = vpop.permute.xlu0 %1421
        %1423 = vrot.lane.b32.xlu0 %v1340, 64
        %v1424 = vpop.permute.xlu0 %1423
        %1425 = vrot.lane.b32.xlu0 %v1341, 64
        %v1426 = vpop.permute.xlu0 %1425
        %1427 = vrot.lane.b32.xlu0 %v1342, 64
        %v1428 = vpop.permute.xlu0 %1427
        %1429 = vrot.lane.b32.xlu0 %v1343, 64
        %v1430 = vpop.permute.xlu0 %1429
        %1431 = vrot.lane.b32.xlu0 %v1344, 64
        %v1432 = vpop.permute.xlu0 %1431
        %1433 = vrot.lane.b32.xlu0 %v1345, 64
        %v1434 = vpop.permute.xlu0 %1433
        %1435 = vrot.lane.b32.xlu0 %v1346, 64
        %v1436 = vpop.permute.xlu0 %1435
        %1437 = vrot.lane.b32.xlu0 %v1347, 64
        %v1438 = vpop.permute.xlu0 %1437
        %1439 = vrot.lane.b32.xlu0 %v1348, 64
        %v1440 = vpop.permute.xlu0 %1439
        %1441 = vrot.lane.b32.xlu0 %v1349, 64
        %v1442 = vpop.permute.xlu0 %1441
        %1443 = vrot.lane.b32.xlu0 %v1350, 64
        %v1444 = vpop.permute.xlu0 %1443
        %1445 = vrot.lane.b32.xlu0 %v1351, 64
        %v1446 = vpop.permute.xlu0 %1445
        %1447 = vrot.lane.b32.xlu0 %v1352, 64
        %v1448 = vpop.permute.xlu0 %1447
        %v1451 = vsel %vm863, %v1289, %v1418
        %v1455 = vsel %vm863, %v1290, %v1420
        %v1459 = vsel %vm863, %v1291, %v1422
        %v1463 = vsel %vm863, %v1292, %v1424
        %v1467 = vsel %vm863, %v1293, %v1426
        %v1471 = vsel %vm863, %v1294, %v1428
        %v1475 = vsel %vm863, %v1295, %v1430
        %v1479 = vsel %vm863, %v1296, %v1432
        %v1483 = vsel %vm863, %v1297, %v1434
        %v1487 = vsel %vm863, %v1298, %v1436
        %v1491 = vsel %vm863, %v1299, %v1438
        %v1495 = vsel %vm863, %v1300, %v1440
        %v1499 = vsel %vm863, %v1301, %v1442
        %v1503 = vsel %vm863, %v1302, %v1444
        %v1507 = vsel %vm863, %v1303, %v1446
        %v1511 = vsel %vm863, %v1304, %v1448
        %v1537 = vunpack.c.l.b16 %v1233
        %v1538 = vunpack.c.l.b16 %v1234
        %v1539 = vunpack.c.l.b16 %v1235
        %v1540 = vunpack.c.l.b16 %v1236
        %v1541 = vunpack.c.l.b16 %v1237
        %v1542 = vunpack.c.l.b16 %v1238
        %v1543 = vunpack.c.l.b16 %v1239
        %v1544 = vunpack.c.l.b16 %v1240
        %v1545 = vunpack.c.l.b16 %v1241
        %v1546 = vunpack.c.l.b16 %v1242
        %v1547 = vunpack.c.l.b16 %v1243
        %v1548 = vunpack.c.l.b16 %v1244
        %v1549 = vunpack.c.l.b16 %v1245
        %v1550 = vunpack.c.l.b16 %v1246
        %v1551 = vunpack.c.l.b16 %v1247
        %v1552 = vunpack.c.l.b16 %v1248
        %v1553 = vunpack.c.l.b16 %v1249
        %v1554 = vunpack.c.l.b16 %v1250
        %v1555 = vunpack.c.l.b16 %v1251
        %v1556 = vunpack.c.l.b16 %v1252
        %v1557 = vunpack.c.l.b16 %v1253
        %v1558 = vunpack.c.l.b16 %v1254
        %v1559 = vunpack.c.l.b16 %v1255
        %v1560 = vunpack.c.l.b16 %v1256
        %v1561 = vpack.c.b16 %v1538, %v1537
        %v1562 = vpack.c.b16 %v1540, %v1539
        %v1563 = vpack.c.b16 %v1542, %v1541
        %v1564 = vpack.c.b16 %v1544, %v1543
        %v1565 = vpack.c.b16 %v1546, %v1545
        %v1566 = vpack.c.b16 %v1548, %v1547
        %v1567 = vpack.c.b16 %v1550, %v1549
        %v1568 = vpack.c.b16 %v1552, %v1551
        %v1569 = vpack.c.b16 %v1554, %v1553
        %v1570 = vpack.c.b16 %v1556, %v1555
        %v1571 = vpack.c.b16 %v1558, %v1557
        %v1572 = vpack.c.b16 %v1560, %v1559
        %v1586 = vsel %vm863, %v1385, 0
        %v1589 = vsel %vm863, %v1386, 0
        %v1592 = vsel %vm863, %v1387, 0
        %v1595 = vsel %vm863, %v1388, 0
        %v1598 = vsel %vm863, %v1389, 0
        %v1601 = vsel %vm863, %v1390, 0
        %v1604 = vsel %vm863, %v1391, 0
        %v1607 = vsel %vm863, %v1392, 0
        %v1610 = vsel %vm863, %v1393, 0
        %v1613 = vsel %vm863, %v1394, 0
        %v1616 = vsel %vm863, %v1395, 0
        %v1619 = vsel %vm863, %v1396, 0
        %v1622 = vsel %vm863, %v1397, 0
        %v1625 = vsel %vm863, %v1398, 0
        %v1628 = vsel %vm863, %v1399, 0
        %v1631 = vsel %vm863, %v1400, 0
        %1633 = vmatprep.subr.bf16.mxu0 0
        %1634 = vmatpush1.bf16.msra.mxu0 %v1568
        %1635 = vmatprep.subr.bf16.mxu0 0
        %1636 = vmatpush1.bf16.msra.mxu0 %v1567
        %1637 = vmatprep.subr.bf16.mxu0 0
        %1638 = vmatpush1.bf16.msra.mxu0 %v1566
        %1639 = vmatprep.subr.bf16.mxu0 0
        %1640 = vmatpush1.bf16.msra.mxu0 %v1565
        %1641 = vmatprep.subr.bf16.mxu0 0
        %1642 = vmatpush1.bf16.msra.mxu0 %v1564
        %1643 = vmatprep.subr.bf16.mxu0 0
        %1644 = vmatpush1.bf16.msra.mxu0 %v1563
        %1645 = vmatprep.subr.bf16.mxu0 0
        %1646 = vmatpush1.bf16.msra.mxu0 %v1562
        %1647 = vmatprep.subr.bf16.mxu0 0
        %1648 = vmatpush1.bf16.msra.mxu0 %v1561
        %1649 = vmatprep.subr.bf16.mxu0 0
        %1650 = vmatpush2.bf16.msra.mxu0 0
        %1651 = vmatprep.subr.bf16.mxu0 0
        %1652 = vmatpush2.bf16.msra.mxu0 0
        %1653 = vmatprep.subr.bf16.mxu0 0
        %1654 = vmatpush2.bf16.msra.mxu0 0
        %1655 = vmatprep.subr.bf16.mxu0 0
        %1656 = vmatpush2.bf16.msra.mxu0 0
        %1657 = vmatprep.subr.bf16.mxu0 0
        %1658 = vmatpush2.bf16.msra.mxu0 %v1572
        %1659 = vmatprep.subr.bf16.mxu0 0
        %1660 = vmatpush2.bf16.msra.mxu0 %v1571
        %1661 = vmatprep.subr.bf16.mxu0 0
        %1662 = vmatpush2.bf16.msra.mxu0 %v1570
        %1663 = vmatprep.subr.bf16.mxu0 0
        %1664 = vmatpush2.bf16.msra.mxu0 %v1569
        %1665 = vmatprep.mubr.bf16.mxu0 %v1586
        %1666 = vmatmul.mubr.bf16.gmra.mxu0 %v1451
        %v1667 = vpop.f32.mrf.mxu0
        %v1668 = vadd.f32 0.0, %v1667
        %v1669 = vpop.f32.mrf.mxu0
        %v1670 = vpop.f32.mrf.mxu0
        %v1671 = vadd.f32 0.0, %v1670
        %v1672 = vpop.f32.mrf.mxu0
        %1673 = vmatprep.mubr.bf16.mxu0 %v1589
        %1674 = vmatmul.mubr.bf16.gmra.mxu0 %v1455
        %v1675 = vpop.f32.mrf.mxu0
        %v1676 = vadd.f32 0.0, %v1675
        %v1677 = vpop.f32.mrf.mxu0
        %v1678 = vpop.f32.mrf.mxu0
        %v1679 = vadd.f32 0.0, %v1678
        %v1680 = vpop.f32.mrf.mxu0
        %1681 = vmatprep.mubr.bf16.mxu0 %v1592
        %1682 = vmatmul.mubr.bf16.gmra.mxu0 %v1459
        %v1683 = vpop.f32.mrf.mxu0
        %v1684 = vadd.f32 0.0, %v1683
        %v1685 = vpop.f32.mrf.mxu0
        %v1686 = vpop.f32.mrf.mxu0
        %v1687 = vadd.f32 0.0, %v1686
        %v1688 = vpop.f32.mrf.mxu0
        %1689 = vmatprep.mubr.bf16.mxu0 %v1595
        %1690 = vmatmul.mubr.bf16.gmra.mxu0 %v1463
        %v1691 = vpop.f32.mrf.mxu0
        %v1692 = vadd.f32 0.0, %v1691
        %v1693 = vpop.f32.mrf.mxu0
        %v1694 = vpop.f32.mrf.mxu0
        %v1695 = vadd.f32 0.0, %v1694
        %v1696 = vpop.f32.mrf.mxu0
        %1697 = vmatprep.mubr.bf16.mxu0 %v1598
        %1698 = vmatmul.mubr.bf16.gmra.mxu0 %v1467
        %v1699 = vpop.f32.mrf.mxu0
        %v1700 = vadd.f32 0.0, %v1699
        %v1701 = vpop.f32.mrf.mxu0
        %v1702 = vpop.f32.mrf.mxu0
        %v1703 = vadd.f32 0.0, %v1702
        %v1704 = vpop.f32.mrf.mxu0
        %1705 = vmatprep.mubr.bf16.mxu0 %v1601
        %1706 = vmatmul.mubr.bf16.gmra.mxu0 %v1471
        %v1707 = vpop.f32.mrf.mxu0
        %v1708 = vadd.f32 0.0, %v1707
        %v1709 = vpop.f32.mrf.mxu0
        %v1710 = vpop.f32.mrf.mxu0
        %v1711 = vadd.f32 0.0, %v1710
        %v1712 = vpop.f32.mrf.mxu0
        %1713 = vmatprep.mubr.bf16.mxu0 %v1604
        %1714 = vmatmul.mubr.bf16.gmra.mxu0 %v1475
        %v1715 = vpop.f32.mrf.mxu0
        %v1716 = vadd.f32 0.0, %v1715
        %v1717 = vpop.f32.mrf.mxu0
        %v1718 = vpop.f32.mrf.mxu0
        %v1719 = vadd.f32 0.0, %v1718
        %v1720 = vpop.f32.mrf.mxu0
        %1721 = vmatprep.mubr.bf16.mxu0 %v1607
        %1722 = vmatmul.mubr.bf16.gmra.mxu0 %v1479
        %v1723 = vpop.f32.mrf.mxu0
        %v1724 = vadd.f32 0.0, %v1723
        %v1725 = vpop.f32.mrf.mxu0
        %v1726 = vpop.f32.mrf.mxu0
        %v1727 = vadd.f32 0.0, %v1726
        %v1728 = vpop.f32.mrf.mxu0
        %1729 = vmatprep.mubr.bf16.mxu0 %v1610
        %1730 = vmatmul.mubr.bf16.gmra.mxu0 %v1483
        %v1731 = vpop.f32.mrf.mxu0
        %v1732 = vadd.f32 0.0, %v1731
        %v1733 = vpop.f32.mrf.mxu0
        %v1734 = vpop.f32.mrf.mxu0
        %v1735 = vadd.f32 0.0, %v1734
        %v1736 = vpop.f32.mrf.mxu0
        %1737 = vmatprep.mubr.bf16.mxu0 %v1613
        %1738 = vmatmul.mubr.bf16.gmra.mxu0 %v1487
        %v1739 = vpop.f32.mrf.mxu0
        %v1740 = vadd.f32 0.0, %v1739
        %v1741 = vpop.f32.mrf.mxu0
        %v1742 = vpop.f32.mrf.mxu0
        %v1743 = vadd.f32 0.0, %v1742
        %v1744 = vpop.f32.mrf.mxu0
        %1745 = vmatprep.mubr.bf16.mxu0 %v1616
        %1746 = vmatmul.mubr.bf16.gmra.mxu0 %v1491
        %v1747 = vpop.f32.mrf.mxu0
        %v1748 = vadd.f32 0.0, %v1747
        %v1749 = vpop.f32.mrf.mxu0
        %v1750 = vpop.f32.mrf.mxu0
        %v1751 = vadd.f32 0.0, %v1750
        %v1752 = vpop.f32.mrf.mxu0
        %1753 = vmatprep.mubr.bf16.mxu0 %v1619
        %1754 = vmatmul.mubr.bf16.gmra.mxu0 %v1495
        %v1755 = vpop.f32.mrf.mxu0
        %v1756 = vadd.f32 0.0, %v1755
        %v1757 = vpop.f32.mrf.mxu0
        %v1758 = vpop.f32.mrf.mxu0
        %v1759 = vadd.f32 0.0, %v1758
        %v1760 = vpop.f32.mrf.mxu0
        %1761 = vmatprep.mubr.bf16.mxu0 %v1622
        %1762 = vmatmul.mubr.bf16.gmra.mxu0 %v1499
        %v1763 = vpop.f32.mrf.mxu0
        %v1764 = vadd.f32 0.0, %v1763
        %v1765 = vpop.f32.mrf.mxu0
        %v1766 = vpop.f32.mrf.mxu0
        %v1767 = vadd.f32 0.0, %v1766
        %v1768 = vpop.f32.mrf.mxu0
        %1769 = vmatprep.mubr.bf16.mxu0 %v1625
        %1770 = vmatmul.mubr.bf16.gmra.mxu0 %v1503
        %v1771 = vpop.f32.mrf.mxu0
        %v1772 = vadd.f32 0.0, %v1771
        %v1773 = vpop.f32.mrf.mxu0
        %v1774 = vpop.f32.mrf.mxu0
        %v1775 = vadd.f32 0.0, %v1774
        %v1776 = vpop.f32.mrf.mxu0
        %1777 = vmatprep.mubr.bf16.mxu0 %v1628
        %1778 = vmatmul.mubr.bf16.gmra.mxu0 %v1507
        %v1779 = vpop.f32.mrf.mxu0
        %v1780 = vadd.f32 0.0, %v1779
        %v1781 = vpop.f32.mrf.mxu0
        %v1782 = vpop.f32.mrf.mxu0
        %v1783 = vadd.f32 0.0, %v1782
        %v1784 = vpop.f32.mrf.mxu0
        %1785 = vmatprep.mubr.bf16.mxu0 %v1631
        %1786 = vmatmul.mubr.bf16.gmra.mxu0 %v1511
        %v1787 = vpop.f32.mrf.mxu0
        %v1788 = vadd.f32 0.0, %v1787
        %v1789 = vpop.f32.mrf.mxu0
        %v1790 = vpop.f32.mrf.mxu0
        %v1791 = vadd.f32 0.0, %v1790
        %v1792 = vpop.f32.mrf.mxu0
        %1793 = vdwg.mxu0
        %v1818 = vunpack.c.l.b16 %v952
        %v1819 = vunpack.c.l.b16 %v953
        %v1820 = vunpack.c.l.b16 %v954
        %v1821 = vunpack.c.l.b16 %v955
        %v1822 = vunpack.c.l.b16 %v956
        %v1823 = vunpack.c.l.b16 %v957
        %v1824 = vunpack.c.l.b16 %v958
        %v1825 = vunpack.c.l.b16 %v959
        %v1826 = vunpack.c.l.b16 %v960
        %v1827 = vunpack.c.l.b16 %v961
        %v1828 = vunpack.c.l.b16 %v962
        %v1829 = vunpack.c.l.b16 %v963
        %v1830 = vunpack.c.l.b16 %v964
        %v1831 = vunpack.c.l.b16 %v965
        %v1832 = vunpack.c.l.b16 %v966
        %v1833 = vunpack.c.l.b16 %v967
        %v1834 = vunpack.c.l.b16 %v968
        %v1835 = vunpack.c.l.b16 %v969
        %v1836 = vunpack.c.l.b16 %v970
        %v1837 = vunpack.c.l.b16 %v971
        %v1838 = vunpack.c.l.b16 %v972
        %v1839 = vunpack.c.l.b16 %v973
        %v1840 = vunpack.c.l.b16 %v974
        %v1841 = vunpack.c.l.b16 %v975
        %v1842 = vpack.c.b16 %v1819, %v1818
        %v1843 = vpack.c.b16 %v1821, %v1820
        %v1844 = vpack.c.b16 %v1823, %v1822
        %v1845 = vpack.c.b16 %v1825, %v1824
        %v1846 = vpack.c.b16 %v1827, %v1826
        %v1847 = vpack.c.b16 %v1829, %v1828
        %v1848 = vpack.c.b16 %v1831, %v1830
        %v1849 = vpack.c.b16 %v1833, %v1832
        %v1850 = vpack.c.b16 %v1835, %v1834
        %v1851 = vpack.c.b16 %v1837, %v1836
        %v1852 = vpack.c.b16 %v1839, %v1838
        %v1853 = vpack.c.b16 %v1841, %v1840
        %v1867 = vsel %vm863, %v1104, 0
        %v1870 = vsel %vm863, %v1105, 0
        %v1873 = vsel %vm863, %v1106, 0
        %v1876 = vsel %vm863, %v1107, 0
        %v1879 = vsel %vm863, %v1108, 0
        %v1882 = vsel %vm863, %v1109, 0
        %v1885 = vsel %vm863, %v1110, 0
        %v1888 = vsel %vm863, %v1111, 0
        %v1891 = vsel %vm863, %v1112, 0
        %v1894 = vsel %vm863, %v1113, 0
        %v1897 = vsel %vm863, %v1114, 0
        %v1900 = vsel %vm863, %v1115, 0
        %v1903 = vsel %vm863, %v1116, 0
        %v1906 = vsel %vm863, %v1117, 0
        %v1909 = vsel %vm863, %v1118, 0
        %v1912 = vsel %vm863, %v1119, 0
        %1914 = vmatprep.subr.bf16.mxu0 0
        %1915 = vmatpush1.bf16.msra.mxu0 %v1849
        %1916 = vmatprep.subr.bf16.mxu0 0
        %1917 = vmatpush1.bf16.msra.mxu0 %v1848
        %1918 = vmatprep.subr.bf16.mxu0 0
        %1919 = vmatpush1.bf16.msra.mxu0 %v1847
        %1920 = vmatprep.subr.bf16.mxu0 0
        %1921 = vmatpush1.bf16.msra.mxu0 %v1846
        %1922 = vmatprep.subr.bf16.mxu0 0
        %1923 = vmatpush1.bf16.msra.mxu0 %v1845
        %1924 = vmatprep.subr.bf16.mxu0 0
        %1925 = vmatpush1.bf16.msra.mxu0 %v1844
        %1926 = vmatprep.subr.bf16.mxu0 0
        %1927 = vmatpush1.bf16.msra.mxu0 %v1843
        %1928 = vmatprep.subr.bf16.mxu0 0
        %1929 = vmatpush1.bf16.msra.mxu0 %v1842
        %1930 = vmatprep.subr.bf16.mxu0 0
        %1931 = vmatpush2.bf16.msra.mxu0 0
        %1932 = vmatprep.subr.bf16.mxu0 0
        %1933 = vmatpush2.bf16.msra.mxu0 0
        %1934 = vmatprep.subr.bf16.mxu0 0
        %1935 = vmatpush2.bf16.msra.mxu0 0
        %1936 = vmatprep.subr.bf16.mxu0 0
        %1937 = vmatpush2.bf16.msra.mxu0 0
        %1938 = vmatprep.subr.bf16.mxu0 0
        %1939 = vmatpush2.bf16.msra.mxu0 %v1853
        %1940 = vmatprep.subr.bf16.mxu0 0
        %1941 = vmatpush2.bf16.msra.mxu0 %v1852
        %1942 = vmatprep.subr.bf16.mxu0 0
        %1943 = vmatpush2.bf16.msra.mxu0 %v1851
        %1944 = vmatprep.subr.bf16.mxu0 0
        %1945 = vmatpush2.bf16.msra.mxu0 %v1850
        %1946 = vmatprep.mubr.bf16.mxu0 %v1867
        %1947 = vmatmul.mubr.bf16.gmra.mxu0 %v1170
        %v1948 = vpop.f32.mrf.mxu0
        %v1949 = vadd.f32 %v1668, %v1948
        %v1950 = vpop.f32.mrf.mxu0
        %v1951 = vpop.f32.mrf.mxu0
        %v1952 = vadd.f32 %v1671, %v1951
        %v1953 = vpop.f32.mrf.mxu0
        %1954 = vmatprep.mubr.bf16.mxu0 %v1870
        %1955 = vmatmul.mubr.bf16.gmra.mxu0 %v1174
        %v1956 = vpop.f32.mrf.mxu0
        %v1957 = vadd.f32 %v1676, %v1956
        %v1958 = vpop.f32.mrf.mxu0
        %v1959 = vpop.f32.mrf.mxu0
        %v1960 = vadd.f32 %v1679, %v1959
        %v1961 = vpop.f32.mrf.mxu0
        %1962 = vmatprep.mubr.bf16.mxu0 %v1873
        %1963 = vmatmul.mubr.bf16.gmra.mxu0 %v1178
        %v1964 = vpop.f32.mrf.mxu0
        %v1965 = vadd.f32 %v1684, %v1964
        %v1966 = vpop.f32.mrf.mxu0
        %v1967 = vpop.f32.mrf.mxu0
        %v1968 = vadd.f32 %v1687, %v1967
        %v1969 = vpop.f32.mrf.mxu0
        %1970 = vmatprep.mubr.bf16.mxu0 %v1876
        %1971 = vmatmul.mubr.bf16.gmra.mxu0 %v1182
        %v1972 = vpop.f32.mrf.mxu0
        %v1973 = vadd.f32 %v1692, %v1972
        %v1974 = vpop.f32.mrf.mxu0
        %v1975 = vpop.f32.mrf.mxu0
        %v1976 = vadd.f32 %v1695, %v1975
        %v1977 = vpop.f32.mrf.mxu0
        %1978 = vmatprep.mubr.bf16.mxu0 %v1879
        %1979 = vmatmul.mubr.bf16.gmra.mxu0 %v1186
        %v1980 = vpop.f32.mrf.mxu0
        %v1981 = vadd.f32 %v1700, %v1980
        %v1982 = vpop.f32.mrf.mxu0
        %v1983 = vpop.f32.mrf.mxu0
        %v1984 = vadd.f32 %v1703, %v1983
        %v1985 = vpop.f32.mrf.mxu0
        %1986 = vmatprep.mubr.bf16.mxu0 %v1882
        %1987 = vmatmul.mubr.bf16.gmra.mxu0 %v1190
        %v1988 = vpop.f32.mrf.mxu0
        %v1989 = vadd.f32 %v1708, %v1988
        %v1990 = vpop.f32.mrf.mxu0
        %v1991 = vpop.f32.mrf.mxu0
        %v1992 = vadd.f32 %v1711, %v1991
        %v1993 = vpop.f32.mrf.mxu0
        %1994 = vmatprep.mubr.bf16.mxu0 %v1885
        %1995 = vmatmul.mubr.bf16.gmra.mxu0 %v1194
        %v1996 = vpop.f32.mrf.mxu0
        %v1997 = vadd.f32 %v1716, %v1996
        %v1998 = vpop.f32.mrf.mxu0
        %v1999 = vpop.f32.mrf.mxu0
        %v2000 = vadd.f32 %v1719, %v1999
        %v2001 = vpop.f32.mrf.mxu0
        %2002 = vmatprep.mubr.bf16.mxu0 %v1888
        %2003 = vmatmul.mubr.bf16.gmra.mxu0 %v1198
        %v2004 = vpop.f32.mrf.mxu0
        %v2005 = vadd.f32 %v1724, %v2004
        %v2006 = vpop.f32.mrf.mxu0
        %v2007 = vpop.f32.mrf.mxu0
        %v2008 = vadd.f32 %v1727, %v2007
        %v2009 = vpop.f32.mrf.mxu0
        %2010 = vmatprep.mubr.bf16.mxu0 %v1891
        %2011 = vmatmul.mubr.bf16.gmra.mxu0 %v1202
        %v2012 = vpop.f32.mrf.mxu0
        %v2013 = vadd.f32 %v1732, %v2012
        %v2014 = vpop.f32.mrf.mxu0
        %v2015 = vpop.f32.mrf.mxu0
        %v2016 = vadd.f32 %v1735, %v2015
        %v2017 = vpop.f32.mrf.mxu0
        %2018 = vmatprep.mubr.bf16.mxu0 %v1894
        %2019 = vmatmul.mubr.bf16.gmra.mxu0 %v1206
        %v2020 = vpop.f32.mrf.mxu0
        %v2021 = vadd.f32 %v1740, %v2020
        %v2022 = vpop.f32.mrf.mxu0
        %v2023 = vpop.f32.mrf.mxu0
        %v2024 = vadd.f32 %v1743, %v2023
        %v2025 = vpop.f32.mrf.mxu0
        %2026 = vmatprep.mubr.bf16.mxu0 %v1897
        %2027 = vmatmul.mubr.bf16.gmra.mxu0 %v1210
        %v2028 = vpop.f32.mrf.mxu0
        %v2029 = vadd.f32 %v1748, %v2028
        %v2030 = vpop.f32.mrf.mxu0
        %v2031 = vpop.f32.mrf.mxu0
        %v2032 = vadd.f32 %v1751, %v2031
        %v2033 = vpop.f32.mrf.mxu0
        %2034 = vmatprep.mubr.bf16.mxu0 %v1900
        %2035 = vmatmul.mubr.bf16.gmra.mxu0 %v1214
        %v2036 = vpop.f32.mrf.mxu0
        %v2037 = vadd.f32 %v1756, %v2036
        %v2038 = vpop.f32.mrf.mxu0
        %v2039 = vpop.f32.mrf.mxu0
        %v2040 = vadd.f32 %v1759, %v2039
        %v2041 = vpop.f32.mrf.mxu0
        %2042 = vmatprep.mubr.bf16.mxu0 %v1903
        %2043 = vmatmul.mubr.bf16.gmra.mxu0 %v1218
        %v2044 = vpop.f32.mrf.mxu0
        %v2045 = vadd.f32 %v1764, %v2044
        %v2046 = vpop.f32.mrf.mxu0
        %v2047 = vpop.f32.mrf.mxu0
        %v2048 = vadd.f32 %v1767, %v2047
        %v2049 = vpop.f32.mrf.mxu0
        %2050 = vmatprep.mubr.bf16.mxu0 %v1906
        %2051 = vmatmul.mubr.bf16.gmra.mxu0 %v1222
        %v2052 = vpop.f32.mrf.mxu0
        %v2053 = vadd.f32 %v1772, %v2052
        %v2054 = vpop.f32.mrf.mxu0
        %v2055 = vpop.f32.mrf.mxu0
        %v2056 = vadd.f32 %v1775, %v2055
        %v2057 = vpop.f32.mrf.mxu0
        %2058 = vmatprep.mubr.bf16.mxu0 %v1909
        %2059 = vmatmul.mubr.bf16.gmra.mxu0 %v1226
        %v2060 = vpop.f32.mrf.mxu0
        %v2061 = vadd.f32 %v1780, %v2060
        %v2062 = vpop.f32.mrf.mxu0
        %v2063 = vpop.f32.mrf.mxu0
        %v2064 = vadd.f32 %v1783, %v2063
        %v2065 = vpop.f32.mrf.mxu0
        %2066 = vmatprep.mubr.bf16.mxu0 %v1912
        %2067 = vmatmul.mubr.bf16.gmra.mxu0 %v1230
        %v2068 = vpop.f32.mrf.mxu0
        %v2069 = vadd.f32 %v1788, %v2068
        %v2070 = vpop.f32.mrf.mxu0
        %v2071 = vpop.f32.mrf.mxu0
        %v2072 = vadd.f32 %v1791, %v2071
        %v2073 = vpop.f32.mrf.mxu0
        %2074 = vdwg.mxu0
        %s2075 = scalar_lea.vmem %s5, 192
        %v2076 = vld [vmem:[%s2075] sm:$0xf]
        %v2077 = vld [vmem:[%s2075 + $0x4] sm:$0xf]
        %v2078 = vld [vmem:[%s2075 + $0x8] sm:$0xf]
        %v2079 = vld [vmem:[%s2075 + $0xc] sm:$0xf]
        %v2080 = vld [vmem:[%s2075 + $0x10] sm:$0xf]
        %v2081 = vld [vmem:[%s2075 + $0x14] sm:$0xf]
        %v2082 = vld [vmem:[%s2075 + $0x18] sm:$0xf]
        %v2083 = vld [vmem:[%s2075 + $0x1c] sm:$0xf]
        %v2084 = vld [vmem:[%s2075 + $0x20] sm:$0xf]
        %v2085 = vld [vmem:[%s2075 + $0x24] sm:$0xf]
        %v2086 = vld [vmem:[%s2075 + $0x28] sm:$0xf]
        %v2087 = vld [vmem:[%s2075 + $0x2c] sm:$0xf]
        %v2088 = vld [vmem:[%s2075 + $0x30] sm:$0xf]
        %v2089 = vld [vmem:[%s2075 + $0x34] sm:$0xf]
        %v2090 = vld [vmem:[%s2075 + $0x38] sm:$0xf]
        %v2091 = vld [vmem:[%s2075 + $0x3c] sm:$0xf]
        %v2092 = vld [vmem:[%s2075 + $0x40] sm:$0xf]
        %v2093 = vld [vmem:[%s2075 + $0x44] sm:$0xf]
        %v2094 = vld [vmem:[%s2075 + $0x48] sm:$0xf]
        %v2095 = vld [vmem:[%s2075 + $0x4c] sm:$0xf]
        %v2096 = vld [vmem:[%s2075 + $0x50] sm:$0xf]
        %v2097 = vld [vmem:[%s2075 + $0x54] sm:$0xf]
        %v2098 = vld [vmem:[%s2075 + $0x58] sm:$0xf]
        %v2099 = vld [vmem:[%s2075 + $0x5c] sm:$0xf]
        %s2100 = scalar_lea.vmem [#allocation2], 48
        %v2101 = vld [vmem:[%s2100] sm:$0xff]
        %v2102 = vld [vmem:[%s2100 + $0x8] sm:$0xff]
        %v2103 = vld [vmem:[%s2100 + $0x18] sm:$0xff]
        %v2104 = vld [vmem:[%s2100 + $0x20] sm:$0xff]
        %v2105 = vld [vmem:[%s2100 + $0x30] sm:$0xff]
        %v2106 = vld [vmem:[%s2100 + $0x38] sm:$0xff]
        %v2107 = vld [vmem:[%s2100 + $0x48] sm:$0xff]
        %v2108 = vld [vmem:[%s2100 + $0x50] sm:$0xff]
        %v2109 = vld [vmem:[%s2100 + $0x60] sm:$0xff]
        %v2110 = vld [vmem:[%s2100 + $0x68] sm:$0xff]
        %v2111 = vld [vmem:[%s2100 + $0x78] sm:$0xff]
        %v2112 = vld [vmem:[%s2100 + $0x80] sm:$0xff]
        %v2113 = vld [vmem:[%s2100 + $0x90] sm:$0xff]
        %v2114 = vld [vmem:[%s2100 + $0x98] sm:$0xff]
        %v2115 = vld [vmem:[%s2100 + $0xa8] sm:$0xff]
        %v2116 = vld [vmem:[%s2100 + $0xb0] sm:$0xff]
        %v2117 = vld [vmem:[%s2100 + $0xc0] sm:$0xff]
        %v2118 = vld [vmem:[%s2100 + $0xc8] sm:$0xff]
        %v2119 = vld [vmem:[%s2100 + $0xd8] sm:$0xff]
        %v2120 = vld [vmem:[%s2100 + $0xe0] sm:$0xff]
        %v2121 = vld [vmem:[%s2100 + $0xf0] sm:$0xff]
        %v2122 = vld [vmem:[%s2100 + $0xf8] sm:$0xff]
        %v2123 = vld [vmem:[%s2100 + $0x108] sm:$0xff]
        %v2124 = vld [vmem:[%s2100 + $0x110] sm:$0xff]
        %v2125 = vld [vmem:[%s2100 + $0x120] sm:$0xff]
        %v2126 = vld [vmem:[%s2100 + $0x128] sm:$0xff]
        %v2127 = vld [vmem:[%s2100 + $0x138] sm:$0xff]
        %v2128 = vld [vmem:[%s2100 + $0x140] sm:$0xff]
        %v2129 = vld [vmem:[%s2100 + $0x150] sm:$0xff]
        %v2130 = vld [vmem:[%s2100 + $0x158] sm:$0xff]
        %v2131 = vld [vmem:[%s2100 + $0x168] sm:$0xff]
        %v2132 = vld [vmem:[%s2100 + $0x170] sm:$0xff]
        %v2133 = vpack.c.bf16 %v2102, %v2101
        %v2134 = vpack.c.bf16 %v2104, %v2103
        %v2135 = vpack.c.bf16 %v2106, %v2105
        %v2136 = vpack.c.bf16 %v2108, %v2107
        %v2137 = vpack.c.bf16 %v2110, %v2109
        %v2138 = vpack.c.bf16 %v2112, %v2111
        %v2139 = vpack.c.bf16 %v2114, %v2113
        %v2140 = vpack.c.bf16 %v2116, %v2115
        %v2141 = vpack.c.bf16 %v2118, %v2117
        %v2142 = vpack.c.bf16 %v2120, %v2119
        %v2143 = vpack.c.bf16 %v2122, %v2121
        %v2144 = vpack.c.bf16 %v2124, %v2123
        %v2145 = vpack.c.bf16 %v2126, %v2125
        %v2146 = vpack.c.bf16 %v2128, %v2127
        %v2147 = vpack.c.bf16 %v2130, %v2129
        %v2148 = vpack.c.bf16 %v2132, %v2131
        %v2149 = vld [vmem:[%s2100 + $0x1] sm:$0xff]
        %v2150 = vld [vmem:[%s2100 + $0x9] sm:$0xff]
        %v2151 = vld [vmem:[%s2100 + $0x19] sm:$0xff]
        %v2152 = vld [vmem:[%s2100 + $0x21] sm:$0xff]
        %v2153 = vld [vmem:[%s2100 + $0x31] sm:$0xff]
        %v2154 = vld [vmem:[%s2100 + $0x39] sm:$0xff]
        %v2155 = vld [vmem:[%s2100 + $0x49] sm:$0xff]
        %v2156 = vld [vmem:[%s2100 + $0x51] sm:$0xff]
        %v2157 = vld [vmem:[%s2100 + $0x61] sm:$0xff]
        %v2158 = vld [vmem:[%s2100 + $0x69] sm:$0xff]
        %v2159 = vld [vmem:[%s2100 + $0x79] sm:$0xff]
        %v2160 = vld [vmem:[%s2100 + $0x81] sm:$0xff]
        %v2161 = vld [vmem:[%s2100 + $0x91] sm:$0xff]
        %v2162 = vld [vmem:[%s2100 + $0x99] sm:$0xff]
        %v2163 = vld [vmem:[%s2100 + $0xa9] sm:$0xff]
        %v2164 = vld [vmem:[%s2100 + $0xb1] sm:$0xff]
        %v2165 = vld [vmem:[%s2100 + $0xc1] sm:$0xff]
        %v2166 = vld [vmem:[%s2100 + $0xc9] sm:$0xff]
        %v2167 = vld [vmem:[%s2100 + $0xd9] sm:$0xff]
        %v2168 = vld [vmem:[%s2100 + $0xe1] sm:$0xff]
        %v2169 = vld [vmem:[%s2100 + $0xf1] sm:$0xff]
        %v2170 = vld [vmem:[%s2100 + $0xf9] sm:$0xff]
        %v2171 = vld [vmem:[%s2100 + $0x109] sm:$0xff]
        %v2172 = vld [vmem:[%s2100 + $0x111] sm:$0xff]
        %v2173 = vld [vmem:[%s2100 + $0x121] sm:$0xff]
        %v2174 = vld [vmem:[%s2100 + $0x129] sm:$0xff]
        %v2175 = vld [vmem:[%s2100 + $0x139] sm:$0xff]
        %v2176 = vld [vmem:[%s2100 + $0x141] sm:$0xff]
        %v2177 = vld [vmem:[%s2100 + $0x151] sm:$0xff]
        %v2178 = vld [vmem:[%s2100 + $0x159] sm:$0xff]
        %v2179 = vld [vmem:[%s2100 + $0x169] sm:$0xff]
        %v2180 = vld [vmem:[%s2100 + $0x171] sm:$0xff]
        %v2181 = vpack.c.bf16 %v2150, %v2149
        %v2182 = vpack.c.bf16 %v2152, %v2151
        %v2183 = vpack.c.bf16 %v2154, %v2153
        %v2184 = vpack.c.bf16 %v2156, %v2155
        %v2185 = vpack.c.bf16 %v2158, %v2157
        %v2186 = vpack.c.bf16 %v2160, %v2159
        %v2187 = vpack.c.bf16 %v2162, %v2161
        %v2188 = vpack.c.bf16 %v2164, %v2163
        %v2189 = vpack.c.bf16 %v2166, %v2165
        %v2190 = vpack.c.bf16 %v2168, %v2167
        %v2191 = vpack.c.bf16 %v2170, %v2169
        %v2192 = vpack.c.bf16 %v2172, %v2171
        %v2193 = vpack.c.bf16 %v2174, %v2173
        %v2194 = vpack.c.bf16 %v2176, %v2175
        %v2195 = vpack.c.bf16 %v2178, %v2177
        %v2196 = vpack.c.bf16 %v2180, %v2179
        %v2197 = vld [vmem:[%s2100 + $0x2] sm:$0xff]
        %v2198 = vld [vmem:[%s2100 + $0xa] sm:$0xff]
        %v2199 = vld [vmem:[%s2100 + $0x1a] sm:$0xff]
        %v2200 = vld [vmem:[%s2100 + $0x22] sm:$0xff]
        %v2201 = vld [vmem:[%s2100 + $0x32] sm:$0xff]
        %v2202 = vld [vmem:[%s2100 + $0x3a] sm:$0xff]
        %v2203 = vld [vmem:[%s2100 + $0x4a] sm:$0xff]
        %v2204 = vld [vmem:[%s2100 + $0x52] sm:$0xff]
        %v2205 = vld [vmem:[%s2100 + $0x62] sm:$0xff]
        %v2206 = vld [vmem:[%s2100 + $0x6a] sm:$0xff]
        %v2207 = vld [vmem:[%s2100 + $0x7a] sm:$0xff]
        %v2208 = vld [vmem:[%s2100 + $0x82] sm:$0xff]
        %v2209 = vld [vmem:[%s2100 + $0x92] sm:$0xff]
        %v2210 = vld [vmem:[%s2100 + $0x9a] sm:$0xff]
        %v2211 = vld [vmem:[%s2100 + $0xaa] sm:$0xff]
        %v2212 = vld [vmem:[%s2100 + $0xb2] sm:$0xff]
        %v2213 = vld [vmem:[%s2100 + $0xc2] sm:$0xff]
        %v2214 = vld [vmem:[%s2100 + $0xca] sm:$0xff]
        %v2215 = vld [vmem:[%s2100 + $0xda] sm:$0xff]
        %v2216 = vld [vmem:[%s2100 + $0xe2] sm:$0xff]
        %v2217 = vld [vmem:[%s2100 + $0xf2] sm:$0xff]
        %v2218 = vld [vmem:[%s2100 + $0xfa] sm:$0xff]
        %v2219 = vld [vmem:[%s2100 + $0x10a] sm:$0xff]
        %v2220 = vld [vmem:[%s2100 + $0x112] sm:$0xff]
        %v2221 = vld [vmem:[%s2100 + $0x122] sm:$0xff]
        %v2222 = vld [vmem:[%s2100 + $0x12a] sm:$0xff]
        %v2223 = vld [vmem:[%s2100 + $0x13a] sm:$0xff]
        %v2224 = vld [vmem:[%s2100 + $0x142] sm:$0xff]
        %v2225 = vld [vmem:[%s2100 + $0x152] sm:$0xff]
        %v2226 = vld [vmem:[%s2100 + $0x15a] sm:$0xff]
        %v2227 = vld [vmem:[%s2100 + $0x16a] sm:$0xff]
        %v2228 = vld [vmem:[%s2100 + $0x172] sm:$0xff]
        %v2229 = vpack.c.bf16 %v2198, %v2197
        %v2230 = vpack.c.bf16 %v2200, %v2199
        %v2231 = vpack.c.bf16 %v2202, %v2201
        %v2232 = vpack.c.bf16 %v2204, %v2203
        %v2233 = vpack.c.bf16 %v2206, %v2205
        %v2234 = vpack.c.bf16 %v2208, %v2207
        %v2235 = vpack.c.bf16 %v2210, %v2209
        %v2236 = vpack.c.bf16 %v2212, %v2211
        %v2237 = vpack.c.bf16 %v2214, %v2213
        %v2238 = vpack.c.bf16 %v2216, %v2215
        %v2239 = vpack.c.bf16 %v2218, %v2217
        %v2240 = vpack.c.bf16 %v2220, %v2219
        %v2241 = vpack.c.bf16 %v2222, %v2221
        %v2242 = vpack.c.bf16 %v2224, %v2223
        %v2243 = vpack.c.bf16 %v2226, %v2225
        %v2244 = vpack.c.bf16 %v2228, %v2227
        %2261 = vrot.lane.b32.xlu0 %v2181, 64
        %v2262 = vpop.permute.xlu0 %2261
        %2263 = vrot.lane.b32.xlu0 %v2182, 64
        %v2264 = vpop.permute.xlu0 %2263
        %2265 = vrot.lane.b32.xlu0 %v2183, 64
        %v2266 = vpop.permute.xlu0 %2265
        %2267 = vrot.lane.b32.xlu0 %v2184, 64
        %v2268 = vpop.permute.xlu0 %2267
        %2269 = vrot.lane.b32.xlu0 %v2185, 64
        %v2270 = vpop.permute.xlu0 %2269
        %2271 = vrot.lane.b32.xlu0 %v2186, 64
        %v2272 = vpop.permute.xlu0 %2271
        %2273 = vrot.lane.b32.xlu0 %v2187, 64
        %v2274 = vpop.permute.xlu0 %2273
        %2275 = vrot.lane.b32.xlu0 %v2188, 64
        %v2276 = vpop.permute.xlu0 %2275
        %2277 = vrot.lane.b32.xlu0 %v2189, 64
        %v2278 = vpop.permute.xlu0 %2277
        %2279 = vrot.lane.b32.xlu0 %v2190, 64
        %v2280 = vpop.permute.xlu0 %2279
        %2281 = vrot.lane.b32.xlu0 %v2191, 64
        %v2282 = vpop.permute.xlu0 %2281
        %2283 = vrot.lane.b32.xlu0 %v2192, 64
        %v2284 = vpop.permute.xlu0 %2283
        %2285 = vrot.lane.b32.xlu0 %v2193, 64
        %v2286 = vpop.permute.xlu0 %2285
        %2287 = vrot.lane.b32.xlu0 %v2194, 64
        %v2288 = vpop.permute.xlu0 %2287
        %2289 = vrot.lane.b32.xlu0 %v2195, 64
        %v2290 = vpop.permute.xlu0 %2289
        %2291 = vrot.lane.b32.xlu0 %v2196, 64
        %v2292 = vpop.permute.xlu0 %2291
        %v2295 = vsel %vm863, %v2133, %v2262
        %v2299 = vsel %vm863, %v2134, %v2264
        %v2303 = vsel %vm863, %v2135, %v2266
        %v2307 = vsel %vm863, %v2136, %v2268
        %v2311 = vsel %vm863, %v2137, %v2270
        %v2315 = vsel %vm863, %v2138, %v2272
        %v2319 = vsel %vm863, %v2139, %v2274
        %v2323 = vsel %vm863, %v2140, %v2276
        %v2327 = vsel %vm863, %v2141, %v2278
        %v2331 = vsel %vm863, %v2142, %v2280
        %v2335 = vsel %vm863, %v2143, %v2282
        %v2339 = vsel %vm863, %v2144, %v2284
        %v2343 = vsel %vm863, %v2145, %v2286
        %v2347 = vsel %vm863, %v2146, %v2288
        %v2351 = vsel %vm863, %v2147, %v2290
        %v2355 = vsel %vm863, %v2148, %v2292
        %v2381 = vunpack.c.l.b16 %v2076
        %v2382 = vunpack.c.l.b16 %v2077
        %v2383 = vunpack.c.l.b16 %v2078
        %v2384 = vunpack.c.l.b16 %v2079
        %v2385 = vunpack.c.l.b16 %v2080
        %v2386 = vunpack.c.l.b16 %v2081
        %v2387 = vunpack.c.l.b16 %v2082
        %v2388 = vunpack.c.l.b16 %v2083
        %v2389 = vunpack.c.l.b16 %v2084
        %v2390 = vunpack.c.l.b16 %v2085
        %v2391 = vunpack.c.l.b16 %v2086
        %v2392 = vunpack.c.l.b16 %v2087
        %v2393 = vunpack.c.l.b16 %v2088
        %v2394 = vunpack.c.l.b16 %v2089
        %v2395 = vunpack.c.l.b16 %v2090
        %v2396 = vunpack.c.l.b16 %v2091
        %v2397 = vunpack.c.l.b16 %v2092
        %v2398 = vunpack.c.l.b16 %v2093
        %v2399 = vunpack.c.l.b16 %v2094
        %v2400 = vunpack.c.l.b16 %v2095
        %v2401 = vunpack.c.l.b16 %v2096
        %v2402 = vunpack.c.l.b16 %v2097
        %v2403 = vunpack.c.l.b16 %v2098
        %v2404 = vunpack.c.l.b16 %v2099
        %v2405 = vpack.c.b16 %v2382, %v2381
        %v2406 = vpack.c.b16 %v2384, %v2383
        %v2407 = vpack.c.b16 %v2386, %v2385
        %v2408 = vpack.c.b16 %v2388, %v2387
        %v2409 = vpack.c.b16 %v2390, %v2389
        %v2410 = vpack.c.b16 %v2392, %v2391
        %v2411 = vpack.c.b16 %v2394, %v2393
        %v2412 = vpack.c.b16 %v2396, %v2395
        %v2413 = vpack.c.b16 %v2398, %v2397
        %v2414 = vpack.c.b16 %v2400, %v2399
        %v2415 = vpack.c.b16 %v2402, %v2401
        %v2416 = vpack.c.b16 %v2404, %v2403
        %v2430 = vsel %vm863, %v2229, 0
        %v2433 = vsel %vm863, %v2230, 0
        %v2436 = vsel %vm863, %v2231, 0
        %v2439 = vsel %vm863, %v2232, 0
        %v2442 = vsel %vm863, %v2233, 0
        %v2445 = vsel %vm863, %v2234, 0
        %v2448 = vsel %vm863, %v2235, 0
        %v2451 = vsel %vm863, %v2236, 0
        %v2454 = vsel %vm863, %v2237, 0
        %v2457 = vsel %vm863, %v2238, 0
        %v2460 = vsel %vm863, %v2239, 0
        %v2463 = vsel %vm863, %v2240, 0
        %v2466 = vsel %vm863, %v2241, 0
        %v2469 = vsel %vm863, %v2242, 0
        %v2472 = vsel %vm863, %v2243, 0
        %v2475 = vsel %vm863, %v2244, 0
        %2477 = vmatprep.subr.bf16.mxu0 0
        %2478 = vmatpush1.bf16.msra.mxu0 %v2412
        %2479 = vmatprep.subr.bf16.mxu0 0
        %2480 = vmatpush1.bf16.msra.mxu0 %v2411
        %2481 = vmatprep.subr.bf16.mxu0 0
        %2482 = vmatpush1.bf16.msra.mxu0 %v2410
        %2483 = vmatprep.subr.bf16.mxu0 0
        %2484 = vmatpush1.bf16.msra.mxu0 %v2409
        %2485 = vmatprep.subr.bf16.mxu0 0
        %2486 = vmatpush1.bf16.msra.mxu0 %v2408
        %2487 = vmatprep.subr.bf16.mxu0 0
        %2488 = vmatpush1.bf16.msra.mxu0 %v2407
        %2489 = vmatprep.subr.bf16.mxu0 0
        %2490 = vmatpush1.bf16.msra.mxu0 %v2406
        %2491 = vmatprep.subr.bf16.mxu0 0
        %2492 = vmatpush1.bf16.msra.mxu0 %v2405
        %2493 = vmatprep.subr.bf16.mxu0 0
        %2494 = vmatpush2.bf16.msra.mxu0 0
        %2495 = vmatprep.subr.bf16.mxu0 0
        %2496 = vmatpush2.bf16.msra.mxu0 0
        %2497 = vmatprep.subr.bf16.mxu0 0
        %2498 = vmatpush2.bf16.msra.mxu0 0
        %2499 = vmatprep.subr.bf16.mxu0 0
        %2500 = vmatpush2.bf16.msra.mxu0 0
        %2501 = vmatprep.subr.bf16.mxu0 0
        %2502 = vmatpush2.bf16.msra.mxu0 %v2416
        %2503 = vmatprep.subr.bf16.mxu0 0
        %2504 = vmatpush2.bf16.msra.mxu0 %v2415
        %2505 = vmatprep.subr.bf16.mxu0 0
        %2506 = vmatpush2.bf16.msra.mxu0 %v2414
        %2507 = vmatprep.subr.bf16.mxu0 0
        %2508 = vmatpush2.bf16.msra.mxu0 %v2413
        %2509 = vmatprep.mubr.bf16.mxu0 %v2430
        %2510 = vmatmul.mubr.bf16.gmra.mxu0 %v2295
        %v2511 = vpop.f32.mrf.mxu0
        %v2512 = vadd.f32 0.0, %v2511
        %v2513 = vpop.f32.mrf.mxu0
        %v2514 = vpop.f32.mrf.mxu0
        %v2515 = vadd.f32 0.0, %v2514
        %v2516 = vpop.f32.mrf.mxu0
        %2517 = vmatprep.mubr.bf16.mxu0 %v2433
        %2518 = vmatmul.mubr.bf16.gmra.mxu0 %v2299
        %v2519 = vpop.f32.mrf.mxu0
        %v2520 = vadd.f32 0.0, %v2519
        %v2521 = vpop.f32.mrf.mxu0
        %v2522 = vpop.f32.mrf.mxu0
        %v2523 = vadd.f32 0.0, %v2522
        %v2524 = vpop.f32.mrf.mxu0
        %2525 = vmatprep.mubr.bf16.mxu0 %v2436
        %2526 = vmatmul.mubr.bf16.gmra.mxu0 %v2303
        %v2527 = vpop.f32.mrf.mxu0
        %v2528 = vadd.f32 0.0, %v2527
        %v2529 = vpop.f32.mrf.mxu0
        %v2530 = vpop.f32.mrf.mxu0
        %v2531 = vadd.f32 0.0, %v2530
        %v2532 = vpop.f32.mrf.mxu0
        %2533 = vmatprep.mubr.bf16.mxu0 %v2439
        %2534 = vmatmul.mubr.bf16.gmra.mxu0 %v2307
        %v2535 = vpop.f32.mrf.mxu0
        %v2536 = vadd.f32 0.0, %v2535
        %v2537 = vpop.f32.mrf.mxu0
        %v2538 = vpop.f32.mrf.mxu0
        %v2539 = vadd.f32 0.0, %v2538
        %v2540 = vpop.f32.mrf.mxu0
        %2541 = vmatprep.mubr.bf16.mxu0 %v2442
        %2542 = vmatmul.mubr.bf16.gmra.mxu0 %v2311
        %v2543 = vpop.f32.mrf.mxu0
        %v2544 = vadd.f32 0.0, %v2543
        %v2545 = vpop.f32.mrf.mxu0
        %v2546 = vpop.f32.mrf.mxu0
        %v2547 = vadd.f32 0.0, %v2546
        %v2548 = vpop.f32.mrf.mxu0
        %2549 = vmatprep.mubr.bf16.mxu0 %v2445
        %2550 = vmatmul.mubr.bf16.gmra.mxu0 %v2315
        %v2551 = vpop.f32.mrf.mxu0
        %v2552 = vadd.f32 0.0, %v2551
        %v2553 = vpop.f32.mrf.mxu0
        %v2554 = vpop.f32.mrf.mxu0
        %v2555 = vadd.f32 0.0, %v2554
        %v2556 = vpop.f32.mrf.mxu0
        %2557 = vmatprep.mubr.bf16.mxu0 %v2448
        %2558 = vmatmul.mubr.bf16.gmra.mxu0 %v2319
        %v2559 = vpop.f32.mrf.mxu0
        %v2560 = vadd.f32 0.0, %v2559
        %v2561 = vpop.f32.mrf.mxu0
        %v2562 = vpop.f32.mrf.mxu0
        %v2563 = vadd.f32 0.0, %v2562
        %v2564 = vpop.f32.mrf.mxu0
        %2565 = vmatprep.mubr.bf16.mxu0 %v2451
        %2566 = vmatmul.mubr.bf16.gmra.mxu0 %v2323
        %v2567 = vpop.f32.mrf.mxu0
        %v2568 = vadd.f32 0.0, %v2567
        %v2569 = vpop.f32.mrf.mxu0
        %v2570 = vpop.f32.mrf.mxu0
        %v2571 = vadd.f32 0.0, %v2570
        %v2572 = vpop.f32.mrf.mxu0
        %2573 = vmatprep.mubr.bf16.mxu0 %v2454
        %2574 = vmatmul.mubr.bf16.gmra.mxu0 %v2327
        %v2575 = vpop.f32.mrf.mxu0
        %v2576 = vadd.f32 0.0, %v2575
        %v2577 = vpop.f32.mrf.mxu0
        %v2578 = vpop.f32.mrf.mxu0
        %v2579 = vadd.f32 0.0, %v2578
        %v2580 = vpop.f32.mrf.mxu0
        %2581 = vmatprep.mubr.bf16.mxu0 %v2457
        %2582 = vmatmul.mubr.bf16.gmra.mxu0 %v2331
        %v2583 = vpop.f32.mrf.mxu0
        %v2584 = vadd.f32 0.0, %v2583
        %v2585 = vpop.f32.mrf.mxu0
        %v2586 = vpop.f32.mrf.mxu0
        %v2587 = vadd.f32 0.0, %v2586
        %v2588 = vpop.f32.mrf.mxu0
        %2589 = vmatprep.mubr.bf16.mxu0 %v2460
        %2590 = vmatmul.mubr.bf16.gmra.mxu0 %v2335
        %v2591 = vpop.f32.mrf.mxu0
        %v2592 = vadd.f32 0.0, %v2591
        %v2593 = vpop.f32.mrf.mxu0
        %v2594 = vpop.f32.mrf.mxu0
        %v2595 = vadd.f32 0.0, %v2594
        %v2596 = vpop.f32.mrf.mxu0
        %2597 = vmatprep.mubr.bf16.mxu0 %v2463
        %2598 = vmatmul.mubr.bf16.gmra.mxu0 %v2339
        %v2599 = vpop.f32.mrf.mxu0
        %v2600 = vadd.f32 0.0, %v2599
        %v2601 = vpop.f32.mrf.mxu0
        %v2602 = vpop.f32.mrf.mxu0
        %v2603 = vadd.f32 0.0, %v2602
        %v2604 = vpop.f32.mrf.mxu0
        %2605 = vmatprep.mubr.bf16.mxu0 %v2466
        %2606 = vmatmul.mubr.bf16.gmra.mxu0 %v2343
        %v2607 = vpop.f32.mrf.mxu0
        %v2608 = vadd.f32 0.0, %v2607
        %v2609 = vpop.f32.mrf.mxu0
        %v2610 = vpop.f32.mrf.mxu0
        %v2611 = vadd.f32 0.0, %v2610
        %v2612 = vpop.f32.mrf.mxu0
        %2613 = vmatprep.mubr.bf16.mxu0 %v2469
        %2614 = vmatmul.mubr.bf16.gmra.mxu0 %v2347
        %v2615 = vpop.f32.mrf.mxu0
        %v2616 = vadd.f32 0.0, %v2615
        %v2617 = vpop.f32.mrf.mxu0
        %v2618 = vpop.f32.mrf.mxu0
        %v2619 = vadd.f32 0.0, %v2618
        %v2620 = vpop.f32.mrf.mxu0
        %2621 = vmatprep.mubr.bf16.mxu0 %v2472
        %2622 = vmatmul.mubr.bf16.gmra.mxu0 %v2351
        %v2623 = vpop.f32.mrf.mxu0
        %v2624 = vadd.f32 0.0, %v2623
        %v2625 = vpop.f32.mrf.mxu0
        %v2626 = vpop.f32.mrf.mxu0
        %v2627 = vadd.f32 0.0, %v2626
        %v2628 = vpop.f32.mrf.mxu0
        %2629 = vmatprep.mubr.bf16.mxu0 %v2475
        %2630 = vmatmul.mubr.bf16.gmra.mxu0 %v2355
        %v2631 = vpop.f32.mrf.mxu0
        %v2632 = vadd.f32 0.0, %v2631
        %v2633 = vpop.f32.mrf.mxu0
        %v2634 = vpop.f32.mrf.mxu0
        %v2635 = vadd.f32 0.0, %v2634
        %v2636 = vpop.f32.mrf.mxu0
        %2637 = vdwg.mxu0
        %v2638 = vadd.f32 %v1949, %v2512
        %v2639 = vadd.f32 %v1952, %v2515
        %v2640 = vadd.f32 %v1957, %v2520
        %v2641 = vadd.f32 %v1960, %v2523
        %v2642 = vadd.f32 %v1965, %v2528
        %v2643 = vadd.f32 %v1968, %v2531
        %v2644 = vadd.f32 %v1973, %v2536
        %v2645 = vadd.f32 %v1976, %v2539
        %v2646 = vadd.f32 %v1981, %v2544
        %v2647 = vadd.f32 %v1984, %v2547
        %v2648 = vadd.f32 %v1989, %v2552
        %v2649 = vadd.f32 %v1992, %v2555
        %v2650 = vadd.f32 %v1997, %v2560
        %v2651 = vadd.f32 %v2000, %v2563
        %v2652 = vadd.f32 %v2005, %v2568
        %v2653 = vadd.f32 %v2008, %v2571
        %v2654 = vadd.f32 %v2013, %v2576
        %v2655 = vadd.f32 %v2016, %v2579
        %v2656 = vadd.f32 %v2021, %v2584
        %v2657 = vadd.f32 %v2024, %v2587
        %v2658 = vadd.f32 %v2029, %v2592
        %v2659 = vadd.f32 %v2032, %v2595
        %v2660 = vadd.f32 %v2037, %v2600
        %v2661 = vadd.f32 %v2040, %v2603
        %v2662 = vadd.f32 %v2045, %v2608
        %v2663 = vadd.f32 %v2048, %v2611
        %v2664 = vadd.f32 %v2053, %v2616
        %v2665 = vadd.f32 %v2056, %v2619
        %v2666 = vadd.f32 %v2061, %v2624
        %v2667 = vadd.f32 %v2064, %v2627
        %v2668 = vadd.f32 %v2069, %v2632
        %v2669 = vadd.f32 %v2072, %v2635
        %v2670 = vld [vmem:[%s6] sm:$0x1]
        %v2672 = vlaneseq
        %v2673 = vshrl.u32 %v2672, 7
        %v2674 = vsub.s32 0, %v2673
        %v2675 = vrot.slane %v2670, %v2674
        %v2677 = vadd.f32 %v2638, %v2675
        %v2678 = vadd.f32 %v2639, %v2675
        %v2679 = vadd.f32 %v2640, %v2675
        %v2680 = vadd.f32 %v2641, %v2675
        %v2681 = vadd.f32 %v2642, %v2675
        %v2682 = vadd.f32 %v2643, %v2675
        %v2683 = vadd.f32 %v2644, %v2675
        %v2684 = vadd.f32 %v2645, %v2675
        %v2685 = vadd.f32 %v2646, %v2675
        %v2686 = vadd.f32 %v2647, %v2675
        %v2687 = vadd.f32 %v2648, %v2675
        %v2688 = vadd.f32 %v2649, %v2675
        %v2689 = vadd.f32 %v2650, %v2675
        %v2690 = vadd.f32 %v2651, %v2675
        %v2691 = vadd.f32 %v2652, %v2675
        %v2692 = vadd.f32 %v2653, %v2675
        %v2693 = vadd.f32 %v2654, %v2675
        %v2694 = vadd.f32 %v2655, %v2675
        %v2695 = vadd.f32 %v2656, %v2675
        %v2696 = vadd.f32 %v2657, %v2675
        %v2697 = vadd.f32 %v2658, %v2675
        %v2698 = vadd.f32 %v2659, %v2675
        %v2699 = vadd.f32 %v2660, %v2675
        %v2700 = vadd.f32 %v2661, %v2675
        %v2701 = vadd.f32 %v2662, %v2675
        %v2702 = vadd.f32 %v2663, %v2675
        %v2703 = vadd.f32 %v2664, %v2675
        %v2704 = vadd.f32 %v2665, %v2675
        %v2705 = vadd.f32 %v2666, %v2675
        %v2706 = vadd.f32 %v2667, %v2675
        %v2707 = vadd.f32 %v2668, %v2675
        %v2708 = vadd.f32 %v2669, %v2675
        %v2709 = vmax.f32 %v2677, 0.0
        %v2710 = vmax.f32 %v2678, 0.0
        %v2711 = vmax.f32 %v2679, 0.0
        %v2712 = vmax.f32 %v2680, 0.0
        %v2713 = vmax.f32 %v2681, 0.0
        %v2714 = vmax.f32 %v2682, 0.0
        %v2715 = vmax.f32 %v2683, 0.0
        %v2716 = vmax.f32 %v2684, 0.0
        %v2717 = vmax.f32 %v2685, 0.0
        %v2718 = vmax.f32 %v2686, 0.0
        %v2719 = vmax.f32 %v2687, 0.0
        %v2720 = vmax.f32 %v2688, 0.0
        %v2721 = vmax.f32 %v2689, 0.0
        %v2722 = vmax.f32 %v2690, 0.0
        %v2723 = vmax.f32 %v2691, 0.0
        %v2724 = vmax.f32 %v2692, 0.0
        %v2725 = vmax.f32 %v2693, 0.0
        %v2726 = vmax.f32 %v2694, 0.0
        %v2727 = vmax.f32 %v2695, 0.0
        %v2728 = vmax.f32 %v2696, 0.0
        %v2729 = vmax.f32 %v2697, 0.0
        %v2730 = vmax.f32 %v2698, 0.0
        %v2731 = vmax.f32 %v2699, 0.0
        %v2732 = vmax.f32 %v2700, 0.0
        %v2733 = vmax.f32 %v2701, 0.0
        %v2734 = vmax.f32 %v2702, 0.0
        %v2735 = vmax.f32 %v2703, 0.0
        %v2736 = vmax.f32 %v2704, 0.0
        %v2737 = vmax.f32 %v2705, 0.0
        %v2738 = vmax.f32 %v2706, 0.0
        %v2739 = vmax.f32 %v2707, 0.0
        %v2740 = vmax.f32 %v2708, 0.0
        %v2741 = vmax.f32 %v2709, %v2711
        %v2742 = vmax.f32 %v2710, %v2712
        %v2743 = vmax.f32 %v2713, %v2715
        %v2744 = vmax.f32 %v2714, %v2716
        %v2745 = vmax.f32 %v2717, %v2719
        %v2746 = vmax.f32 %v2718, %v2720
        %v2747 = vmax.f32 %v2721, %v2723
        %v2748 = vmax.f32 %v2722, %v2724
        %v2749 = vmax.f32 %v2725, %v2727
        %v2750 = vmax.f32 %v2726, %v2728
        %v2751 = vmax.f32 %v2729, %v2731
        %v2752 = vmax.f32 %v2730, %v2732
        %v2753 = vmax.f32 %v2733, %v2735
        %v2754 = vmax.f32 %v2734, %v2736
        %v2755 = vmax.f32 %v2737, %v2739
        %v2756 = vmax.f32 %v2738, %v2740
        %v2773 = vcombine.high %v2741, %v2741
        %v2775 = vunpack.c.l.s4 1983009808
        %v2776 = vunpack.c.0.s8 %v2775
        %v2777 = vlaneseq
        %v2778 = vshrl.u32 %v2777, 7
        %v2779 = vsub.s32 %v2776, %v2778
        %v2780 = vrot.slane %v2741, %v2779
        %v2782 = vunpack.c.l.s4 1983009808
        %v2783 = vunpack.c.0.s8 %v2782
        %v2784 = vlaneseq
        %v2785 = vshrl.u32 %v2784, 7
        %v2786 = vsub.s32 %v2783, %v2785
        %v2787 = vrot.slane %v2773, %v2786
        %v2788 = vcombine.high %v2780, %v2780
        %v2789 = vcombine.high %v2787, %v2787
        %v2790 = vcombine.high %v2742, %v2742
        %v2792 = vunpack.c.l.s4 1983009808
        %v2793 = vunpack.c.0.s8 %v2792
        %v2794 = vlaneseq
        %v2795 = vshrl.u32 %v2794, 7
        %v2796 = vsub.s32 %v2793, %v2795
        %v2797 = vrot.slane %v2742, %v2796
        %v2799 = vunpack.c.l.s4 1983009808
        %v2800 = vunpack.c.0.s8 %v2799
        %v2801 = vlaneseq
        %v2802 = vshrl.u32 %v2801, 7
        %v2803 = vsub.s32 %v2800, %v2802
        %v2804 = vrot.slane %v2790, %v2803
        %v2805 = vcombine.high %v2797, %v2797
        %v2806 = vcombine.high %v2804, %v2804
        %v2807 = vcombine.high %v2743, %v2743
        %v2809 = vunpack.c.l.s4 1983009808
        %v2810 = vunpack.c.0.s8 %v2809
        %v2811 = vlaneseq
        %v2812 = vshrl.u32 %v2811, 7
        %v2813 = vsub.s32 %v2810, %v2812
        %v2814 = vrot.slane %v2743, %v2813
        %v2816 = vunpack.c.l.s4 1983009808
        %v2817 = vunpack.c.0.s8 %v2816
        %v2818 = vlaneseq
        %v2819 = vshrl.u32 %v2818, 7
        %v2820 = vsub.s32 %v2817, %v2819
        %v2821 = vrot.slane %v2807, %v2820
        %v2822 = vcombine.high %v2814, %v2814
        %v2823 = vcombine.high %v2821, %v2821
        %v2824 = vcombine.high %v2744, %v2744
        %v2826 = vunpack.c.l.s4 1983009808
        %v2827 = vunpack.c.0.s8 %v2826
        %v2828 = vlaneseq
        %v2829 = vshrl.u32 %v2828, 7
        %v2830 = vsub.s32 %v2827, %v2829
        %v2831 = vrot.slane %v2744, %v2830
        %v2833 = vunpack.c.l.s4 1983009808
        %v2834 = vunpack.c.0.s8 %v2833
        %v2835 = vlaneseq
        %v2836 = vshrl.u32 %v2835, 7
        %v2837 = vsub.s32 %v2834, %v2836
        %v2838 = vrot.slane %v2824, %v2837
        %v2839 = vcombine.high %v2831, %v2831
        %v2840 = vcombine.high %v2838, %v2838
        %v2841 = vcombine.high %v2745, %v2745
        %v2843 = vunpack.c.l.s4 1983009808
        %v2844 = vunpack.c.0.s8 %v2843
        %v2845 = vlaneseq
        %v2846 = vshrl.u32 %v2845, 7
        %v2847 = vsub.s32 %v2844, %v2846
        %v2848 = vrot.slane %v2745, %v2847
        %v2850 = vunpack.c.l.s4 1983009808
        %v2851 = vunpack.c.0.s8 %v2850
        %v2852 = vlaneseq
        %v2853 = vshrl.u32 %v2852, 7
        %v2854 = vsub.s32 %v2851, %v2853
        %v2855 = vrot.slane %v2841, %v2854
        %v2856 = vcombine.high %v2848, %v2848
        %v2857 = vcombine.high %v2855, %v2855
        %v2858 = vcombine.high %v2746, %v2746
        %v2860 = vunpack.c.l.s4 1983009808
        %v2861 = vunpack.c.0.s8 %v2860
        %v2862 = vlaneseq
        %v2863 = vshrl.u32 %v2862, 7
        %v2864 = vsub.s32 %v2861, %v2863
        %v2865 = vrot.slane %v2746, %v2864
        %v2867 = vunpack.c.l.s4 1983009808
        %v2868 = vunpack.c.0.s8 %v2867
        %v2869 = vlaneseq
        %v2870 = vshrl.u32 %v2869, 7
        %v2871 = vsub.s32 %v2868, %v2870
        %v2872 = vrot.slane %v2858, %v2871
        %v2873 = vcombine.high %v2865, %v2865
        %v2874 = vcombine.high %v2872, %v2872
        %v2875 = vcombine.high %v2747, %v2747
        %v2877 = vunpack.c.l.s4 1983009808
        %v2878 = vunpack.c.0.s8 %v2877
        %v2879 = vlaneseq
        %v2880 = vshrl.u32 %v2879, 7
        %v2881 = vsub.s32 %v2878, %v2880
        %v2882 = vrot.slane %v2747, %v2881
        %v2884 = vunpack.c.l.s4 1983009808
        %v2885 = vunpack.c.0.s8 %v2884
        %v2886 = vlaneseq
        %v2887 = vshrl.u32 %v2886, 7
        %v2888 = vsub.s32 %v2885, %v2887
        %v2889 = vrot.slane %v2875, %v2888
        %v2890 = vcombine.high %v2882, %v2882
        %v2891 = vcombine.high %v2889, %v2889
        %v2892 = vcombine.high %v2748, %v2748
        %v2894 = vunpack.c.l.s4 1983009808
        %v2895 = vunpack.c.0.s8 %v2894
        %v2896 = vlaneseq
        %v2897 = vshrl.u32 %v2896, 7
        %v2898 = vsub.s32 %v2895, %v2897
        %v2899 = vrot.slane %v2748, %v2898
        %v2901 = vunpack.c.l.s4 1983009808
        %v2902 = vunpack.c.0.s8 %v2901
        %v2903 = vlaneseq
        %v2904 = vshrl.u32 %v2903, 7
        %v2905 = vsub.s32 %v2902, %v2904
        %v2906 = vrot.slane %v2892, %v2905
        %v2907 = vcombine.high %v2899, %v2899
        %v2908 = vcombine.high %v2906, %v2906
        %v2909 = vcombine.high %v2749, %v2749
        %v2911 = vunpack.c.l.s4 1983009808
        %v2912 = vunpack.c.0.s8 %v2911
        %v2913 = vlaneseq
        %v2914 = vshrl.u32 %v2913, 7
        %v2915 = vsub.s32 %v2912, %v2914
        %v2916 = vrot.slane %v2749, %v2915
        %v2918 = vunpack.c.l.s4 1983009808
        %v2919 = vunpack.c.0.s8 %v2918
        %v2920 = vlaneseq
        %v2921 = vshrl.u32 %v2920, 7
        %v2922 = vsub.s32 %v2919, %v2921
        %v2923 = vrot.slane %v2909, %v2922
        %v2924 = vcombine.high %v2916, %v2916
        %v2925 = vcombine.high %v2923, %v2923
        %v2926 = vcombine.high %v2750, %v2750
        %v2928 = vunpack.c.l.s4 1983009808
        %v2929 = vunpack.c.0.s8 %v2928
        %v2930 = vlaneseq
        %v2931 = vshrl.u32 %v2930, 7
        %v2932 = vsub.s32 %v2929, %v2931
        %v2933 = vrot.slane %v2750, %v2932
        %v2935 = vunpack.c.l.s4 1983009808
        %v2936 = vunpack.c.0.s8 %v2935
        %v2937 = vlaneseq
        %v2938 = vshrl.u32 %v2937, 7
        %v2939 = vsub.s32 %v2936, %v2938
        %v2940 = vrot.slane %v2926, %v2939
        %v2941 = vcombine.high %v2933, %v2933
        %v2942 = vcombine.high %v2940, %v2940
        %v2943 = vcombine.high %v2751, %v2751
        %v2945 = vunpack.c.l.s4 1983009808
        %v2946 = vunpack.c.0.s8 %v2945
        %v2947 = vlaneseq
        %v2948 = vshrl.u32 %v2947, 7
        %v2949 = vsub.s32 %v2946, %v2948
        %v2950 = vrot.slane %v2751, %v2949
        %v2952 = vunpack.c.l.s4 1983009808
        %v2953 = vunpack.c.0.s8 %v2952
        %v2954 = vlaneseq
        %v2955 = vshrl.u32 %v2954, 7
        %v2956 = vsub.s32 %v2953, %v2955
        %v2957 = vrot.slane %v2943, %v2956
        %v2958 = vcombine.high %v2950, %v2950
        %v2959 = vcombine.high %v2957, %v2957
        %v2960 = vcombine.high %v2752, %v2752
        %v2962 = vunpack.c.l.s4 1983009808
        %v2963 = vunpack.c.0.s8 %v2962
        %v2964 = vlaneseq
        %v2965 = vshrl.u32 %v2964, 7
        %v2966 = vsub.s32 %v2963, %v2965
        %v2967 = vrot.slane %v2752, %v2966
        %v2969 = vunpack.c.l.s4 1983009808
        %v2970 = vunpack.c.0.s8 %v2969
        %v2971 = vlaneseq
        %v2972 = vshrl.u32 %v2971, 7
        %v2973 = vsub.s32 %v2970, %v2972
        %v2974 = vrot.slane %v2960, %v2973
        %v2975 = vcombine.high %v2967, %v2967
        %v2976 = vcombine.high %v2974, %v2974
        %v2977 = vcombine.high %v2753, %v2753
        %v2979 = vunpack.c.l.s4 1983009808
        %v2980 = vunpack.c.0.s8 %v2979
        %v2981 = vlaneseq
        %v2982 = vshrl.u32 %v2981, 7
        %v2983 = vsub.s32 %v2980, %v2982
        %v2984 = vrot.slane %v2753, %v2983
        %v2986 = vunpack.c.l.s4 1983009808
        %v2987 = vunpack.c.0.s8 %v2986
        %v2988 = vlaneseq
        %v2989 = vshrl.u32 %v2988, 7
        %v2990 = vsub.s32 %v2987, %v2989
        %v2991 = vrot.slane %v2977, %v2990
        %v2992 = vcombine.high %v2984, %v2984
        %v2993 = vcombine.high %v2991, %v2991
        %v2994 = vcombine.high %v2754, %v2754
        %v2996 = vunpack.c.l.s4 1983009808
        %v2997 = vunpack.c.0.s8 %v2996
        %v2998 = vlaneseq
        %v2999 = vshrl.u32 %v2998, 7
        %v3000 = vsub.s32 %v2997, %v2999
        %v3001 = vrot.slane %v2754, %v3000
        %v3003 = vunpack.c.l.s4 1983009808
        %v3004 = vunpack.c.0.s8 %v3003
        %v3005 = vlaneseq
        %v3006 = vshrl.u32 %v3005, 7
        %v3007 = vsub.s32 %v3004, %v3006
        %v3008 = vrot.slane %v2994, %v3007
        %v3009 = vcombine.high %v3001, %v3001
        %v3010 = vcombine.high %v3008, %v3008
        %v3011 = vcombine.high %v2755, %v2755
        %v3013 = vunpack.c.l.s4 1983009808
        %v3014 = vunpack.c.0.s8 %v3013
        %v3015 = vlaneseq
        %v3016 = vshrl.u32 %v3015, 7
        %v3017 = vsub.s32 %v3014, %v3016
        %v3018 = vrot.slane %v2755, %v3017
        %v3020 = vunpack.c.l.s4 1983009808
        %v3021 = vunpack.c.0.s8 %v3020
        %v3022 = vlaneseq
        %v3023 = vshrl.u32 %v3022, 7
        %v3024 = vsub.s32 %v3021, %v3023
        %v3025 = vrot.slane %v3011, %v3024
        %v3026 = vcombine.high %v3018, %v3018
        %v3027 = vcombine.high %v3025, %v3025
        %v3028 = vcombine.high %v2756, %v2756
        %v3030 = vunpack.c.l.s4 1983009808
        %v3031 = vunpack.c.0.s8 %v3030
        %v3032 = vlaneseq
        %v3033 = vshrl.u32 %v3032, 7
        %v3034 = vsub.s32 %v3031, %v3033
        %v3035 = vrot.slane %v2756, %v3034
        %v3037 = vunpack.c.l.s4 1983009808
        %v3038 = vunpack.c.0.s8 %v3037
        %v3039 = vlaneseq
        %v3040 = vshrl.u32 %v3039, 7
        %v3041 = vsub.s32 %v3038, %v3040
        %v3042 = vrot.slane %v3028, %v3041
        %v3043 = vcombine.high %v3035, %v3035
        %v3044 = vcombine.high %v3042, %v3042
        %v3109 = vrot.slane %v2780, 7
        %v3110 = vrot.slane %v3109, 2
        %v3111 = vrot.slane %v2788, 7
        %v3112 = vrot.slane %v3111, 2
        %v3113 = vrot.slane %v2787, 7
        %v3114 = vrot.slane %v3113, 2
        %v3115 = vrot.slane %v2789, 7
        %v3116 = vrot.slane %v3115, 2
        %v3117 = vrot.slane %v2797, 7
        %v3118 = vrot.slane %v3117, 2
        %v3119 = vrot.slane %v2805, 7
        %v3120 = vrot.slane %v3119, 2
        %v3121 = vrot.slane %v2804, 7
        %v3122 = vrot.slane %v3121, 2
        %v3123 = vrot.slane %v2806, 7
        %v3124 = vrot.slane %v3123, 2
        %v3125 = vrot.slane %v2814, 7
        %v3126 = vrot.slane %v3125, 2
        %v3127 = vrot.slane %v2822, 7
        %v3128 = vrot.slane %v3127, 2
        %v3129 = vrot.slane %v2821, 7
        %v3130 = vrot.slane %v3129, 2
        %v3131 = vrot.slane %v2823, 7
        %v3132 = vrot.slane %v3131, 2
        %v3133 = vrot.slane %v2831, 7
        %v3134 = vrot.slane %v3133, 2
        %v3135 = vrot.slane %v2839, 7
        %v3136 = vrot.slane %v3135, 2
        %v3137 = vrot.slane %v2838, 7
        %v3138 = vrot.slane %v3137, 2
        %v3139 = vrot.slane %v2840, 7
        %v3140 = vrot.slane %v3139, 2
        %v3141 = vrot.slane %v2848, 7
        %v3142 = vrot.slane %v3141, 2
        %v3143 = vrot.slane %v2856, 7
        %v3144 = vrot.slane %v3143, 2
        %v3145 = vrot.slane %v2855, 7
        %v3146 = vrot.slane %v3145, 2
        %v3147 = vrot.slane %v2857, 7
        %v3148 = vrot.slane %v3147, 2
        %v3149 = vrot.slane %v2865, 7
        %v3150 = vrot.slane %v3149, 2
        %v3151 = vrot.slane %v2873, 7
        %v3152 = vrot.slane %v3151, 2
        %v3153 = vrot.slane %v2872, 7
        %v3154 = vrot.slane %v3153, 2
        %v3155 = vrot.slane %v2874, 7
        %v3156 = vrot.slane %v3155, 2
        %v3157 = vrot.slane %v2882, 7
        %v3158 = vrot.slane %v3157, 2
        %v3159 = vrot.slane %v2890, 7
        %v3160 = vrot.slane %v3159, 2
        %v3161 = vrot.slane %v2889, 7
        %v3162 = vrot.slane %v3161, 2
        %v3163 = vrot.slane %v2891, 7
        %v3164 = vrot.slane %v3163, 2
        %v3165 = vrot.slane %v2899, 7
        %v3166 = vrot.slane %v3165, 2
        %v3167 = vrot.slane %v2907, 7
        %v3168 = vrot.slane %v3167, 2
        %v3169 = vrot.slane %v2906, 7
        %v3170 = vrot.slane %v3169, 2
        %v3171 = vrot.slane %v2908, 7
        %v3172 = vrot.slane %v3171, 2
        %v3173 = vrot.slane %v2916, 7
        %v3174 = vrot.slane %v3173, 2
        %v3175 = vrot.slane %v2924, 7
        %v3176 = vrot.slane %v3175, 2
        %v3177 = vrot.slane %v2923, 7
        %v3178 = vrot.slane %v3177, 2
        %v3179 = vrot.slane %v2925, 7
        %v3180 = vrot.slane %v3179, 2
        %v3181 = vrot.slane %v2933, 7
        %v3182 = vrot.slane %v3181, 2
        %v3183 = vrot.slane %v2941, 7
        %v3184 = vrot.slane %v3183, 2
        %v3185 = vrot.slane %v2940, 7
        %v3186 = vrot.slane %v3185, 2
        %v3187 = vrot.slane %v2942, 7
        %v3188 = vrot.slane %v3187, 2
        %v3189 = vrot.slane %v2950, 7
        %v3190 = vrot.slane %v3189, 2
        %v3191 = vrot.slane %v2958, 7
        %v3192 = vrot.slane %v3191, 2
        %v3193 = vrot.slane %v2957, 7
        %v3194 = vrot.slane %v3193, 2
        %v3195 = vrot.slane %v2959, 7
        %v3196 = vrot.slane %v3195, 2
        %v3197 = vrot.slane %v2967, 7
        %v3198 = vrot.slane %v3197, 2
        %v3199 = vrot.slane %v2975, 7
        %v3200 = vrot.slane %v3199, 2
        %v3201 = vrot.slane %v2974, 7
        %v3202 = vrot.slane %v3201, 2
        %v3203 = vrot.slane %v2976, 7
        %v3204 = vrot.slane %v3203, 2
        %v3205 = vrot.slane %v2984, 7
        %v3206 = vrot.slane %v3205, 2
        %v3207 = vrot.slane %v2992, 7
        %v3208 = vrot.slane %v3207, 2
        %v3209 = vrot.slane %v2991, 7
        %v3210 = vrot.slane %v3209, 2
        %v3211 = vrot.slane %v2993, 7
        %v3212 = vrot.slane %v3211, 2
        %v3213 = vrot.slane %v3001, 7
        %v3214 = vrot.slane %v3213, 2
        %v3215 = vrot.slane %v3009, 7
        %v3216 = vrot.slane %v3215, 2
        %v3217 = vrot.slane %v3008, 7
        %v3218 = vrot.slane %v3217, 2
        %v3219 = vrot.slane %v3010, 7
        %v3220 = vrot.slane %v3219, 2
        %v3221 = vrot.slane %v3018, 7
        %v3222 = vrot.slane %v3221, 2
        %v3223 = vrot.slane %v3026, 7
        %v3224 = vrot.slane %v3223, 2
        %v3225 = vrot.slane %v3025, 7
        %v3226 = vrot.slane %v3225, 2
        %v3227 = vrot.slane %v3027, 7
        %v3228 = vrot.slane %v3227, 2
        %v3229 = vrot.slane %v3035, 7
        %v3230 = vrot.slane %v3229, 2
        %v3231 = vrot.slane %v3043, 7
        %v3232 = vrot.slane %v3231, 2
        %v3233 = vrot.slane %v3042, 7
        %v3234 = vrot.slane %v3233, 2
        %v3235 = vrot.slane %v3044, 7
        %v3236 = vrot.slane %v3235, 2
        %v3301 = vmax.f32 %v2780, %v3110
        %v3302 = vmax.f32 %v2788, %v3112
        %v3303 = vmax.f32 %v2787, %v3114
        %v3304 = vmax.f32 %v2789, %v3116
        %v3305 = vmax.f32 %v2797, %v3118
        %v3306 = vmax.f32 %v2805, %v3120
        %v3307 = vmax.f32 %v2804, %v3122
        %v3308 = vmax.f32 %v2806, %v3124
        %v3309 = vmax.f32 %v2814, %v3126
        %v3310 = vmax.f32 %v2822, %v3128
        %v3311 = vmax.f32 %v2821, %v3130
        %v3312 = vmax.f32 %v2823, %v3132
        %v3313 = vmax.f32 %v2831, %v3134
        %v3314 = vmax.f32 %v2839, %v3136
        %v3315 = vmax.f32 %v2838, %v3138
        %v3316 = vmax.f32 %v2840, %v3140
        %v3317 = vmax.f32 %v2848, %v3142
        %v3318 = vmax.f32 %v2856, %v3144
        %v3319 = vmax.f32 %v2855, %v3146
        %v3320 = vmax.f32 %v2857, %v3148
        %v3321 = vmax.f32 %v2865, %v3150
        %v3322 = vmax.f32 %v2873, %v3152
        %v3323 = vmax.f32 %v2872, %v3154
        %v3324 = vmax.f32 %v2874, %v3156
        %v3325 = vmax.f32 %v2882, %v3158
        %v3326 = vmax.f32 %v2890, %v3160
        %v3327 = vmax.f32 %v2889, %v3162
        %v3328 = vmax.f32 %v2891, %v3164
        %v3329 = vmax.f32 %v2899, %v3166
        %v3330 = vmax.f32 %v2907, %v3168
        %v3331 = vmax.f32 %v2906, %v3170
        %v3332 = vmax.f32 %v2908, %v3172
        %v3333 = vmax.f32 %v2916, %v3174
        %v3334 = vmax.f32 %v2924, %v3176
        %v3335 = vmax.f32 %v2923, %v3178
        %v3336 = vmax.f32 %v2925, %v3180
        %v3337 = vmax.f32 %v2933, %v3182
        %v3338 = vmax.f32 %v2941, %v3184
        %v3339 = vmax.f32 %v2940, %v3186
        %v3340 = vmax.f32 %v2942, %v3188
        %v3341 = vmax.f32 %v2950, %v3190
        %v3342 = vmax.f32 %v2958, %v3192
        %v3343 = vmax.f32 %v2957, %v3194
        %v3344 = vmax.f32 %v2959, %v3196
        %v3345 = vmax.f32 %v2967, %v3198
        %v3346 = vmax.f32 %v2975, %v3200
        %v3347 = vmax.f32 %v2974, %v3202
        %v3348 = vmax.f32 %v2976, %v3204
        %v3349 = vmax.f32 %v2984, %v3206
        %v3350 = vmax.f32 %v2992, %v3208
        %v3351 = vmax.f32 %v2991, %v3210
        %v3352 = vmax.f32 %v2993, %v3212
        %v3353 = vmax.f32 %v3001, %v3214
        %v3354 = vmax.f32 %v3009, %v3216
        %v3355 = vmax.f32 %v3008, %v3218
        %v3356 = vmax.f32 %v3010, %v3220
        %v3357 = vmax.f32 %v3018, %v3222
        %v3358 = vmax.f32 %v3026, %v3224
        %v3359 = vmax.f32 %v3025, %v3226
        %v3360 = vmax.f32 %v3027, %v3228
        %v3361 = vmax.f32 %v3035, %v3230
        %v3362 = vmax.f32 %v3043, %v3232
        %v3363 = vmax.f32 %v3042, %v3234
        %v3364 = vmax.f32 %v3044, %v3236
        %3365 = vst.msk [vmem:[#allocation3] sm:$0xff] %vm863, 0.0
        %3366 = vst.msk [vmem:[#allocation3 + $0x8] sm:$0x3] %vm866, 0.0
        %3367 = vst.msk [vmem:[#allocation3 + $0x10] sm:$0xff] %vm863, 0.0
        %3368 = vst.msk [vmem:[#allocation3 + $0x18] sm:$0x3] %vm866, 0.0
        %3369 = vst.msk [vmem:[#allocation3 + $0x20] sm:$0xff] %vm863, 0.0
        %3370 = vst.msk [vmem:[#allocation3 + $0x28] sm:$0x3] %vm866, 0.0
        %3371 = vst.msk [vmem:[#allocation3 + $0x30] sm:$0xff] %vm863, 0.0
        %3372 = vst.msk [vmem:[#allocation3 + $0x38] sm:$0x3] %vm866, 0.0
        %3373 = vst.msk [vmem:[#allocation3 + $0x40] sm:$0xff] %vm863, 0.0
        %3374 = vst.msk [vmem:[#allocation3 + $0x48] sm:$0x3] %vm866, 0.0
        %3375 = vst.msk [vmem:[#allocation3 + $0x50] sm:$0xff] %vm863, 0.0
        %3376 = vst.msk [vmem:[#allocation3 + $0x58] sm:$0x3] %vm866, 0.0
        %3377 = vst.msk [vmem:[#allocation3 + $0x60] sm:$0xff] %vm863, 0.0
        %3378 = vst.msk [vmem:[#allocation3 + $0x68] sm:$0x3] %vm866, 0.0
        %3379 = vst.msk [vmem:[#allocation3 + $0x70] sm:$0xff] %vm863, 0.0
        %3380 = vst.msk [vmem:[#allocation3 + $0x78] sm:$0x3] %vm866, 0.0
        %3381 = vst.msk [vmem:[#allocation3 + $0x80] sm:$0xff] %vm863, 0.0
        %3382 = vst.msk [vmem:[#allocation3 + $0x88] sm:$0x3] %vm866, 0.0
        %3383 = vst.msk [vmem:[#allocation3 + $0x90] sm:$0xff] %vm863, 0.0
        %3384 = vst.msk [vmem:[#allocation3 + $0x98] sm:$0x3] %vm866, 0.0
        %v3449 = vlaneseq
        %v3450 = vshrl.u32 %v3449, 7
        %v3451 = vsub.s32 0, %v3450
        %v3452 = vrot.slane %v3301, %v3451
        %v3453 = vlaneseq
        %v3454 = vshrl.u32 %v3453, 7
        %v3455 = vsub.s32 0, %v3454
        %v3456 = vrot.slane %v3302, %v3455
        %v3457 = vlaneseq
        %v3458 = vshrl.u32 %v3457, 7
        %v3459 = vsub.s32 0, %v3458
        %v3460 = vrot.slane %v3303, %v3459
        %v3461 = vlaneseq
        %v3462 = vshrl.u32 %v3461, 7
        %v3463 = vsub.s32 0, %v3462
        %v3464 = vrot.slane %v3304, %v3463
        %v3465 = vlaneseq
        %v3466 = vshrl.u32 %v3465, 7
        %v3467 = vsub.s32 0, %v3466
        %v3468 = vrot.slane %v3305, %v3467
        %v3469 = vlaneseq
        %v3470 = vshrl.u32 %v3469, 7
        %v3471 = vsub.s32 0, %v3470
        %v3472 = vrot.slane %v3306, %v3471
        %v3473 = vlaneseq
        %v3474 = vshrl.u32 %v3473, 7
        %v3475 = vsub.s32 0, %v3474
        %v3476 = vrot.slane %v3307, %v3475
        %v3477 = vlaneseq
        %v3478 = vshrl.u32 %v3477, 7
        %v3479 = vsub.s32 0, %v3478
        %v3480 = vrot.slane %v3308, %v3479
        %v3481 = vlaneseq
        %v3482 = vshrl.u32 %v3481, 7
        %v3483 = vsub.s32 0, %v3482
        %v3484 = vrot.slane %v3309, %v3483
        %v3485 = vlaneseq
        %v3486 = vshrl.u32 %v3485, 7
        %v3487 = vsub.s32 0, %v3486
        %v3488 = vrot.slane %v3310, %v3487
        %v3489 = vlaneseq
        %v3490 = vshrl.u32 %v3489, 7
        %v3491 = vsub.s32 0, %v3490
        %v3492 = vrot.slane %v3311, %v3491
        %v3493 = vlaneseq
        %v3494 = vshrl.u32 %v3493, 7
        %v3495 = vsub.s32 0, %v3494
        %v3496 = vrot.slane %v3312, %v3495
        %v3497 = vlaneseq
        %v3498 = vshrl.u32 %v3497, 7
        %v3499 = vsub.s32 0, %v3498
        %v3500 = vrot.slane %v3313, %v3499
        %v3501 = vlaneseq
        %v3502 = vshrl.u32 %v3501, 7
        %v3503 = vsub.s32 0, %v3502
        %v3504 = vrot.slane %v3314, %v3503
        %v3505 = vlaneseq
        %v3506 = vshrl.u32 %v3505, 7
        %v3507 = vsub.s32 0, %v3506
        %v3508 = vrot.slane %v3315, %v3507
        %v3509 = vlaneseq
        %v3510 = vshrl.u32 %v3509, 7
        %v3511 = vsub.s32 0, %v3510
        %v3512 = vrot.slane %v3316, %v3511
        %v3513 = vlaneseq
        %v3514 = vshrl.u32 %v3513, 7
        %v3515 = vsub.s32 0, %v3514
        %v3516 = vrot.slane %v3317, %v3515
        %v3517 = vlaneseq
        %v3518 = vshrl.u32 %v3517, 7
        %v3519 = vsub.s32 0, %v3518
        %v3520 = vrot.slane %v3318, %v3519
        %v3521 = vlaneseq
        %v3522 = vshrl.u32 %v3521, 7
        %v3523 = vsub.s32 0, %v3522
        %v3524 = vrot.slane %v3319, %v3523
        %v3525 = vlaneseq
        %v3526 = vshrl.u32 %v3525, 7
        %v3527 = vsub.s32 0, %v3526
        %v3528 = vrot.slane %v3320, %v3527
        %v3529 = vlaneseq
        %v3530 = vshrl.u32 %v3529, 7
        %v3531 = vsub.s32 0, %v3530
        %v3532 = vrot.slane %v3321, %v3531
        %v3533 = vlaneseq
        %v3534 = vshrl.u32 %v3533, 7
        %v3535 = vsub.s32 0, %v3534
        %v3536 = vrot.slane %v3322, %v3535
        %v3537 = vlaneseq
        %v3538 = vshrl.u32 %v3537, 7
        %v3539 = vsub.s32 0, %v3538
        %v3540 = vrot.slane %v3323, %v3539
        %v3541 = vlaneseq
        %v3542 = vshrl.u32 %v3541, 7
        %v3543 = vsub.s32 0, %v3542
        %v3544 = vrot.slane %v3324, %v3543
        %v3545 = vlaneseq
        %v3546 = vshrl.u32 %v3545, 7
        %v3547 = vsub.s32 0, %v3546
        %v3548 = vrot.slane %v3325, %v3547
        %v3549 = vlaneseq
        %v3550 = vshrl.u32 %v3549, 7
        %v3551 = vsub.s32 0, %v3550
        %v3552 = vrot.slane %v3326, %v3551
        %v3553 = vlaneseq
        %v3554 = vshrl.u32 %v3553, 7
        %v3555 = vsub.s32 0, %v3554
        %v3556 = vrot.slane %v3327, %v3555
        %v3557 = vlaneseq
        %v3558 = vshrl.u32 %v3557, 7
        %v3559 = vsub.s32 0, %v3558
        %v3560 = vrot.slane %v3328, %v3559
        %v3561 = vlaneseq
        %v3562 = vshrl.u32 %v3561, 7
        %v3563 = vsub.s32 0, %v3562
        %v3564 = vrot.slane %v3329, %v3563
        %v3565 = vlaneseq
        %v3566 = vshrl.u32 %v3565, 7
        %v3567 = vsub.s32 0, %v3566
        %v3568 = vrot.slane %v3330, %v3567
        %v3569 = vlaneseq
        %v3570 = vshrl.u32 %v3569, 7
        %v3571 = vsub.s32 0, %v3570
        %v3572 = vrot.slane %v3331, %v3571
        %v3573 = vlaneseq
        %v3574 = vshrl.u32 %v3573, 7
        %v3575 = vsub.s32 0, %v3574
        %v3576 = vrot.slane %v3332, %v3575
        %v3577 = vlaneseq
        %v3578 = vshrl.u32 %v3577, 7
        %v3579 = vsub.s32 0, %v3578
        %v3580 = vrot.slane %v3333, %v3579
        %v3581 = vlaneseq
        %v3582 = vshrl.u32 %v3581, 7
        %v3583 = vsub.s32 0, %v3582
        %v3584 = vrot.slane %v3334, %v3583
        %v3585 = vlaneseq
        %v3586 = vshrl.u32 %v3585, 7
        %v3587 = vsub.s32 0, %v3586
        %v3588 = vrot.slane %v3335, %v3587
        %v3589 = vlaneseq
        %v3590 = vshrl.u32 %v3589, 7
        %v3591 = vsub.s32 0, %v3590
        %v3592 = vrot.slane %v3336, %v3591
        %v3593 = vlaneseq
        %v3594 = vshrl.u32 %v3593, 7
        %v3595 = vsub.s32 0, %v3594
        %v3596 = vrot.slane %v3337, %v3595
        %v3597 = vlaneseq
        %v3598 = vshrl.u32 %v3597, 7
        %v3599 = vsub.s32 0, %v3598
        %v3600 = vrot.slane %v3338, %v3599
        %v3601 = vlaneseq
        %v3602 = vshrl.u32 %v3601, 7
        %v3603 = vsub.s32 0, %v3602
        %v3604 = vrot.slane %v3339, %v3603
        %v3605 = vlaneseq
        %v3606 = vshrl.u32 %v3605, 7
        %v3607 = vsub.s32 0, %v3606
        %v3608 = vrot.slane %v3340, %v3607
        %v3609 = vlaneseq
        %v3610 = vshrl.u32 %v3609, 7
        %v3611 = vsub.s32 0, %v3610
        %v3612 = vrot.slane %v3341, %v3611
        %v3613 = vlaneseq
        %v3614 = vshrl.u32 %v3613, 7
        %v3615 = vsub.s32 0, %v3614
        %v3616 = vrot.slane %v3342, %v3615
        %v3617 = vlaneseq
        %v3618 = vshrl.u32 %v3617, 7
        %v3619 = vsub.s32 0, %v3618
        %v3620 = vrot.slane %v3343, %v3619
        %v3621 = vlaneseq
        %v3622 = vshrl.u32 %v3621, 7
        %v3623 = vsub.s32 0, %v3622
        %v3624 = vrot.slane %v3344, %v3623
        %v3625 = vlaneseq
        %v3626 = vshrl.u32 %v3625, 7
        %v3627 = vsub.s32 0, %v3626
        %v3628 = vrot.slane %v3345, %v3627
        %v3629 = vlaneseq
        %v3630 = vshrl.u32 %v3629, 7
        %v3631 = vsub.s32 0, %v3630
        %v3632 = vrot.slane %v3346, %v3631
        %v3633 = vlaneseq
        %v3634 = vshrl.u32 %v3633, 7
        %v3635 = vsub.s32 0, %v3634
        %v3636 = vrot.slane %v3347, %v3635
        %v3637 = vlaneseq
        %v3638 = vshrl.u32 %v3637, 7
        %v3639 = vsub.s32 0, %v3638
        %v3640 = vrot.slane %v3348, %v3639
        %v3641 = vlaneseq
        %v3642 = vshrl.u32 %v3641, 7
        %v3643 = vsub.s32 0, %v3642
        %v3644 = vrot.slane %v3349, %v3643
        %v3645 = vlaneseq
        %v3646 = vshrl.u32 %v3645, 7
        %v3647 = vsub.s32 0, %v3646
        %v3648 = vrot.slane %v3350, %v3647
        %v3649 = vlaneseq
        %v3650 = vshrl.u32 %v3649, 7
        %v3651 = vsub.s32 0, %v3650
        %v3652 = vrot.slane %v3351, %v3651
        %v3653 = vlaneseq
        %v3654 = vshrl.u32 %v3653, 7
        %v3655 = vsub.s32 0, %v3654
        %v3656 = vrot.slane %v3352, %v3655
        %v3657 = vlaneseq
        %v3658 = vshrl.u32 %v3657, 7
        %v3659 = vsub.s32 0, %v3658
        %v3660 = vrot.slane %v3353, %v3659
        %v3661 = vlaneseq
        %v3662 = vshrl.u32 %v3661, 7
        %v3663 = vsub.s32 0, %v3662
        %v3664 = vrot.slane %v3354, %v3663
        %v3665 = vlaneseq
        %v3666 = vshrl.u32 %v3665, 7
        %v3667 = vsub.s32 0, %v3666
        %v3668 = vrot.slane %v3355, %v3667
        %v3669 = vlaneseq
        %v3670 = vshrl.u32 %v3669, 7
        %v3671 = vsub.s32 0, %v3670
        %v3672 = vrot.slane %v3356, %v3671
        %v3673 = vlaneseq
        %v3674 = vshrl.u32 %v3673, 7
        %v3675 = vsub.s32 0, %v3674
        %v3676 = vrot.slane %v3357, %v3675
        %v3677 = vlaneseq
        %v3678 = vshrl.u32 %v3677, 7
        %v3679 = vsub.s32 0, %v3678
        %v3680 = vrot.slane %v3358, %v3679
        %v3681 = vlaneseq
        %v3682 = vshrl.u32 %v3681, 7
        %v3683 = vsub.s32 0, %v3682
        %v3684 = vrot.slane %v3359, %v3683
        %v3685 = vlaneseq
        %v3686 = vshrl.u32 %v3685, 7
        %v3687 = vsub.s32 0, %v3686
        %v3688 = vrot.slane %v3360, %v3687
        %v3689 = vlaneseq
        %v3690 = vshrl.u32 %v3689, 7
        %v3691 = vsub.s32 0, %v3690
        %v3692 = vrot.slane %v3361, %v3691
        %v3693 = vlaneseq
        %v3694 = vshrl.u32 %v3693, 7
        %v3695 = vsub.s32 0, %v3694
        %v3696 = vrot.slane %v3362, %v3695
        %v3697 = vlaneseq
        %v3698 = vshrl.u32 %v3697, 7
        %v3699 = vsub.s32 0, %v3698
        %v3700 = vrot.slane %v3363, %v3699
        %v3701 = vlaneseq
        %v3702 = vshrl.u32 %v3701, 7
        %v3703 = vsub.s32 0, %v3702
        %v3704 = vrot.slane %v3364, %v3703
        %vm3705 = vcmask 1041409
        %v3706 = vsel %vm3705, %v3456, %v3452
        %vm3707 = vcmask 1042434
        %v3708 = vsel %vm3707, %v3460, %v3706
        %vm3709 = vcmask 1043459
        %v3710 = vsel %vm3709, %v3464, %v3708
        %vm3711 = vcmask 1044484
        %v3712 = vsel %vm3711, %v3468, %v3710
        %vm3713 = vcmask 1045509
        %v3714 = vsel %vm3713, %v3472, %v3712
        %vm3715 = vcmask 1046534
        %v3716 = vsel %vm3715, %v3476, %v3714
        %vm3717 = vcmask 1047559
        %v3718 = vsel %vm3717, %v3480, %v3716
        %v3719 = vsel %vm3705, %v3488, %v3484
        %v3720 = vsel %vm3707, %v3492, %v3719
        %v3721 = vsel %vm3709, %v3496, %v3720
        %v3722 = vsel %vm3711, %v3500, %v3721
        %v3723 = vsel %vm3713, %v3504, %v3722
        %v3724 = vsel %vm3715, %v3508, %v3723
        %v3725 = vsel %vm3717, %v3512, %v3724
        %v3726 = vsel %vm3705, %v3520, %v3516
        %v3727 = vsel %vm3707, %v3524, %v3726
        %v3728 = vsel %vm3709, %v3528, %v3727
        %v3729 = vsel %vm3711, %v3532, %v3728
        %v3730 = vsel %vm3713, %v3536, %v3729
        %v3731 = vsel %vm3715, %v3540, %v3730
        %v3732 = vsel %vm3717, %v3544, %v3731
        %v3733 = vsel %vm3705, %v3552, %v3548
        %v3734 = vsel %vm3707, %v3556, %v3733
        %v3735 = vsel %vm3709, %v3560, %v3734
        %v3736 = vsel %vm3711, %v3564, %v3735
        %v3737 = vsel %vm3713, %v3568, %v3736
        %v3738 = vsel %vm3715, %v3572, %v3737
        %v3739 = vsel %vm3717, %v3576, %v3738
        %v3740 = vsel %vm3705, %v3584, %v3580
        %v3741 = vsel %vm3707, %v3588, %v3740
        %v3742 = vsel %vm3709, %v3592, %v3741
        %v3743 = vsel %vm3711, %v3596, %v3742
        %v3744 = vsel %vm3713, %v3600, %v3743
        %v3745 = vsel %vm3715, %v3604, %v3744
        %v3746 = vsel %vm3717, %v3608, %v3745
        %v3747 = vsel %vm3705, %v3616, %v3612
        %v3748 = vsel %vm3707, %v3620, %v3747
        %v3749 = vsel %vm3709, %v3624, %v3748
        %v3750 = vsel %vm3711, %v3628, %v3749
        %v3751 = vsel %vm3713, %v3632, %v3750
        %v3752 = vsel %vm3715, %v3636, %v3751
        %v3753 = vsel %vm3717, %v3640, %v3752
        %v3754 = vsel %vm3705, %v3648, %v3644
        %v3755 = vsel %vm3707, %v3652, %v3754
        %v3756 = vsel %vm3709, %v3656, %v3755
        %v3757 = vsel %vm3711, %v3660, %v3756
        %v3758 = vsel %vm3713, %v3664, %v3757
        %v3759 = vsel %vm3715, %v3668, %v3758
        %v3760 = vsel %vm3717, %v3672, %v3759
        %v3761 = vsel %vm3705, %v3680, %v3676
        %v3762 = vsel %vm3707, %v3684, %v3761
        %v3763 = vsel %vm3709, %v3688, %v3762
        %v3764 = vsel %vm3711, %v3692, %v3763
        %v3765 = vsel %vm3713, %v3696, %v3764
        %v3766 = vsel %vm3715, %v3700, %v3765
        %v3767 = vsel %vm3717, %v3704, %v3766
        %s3776 = scalar_lea.vmem [#allocation3], 16
        %3777 = vst.msk [vmem:[%s3776 + $0x1] sm:$0xff] %vm863, %v3718
        %3778 = vst.msk [vmem:[%s3776 + $0x11] sm:$0xff] %vm863, %v3725
        %3779 = vst.msk [vmem:[%s3776 + $0x21] sm:$0xff] %vm863, %v3732
        %3780 = vst.msk [vmem:[%s3776 + $0x31] sm:$0xff] %vm863, %v3739
        %3781 = vst.msk [vmem:[%s3776 + $0x41] sm:$0xff] %vm863, %v3746
        %3782 = vst.msk [vmem:[%s3776 + $0x51] sm:$0xff] %vm863, %v3753
        %3783 = vst.msk [vmem:[%s3776 + $0x61] sm:$0xff] %vm863, %v3760
        %3784 = vst.msk [vmem:[%s3776 + $0x71] sm:$0xff] %vm863, %v3767
        %v3785 = vld [vmem:[%s7] sm:$0xf]
        %v3786 = vld [vmem:[%s7 + $0x4] sm:$0xf]
        %v3787 = vld [vmem:[%s7 + $0x8] sm:$0xf]
        %v3788 = vld [vmem:[%s7 + $0xc] sm:$0xf]
        %v3789 = vld [vmem:[%s7 + $0x10] sm:$0xf]
        %v3790 = vld [vmem:[%s7 + $0x14] sm:$0xf]
        %v3791 = vld [vmem:[%s7 + $0x18] sm:$0xf]
        %v3792 = vld [vmem:[%s7 + $0x1c] sm:$0xf]
        %v3793 = vld [vmem:[%s7 + $0x20] sm:$0xf]
        %v3794 = vld [vmem:[%s7 + $0x24] sm:$0xf]
        %v3795 = vld [vmem:[%s7 + $0x28] sm:$0xf]
        %v3796 = vld [vmem:[%s7 + $0x2c] sm:$0xf]
        %v3797 = vld [vmem:[%s7 + $0x30] sm:$0xf]
        %v3798 = vld [vmem:[%s7 + $0x34] sm:$0xf]
        %v3799 = vld [vmem:[%s7 + $0x38] sm:$0xf]
        %v3800 = vld [vmem:[%s7 + $0x3c] sm:$0xf]
        %v3801 = vld [vmem:[%s7 + $0x40] sm:$0xf]
        %v3802 = vld [vmem:[%s7 + $0x44] sm:$0xf]
        %v3803 = vld [vmem:[%s7 + $0x48] sm:$0xf]
        %v3804 = vld [vmem:[%s7 + $0x4c] sm:$0xf]
        %v3805 = vld [vmem:[%s7 + $0x50] sm:$0xf]
        %v3806 = vld [vmem:[%s7 + $0x54] sm:$0xf]
        %v3807 = vld [vmem:[%s7 + $0x58] sm:$0xf]
        %v3808 = vld [vmem:[%s7 + $0x5c] sm:$0xf]
        %v3809 = vld [vmem:[#allocation3] sm:$0xff]
        %v3810 = vld [vmem:[#allocation3 + $0x10] sm:$0xff]
        %v3811 = vld [vmem:[#allocation3 + $0x20] sm:$0xff]
        %v3812 = vld [vmem:[#allocation3 + $0x30] sm:$0xff]
        %v3813 = vld [vmem:[#allocation3 + $0x40] sm:$0xff]
        %v3814 = vld [vmem:[#allocation3 + $0x50] sm:$0xff]
        %v3815 = vld [vmem:[#allocation3 + $0x60] sm:$0xff]
        %v3816 = vld [vmem:[#allocation3 + $0x70] sm:$0xff]
        %v3817 = vpack.c.bf16 %v3809, %v3809
        %v3818 = vpack.c.bf16 %v3810, %v3810
        %v3819 = vpack.c.bf16 %v3811, %v3811
        %v3820 = vpack.c.bf16 %v3812, %v3812
        %v3821 = vpack.c.bf16 %v3813, %v3813
        %v3822 = vpack.c.bf16 %v3814, %v3814
        %v3823 = vpack.c.bf16 %v3815, %v3815
        %v3824 = vpack.c.bf16 %v3816, %v3816
        %v3825 = vld [vmem:[#allocation3 + $0x1] sm:$0xff]
        %v3826 = vld [vmem:[#allocation3 + $0x11] sm:$0xff]
        %v3827 = vld [vmem:[#allocation3 + $0x21] sm:$0xff]
        %v3828 = vld [vmem:[#allocation3 + $0x31] sm:$0xff]
        %v3829 = vld [vmem:[#allocation3 + $0x41] sm:$0xff]
        %v3830 = vld [vmem:[#allocation3 + $0x51] sm:$0xff]
        %v3831 = vld [vmem:[#allocation3 + $0x61] sm:$0xff]
        %v3832 = vld [vmem:[#allocation3 + $0x71] sm:$0xff]
        %v3833 = vpack.c.bf16 %v3825, %v3825
        %v3834 = vpack.c.bf16 %v3826, %v3826
        %v3835 = vpack.c.bf16 %v3827, %v3827
        %v3836 = vpack.c.bf16 %v3828, %v3828
        %v3837 = vpack.c.bf16 %v3829, %v3829
        %v3838 = vpack.c.bf16 %v3830, %v3830
        %v3839 = vpack.c.bf16 %v3831, %v3831
        %v3840 = vpack.c.bf16 %v3832, %v3832
        %v3841 = vld [vmem:[#allocation3 + $0x2] sm:$0xff]
        %v3842 = vld [vmem:[#allocation3 + $0x12] sm:$0xff]
        %v3843 = vld [vmem:[#allocation3 + $0x22] sm:$0xff]
        %v3844 = vld [vmem:[#allocation3 + $0x32] sm:$0xff]
        %v3845 = vld [vmem:[#allocation3 + $0x42] sm:$0xff]
        %v3846 = vld [vmem:[#allocation3 + $0x52] sm:$0xff]
        %v3847 = vld [vmem:[#allocation3 + $0x62] sm:$0xff]
        %v3848 = vld [vmem:[#allocation3 + $0x72] sm:$0xff]
        %v3849 = vpack.c.bf16 %v3841, %v3841
        %v3850 = vpack.c.bf16 %v3842, %v3842
        %v3851 = vpack.c.bf16 %v3843, %v3843
        %v3852 = vpack.c.bf16 %v3844, %v3844
        %v3853 = vpack.c.bf16 %v3845, %v3845
        %v3854 = vpack.c.bf16 %v3846, %v3846
        %v3855 = vpack.c.bf16 %v3847, %v3847
        %v3856 = vpack.c.bf16 %v3848, %v3848
        %3865 = vrot.lane.b32.xlu0 %v3833, 64
        %v3866 = vpop.permute.xlu0 %3865
        %3867 = vrot.lane.b32.xlu0 %v3834, 64
        %v3868 = vpop.permute.xlu0 %3867
        %3869 = vrot.lane.b32.xlu0 %v3835, 64
        %v3870 = vpop.permute.xlu0 %3869
        %3871 = vrot.lane.b32.xlu0 %v3836, 64
        %v3872 = vpop.permute.xlu0 %3871
        %3873 = vrot.lane.b32.xlu0 %v3837, 64
        %v3874 = vpop.permute.xlu0 %3873
        %3875 = vrot.lane.b32.xlu0 %v3838, 64
        %v3876 = vpop.permute.xlu0 %3875
        %3877 = vrot.lane.b32.xlu0 %v3839, 64
        %v3878 = vpop.permute.xlu0 %3877
        %3879 = vrot.lane.b32.xlu0 %v3840, 64
        %v3880 = vpop.permute.xlu0 %3879
        %v3883 = vsel %vm863, %v3817, %v3866
        %v3886 = vsel %vm863, %v3818, %v3868
        %v3889 = vsel %vm863, %v3819, %v3870
        %v3892 = vsel %vm863, %v3820, %v3872
        %v3895 = vsel %vm863, %v3821, %v3874
        %v3898 = vsel %vm863, %v3822, %v3876
        %v3901 = vsel %vm863, %v3823, %v3878
        %v3904 = vsel %vm863, %v3824, %v3880
        %v3921 = vunpack.c.l.b16 %v3883
        %v3922 = vunpack.c.l.b16 %v3849
        %v3923 = vunpack.c.l.b16 %v3886
        %v3924 = vunpack.c.l.b16 %v3850
        %v3925 = vunpack.c.l.b16 %v3889
        %v3926 = vunpack.c.l.b16 %v3851
        %v3927 = vunpack.c.l.b16 %v3892
        %v3928 = vunpack.c.l.b16 %v3852
        %v3929 = vunpack.c.l.b16 %v3895
        %v3930 = vunpack.c.l.b16 %v3853
        %v3931 = vunpack.c.l.b16 %v3898
        %v3932 = vunpack.c.l.b16 %v3854
        %v3933 = vunpack.c.l.b16 %v3901
        %v3934 = vunpack.c.l.b16 %v3855
        %v3935 = vunpack.c.l.b16 %v3904
        %v3936 = vunpack.c.l.b16 %v3856
        %s3937 = scalar_lea.vmem %s7, 96
        %v3938 = vld [vmem:[%s3937] sm:$0xf]
        %v3939 = vld [vmem:[%s3937 + $0x4] sm:$0xf]
        %v3940 = vld [vmem:[%s3937 + $0x8] sm:$0xf]
        %v3941 = vld [vmem:[%s3937 + $0xc] sm:$0xf]
        %v3942 = vld [vmem:[%s3937 + $0x10] sm:$0xf]
        %v3943 = vld [vmem:[%s3937 + $0x14] sm:$0xf]
        %v3944 = vld [vmem:[%s3937 + $0x18] sm:$0xf]
        %v3945 = vld [vmem:[%s3937 + $0x1c] sm:$0xf]
        %v3946 = vld [vmem:[%s3937 + $0x20] sm:$0xf]
        %v3947 = vld [vmem:[%s3937 + $0x24] sm:$0xf]
        %v3948 = vld [vmem:[%s3937 + $0x28] sm:$0xf]
        %v3949 = vld [vmem:[%s3937 + $0x2c] sm:$0xf]
        %v3950 = vld [vmem:[%s3937 + $0x30] sm:$0xf]
        %v3951 = vld [vmem:[%s3937 + $0x34] sm:$0xf]
        %v3952 = vld [vmem:[%s3937 + $0x38] sm:$0xf]
        %v3953 = vld [vmem:[%s3937 + $0x3c] sm:$0xf]
        %v3954 = vld [vmem:[%s3937 + $0x40] sm:$0xf]
        %v3955 = vld [vmem:[%s3937 + $0x44] sm:$0xf]
        %v3956 = vld [vmem:[%s3937 + $0x48] sm:$0xf]
        %v3957 = vld [vmem:[%s3937 + $0x4c] sm:$0xf]
        %v3958 = vld [vmem:[%s3937 + $0x50] sm:$0xf]
        %v3959 = vld [vmem:[%s3937 + $0x54] sm:$0xf]
        %v3960 = vld [vmem:[%s3937 + $0x58] sm:$0xf]
        %v3961 = vld [vmem:[%s3937 + $0x5c] sm:$0xf]
        %v3962 = vld [vmem:[%s3776] sm:$0xff]
        %v3963 = vld [vmem:[%s3776 + $0x10] sm:$0xff]
        %v3964 = vld [vmem:[%s3776 + $0x20] sm:$0xff]
        %v3965 = vld [vmem:[%s3776 + $0x30] sm:$0xff]
        %v3966 = vld [vmem:[%s3776 + $0x40] sm:$0xff]
        %v3967 = vld [vmem:[%s3776 + $0x50] sm:$0xff]
        %v3968 = vld [vmem:[%s3776 + $0x60] sm:$0xff]
        %v3969 = vld [vmem:[%s3776 + $0x70] sm:$0xff]
        %v3970 = vpack.c.bf16 %v3962, %v3962
        %v3971 = vpack.c.bf16 %v3963, %v3963
        %v3972 = vpack.c.bf16 %v3964, %v3964
        %v3973 = vpack.c.bf16 %v3965, %v3965
        %v3974 = vpack.c.bf16 %v3966, %v3966
        %v3975 = vpack.c.bf16 %v3967, %v3967
        %v3976 = vpack.c.bf16 %v3968, %v3968
        %v3977 = vpack.c.bf16 %v3969, %v3969
        %v3978 = vld [vmem:[%s3776 + $0x1] sm:$0xff]
        %v3979 = vld [vmem:[%s3776 + $0x11] sm:$0xff]
        %v3980 = vld [vmem:[%s3776 + $0x21] sm:$0xff]
        %v3981 = vld [vmem:[%s3776 + $0x31] sm:$0xff]
        %v3982 = vld [vmem:[%s3776 + $0x41] sm:$0xff]
        %v3983 = vld [vmem:[%s3776 + $0x51] sm:$0xff]
        %v3984 = vld [vmem:[%s3776 + $0x61] sm:$0xff]
        %v3985 = vld [vmem:[%s3776 + $0x71] sm:$0xff]
        %v3986 = vpack.c.bf16 %v3978, %v3978
        %v3987 = vpack.c.bf16 %v3979, %v3979
        %v3988 = vpack.c.bf16 %v3980, %v3980
        %v3989 = vpack.c.bf16 %v3981, %v3981
        %v3990 = vpack.c.bf16 %v3982, %v3982
        %v3991 = vpack.c.bf16 %v3983, %v3983
        %v3992 = vpack.c.bf16 %v3984, %v3984
        %v3993 = vpack.c.bf16 %v3985, %v3985
        %v3994 = vld [vmem:[%s3776 + $0x2] sm:$0xff]
        %v3995 = vld [vmem:[%s3776 + $0x12] sm:$0xff]
        %v3996 = vld [vmem:[%s3776 + $0x22] sm:$0xff]
        %v3997 = vld [vmem:[%s3776 + $0x32] sm:$0xff]
        %v3998 = vld [vmem:[%s3776 + $0x42] sm:$0xff]
        %v3999 = vld [vmem:[%s3776 + $0x52] sm:$0xff]
        %v4000 = vld [vmem:[%s3776 + $0x62] sm:$0xff]
        %v4001 = vld [vmem:[%s3776 + $0x72] sm:$0xff]
        %v4002 = vpack.c.bf16 %v3994, %v3994
        %v4003 = vpack.c.bf16 %v3995, %v3995
        %v4004 = vpack.c.bf16 %v3996, %v3996
        %v4005 = vpack.c.bf16 %v3997, %v3997
        %v4006 = vpack.c.bf16 %v3998, %v3998
        %v4007 = vpack.c.bf16 %v3999, %v3999
        %v4008 = vpack.c.bf16 %v4000, %v4000
        %v4009 = vpack.c.bf16 %v4001, %v4001
        %4018 = vrot.lane.b32.xlu0 %v3986, 64
        %v4019 = vpop.permute.xlu0 %4018
        %4020 = vrot.lane.b32.xlu0 %v3987, 64
        %v4021 = vpop.permute.xlu0 %4020
        %4022 = vrot.lane.b32.xlu0 %v3988, 64
        %v4023 = vpop.permute.xlu0 %4022
        %4024 = vrot.lane.b32.xlu0 %v3989, 64
        %v4025 = vpop.permute.xlu0 %4024
        %4026 = vrot.lane.b32.xlu0 %v3990, 64
        %v4027 = vpop.permute.xlu0 %4026
        %4028 = vrot.lane.b32.xlu0 %v3991, 64
        %v4029 = vpop.permute.xlu0 %4028
        %4030 = vrot.lane.b32.xlu0 %v3992, 64
        %v4031 = vpop.permute.xlu0 %4030
        %4032 = vrot.lane.b32.xlu0 %v3993, 64
        %v4033 = vpop.permute.xlu0 %4032
        %v4036 = vsel %vm863, %v3970, %v4019
        %v4039 = vsel %vm863, %v3971, %v4021
        %v4042 = vsel %vm863, %v3972, %v4023
        %v4045 = vsel %vm863, %v3973, %v4025
        %v4048 = vsel %vm863, %v3974, %v4027
        %v4051 = vsel %vm863, %v3975, %v4029
        %v4054 = vsel %vm863, %v3976, %v4031
        %v4057 = vsel %vm863, %v3977, %v4033
        %v4074 = vunpack.c.l.b16 %v4036
        %v4075 = vunpack.c.l.b16 %v4002
        %v4076 = vunpack.c.l.b16 %v4039
        %v4077 = vunpack.c.l.b16 %v4003
        %v4078 = vunpack.c.l.b16 %v4042
        %v4079 = vunpack.c.l.b16 %v4004
        %v4080 = vunpack.c.l.b16 %v4045
        %v4081 = vunpack.c.l.b16 %v4005
        %v4082 = vunpack.c.l.b16 %v4048
        %v4083 = vunpack.c.l.b16 %v4006
        %v4084 = vunpack.c.l.b16 %v4051
        %v4085 = vunpack.c.l.b16 %v4007
        %v4086 = vunpack.c.l.b16 %v4054
        %v4087 = vunpack.c.l.b16 %v4008
        %v4088 = vunpack.c.l.b16 %v4057
        %v4089 = vunpack.c.l.b16 %v4009
        %v4090 = vpack.c.b16 %v4076, %v4074
        %v4091 = vpack.c.b16 %v4077, %v4075
        %v4092 = vpack.c.b16 %v4080, %v4078
        %v4093 = vpack.c.b16 %v4081, %v4079
        %v4094 = vpack.c.b16 %v4084, %v4082
        %v4095 = vpack.c.b16 %v4085, %v4083
        %v4096 = vpack.c.b16 %v4088, %v4086
        %v4097 = vpack.c.b16 %v4089, %v4087
        %v4126 = vunpack.c.l.b16 %v3938
        %v4127 = vunpack.c.l.b16 %v3939
        %v4128 = vunpack.c.l.b16 %v3940
        %v4129 = vunpack.c.l.b16 %v3941
        %v4130 = vunpack.c.l.b16 %v3942
        %v4131 = vunpack.c.l.b16 %v3943
        %v4132 = vunpack.c.l.b16 %v3944
        %v4133 = vunpack.c.l.b16 %v3945
        %v4134 = vunpack.c.l.b16 %v3946
        %v4135 = vunpack.c.l.b16 %v3947
        %v4136 = vunpack.c.l.b16 %v3948
        %v4137 = vunpack.c.l.b16 %v3949
        %v4138 = vunpack.c.l.b16 %v3950
        %v4139 = vunpack.c.l.b16 %v3951
        %v4140 = vunpack.c.l.b16 %v3952
        %v4141 = vunpack.c.l.b16 %v3953
        %v4142 = vunpack.c.l.b16 %v3954
        %v4143 = vunpack.c.l.b16 %v3955
        %v4144 = vunpack.c.l.b16 %v3956
        %v4145 = vunpack.c.l.b16 %v3957
        %v4146 = vunpack.c.l.b16 %v3958
        %v4147 = vunpack.c.l.b16 %v3959
        %v4148 = vunpack.c.l.b16 %v3960
        %v4149 = vunpack.c.l.b16 %v3961
        %v4150 = vpack.c.b16 %v4127, %v4126
        %v4151 = vpack.c.b16 %v4129, %v4128
        %v4152 = vpack.c.b16 %v4131, %v4130
        %v4153 = vpack.c.b16 %v4133, %v4132
        %v4154 = vpack.c.b16 %v4135, %v4134
        %v4155 = vpack.c.b16 %v4137, %v4136
        %v4156 = vpack.c.b16 %v4139, %v4138
        %v4157 = vpack.c.b16 %v4141, %v4140
        %v4158 = vpack.c.b16 %v4143, %v4142
        %v4159 = vpack.c.b16 %v4145, %v4144
        %v4160 = vpack.c.b16 %v4147, %v4146
        %v4161 = vpack.c.b16 %v4149, %v4148
        %v4175 = vsel %vm863, %v4091, 0
        %v4178 = vsel %vm863, %v4093, 0
        %v4181 = vsel %vm863, %v4095, 0
        %v4184 = vsel %vm863, %v4097, 0
        %4186 = vmatprep.subr.bf16.mxu0 0
        %4187 = vmatpush1.bf16.msra.mxu0 %v4157
        %4188 = vmatprep.subr.bf16.mxu0 0
        %4189 = vmatpush1.bf16.msra.mxu0 %v4156
        %4190 = vmatprep.subr.bf16.mxu0 0
        %4191 = vmatpush1.bf16.msra.mxu0 %v4155
        %4192 = vmatprep.subr.bf16.mxu0 0
        %4193 = vmatpush1.bf16.msra.mxu0 %v4154
        %4194 = vmatprep.subr.bf16.mxu0 0
        %4195 = vmatpush1.bf16.msra.mxu0 %v4153
        %4196 = vmatprep.subr.bf16.mxu0 0
        %4197 = vmatpush1.bf16.msra.mxu0 %v4152
        %4198 = vmatprep.subr.bf16.mxu0 0
        %4199 = vmatpush1.bf16.msra.mxu0 %v4151
        %4200 = vmatprep.subr.bf16.mxu0 0
        %4201 = vmatpush1.bf16.msra.mxu0 %v4150
        %4202 = vmatprep.subr.bf16.mxu0 0
        %4203 = vmatpush2.bf16.msra.mxu0 0
        %4204 = vmatprep.subr.bf16.mxu0 0
        %4205 = vmatpush2.bf16.msra.mxu0 0
        %4206 = vmatprep.subr.bf16.mxu0 0
        %4207 = vmatpush2.bf16.msra.mxu0 0
        %4208 = vmatprep.subr.bf16.mxu0 0
        %4209 = vmatpush2.bf16.msra.mxu0 0
        %4210 = vmatprep.subr.bf16.mxu0 0
        %4211 = vmatpush2.bf16.msra.mxu0 %v4161
        %4212 = vmatprep.subr.bf16.mxu0 0
        %4213 = vmatpush2.bf16.msra.mxu0 %v4160
        %4214 = vmatprep.subr.bf16.mxu0 0
        %4215 = vmatpush2.bf16.msra.mxu0 %v4159
        %4216 = vmatprep.subr.bf16.mxu0 0
        %4217 = vmatpush2.bf16.msra.mxu0 %v4158
        %4218 = vmatprep.mubr.bf16.mxu0 %v4175
        %4219 = vmatmul.mubr.bf16.gmra.mxu0 %v4090
        %v4220 = vpop.f32.mrf.mxu0
        %v4221 = vadd.f32 0.0, %v4220
        %v4222 = vpop.f32.mrf.mxu0
        %v4223 = vpop.f32.mrf.mxu0
        %v4224 = vadd.f32 0.0, %v4223
        %v4225 = vpop.f32.mrf.mxu0
        %4226 = vmatprep.mubr.bf16.mxu0 %v4178
        %4227 = vmatmul.mubr.bf16.gmra.mxu0 %v4092
        %v4228 = vpop.f32.mrf.mxu0
        %v4229 = vadd.f32 0.0, %v4228
        %v4230 = vpop.f32.mrf.mxu0
        %v4231 = vpop.f32.mrf.mxu0
        %v4232 = vadd.f32 0.0, %v4231
        %v4233 = vpop.f32.mrf.mxu0
        %4234 = vmatprep.mubr.bf16.mxu0 %v4181
        %4235 = vmatmul.mubr.bf16.gmra.mxu0 %v4094
        %v4236 = vpop.f32.mrf.mxu0
        %v4237 = vadd.f32 0.0, %v4236
        %v4238 = vpop.f32.mrf.mxu0
        %v4239 = vpop.f32.mrf.mxu0
        %v4240 = vadd.f32 0.0, %v4239
        %v4241 = vpop.f32.mrf.mxu0
        %4242 = vmatprep.mubr.bf16.mxu0 %v4184
        %4243 = vmatmul.mubr.bf16.gmra.mxu0 %v4096
        %v4244 = vpop.f32.mrf.mxu0
        %v4245 = vadd.f32 0.0, %v4244
        %v4246 = vpop.f32.mrf.mxu0
        %v4247 = vpop.f32.mrf.mxu0
        %v4248 = vadd.f32 0.0, %v4247
        %v4249 = vpop.f32.mrf.mxu0
        %4250 = vdwg.mxu0
        %v4251 = vpack.c.b16 %v3923, %v3921
        %v4252 = vpack.c.b16 %v3924, %v3922
        %v4253 = vpack.c.b16 %v3927, %v3925
        %v4254 = vpack.c.b16 %v3928, %v3926
        %v4255 = vpack.c.b16 %v3931, %v3929
        %v4256 = vpack.c.b16 %v3932, %v3930
        %v4257 = vpack.c.b16 %v3935, %v3933
        %v4258 = vpack.c.b16 %v3936, %v3934
        %v4287 = vunpack.c.l.b16 %v3785
        %v4288 = vunpack.c.l.b16 %v3786
        %v4289 = vunpack.c.l.b16 %v3787
        %v4290 = vunpack.c.l.b16 %v3788
        %v4291 = vunpack.c.l.b16 %v3789
        %v4292 = vunpack.c.l.b16 %v3790
        %v4293 = vunpack.c.l.b16 %v3791
        %v4294 = vunpack.c.l.b16 %v3792
        %v4295 = vunpack.c.l.b16 %v3793
        %v4296 = vunpack.c.l.b16 %v3794
        %v4297 = vunpack.c.l.b16 %v3795
        %v4298 = vunpack.c.l.b16 %v3796
        %v4299 = vunpack.c.l.b16 %v3797
        %v4300 = vunpack.c.l.b16 %v3798
        %v4301 = vunpack.c.l.b16 %v3799
        %v4302 = vunpack.c.l.b16 %v3800
        %v4303 = vunpack.c.l.b16 %v3801
        %v4304 = vunpack.c.l.b16 %v3802
        %v4305 = vunpack.c.l.b16 %v3803
        %v4306 = vunpack.c.l.b16 %v3804
        %v4307 = vunpack.c.l.b16 %v3805
        %v4308 = vunpack.c.l.b16 %v3806
        %v4309 = vunpack.c.l.b16 %v3807
        %v4310 = vunpack.c.l.b16 %v3808
        %v4311 = vpack.c.b16 %v4288, %v4287
        %v4312 = vpack.c.b16 %v4290, %v4289
        %v4313 = vpack.c.b16 %v4292, %v4291
        %v4314 = vpack.c.b16 %v4294, %v4293
        %v4315 = vpack.c.b16 %v4296, %v4295
        %v4316 = vpack.c.b16 %v4298, %v4297
        %v4317 = vpack.c.b16 %v4300, %v4299
        %v4318 = vpack.c.b16 %v4302, %v4301
        %v4319 = vpack.c.b16 %v4304, %v4303
        %v4320 = vpack.c.b16 %v4306, %v4305
        %v4321 = vpack.c.b16 %v4308, %v4307
        %v4322 = vpack.c.b16 %v4310, %v4309
        %v4336 = vsel %vm863, %v4252, 0
        %v4339 = vsel %vm863, %v4254, 0
        %v4342 = vsel %vm863, %v4256, 0
        %v4345 = vsel %vm863, %v4258, 0
        %4347 = vmatprep.subr.bf16.mxu0 0
        %4348 = vmatpush1.bf16.msra.mxu0 %v4318
        %4349 = vmatprep.subr.bf16.mxu0 0
        %4350 = vmatpush1.bf16.msra.mxu0 %v4317
        %4351 = vmatprep.subr.bf16.mxu0 0
        %4352 = vmatpush1.bf16.msra.mxu0 %v4316
        %4353 = vmatprep.subr.bf16.mxu0 0
        %4354 = vmatpush1.bf16.msra.mxu0 %v4315
        %4355 = vmatprep.subr.bf16.mxu0 0
        %4356 = vmatpush1.bf16.msra.mxu0 %v4314
        %4357 = vmatprep.subr.bf16.mxu0 0
        %4358 = vmatpush1.bf16.msra.mxu0 %v4313
        %4359 = vmatprep.subr.bf16.mxu0 0
        %4360 = vmatpush1.bf16.msra.mxu0 %v4312
        %4361 = vmatprep.subr.bf16.mxu0 0
        %4362 = vmatpush1.bf16.msra.mxu0 %v4311
        %4363 = vmatprep.subr.bf16.mxu0 0
        %4364 = vmatpush2.bf16.msra.mxu0 0
        %4365 = vmatprep.subr.bf16.mxu0 0
        %4366 = vmatpush2.bf16.msra.mxu0 0
        %4367 = vmatprep.subr.bf16.mxu0 0
        %4368 = vmatpush2.bf16.msra.mxu0 0
        %4369 = vmatprep.subr.bf16.mxu0 0
        %4370 = vmatpush2.bf16.msra.mxu0 0
        %4371 = vmatprep.subr.bf16.mxu0 0
        %4372 = vmatpush2.bf16.msra.mxu0 %v4322
        %4373 = vmatprep.subr.bf16.mxu0 0
        %4374 = vmatpush2.bf16.msra.mxu0 %v4321
        %4375 = vmatprep.subr.bf16.mxu0 0
        %4376 = vmatpush2.bf16.msra.mxu0 %v4320
        %4377 = vmatprep.subr.bf16.mxu0 0
        %4378 = vmatpush2.bf16.msra.mxu0 %v4319
        %4379 = vmatprep.mubr.bf16.mxu0 %v4336
        %4380 = vmatmul.mubr.bf16.gmra.mxu0 %v4251
        %v4381 = vpop.f32.mrf.mxu0
        %v4382 = vadd.f32 %v4221, %v4381
        %v4383 = vpop.f32.mrf.mxu0
        %v4384 = vpop.f32.mrf.mxu0
        %v4385 = vadd.f32 %v4224, %v4384
        %v4386 = vpop.f32.mrf.mxu0
        %4387 = vmatprep.mubr.bf16.mxu0 %v4339
        %4388 = vmatmul.mubr.bf16.gmra.mxu0 %v4253
        %v4389 = vpop.f32.mrf.mxu0
        %v4390 = vadd.f32 %v4229, %v4389
        %v4391 = vpop.f32.mrf.mxu0
        %v4392 = vpop.f32.mrf.mxu0
        %v4393 = vadd.f32 %v4232, %v4392
        %v4394 = vpop.f32.mrf.mxu0
        %4395 = vmatprep.mubr.bf16.mxu0 %v4342
        %4396 = vmatmul.mubr.bf16.gmra.mxu0 %v4255
        %v4397 = vpop.f32.mrf.mxu0
        %v4398 = vadd.f32 %v4237, %v4397
        %v4399 = vpop.f32.mrf.mxu0
        %v4400 = vpop.f32.mrf.mxu0
        %v4401 = vadd.f32 %v4240, %v4400
        %v4402 = vpop.f32.mrf.mxu0
        %4403 = vmatprep.mubr.bf16.mxu0 %v4345
        %4404 = vmatmul.mubr.bf16.gmra.mxu0 %v4257
        %v4405 = vpop.f32.mrf.mxu0
        %v4406 = vadd.f32 %v4245, %v4405
        %v4407 = vpop.f32.mrf.mxu0
        %v4408 = vpop.f32.mrf.mxu0
        %v4409 = vadd.f32 %v4248, %v4408
        %v4410 = vpop.f32.mrf.mxu0
        %4411 = vdwg.mxu0
        %s4412 = scalar_lea.vmem %s7, 192
        %v4413 = vld [vmem:[%s4412] sm:$0xf]
        %v4414 = vld [vmem:[%s4412 + $0x4] sm:$0xf]
        %v4415 = vld [vmem:[%s4412 + $0x8] sm:$0xf]
        %v4416 = vld [vmem:[%s4412 + $0xc] sm:$0xf]
        %v4417 = vld [vmem:[%s4412 + $0x10] sm:$0xf]
        %v4418 = vld [vmem:[%s4412 + $0x14] sm:$0xf]
        %v4419 = vld [vmem:[%s4412 + $0x18] sm:$0xf]
        %v4420 = vld [vmem:[%s4412 + $0x1c] sm:$0xf]
        %v4421 = vld [vmem:[%s4412 + $0x20] sm:$0xf]
        %v4422 = vld [vmem:[%s4412 + $0x24] sm:$0xf]
        %v4423 = vld [vmem:[%s4412 + $0x28] sm:$0xf]
        %v4424 = vld [vmem:[%s4412 + $0x2c] sm:$0xf]
        %v4425 = vld [vmem:[%s4412 + $0x30] sm:$0xf]
        %v4426 = vld [vmem:[%s4412 + $0x34] sm:$0xf]
        %v4427 = vld [vmem:[%s4412 + $0x38] sm:$0xf]
        %v4428 = vld [vmem:[%s4412 + $0x3c] sm:$0xf]
        %v4429 = vld [vmem:[%s4412 + $0x40] sm:$0xf]
        %v4430 = vld [vmem:[%s4412 + $0x44] sm:$0xf]
        %v4431 = vld [vmem:[%s4412 + $0x48] sm:$0xf]
        %v4432 = vld [vmem:[%s4412 + $0x4c] sm:$0xf]
        %v4433 = vld [vmem:[%s4412 + $0x50] sm:$0xf]
        %v4434 = vld [vmem:[%s4412 + $0x54] sm:$0xf]
        %v4435 = vld [vmem:[%s4412 + $0x58] sm:$0xf]
        %v4436 = vld [vmem:[%s4412 + $0x5c] sm:$0xf]
        %s4437 = scalar_lea.vmem [#allocation3], 32
        %v4438 = vld [vmem:[%s4437] sm:$0xff]
        %v4439 = vld [vmem:[%s4437 + $0x10] sm:$0xff]
        %v4440 = vld [vmem:[%s4437 + $0x20] sm:$0xff]
        %v4441 = vld [vmem:[%s4437 + $0x30] sm:$0xff]
        %v4442 = vld [vmem:[%s4437 + $0x40] sm:$0xff]
        %v4443 = vld [vmem:[%s4437 + $0x50] sm:$0xff]
        %v4444 = vld [vmem:[%s4437 + $0x60] sm:$0xff]
        %v4445 = vld [vmem:[%s4437 + $0x70] sm:$0xff]
        %v4446 = vpack.c.bf16 %v4438, %v4438
        %v4447 = vpack.c.bf16 %v4439, %v4439
        %v4448 = vpack.c.bf16 %v4440, %v4440
        %v4449 = vpack.c.bf16 %v4441, %v4441
        %v4450 = vpack.c.bf16 %v4442, %v4442
        %v4451 = vpack.c.bf16 %v4443, %v4443
        %v4452 = vpack.c.bf16 %v4444, %v4444
        %v4453 = vpack.c.bf16 %v4445, %v4445
        %v4454 = vld [vmem:[%s4437 + $0x1] sm:$0xff]
        %v4455 = vld [vmem:[%s4437 + $0x11] sm:$0xff]
        %v4456 = vld [vmem:[%s4437 + $0x21] sm:$0xff]
        %v4457 = vld [vmem:[%s4437 + $0x31] sm:$0xff]
        %v4458 = vld [vmem:[%s4437 + $0x41] sm:$0xff]
        %v4459 = vld [vmem:[%s4437 + $0x51] sm:$0xff]
        %v4460 = vld [vmem:[%s4437 + $0x61] sm:$0xff]
        %v4461 = vld [vmem:[%s4437 + $0x71] sm:$0xff]
        %v4462 = vpack.c.bf16 %v4454, %v4454
        %v4463 = vpack.c.bf16 %v4455, %v4455
        %v4464 = vpack.c.bf16 %v4456, %v4456
        %v4465 = vpack.c.bf16 %v4457, %v4457
        %v4466 = vpack.c.bf16 %v4458, %v4458
        %v4467 = vpack.c.bf16 %v4459, %v4459
        %v4468 = vpack.c.bf16 %v4460, %v4460
        %v4469 = vpack.c.bf16 %v4461, %v4461
        %v4470 = vld [vmem:[%s4437 + $0x2] sm:$0xff]
        %v4471 = vld [vmem:[%s4437 + $0x12] sm:$0xff]
        %v4472 = vld [vmem:[%s4437 + $0x22] sm:$0xff]
        %v4473 = vld [vmem:[%s4437 + $0x32] sm:$0xff]
        %v4474 = vld [vmem:[%s4437 + $0x42] sm:$0xff]
        %v4475 = vld [vmem:[%s4437 + $0x52] sm:$0xff]
        %v4476 = vld [vmem:[%s4437 + $0x62] sm:$0xff]
        %v4477 = vld [vmem:[%s4437 + $0x72] sm:$0xff]
        %v4478 = vpack.c.bf16 %v4470, %v4470
        %v4479 = vpack.c.bf16 %v4471, %v4471
        %v4480 = vpack.c.bf16 %v4472, %v4472
        %v4481 = vpack.c.bf16 %v4473, %v4473
        %v4482 = vpack.c.bf16 %v4474, %v4474
        %v4483 = vpack.c.bf16 %v4475, %v4475
        %v4484 = vpack.c.bf16 %v4476, %v4476
        %v4485 = vpack.c.bf16 %v4477, %v4477
        %4494 = vrot.lane.b32.xlu0 %v4462, 64
        %v4495 = vpop.permute.xlu0 %4494
        %4496 = vrot.lane.b32.xlu0 %v4463, 64
        %v4497 = vpop.permute.xlu0 %4496
        %4498 = vrot.lane.b32.xlu0 %v4464, 64
        %v4499 = vpop.permute.xlu0 %4498
        %4500 = vrot.lane.b32.xlu0 %v4465, 64
        %v4501 = vpop.permute.xlu0 %4500
        %4502 = vrot.lane.b32.xlu0 %v4466, 64
        %v4503 = vpop.permute.xlu0 %4502
        %4504 = vrot.lane.b32.xlu0 %v4467, 64
        %v4505 = vpop.permute.xlu0 %4504
        %4506 = vrot.lane.b32.xlu0 %v4468, 64
        %v4507 = vpop.permute.xlu0 %4506
        %4508 = vrot.lane.b32.xlu0 %v4469, 64
        %v4509 = vpop.permute.xlu0 %4508
        %v4512 = vsel %vm863, %v4446, %v4495
        %v4515 = vsel %vm863, %v4447, %v4497
        %v4518 = vsel %vm863, %v4448, %v4499
        %v4521 = vsel %vm863, %v4449, %v4501
        %v4524 = vsel %vm863, %v4450, %v4503
        %v4527 = vsel %vm863, %v4451, %v4505
        %v4530 = vsel %vm863, %v4452, %v4507
        %v4533 = vsel %vm863, %v4453, %v4509
        %v4550 = vunpack.c.l.b16 %v4512
        %v4551 = vunpack.c.l.b16 %v4478
        %v4552 = vunpack.c.l.b16 %v4515
        %v4553 = vunpack.c.l.b16 %v4479
        %v4554 = vunpack.c.l.b16 %v4518
        %v4555 = vunpack.c.l.b16 %v4480
        %v4556 = vunpack.c.l.b16 %v4521
        %v4557 = vunpack.c.l.b16 %v4481
        %v4558 = vunpack.c.l.b16 %v4524
        %v4559 = vunpack.c.l.b16 %v4482
        %v4560 = vunpack.c.l.b16 %v4527
        %v4561 = vunpack.c.l.b16 %v4483
        %v4562 = vunpack.c.l.b16 %v4530
        %v4563 = vunpack.c.l.b16 %v4484
        %v4564 = vunpack.c.l.b16 %v4533
        %v4565 = vunpack.c.l.b16 %v4485
        %v4566 = vpack.c.b16 %v4552, %v4550
        %v4567 = vpack.c.b16 %v4553, %v4551
        %v4568 = vpack.c.b16 %v4556, %v4554
        %v4569 = vpack.c.b16 %v4557, %v4555
        %v4570 = vpack.c.b16 %v4560, %v4558
        %v4571 = vpack.c.b16 %v4561, %v4559
        %v4572 = vpack.c.b16 %v4564, %v4562
        %v4573 = vpack.c.b16 %v4565, %v4563
        %v4602 = vunpack.c.l.b16 %v4413
        %v4603 = vunpack.c.l.b16 %v4414
        %v4604 = vunpack.c.l.b16 %v4415
        %v4605 = vunpack.c.l.b16 %v4416
        %v4606 = vunpack.c.l.b16 %v4417
        %v4607 = vunpack.c.l.b16 %v4418
        %v4608 = vunpack.c.l.b16 %v4419
        %v4609 = vunpack.c.l.b16 %v4420
        %v4610 = vunpack.c.l.b16 %v4421
        %v4611 = vunpack.c.l.b16 %v4422
        %v4612 = vunpack.c.l.b16 %v4423
        %v4613 = vunpack.c.l.b16 %v4424
        %v4614 = vunpack.c.l.b16 %v4425
        %v4615 = vunpack.c.l.b16 %v4426
        %v4616 = vunpack.c.l.b16 %v4427
        %v4617 = vunpack.c.l.b16 %v4428
        %v4618 = vunpack.c.l.b16 %v4429
        %v4619 = vunpack.c.l.b16 %v4430
        %v4620 = vunpack.c.l.b16 %v4431
        %v4621 = vunpack.c.l.b16 %v4432
        %v4622 = vunpack.c.l.b16 %v4433
        %v4623 = vunpack.c.l.b16 %v4434
        %v4624 = vunpack.c.l.b16 %v4435
        %v4625 = vunpack.c.l.b16 %v4436
        %v4626 = vpack.c.b16 %v4603, %v4602
        %v4627 = vpack.c.b16 %v4605, %v4604
        %v4628 = vpack.c.b16 %v4607, %v4606
        %v4629 = vpack.c.b16 %v4609, %v4608
        %v4630 = vpack.c.b16 %v4611, %v4610
        %v4631 = vpack.c.b16 %v4613, %v4612
        %v4632 = vpack.c.b16 %v4615, %v4614
        %v4633 = vpack.c.b16 %v4617, %v4616
        %v4634 = vpack.c.b16 %v4619, %v4618
        %v4635 = vpack.c.b16 %v4621, %v4620
        %v4636 = vpack.c.b16 %v4623, %v4622
        %v4637 = vpack.c.b16 %v4625, %v4624
        %v4651 = vsel %vm863, %v4567, 0
        %v4654 = vsel %vm863, %v4569, 0
        %v4657 = vsel %vm863, %v4571, 0
        %v4660 = vsel %vm863, %v4573, 0
        %4662 = vmatprep.subr.bf16.mxu0 0
        %4663 = vmatpush1.bf16.msra.mxu0 %v4633
        %4664 = vmatprep.subr.bf16.mxu0 0
        %4665 = vmatpush1.bf16.msra.mxu0 %v4632
        %4666 = vmatprep.subr.bf16.mxu0 0
        %4667 = vmatpush1.bf16.msra.mxu0 %v4631
        %4668 = vmatprep.subr.bf16.mxu0 0
        %4669 = vmatpush1.bf16.msra.mxu0 %v4630
        %4670 = vmatprep.subr.bf16.mxu0 0
        %4671 = vmatpush1.bf16.msra.mxu0 %v4629
        %4672 = vmatprep.subr.bf16.mxu0 0
        %4673 = vmatpush1.bf16.msra.mxu0 %v4628
        %4674 = vmatprep.subr.bf16.mxu0 0
        %4675 = vmatpush1.bf16.msra.mxu0 %v4627
        %4676 = vmatprep.subr.bf16.mxu0 0
        %4677 = vmatpush1.bf16.msra.mxu0 %v4626
        %4678 = vmatprep.subr.bf16.mxu0 0
        %4679 = vmatpush2.bf16.msra.mxu0 0
        %4680 = vmatprep.subr.bf16.mxu0 0
        %4681 = vmatpush2.bf16.msra.mxu0 0
        %4682 = vmatprep.subr.bf16.mxu0 0
        %4683 = vmatpush2.bf16.msra.mxu0 0
        %4684 = vmatprep.subr.bf16.mxu0 0
        %4685 = vmatpush2.bf16.msra.mxu0 0
        %4686 = vmatprep.subr.bf16.mxu0 0
        %4687 = vmatpush2.bf16.msra.mxu0 %v4637
        %4688 = vmatprep.subr.bf16.mxu0 0
        %4689 = vmatpush2.bf16.msra.mxu0 %v4636
        %4690 = vmatprep.subr.bf16.mxu0 0
        %4691 = vmatpush2.bf16.msra.mxu0 %v4635
        %4692 = vmatprep.subr.bf16.mxu0 0
        %4693 = vmatpush2.bf16.msra.mxu0 %v4634
        %4694 = vmatprep.mubr.bf16.mxu0 %v4651
        %4695 = vmatmul.mubr.bf16.gmra.mxu0 %v4566
        %v4696 = vpop.f32.mrf.mxu0
        %v4697 = vadd.f32 0.0, %v4696
        %v4698 = vpop.f32.mrf.mxu0
        %v4699 = vpop.f32.mrf.mxu0
        %v4700 = vadd.f32 0.0, %v4699
        %v4701 = vpop.f32.mrf.mxu0
        %4702 = vmatprep.mubr.bf16.mxu0 %v4654
        %4703 = vmatmul.mubr.bf16.gmra.mxu0 %v4568
        %v4704 = vpop.f32.mrf.mxu0
        %v4705 = vadd.f32 0.0, %v4704
        %v4706 = vpop.f32.mrf.mxu0
        %v4707 = vpop.f32.mrf.mxu0
        %v4708 = vadd.f32 0.0, %v4707
        %v4709 = vpop.f32.mrf.mxu0
        %4710 = vmatprep.mubr.bf16.mxu0 %v4657
        %4711 = vmatmul.mubr.bf16.gmra.mxu0 %v4570
        %v4712 = vpop.f32.mrf.mxu0
        %v4713 = vadd.f32 0.0, %v4712
        %v4714 = vpop.f32.mrf.mxu0
        %v4715 = vpop.f32.mrf.mxu0
        %v4716 = vadd.f32 0.0, %v4715
        %v4717 = vpop.f32.mrf.mxu0
        %4718 = vmatprep.mubr.bf16.mxu0 %v4660
        %4719 = vmatmul.mubr.bf16.gmra.mxu0 %v4572
        %v4720 = vpop.f32.mrf.mxu0
        %v4721 = vadd.f32 0.0, %v4720
        %v4722 = vpop.f32.mrf.mxu0
        %v4723 = vpop.f32.mrf.mxu0
        %v4724 = vadd.f32 0.0, %v4723
        %v4725 = vpop.f32.mrf.mxu0
        %4726 = vdwg.mxu0
        %v4727 = vadd.f32 %v4382, %v4697
        %v4728 = vadd.f32 %v4385, %v4700
        %v4729 = vadd.f32 %v4390, %v4705
        %v4730 = vadd.f32 %v4393, %v4708
        %v4731 = vadd.f32 %v4398, %v4713
        %v4732 = vadd.f32 %v4401, %v4716
        %v4733 = vadd.f32 %v4406, %v4721
        %v4734 = vadd.f32 %v4409, %v4724
        %v4735 = vld [vmem:[%s8] sm:$0x1]
        %v4737 = vlaneseq
        %v4738 = vshrl.u32 %v4737, 7
        %v4739 = vsub.s32 0, %v4738
        %v4740 = vrot.slane %v4735, %v4739
        %v4742 = vadd.f32 %v4727, %v4740
        %v4743 = vadd.f32 %v4728, %v4740
        %v4744 = vadd.f32 %v4729, %v4740
        %v4745 = vadd.f32 %v4730, %v4740
        %v4746 = vadd.f32 %v4731, %v4740
        %v4747 = vadd.f32 %v4732, %v4740
        %v4748 = vadd.f32 %v4733, %v4740
        %v4749 = vadd.f32 %v4734, %v4740
        %v4750 = vmax.f32 %v4742, 0.0
        %v4751 = vmax.f32 %v4743, 0.0
        %v4752 = vmax.f32 %v4744, 0.0
        %v4753 = vmax.f32 %v4745, 0.0
        %v4754 = vmax.f32 %v4746, 0.0
        %v4755 = vmax.f32 %v4747, 0.0
        %v4756 = vmax.f32 %v4748, 0.0
        %v4757 = vmax.f32 %v4749, 0.0
        %4758 = vst [vmem:[#allocation4] sm:$0xff] 0.0
        %4759 = vst [vmem:[#allocation4 + $0x8] sm:$0x3] 0.0
        %4760 = vst [vmem:[#allocation4 + $0x10] sm:$0xff] 0.0
        %4761 = vst [vmem:[#allocation4 + $0x18] sm:$0x3] 0.0
        %4762 = vst [vmem:[#allocation4 + $0x20] sm:$0xff] 0.0
        %4763 = vst [vmem:[#allocation4 + $0x28] sm:$0x3] 0.0
        %4764 = vst [vmem:[#allocation4 + $0x30] sm:$0xff] 0.0
        %4765 = vst [vmem:[#allocation4 + $0x38] sm:$0x3] 0.0
        %4766 = vst [vmem:[#allocation4 + $0x40] sm:$0xff] 0.0
        %4767 = vst [vmem:[#allocation4 + $0x48] sm:$0x3] 0.0
        %4768 = vst [vmem:[#allocation4 + $0x50] sm:$0xff] 0.0
        %4769 = vst [vmem:[#allocation4 + $0x58] sm:$0x3] 0.0
        %4770 = vst [vmem:[#allocation4 + $0x60] sm:$0xff] 0.0
        %4771 = vst [vmem:[#allocation4 + $0x68] sm:$0x3] 0.0
        %4772 = vst [vmem:[#allocation4 + $0x70] sm:$0xff] 0.0
        %4773 = vst [vmem:[#allocation4 + $0x78] sm:$0x3] 0.0
        %4774 = vst [vmem:[#allocation4 + $0x80] sm:$0xff] 0.0
        %4775 = vst [vmem:[#allocation4 + $0x88] sm:$0x3] 0.0
        %4776 = vst [vmem:[#allocation4 + $0x90] sm:$0xff] 0.0
        %4777 = vst [vmem:[#allocation4 + $0x98] sm:$0x3] 0.0
        %s4778 = scalar_lea.vmem [#allocation4], 16
        %4779 = vst [vmem:[%s4778 + $0x1] sm:$0xff] %v4750
        %4780 = vst [vmem:[%s4778 + $0x11] sm:$0xff] %v4751
        %4781 = vst [vmem:[%s4778 + $0x21] sm:$0xff] %v4752
        %4782 = vst [vmem:[%s4778 + $0x31] sm:$0xff] %v4753
        %4783 = vst [vmem:[%s4778 + $0x41] sm:$0xff] %v4754
        %4784 = vst [vmem:[%s4778 + $0x51] sm:$0xff] %v4755
        %4785 = vst [vmem:[%s4778 + $0x61] sm:$0xff] %v4756
        %4786 = vst [vmem:[%s4778 + $0x71] sm:$0xff] %v4757
        %v4787 = vld [vmem:[%s9] sm:$0xf]
        %v4788 = vld [vmem:[%s9 + $0x4] sm:$0xf]
        %v4789 = vld [vmem:[%s9 + $0x8] sm:$0xf]
        %v4790 = vld [vmem:[%s9 + $0xc] sm:$0xf]
        %v4791 = vld [vmem:[%s9 + $0x10] sm:$0xf]
        %v4792 = vld [vmem:[%s9 + $0x14] sm:$0xf]
        %v4793 = vld [vmem:[%s9 + $0x18] sm:$0xf]
        %v4794 = vld [vmem:[%s9 + $0x1c] sm:$0xf]
        %v4795 = vld [vmem:[%s9 + $0x20] sm:$0xf]
        %v4796 = vld [vmem:[%s9 + $0x24] sm:$0xf]
        %v4797 = vld [vmem:[%s9 + $0x28] sm:$0xf]
        %v4798 = vld [vmem:[%s9 + $0x2c] sm:$0xf]
        %v4799 = vld [vmem:[%s9 + $0x30] sm:$0xf]
        %v4800 = vld [vmem:[%s9 + $0x34] sm:$0xf]
        %v4801 = vld [vmem:[%s9 + $0x38] sm:$0xf]
        %v4802 = vld [vmem:[%s9 + $0x3c] sm:$0xf]
        %v4803 = vld [vmem:[%s9 + $0x40] sm:$0xf]
        %v4804 = vld [vmem:[%s9 + $0x44] sm:$0xf]
        %v4805 = vld [vmem:[%s9 + $0x48] sm:$0xf]
        %v4806 = vld [vmem:[%s9 + $0x4c] sm:$0xf]
        %v4807 = vld [vmem:[%s9 + $0x50] sm:$0xf]
        %v4808 = vld [vmem:[%s9 + $0x54] sm:$0xf]
        %v4809 = vld [vmem:[%s9 + $0x58] sm:$0xf]
        %v4810 = vld [vmem:[%s9 + $0x5c] sm:$0xf]
        %v4811 = vld [vmem:[%s9 + $0x60] sm:$0xf]
        %v4812 = vld [vmem:[%s9 + $0x64] sm:$0xf]
        %v4813 = vld [vmem:[%s9 + $0x68] sm:$0xf]
        %v4814 = vld [vmem:[%s9 + $0x6c] sm:$0xf]
        %v4815 = vld [vmem:[%s9 + $0x70] sm:$0xf]
        %v4816 = vld [vmem:[%s9 + $0x74] sm:$0xf]
        %v4817 = vld [vmem:[%s9 + $0x78] sm:$0xf]
        %v4818 = vld [vmem:[%s9 + $0x7c] sm:$0xf]
        %v4819 = vld [vmem:[%s9 + $0x80] sm:$0xf]
        %v4820 = vld [vmem:[%s9 + $0x84] sm:$0xf]
        %v4821 = vld [vmem:[%s9 + $0x88] sm:$0xf]
        %v4822 = vld [vmem:[%s9 + $0x8c] sm:$0xf]
        %v4823 = vld [vmem:[%s9 + $0x90] sm:$0xf]
        %v4824 = vld [vmem:[%s9 + $0x94] sm:$0xf]
        %v4825 = vld [vmem:[%s9 + $0x98] sm:$0xf]
        %v4826 = vld [vmem:[%s9 + $0x9c] sm:$0xf]
        %v4827 = vld [vmem:[%s9 + $0xa0] sm:$0xf]
        %v4828 = vld [vmem:[%s9 + $0xa4] sm:$0xf]
        %v4829 = vld [vmem:[%s9 + $0xa8] sm:$0xf]
        %v4830 = vld [vmem:[%s9 + $0xac] sm:$0xf]
        %v4831 = vld [vmem:[%s9 + $0xb0] sm:$0xf]
        %v4832 = vld [vmem:[%s9 + $0xb4] sm:$0xf]
        %v4833 = vld [vmem:[%s9 + $0xb8] sm:$0xf]
        %v4834 = vld [vmem:[%s9 + $0xbc] sm:$0xf]
        %v4835 = vld [vmem:[#allocation4] sm:$0xff]
        %v4836 = vld [vmem:[#allocation4 + $0x10] sm:$0xff]
        %v4837 = vld [vmem:[#allocation4 + $0x20] sm:$0xff]
        %v4838 = vld [vmem:[#allocation4 + $0x30] sm:$0xff]
        %v4839 = vld [vmem:[#allocation4 + $0x40] sm:$0xff]
        %v4840 = vld [vmem:[#allocation4 + $0x50] sm:$0xff]
        %v4841 = vld [vmem:[#allocation4 + $0x60] sm:$0xff]
        %v4842 = vld [vmem:[#allocation4 + $0x70] sm:$0xff]
        %v4843 = vpack.c.bf16 %v4835, %v4835
        %v4844 = vpack.c.bf16 %v4836, %v4836
        %v4845 = vpack.c.bf16 %v4837, %v4837
        %v4846 = vpack.c.bf16 %v4838, %v4838
        %v4847 = vpack.c.bf16 %v4839, %v4839
        %v4848 = vpack.c.bf16 %v4840, %v4840
        %v4849 = vpack.c.bf16 %v4841, %v4841
        %v4850 = vpack.c.bf16 %v4842, %v4842
        %v4851 = vld [vmem:[#allocation4 + $0x1] sm:$0xff]
        %v4852 = vld [vmem:[#allocation4 + $0x11] sm:$0xff]
        %v4853 = vld [vmem:[#allocation4 + $0x21] sm:$0xff]
        %v4854 = vld [vmem:[#allocation4 + $0x31] sm:$0xff]
        %v4855 = vld [vmem:[#allocation4 + $0x41] sm:$0xff]
        %v4856 = vld [vmem:[#allocation4 + $0x51] sm:$0xff]
        %v4857 = vld [vmem:[#allocation4 + $0x61] sm:$0xff]
        %v4858 = vld [vmem:[#allocation4 + $0x71] sm:$0xff]
        %v4859 = vpack.c.bf16 %v4851, %v4851
        %v4860 = vpack.c.bf16 %v4852, %v4852
        %v4861 = vpack.c.bf16 %v4853, %v4853
        %v4862 = vpack.c.bf16 %v4854, %v4854
        %v4863 = vpack.c.bf16 %v4855, %v4855
        %v4864 = vpack.c.bf16 %v4856, %v4856
        %v4865 = vpack.c.bf16 %v4857, %v4857
        %v4866 = vpack.c.bf16 %v4858, %v4858
        %v4867 = vld [vmem:[#allocation4 + $0x2] sm:$0xff]
        %v4868 = vld [vmem:[#allocation4 + $0x12] sm:$0xff]
        %v4869 = vld [vmem:[#allocation4 + $0x22] sm:$0xff]
        %v4870 = vld [vmem:[#allocation4 + $0x32] sm:$0xff]
        %v4871 = vld [vmem:[#allocation4 + $0x42] sm:$0xff]
        %v4872 = vld [vmem:[#allocation4 + $0x52] sm:$0xff]
        %v4873 = vld [vmem:[#allocation4 + $0x62] sm:$0xff]
        %v4874 = vld [vmem:[#allocation4 + $0x72] sm:$0xff]
        %v4875 = vpack.c.bf16 %v4867, %v4867
        %v4876 = vpack.c.bf16 %v4868, %v4868
        %v4877 = vpack.c.bf16 %v4869, %v4869
        %v4878 = vpack.c.bf16 %v4870, %v4870
        %v4879 = vpack.c.bf16 %v4871, %v4871
        %v4880 = vpack.c.bf16 %v4872, %v4872
        %v4881 = vpack.c.bf16 %v4873, %v4873
        %v4882 = vpack.c.bf16 %v4874, %v4874
        %v4907 = vunpack.c.l.b16 %v4843
        %v4908 = vunpack.c.l.b16 %v4859
        %v4909 = vunpack.c.l.b16 %v4875
        %v4910 = vunpack.c.l.b16 %v4844
        %v4911 = vunpack.c.l.b16 %v4860
        %v4912 = vunpack.c.l.b16 %v4876
        %v4913 = vunpack.c.l.b16 %v4845
        %v4914 = vunpack.c.l.b16 %v4861
        %v4915 = vunpack.c.l.b16 %v4877
        %v4916 = vunpack.c.l.b16 %v4846
        %v4917 = vunpack.c.l.b16 %v4862
        %v4918 = vunpack.c.l.b16 %v4878
        %v4919 = vunpack.c.l.b16 %v4847
        %v4920 = vunpack.c.l.b16 %v4863
        %v4921 = vunpack.c.l.b16 %v4879
        %v4922 = vunpack.c.l.b16 %v4848
        %v4923 = vunpack.c.l.b16 %v4864
        %v4924 = vunpack.c.l.b16 %v4880
        %v4925 = vunpack.c.l.b16 %v4849
        %v4926 = vunpack.c.l.b16 %v4865
        %v4927 = vunpack.c.l.b16 %v4881
        %v4928 = vunpack.c.l.b16 %v4850
        %v4929 = vunpack.c.l.b16 %v4866
        %v4930 = vunpack.c.l.b16 %v4882
        %s4931 = scalar_lea.vmem %s9, 192
        %v4932 = vld [vmem:[%s4931] sm:$0xf]
        %v4933 = vld [vmem:[%s4931 + $0x4] sm:$0xf]
        %v4934 = vld [vmem:[%s4931 + $0x8] sm:$0xf]
        %v4935 = vld [vmem:[%s4931 + $0xc] sm:$0xf]
        %v4936 = vld [vmem:[%s4931 + $0x10] sm:$0xf]
        %v4937 = vld [vmem:[%s4931 + $0x14] sm:$0xf]
        %v4938 = vld [vmem:[%s4931 + $0x18] sm:$0xf]
        %v4939 = vld [vmem:[%s4931 + $0x1c] sm:$0xf]
        %v4940 = vld [vmem:[%s4931 + $0x20] sm:$0xf]
        %v4941 = vld [vmem:[%s4931 + $0x24] sm:$0xf]
        %v4942 = vld [vmem:[%s4931 + $0x28] sm:$0xf]
        %v4943 = vld [vmem:[%s4931 + $0x2c] sm:$0xf]
        %v4944 = vld [vmem:[%s4931 + $0x30] sm:$0xf]
        %v4945 = vld [vmem:[%s4931 + $0x34] sm:$0xf]
        %v4946 = vld [vmem:[%s4931 + $0x38] sm:$0xf]
        %v4947 = vld [vmem:[%s4931 + $0x3c] sm:$0xf]
        %v4948 = vld [vmem:[%s4931 + $0x40] sm:$0xf]
        %v4949 = vld [vmem:[%s4931 + $0x44] sm:$0xf]
        %v4950 = vld [vmem:[%s4931 + $0x48] sm:$0xf]
        %v4951 = vld [vmem:[%s4931 + $0x4c] sm:$0xf]
        %v4952 = vld [vmem:[%s4931 + $0x50] sm:$0xf]
        %v4953 = vld [vmem:[%s4931 + $0x54] sm:$0xf]
        %v4954 = vld [vmem:[%s4931 + $0x58] sm:$0xf]
        %v4955 = vld [vmem:[%s4931 + $0x5c] sm:$0xf]
        %v4956 = vld [vmem:[%s4931 + $0x60] sm:$0xf]
        %v4957 = vld [vmem:[%s4931 + $0x64] sm:$0xf]
        %v4958 = vld [vmem:[%s4931 + $0x68] sm:$0xf]
        %v4959 = vld [vmem:[%s4931 + $0x6c] sm:$0xf]
        %v4960 = vld [vmem:[%s4931 + $0x70] sm:$0xf]
        %v4961 = vld [vmem:[%s4931 + $0x74] sm:$0xf]
        %v4962 = vld [vmem:[%s4931 + $0x78] sm:$0xf]
        %v4963 = vld [vmem:[%s4931 + $0x7c] sm:$0xf]
        %v4964 = vld [vmem:[%s4931 + $0x80] sm:$0xf]
        %v4965 = vld [vmem:[%s4931 + $0x84] sm:$0xf]
        %v4966 = vld [vmem:[%s4931 + $0x88] sm:$0xf]
        %v4967 = vld [vmem:[%s4931 + $0x8c] sm:$0xf]
        %v4968 = vld [vmem:[%s4931 + $0x90] sm:$0xf]
        %v4969 = vld [vmem:[%s4931 + $0x94] sm:$0xf]
        %v4970 = vld [vmem:[%s4931 + $0x98] sm:$0xf]
        %v4971 = vld [vmem:[%s4931 + $0x9c] sm:$0xf]
        %v4972 = vld [vmem:[%s4931 + $0xa0] sm:$0xf]
        %v4973 = vld [vmem:[%s4931 + $0xa4] sm:$0xf]
        %v4974 = vld [vmem:[%s4931 + $0xa8] sm:$0xf]
        %v4975 = vld [vmem:[%s4931 + $0xac] sm:$0xf]
        %v4976 = vld [vmem:[%s4931 + $0xb0] sm:$0xf]
        %v4977 = vld [vmem:[%s4931 + $0xb4] sm:$0xf]
        %v4978 = vld [vmem:[%s4931 + $0xb8] sm:$0xf]
        %v4979 = vld [vmem:[%s4931 + $0xbc] sm:$0xf]
        %v4980 = vld [vmem:[%s4778] sm:$0xff]
        %v4981 = vld [vmem:[%s4778 + $0x10] sm:$0xff]
        %v4982 = vld [vmem:[%s4778 + $0x20] sm:$0xff]
        %v4983 = vld [vmem:[%s4778 + $0x30] sm:$0xff]
        %v4984 = vld [vmem:[%s4778 + $0x40] sm:$0xff]
        %v4985 = vld [vmem:[%s4778 + $0x50] sm:$0xff]
        %v4986 = vld [vmem:[%s4778 + $0x60] sm:$0xff]
        %v4987 = vld [vmem:[%s4778 + $0x70] sm:$0xff]
        %v4988 = vpack.c.bf16 %v4980, %v4980
        %v4989 = vpack.c.bf16 %v4981, %v4981
        %v4990 = vpack.c.bf16 %v4982, %v4982
        %v4991 = vpack.c.bf16 %v4983, %v4983
        %v4992 = vpack.c.bf16 %v4984, %v4984
        %v4993 = vpack.c.bf16 %v4985, %v4985
        %v4994 = vpack.c.bf16 %v4986, %v4986
        %v4995 = vpack.c.bf16 %v4987, %v4987
        %v4996 = vld [vmem:[%s4778 + $0x1] sm:$0xff]
        %v4997 = vld [vmem:[%s4778 + $0x11] sm:$0xff]
        %v4998 = vld [vmem:[%s4778 + $0x21] sm:$0xff]
        %v4999 = vld [vmem:[%s4778 + $0x31] sm:$0xff]
        %v5000 = vld [vmem:[%s4778 + $0x41] sm:$0xff]
        %v5001 = vld [vmem:[%s4778 + $0x51] sm:$0xff]
        %v5002 = vld [vmem:[%s4778 + $0x61] sm:$0xff]
        %v5003 = vld [vmem:[%s4778 + $0x71] sm:$0xff]
        %v5004 = vpack.c.bf16 %v4996, %v4996
        %v5005 = vpack.c.bf16 %v4997, %v4997
        %v5006 = vpack.c.bf16 %v4998, %v4998
        %v5007 = vpack.c.bf16 %v4999, %v4999
        %v5008 = vpack.c.bf16 %v5000, %v5000
        %v5009 = vpack.c.bf16 %v5001, %v5001
        %v5010 = vpack.c.bf16 %v5002, %v5002
        %v5011 = vpack.c.bf16 %v5003, %v5003
        %v5012 = vld [vmem:[%s4778 + $0x2] sm:$0xff]
        %v5013 = vld [vmem:[%s4778 + $0x12] sm:$0xff]
        %v5014 = vld [vmem:[%s4778 + $0x22] sm:$0xff]
        %v5015 = vld [vmem:[%s4778 + $0x32] sm:$0xff]
        %v5016 = vld [vmem:[%s4778 + $0x42] sm:$0xff]
        %v5017 = vld [vmem:[%s4778 + $0x52] sm:$0xff]
        %v5018 = vld [vmem:[%s4778 + $0x62] sm:$0xff]
        %v5019 = vld [vmem:[%s4778 + $0x72] sm:$0xff]
        %v5020 = vpack.c.bf16 %v5012, %v5012
        %v5021 = vpack.c.bf16 %v5013, %v5013
        %v5022 = vpack.c.bf16 %v5014, %v5014
        %v5023 = vpack.c.bf16 %v5015, %v5015
        %v5024 = vpack.c.bf16 %v5016, %v5016
        %v5025 = vpack.c.bf16 %v5017, %v5017
        %v5026 = vpack.c.bf16 %v5018, %v5018
        %v5027 = vpack.c.bf16 %v5019, %v5019
        %v5052 = vunpack.c.l.b16 %v4988
        %v5053 = vunpack.c.l.b16 %v5004
        %v5054 = vunpack.c.l.b16 %v5020
        %v5055 = vunpack.c.l.b16 %v4989
        %v5056 = vunpack.c.l.b16 %v5005
        %v5057 = vunpack.c.l.b16 %v5021
        %v5058 = vunpack.c.l.b16 %v4990
        %v5059 = vunpack.c.l.b16 %v5006
        %v5060 = vunpack.c.l.b16 %v5022
        %v5061 = vunpack.c.l.b16 %v4991
        %v5062 = vunpack.c.l.b16 %v5007
        %v5063 = vunpack.c.l.b16 %v5023
        %v5064 = vunpack.c.l.b16 %v4992
        %v5065 = vunpack.c.l.b16 %v5008
        %v5066 = vunpack.c.l.b16 %v5024
        %v5067 = vunpack.c.l.b16 %v4993
        %v5068 = vunpack.c.l.b16 %v5009
        %v5069 = vunpack.c.l.b16 %v5025
        %v5070 = vunpack.c.l.b16 %v4994
        %v5071 = vunpack.c.l.b16 %v5010
        %v5072 = vunpack.c.l.b16 %v5026
        %v5073 = vunpack.c.l.b16 %v4995
        %v5074 = vunpack.c.l.b16 %v5011
        %v5075 = vunpack.c.l.b16 %v5027
        %v5076 = vpack.c.b16 %v5055, %v5052
        %v5077 = vpack.c.b16 %v5056, %v5053
        %v5078 = vpack.c.b16 %v5057, %v5054
        %v5079 = vpack.c.b16 %v5061, %v5058
        %v5080 = vpack.c.b16 %v5062, %v5059
        %v5081 = vpack.c.b16 %v5063, %v5060
        %v5082 = vpack.c.b16 %v5067, %v5064
        %v5083 = vpack.c.b16 %v5068, %v5065
        %v5084 = vpack.c.b16 %v5069, %v5066
        %v5085 = vpack.c.b16 %v5073, %v5070
        %v5086 = vpack.c.b16 %v5074, %v5071
        %v5087 = vpack.c.b16 %v5075, %v5072
        %v5148 = vunpack.c.l.b16 %v4932
        %v5149 = vunpack.c.l.b16 %v4933
        %v5150 = vunpack.c.l.b16 %v4934
        %v5151 = vunpack.c.l.b16 %v4935
        %v5152 = vunpack.c.l.b16 %v4936
        %v5153 = vunpack.c.l.b16 %v4937
        %v5154 = vunpack.c.l.b16 %v4938
        %v5155 = vunpack.c.l.b16 %v4939
        %v5156 = vunpack.c.l.b16 %v4940
        %v5157 = vunpack.c.l.b16 %v4941
        %v5158 = vunpack.c.l.b16 %v4942
        %v5159 = vunpack.c.l.b16 %v4943
        %v5160 = vunpack.c.l.b16 %v4944
        %v5161 = vunpack.c.l.b16 %v4945
        %v5162 = vunpack.c.l.b16 %v4946
        %v5163 = vunpack.c.l.b16 %v4947
        %v5164 = vunpack.c.l.b16 %v4948
        %v5165 = vunpack.c.l.b16 %v4949
        %v5166 = vunpack.c.l.b16 %v4950
        %v5167 = vunpack.c.l.b16 %v4951
        %v5168 = vunpack.c.l.b16 %v4952
        %v5169 = vunpack.c.l.b16 %v4953
        %v5170 = vunpack.c.l.b16 %v4954
        %v5171 = vunpack.c.l.b16 %v4955
        %v5172 = vunpack.c.l.b16 %v4956
        %v5173 = vunpack.c.l.b16 %v4957
        %v5174 = vunpack.c.l.b16 %v4958
        %v5175 = vunpack.c.l.b16 %v4959
        %v5176 = vunpack.c.l.b16 %v4960
        %v5177 = vunpack.c.l.b16 %v4961
        %v5178 = vunpack.c.l.b16 %v4962
        %v5179 = vunpack.c.l.b16 %v4963
        %v5180 = vunpack.c.l.b16 %v4964
        %v5181 = vunpack.c.l.b16 %v4965
        %v5182 = vunpack.c.l.b16 %v4966
        %v5183 = vunpack.c.l.b16 %v4967
        %v5184 = vunpack.c.l.b16 %v4968
        %v5185 = vunpack.c.l.b16 %v4969
        %v5186 = vunpack.c.l.b16 %v4970
        %v5187 = vunpack.c.l.b16 %v4971
        %v5188 = vunpack.c.l.b16 %v4972
        %v5189 = vunpack.c.l.b16 %v4973
        %v5190 = vunpack.c.l.b16 %v4974
        %v5191 = vunpack.c.l.b16 %v4975
        %v5192 = vunpack.c.l.b16 %v4976
        %v5193 = vunpack.c.l.b16 %v4977
        %v5194 = vunpack.c.l.b16 %v4978
        %v5195 = vunpack.c.l.b16 %v4979
        %v5196 = vpack.c.b16 %v5149, %v5148
        %v5197 = vpack.c.b16 %v5151, %v5150
        %v5198 = vpack.c.b16 %v5153, %v5152
        %v5199 = vpack.c.b16 %v5155, %v5154
        %v5200 = vpack.c.b16 %v5157, %v5156
        %v5201 = vpack.c.b16 %v5159, %v5158
        %v5202 = vpack.c.b16 %v5161, %v5160
        %v5203 = vpack.c.b16 %v5163, %v5162
        %v5204 = vpack.c.b16 %v5165, %v5164
        %v5205 = vpack.c.b16 %v5167, %v5166
        %v5206 = vpack.c.b16 %v5169, %v5168
        %v5207 = vpack.c.b16 %v5171, %v5170
        %v5208 = vpack.c.b16 %v5173, %v5172
        %v5209 = vpack.c.b16 %v5175, %v5174
        %v5210 = vpack.c.b16 %v5177, %v5176
        %v5211 = vpack.c.b16 %v5179, %v5178
        %v5212 = vpack.c.b16 %v5181, %v5180
        %v5213 = vpack.c.b16 %v5183, %v5182
        %v5214 = vpack.c.b16 %v5185, %v5184
        %v5215 = vpack.c.b16 %v5187, %v5186
        %v5216 = vpack.c.b16 %v5189, %v5188
        %v5217 = vpack.c.b16 %v5191, %v5190
        %v5218 = vpack.c.b16 %v5193, %v5192
        %v5219 = vpack.c.b16 %v5195, %v5194
        %5244 = vmatprep.subr.bf16.mxu0 0
        %5245 = vmatpush1.bf16.msra.mxu0 %v5203
        %5246 = vmatprep.subr.bf16.mxu0 0
        %5247 = vmatpush1.bf16.msra.mxu0 %v5202
        %5248 = vmatprep.subr.bf16.mxu0 0
        %5249 = vmatpush1.bf16.msra.mxu0 %v5201
        %5250 = vmatprep.subr.bf16.mxu0 0
        %5251 = vmatpush1.bf16.msra.mxu0 %v5200
        %5252 = vmatprep.subr.bf16.mxu0 0
        %5253 = vmatpush1.bf16.msra.mxu0 %v5199
        %5254 = vmatprep.subr.bf16.mxu0 0
        %5255 = vmatpush1.bf16.msra.mxu0 %v5198
        %5256 = vmatprep.subr.bf16.mxu0 0
        %5257 = vmatpush1.bf16.msra.mxu0 %v5197
        %5258 = vmatprep.subr.bf16.mxu0 0
        %5259 = vmatpush1.bf16.msra.mxu0 %v5196
        %5260 = vmatprep.subr.bf16.mxu0 0
        %5261 = vmatpush2.bf16.msra.mxu0 %v5211
        %5262 = vmatprep.subr.bf16.mxu0 0
        %5263 = vmatpush2.bf16.msra.mxu0 %v5210
        %5264 = vmatprep.subr.bf16.mxu0 0
        %5265 = vmatpush2.bf16.msra.mxu0 %v5209
        %5266 = vmatprep.subr.bf16.mxu0 0
        %5267 = vmatpush2.bf16.msra.mxu0 %v5208
        %5268 = vmatprep.subr.bf16.mxu0 0
        %5269 = vmatpush2.bf16.msra.mxu0 %v5207
        %5270 = vmatprep.subr.bf16.mxu0 0
        %5271 = vmatpush2.bf16.msra.mxu0 %v5206
        %5272 = vmatprep.subr.bf16.mxu0 0
        %5273 = vmatpush2.bf16.msra.mxu0 %v5205
        %5274 = vmatprep.subr.bf16.mxu0 0
        %5275 = vmatpush2.bf16.msra.mxu0 %v5204
        %5276 = vmatprep.mubr.bf16.mxu0 %v5077
        %5277 = vmatmul.mubr.bf16.gmra.mxu0 %v5076
        %v5278 = vpop.f32.mrf.mxu0
        %v5279 = vadd.f32 0.0, %v5278
        %v5280 = vpop.f32.mrf.mxu0
        %v5281 = vpop.f32.mrf.mxu0
        %v5282 = vadd.f32 0.0, %v5281
        %v5283 = vpop.f32.mrf.mxu0
        %5284 = vmatprep.mubr.bf16.mxu0 %v5080
        %5285 = vmatmul.mubr.bf16.gmra.mxu0 %v5079
        %v5286 = vpop.f32.mrf.mxu0
        %v5287 = vadd.f32 0.0, %v5286
        %v5288 = vpop.f32.mrf.mxu0
        %v5289 = vpop.f32.mrf.mxu0
        %v5290 = vadd.f32 0.0, %v5289
        %v5291 = vpop.f32.mrf.mxu0
        %5292 = vmatprep.mubr.bf16.mxu0 %v5083
        %5293 = vmatmul.mubr.bf16.gmra.mxu0 %v5082
        %v5294 = vpop.f32.mrf.mxu0
        %v5295 = vadd.f32 0.0, %v5294
        %v5296 = vpop.f32.mrf.mxu0
        %v5297 = vpop.f32.mrf.mxu0
        %v5298 = vadd.f32 0.0, %v5297
        %v5299 = vpop.f32.mrf.mxu0
        %5300 = vmatprep.mubr.bf16.mxu0 %v5086
        %5301 = vmatmul.mubr.bf16.gmra.mxu0 %v5085
        %v5302 = vpop.f32.mrf.mxu0
        %v5303 = vadd.f32 0.0, %v5302
        %v5304 = vpop.f32.mrf.mxu0
        %v5305 = vpop.f32.mrf.mxu0
        %v5306 = vadd.f32 0.0, %v5305
        %v5307 = vpop.f32.mrf.mxu0
        %5308 = vdwg.mxu0
        %5309 = vmatprep.subr.bf16.mxu0 0
        %5310 = vmatpush1.bf16.msra.mxu0 %v5219
        %5311 = vmatprep.subr.bf16.mxu0 0
        %5312 = vmatpush1.bf16.msra.mxu0 %v5218
        %5313 = vmatprep.subr.bf16.mxu0 0
        %5314 = vmatpush1.bf16.msra.mxu0 %v5217
        %5315 = vmatprep.subr.bf16.mxu0 0
        %5316 = vmatpush1.bf16.msra.mxu0 %v5216
        %5317 = vmatprep.subr.bf16.mxu0 0
        %5318 = vmatpush1.bf16.msra.mxu0 %v5215
        %5319 = vmatprep.subr.bf16.mxu0 0
        %5320 = vmatpush1.bf16.msra.mxu0 %v5214
        %5321 = vmatprep.subr.bf16.mxu0 0
        %5322 = vmatpush1.bf16.msra.mxu0 %v5213
        %5323 = vmatprep.subr.bf16.mxu0 0
        %5324 = vmatpush1.bf16.msra.mxu0 %v5212
        %5325 = vmatprep.subr.bf16.mxu0 0
        %5326 = vmatpush2.bf16.msra.mxu0 0
        %5327 = vmatprep.subr.bf16.mxu0 0
        %5328 = vmatpush2.bf16.msra.mxu0 0
        %5329 = vmatprep.subr.bf16.mxu0 0
        %5330 = vmatpush2.bf16.msra.mxu0 0
        %5331 = vmatprep.subr.bf16.mxu0 0
        %5332 = vmatpush2.bf16.msra.mxu0 0
        %5333 = vmatprep.subr.bf16.mxu0 0
        %5334 = vmatpush2.bf16.msra.mxu0 0
        %5335 = vmatprep.subr.bf16.mxu0 0
        %5336 = vmatpush2.bf16.msra.mxu0 0
        %5337 = vmatprep.subr.bf16.mxu0 0
        %5338 = vmatpush2.bf16.msra.mxu0 0
        %5339 = vmatprep.subr.bf16.mxu0 0
        %5340 = vmatpush2.bf16.msra.mxu0 0
        %5341 = vmatprep.mubr.bf16.mxu0 0
        %5342 = vmatmul.mubr.bf16.gmra.mxu0 %v5078
        %v5343 = vpop.f32.mrf.mxu0
        %v5344 = vadd.f32 %v5279, %v5343
        %v5345 = vpop.f32.mrf.mxu0
        %v5346 = vpop.f32.mrf.mxu0
        %v5347 = vadd.f32 %v5282, %v5346
        %v5348 = vpop.f32.mrf.mxu0
        %5349 = vmatprep.mubr.bf16.mxu0 0
        %5350 = vmatmul.mubr.bf16.gmra.mxu0 %v5081
        %v5351 = vpop.f32.mrf.mxu0
        %v5352 = vadd.f32 %v5287, %v5351
        %v5353 = vpop.f32.mrf.mxu0
        %v5354 = vpop.f32.mrf.mxu0
        %v5355 = vadd.f32 %v5290, %v5354
        %v5356 = vpop.f32.mrf.mxu0
        %5357 = vmatprep.mubr.bf16.mxu0 0
        %5358 = vmatmul.mubr.bf16.gmra.mxu0 %v5084
        %v5359 = vpop.f32.mrf.mxu0
        %v5360 = vadd.f32 %v5295, %v5359
        %v5361 = vpop.f32.mrf.mxu0
        %v5362 = vpop.f32.mrf.mxu0
        %v5363 = vadd.f32 %v5298, %v5362
        %v5364 = vpop.f32.mrf.mxu0
        %5365 = vmatprep.mubr.bf16.mxu0 0
        %5366 = vmatmul.mubr.bf16.gmra.mxu0 %v5087
        %v5367 = vpop.f32.mrf.mxu0
        %v5368 = vadd.f32 %v5303, %v5367
        %v5369 = vpop.f32.mrf.mxu0
        %v5370 = vpop.f32.mrf.mxu0
        %v5371 = vadd.f32 %v5306, %v5370
        %v5372 = vpop.f32.mrf.mxu0
        %5373 = vdwg.mxu0
        %v5374 = vpack.c.b16 %v4910, %v4907
        %v5375 = vpack.c.b16 %v4911, %v4908
        %v5376 = vpack.c.b16 %v4912, %v4909
        %v5377 = vpack.c.b16 %v4916, %v4913
        %v5378 = vpack.c.b16 %v4917, %v4914
        %v5379 = vpack.c.b16 %v4918, %v4915
        %v5380 = vpack.c.b16 %v4922, %v4919
        %v5381 = vpack.c.b16 %v4923, %v4920
        %v5382 = vpack.c.b16 %v4924, %v4921
        %v5383 = vpack.c.b16 %v4928, %v4925
        %v5384 = vpack.c.b16 %v4929, %v4926
        %v5385 = vpack.c.b16 %v4930, %v4927
        %v5446 = vunpack.c.l.b16 %v4787
        %v5447 = vunpack.c.l.b16 %v4788
        %v5448 = vunpack.c.l.b16 %v4789
        %v5449 = vunpack.c.l.b16 %v4790
        %v5450 = vunpack.c.l.b16 %v4791
        %v5451 = vunpack.c.l.b16 %v4792
        %v5452 = vunpack.c.l.b16 %v4793
        %v5453 = vunpack.c.l.b16 %v4794
        %v5454 = vunpack.c.l.b16 %v4795
        %v5455 = vunpack.c.l.b16 %v4796
        %v5456 = vunpack.c.l.b16 %v4797
        %v5457 = vunpack.c.l.b16 %v4798
        %v5458 = vunpack.c.l.b16 %v4799
        %v5459 = vunpack.c.l.b16 %v4800
        %v5460 = vunpack.c.l.b16 %v4801
        %v5461 = vunpack.c.l.b16 %v4802
        %v5462 = vunpack.c.l.b16 %v4803
        %v5463 = vunpack.c.l.b16 %v4804
        %v5464 = vunpack.c.l.b16 %v4805
        %v5465 = vunpack.c.l.b16 %v4806
        %v5466 = vunpack.c.l.b16 %v4807
        %v5467 = vunpack.c.l.b16 %v4808
        %v5468 = vunpack.c.l.b16 %v4809
        %v5469 = vunpack.c.l.b16 %v4810
        %v5470 = vunpack.c.l.b16 %v4811
        %v5471 = vunpack.c.l.b16 %v4812
        %v5472 = vunpack.c.l.b16 %v4813
        %v5473 = vunpack.c.l.b16 %v4814
        %v5474 = vunpack.c.l.b16 %v4815
        %v5475 = vunpack.c.l.b16 %v4816
        %v5476 = vunpack.c.l.b16 %v4817
        %v5477 = vunpack.c.l.b16 %v4818
        %v5478 = vunpack.c.l.b16 %v4819
        %v5479 = vunpack.c.l.b16 %v4820
        %v5480 = vunpack.c.l.b16 %v4821
        %v5481 = vunpack.c.l.b16 %v4822
        %v5482 = vunpack.c.l.b16 %v4823
        %v5483 = vunpack.c.l.b16 %v4824
        %v5484 = vunpack.c.l.b16 %v4825
        %v5485 = vunpack.c.l.b16 %v4826
        %v5486 = vunpack.c.l.b16 %v4827
        %v5487 = vunpack.c.l.b16 %v4828
        %v5488 = vunpack.c.l.b16 %v4829
        %v5489 = vunpack.c.l.b16 %v4830
        %v5490 = vunpack.c.l.b16 %v4831
        %v5491 = vunpack.c.l.b16 %v4832
        %v5492 = vunpack.c.l.b16 %v4833
        %v5493 = vunpack.c.l.b16 %v4834
        %v5494 = vpack.c.b16 %v5447, %v5446
        %v5495 = vpack.c.b16 %v5449, %v5448
        %v5496 = vpack.c.b16 %v5451, %v5450
        %v5497 = vpack.c.b16 %v5453, %v5452
        %v5498 = vpack.c.b16 %v5455, %v5454
        %v5499 = vpack.c.b16 %v5457, %v5456
        %v5500 = vpack.c.b16 %v5459, %v5458
        %v5501 = vpack.c.b16 %v5461, %v5460
        %v5502 = vpack.c.b16 %v5463, %v5462
        %v5503 = vpack.c.b16 %v5465, %v5464
        %v5504 = vpack.c.b16 %v5467, %v5466
        %v5505 = vpack.c.b16 %v5469, %v5468
        %v5506 = vpack.c.b16 %v5471, %v5470
        %v5507 = vpack.c.b16 %v5473, %v5472
        %v5508 = vpack.c.b16 %v5475, %v5474
        %v5509 = vpack.c.b16 %v5477, %v5476
        %v5510 = vpack.c.b16 %v5479, %v5478
        %v5511 = vpack.c.b16 %v5481, %v5480
        %v5512 = vpack.c.b16 %v5483, %v5482
        %v5513 = vpack.c.b16 %v5485, %v5484
        %v5514 = vpack.c.b16 %v5487, %v5486
        %v5515 = vpack.c.b16 %v5489, %v5488
        %v5516 = vpack.c.b16 %v5491, %v5490
        %v5517 = vpack.c.b16 %v5493, %v5492
        %5542 = vmatprep.subr.bf16.mxu0 0
        %5543 = vmatpush1.bf16.msra.mxu0 %v5501
        %5544 = vmatprep.subr.bf16.mxu0 0
        %5545 = vmatpush1.bf16.msra.mxu0 %v5500
        %5546 = vmatprep.subr.bf16.mxu0 0
        %5547 = vmatpush1.bf16.msra.mxu0 %v5499
        %5548 = vmatprep.subr.bf16.mxu0 0
        %5549 = vmatpush1.bf16.msra.mxu0 %v5498
        %5550 = vmatprep.subr.bf16.mxu0 0
        %5551 = vmatpush1.bf16.msra.mxu0 %v5497
        %5552 = vmatprep.subr.bf16.mxu0 0
        %5553 = vmatpush1.bf16.msra.mxu0 %v5496
        %5554 = vmatprep.subr.bf16.mxu0 0
        %5555 = vmatpush1.bf16.msra.mxu0 %v5495
        %5556 = vmatprep.subr.bf16.mxu0 0
        %5557 = vmatpush1.bf16.msra.mxu0 %v5494
        %5558 = vmatprep.subr.bf16.mxu0 0
        %5559 = vmatpush2.bf16.msra.mxu0 %v5509
        %5560 = vmatprep.subr.bf16.mxu0 0
        %5561 = vmatpush2.bf16.msra.mxu0 %v5508
        %5562 = vmatprep.subr.bf16.mxu0 0
        %5563 = vmatpush2.bf16.msra.mxu0 %v5507
        %5564 = vmatprep.subr.bf16.mxu0 0
        %5565 = vmatpush2.bf16.msra.mxu0 %v5506
        %5566 = vmatprep.subr.bf16.mxu0 0
        %5567 = vmatpush2.bf16.msra.mxu0 %v5505
        %5568 = vmatprep.subr.bf16.mxu0 0
        %5569 = vmatpush2.bf16.msra.mxu0 %v5504
        %5570 = vmatprep.subr.bf16.mxu0 0
        %5571 = vmatpush2.bf16.msra.mxu0 %v5503
        %5572 = vmatprep.subr.bf16.mxu0 0
        %5573 = vmatpush2.bf16.msra.mxu0 %v5502
        %5574 = vmatprep.mubr.bf16.mxu0 %v5375
        %5575 = vmatmul.mubr.bf16.gmra.mxu0 %v5374
        %v5576 = vpop.f32.mrf.mxu0
        %v5577 = vadd.f32 %v5344, %v5576
        %v5578 = vpop.f32.mrf.mxu0
        %v5579 = vpop.f32.mrf.mxu0
        %v5580 = vadd.f32 %v5347, %v5579
        %v5581 = vpop.f32.mrf.mxu0
        %5582 = vmatprep.mubr.bf16.mxu0 %v5378
        %5583 = vmatmul.mubr.bf16.gmra.mxu0 %v5377
        %v5584 = vpop.f32.mrf.mxu0
        %v5585 = vadd.f32 %v5352, %v5584
        %v5586 = vpop.f32.mrf.mxu0
        %v5587 = vpop.f32.mrf.mxu0
        %v5588 = vadd.f32 %v5355, %v5587
        %v5589 = vpop.f32.mrf.mxu0
        %5590 = vmatprep.mubr.bf16.mxu0 %v5381
        %5591 = vmatmul.mubr.bf16.gmra.mxu0 %v5380
        %v5592 = vpop.f32.mrf.mxu0
        %v5593 = vadd.f32 %v5360, %v5592
        %v5594 = vpop.f32.mrf.mxu0
        %v5595 = vpop.f32.mrf.mxu0
        %v5596 = vadd.f32 %v5363, %v5595
        %v5597 = vpop.f32.mrf.mxu0
        %5598 = vmatprep.mubr.bf16.mxu0 %v5384
        %5599 = vmatmul.mubr.bf16.gmra.mxu0 %v5383
        %v5600 = vpop.f32.mrf.mxu0
        %v5601 = vadd.f32 %v5368, %v5600
        %v5602 = vpop.f32.mrf.mxu0
        %v5603 = vpop.f32.mrf.mxu0
        %v5604 = vadd.f32 %v5371, %v5603
        %v5605 = vpop.f32.mrf.mxu0
        %5606 = vdwg.mxu0
        %5607 = vmatprep.subr.bf16.mxu0 0
        %5608 = vmatpush1.bf16.msra.mxu0 %v5517
        %5609 = vmatprep.subr.bf16.mxu0 0
        %5610 = vmatpush1.bf16.msra.mxu0 %v5516
        %5611 = vmatprep.subr.bf16.mxu0 0
        %5612 = vmatpush1.bf16.msra.mxu0 %v5515
        %5613 = vmatprep.subr.bf16.mxu0 0
        %5614 = vmatpush1.bf16.msra.mxu0 %v5514
        %5615 = vmatprep.subr.bf16.mxu0 0
        %5616 = vmatpush1.bf16.msra.mxu0 %v5513
        %5617 = vmatprep.subr.bf16.mxu0 0
        %5618 = vmatpush1.bf16.msra.mxu0 %v5512
        %5619 = vmatprep.subr.bf16.mxu0 0
        %5620 = vmatpush1.bf16.msra.mxu0 %v5511
        %5621 = vmatprep.subr.bf16.mxu0 0
        %5622 = vmatpush1.bf16.msra.mxu0 %v5510
        %5623 = vmatprep.subr.bf16.mxu0 0
        %5624 = vmatpush2.bf16.msra.mxu0 0
        %5625 = vmatprep.subr.bf16.mxu0 0
        %5626 = vmatpush2.bf16.msra.mxu0 0
        %5627 = vmatprep.subr.bf16.mxu0 0
        %5628 = vmatpush2.bf16.msra.mxu0 0
        %5629 = vmatprep.subr.bf16.mxu0 0
        %5630 = vmatpush2.bf16.msra.mxu0 0
        %5631 = vmatprep.subr.bf16.mxu0 0
        %5632 = vmatpush2.bf16.msra.mxu0 0
        %5633 = vmatprep.subr.bf16.mxu0 0
        %5634 = vmatpush2.bf16.msra.mxu0 0
        %5635 = vmatprep.subr.bf16.mxu0 0
        %5636 = vmatpush2.bf16.msra.mxu0 0
        %5637 = vmatprep.subr.bf16.mxu0 0
        %5638 = vmatpush2.bf16.msra.mxu0 0
        %5639 = vmatprep.mubr.bf16.mxu0 0
        %5640 = vmatmul.mubr.bf16.gmra.mxu0 %v5376
        %v5641 = vpop.f32.mrf.mxu0
        %v5642 = vadd.f32 %v5577, %v5641
        %v5643 = vpop.f32.mrf.mxu0
        %v5644 = vpop.f32.mrf.mxu0
        %v5645 = vadd.f32 %v5580, %v5644
        %v5646 = vpop.f32.mrf.mxu0
        %5647 = vmatprep.mubr.bf16.mxu0 0
        %5648 = vmatmul.mubr.bf16.gmra.mxu0 %v5379
        %v5649 = vpop.f32.mrf.mxu0
        %v5650 = vadd.f32 %v5585, %v5649
        %v5651 = vpop.f32.mrf.mxu0
        %v5652 = vpop.f32.mrf.mxu0
        %v5653 = vadd.f32 %v5588, %v5652
        %v5654 = vpop.f32.mrf.mxu0
        %5655 = vmatprep.mubr.bf16.mxu0 0
        %5656 = vmatmul.mubr.bf16.gmra.mxu0 %v5382
        %v5657 = vpop.f32.mrf.mxu0
        %v5658 = vadd.f32 %v5593, %v5657
        %v5659 = vpop.f32.mrf.mxu0
        %v5660 = vpop.f32.mrf.mxu0
        %v5661 = vadd.f32 %v5596, %v5660
        %v5662 = vpop.f32.mrf.mxu0
        %5663 = vmatprep.mubr.bf16.mxu0 0
        %5664 = vmatmul.mubr.bf16.gmra.mxu0 %v5385
        %v5665 = vpop.f32.mrf.mxu0
        %v5666 = vadd.f32 %v5601, %v5665
        %v5667 = vpop.f32.mrf.mxu0
        %v5668 = vpop.f32.mrf.mxu0
        %v5669 = vadd.f32 %v5604, %v5668
        %v5670 = vpop.f32.mrf.mxu0
        %5671 = vdwg.mxu0
        %s5672 = scalar_lea.vmem %s9, 384
        %v5673 = vld [vmem:[%s5672] sm:$0xf]
        %v5674 = vld [vmem:[%s5672 + $0x4] sm:$0xf]
        %v5675 = vld [vmem:[%s5672 + $0x8] sm:$0xf]
        %v5676 = vld [vmem:[%s5672 + $0xc] sm:$0xf]
        %v5677 = vld [vmem:[%s5672 + $0x10] sm:$0xf]
        %v5678 = vld [vmem:[%s5672 + $0x14] sm:$0xf]
        %v5679 = vld [vmem:[%s5672 + $0x18] sm:$0xf]
        %v5680 = vld [vmem:[%s5672 + $0x1c] sm:$0xf]
        %v5681 = vld [vmem:[%s5672 + $0x20] sm:$0xf]
        %v5682 = vld [vmem:[%s5672 + $0x24] sm:$0xf]
        %v5683 = vld [vmem:[%s5672 + $0x28] sm:$0xf]
        %v5684 = vld [vmem:[%s5672 + $0x2c] sm:$0xf]
        %v5685 = vld [vmem:[%s5672 + $0x30] sm:$0xf]
        %v5686 = vld [vmem:[%s5672 + $0x34] sm:$0xf]
        %v5687 = vld [vmem:[%s5672 + $0x38] sm:$0xf]
        %v5688 = vld [vmem:[%s5672 + $0x3c] sm:$0xf]
        %v5689 = vld [vmem:[%s5672 + $0x40] sm:$0xf]
        %v5690 = vld [vmem:[%s5672 + $0x44] sm:$0xf]
        %v5691 = vld [vmem:[%s5672 + $0x48] sm:$0xf]
        %v5692 = vld [vmem:[%s5672 + $0x4c] sm:$0xf]
        %v5693 = vld [vmem:[%s5672 + $0x50] sm:$0xf]
        %v5694 = vld [vmem:[%s5672 + $0x54] sm:$0xf]
        %v5695 = vld [vmem:[%s5672 + $0x58] sm:$0xf]
        %v5696 = vld [vmem:[%s5672 + $0x5c] sm:$0xf]
        %v5697 = vld [vmem:[%s5672 + $0x60] sm:$0xf]
        %v5698 = vld [vmem:[%s5672 + $0x64] sm:$0xf]
        %v5699 = vld [vmem:[%s5672 + $0x68] sm:$0xf]
        %v5700 = vld [vmem:[%s5672 + $0x6c] sm:$0xf]
        %v5701 = vld [vmem:[%s5672 + $0x70] sm:$0xf]
        %v5702 = vld [vmem:[%s5672 + $0x74] sm:$0xf]
        %v5703 = vld [vmem:[%s5672 + $0x78] sm:$0xf]
        %v5704 = vld [vmem:[%s5672 + $0x7c] sm:$0xf]
        %v5705 = vld [vmem:[%s5672 + $0x80] sm:$0xf]
        %v5706 = vld [vmem:[%s5672 + $0x84] sm:$0xf]
        %v5707 = vld [vmem:[%s5672 + $0x88] sm:$0xf]
        %v5708 = vld [vmem:[%s5672 + $0x8c] sm:$0xf]
        %v5709 = vld [vmem:[%s5672 + $0x90] sm:$0xf]
        %v5710 = vld [vmem:[%s5672 + $0x94] sm:$0xf]
        %v5711 = vld [vmem:[%s5672 + $0x98] sm:$0xf]
        %v5712 = vld [vmem:[%s5672 + $0x9c] sm:$0xf]
        %v5713 = vld [vmem:[%s5672 + $0xa0] sm:$0xf]
        %v5714 = vld [vmem:[%s5672 + $0xa4] sm:$0xf]
        %v5715 = vld [vmem:[%s5672 + $0xa8] sm:$0xf]
        %v5716 = vld [vmem:[%s5672 + $0xac] sm:$0xf]
        %v5717 = vld [vmem:[%s5672 + $0xb0] sm:$0xf]
        %v5718 = vld [vmem:[%s5672 + $0xb4] sm:$0xf]
        %v5719 = vld [vmem:[%s5672 + $0xb8] sm:$0xf]
        %v5720 = vld [vmem:[%s5672 + $0xbc] sm:$0xf]
        %s5721 = scalar_lea.vmem [#allocation4], 32
        %v5722 = vld [vmem:[%s5721] sm:$0xff]
        %v5723 = vld [vmem:[%s5721 + $0x10] sm:$0xff]
        %v5724 = vld [vmem:[%s5721 + $0x20] sm:$0xff]
        %v5725 = vld [vmem:[%s5721 + $0x30] sm:$0xff]
        %v5726 = vld [vmem:[%s5721 + $0x40] sm:$0xff]
        %v5727 = vld [vmem:[%s5721 + $0x50] sm:$0xff]
        %v5728 = vld [vmem:[%s5721 + $0x60] sm:$0xff]
        %v5729 = vld [vmem:[%s5721 + $0x70] sm:$0xff]
        %v5730 = vpack.c.bf16 %v5722, %v5722
        %v5731 = vpack.c.bf16 %v5723, %v5723
        %v5732 = vpack.c.bf16 %v5724, %v5724
        %v5733 = vpack.c.bf16 %v5725, %v5725
        %v5734 = vpack.c.bf16 %v5726, %v5726
        %v5735 = vpack.c.bf16 %v5727, %v5727
        %v5736 = vpack.c.bf16 %v5728, %v5728
        %v5737 = vpack.c.bf16 %v5729, %v5729
        %v5738 = vld [vmem:[%s5721 + $0x1] sm:$0xff]
        %v5739 = vld [vmem:[%s5721 + $0x11] sm:$0xff]
        %v5740 = vld [vmem:[%s5721 + $0x21] sm:$0xff]
        %v5741 = vld [vmem:[%s5721 + $0x31] sm:$0xff]
        %v5742 = vld [vmem:[%s5721 + $0x41] sm:$0xff]
        %v5743 = vld [vmem:[%s5721 + $0x51] sm:$0xff]
        %v5744 = vld [vmem:[%s5721 + $0x61] sm:$0xff]
        %v5745 = vld [vmem:[%s5721 + $0x71] sm:$0xff]
        %v5746 = vpack.c.bf16 %v5738, %v5738
        %v5747 = vpack.c.bf16 %v5739, %v5739
        %v5748 = vpack.c.bf16 %v5740, %v5740
        %v5749 = vpack.c.bf16 %v5741, %v5741
        %v5750 = vpack.c.bf16 %v5742, %v5742
        %v5751 = vpack.c.bf16 %v5743, %v5743
        %v5752 = vpack.c.bf16 %v5744, %v5744
        %v5753 = vpack.c.bf16 %v5745, %v5745
        %v5754 = vld [vmem:[%s5721 + $0x2] sm:$0xff]
        %v5755 = vld [vmem:[%s5721 + $0x12] sm:$0xff]
        %v5756 = vld [vmem:[%s5721 + $0x22] sm:$0xff]
        %v5757 = vld [vmem:[%s5721 + $0x32] sm:$0xff]
        %v5758 = vld [vmem:[%s5721 + $0x42] sm:$0xff]
        %v5759 = vld [vmem:[%s5721 + $0x52] sm:$0xff]
        %v5760 = vld [vmem:[%s5721 + $0x62] sm:$0xff]
        %v5761 = vld [vmem:[%s5721 + $0x72] sm:$0xff]
        %v5762 = vpack.c.bf16 %v5754, %v5754
        %v5763 = vpack.c.bf16 %v5755, %v5755
        %v5764 = vpack.c.bf16 %v5756, %v5756
        %v5765 = vpack.c.bf16 %v5757, %v5757
        %v5766 = vpack.c.bf16 %v5758, %v5758
        %v5767 = vpack.c.bf16 %v5759, %v5759
        %v5768 = vpack.c.bf16 %v5760, %v5760
        %v5769 = vpack.c.bf16 %v5761, %v5761
        %v5794 = vunpack.c.l.b16 %v5730
        %v5795 = vunpack.c.l.b16 %v5746
        %v5796 = vunpack.c.l.b16 %v5762
        %v5797 = vunpack.c.l.b16 %v5731
        %v5798 = vunpack.c.l.b16 %v5747
        %v5799 = vunpack.c.l.b16 %v5763
        %v5800 = vunpack.c.l.b16 %v5732
        %v5801 = vunpack.c.l.b16 %v5748
        %v5802 = vunpack.c.l.b16 %v5764
        %v5803 = vunpack.c.l.b16 %v5733
        %v5804 = vunpack.c.l.b16 %v5749
        %v5805 = vunpack.c.l.b16 %v5765
        %v5806 = vunpack.c.l.b16 %v5734
        %v5807 = vunpack.c.l.b16 %v5750
        %v5808 = vunpack.c.l.b16 %v5766
        %v5809 = vunpack.c.l.b16 %v5735
        %v5810 = vunpack.c.l.b16 %v5751
        %v5811 = vunpack.c.l.b16 %v5767
        %v5812 = vunpack.c.l.b16 %v5736
        %v5813 = vunpack.c.l.b16 %v5752
        %v5814 = vunpack.c.l.b16 %v5768
        %v5815 = vunpack.c.l.b16 %v5737
        %v5816 = vunpack.c.l.b16 %v5753
        %v5817 = vunpack.c.l.b16 %v5769
        %v5818 = vpack.c.b16 %v5797, %v5794
        %v5819 = vpack.c.b16 %v5798, %v5795
        %v5820 = vpack.c.b16 %v5799, %v5796
        %v5821 = vpack.c.b16 %v5803, %v5800
        %v5822 = vpack.c.b16 %v5804, %v5801
        %v5823 = vpack.c.b16 %v5805, %v5802
        %v5824 = vpack.c.b16 %v5809, %v5806
        %v5825 = vpack.c.b16 %v5810, %v5807
        %v5826 = vpack.c.b16 %v5811, %v5808
        %v5827 = vpack.c.b16 %v5815, %v5812
        %v5828 = vpack.c.b16 %v5816, %v5813
        %v5829 = vpack.c.b16 %v5817, %v5814
        %v5890 = vunpack.c.l.b16 %v5673
        %v5891 = vunpack.c.l.b16 %v5674
        %v5892 = vunpack.c.l.b16 %v5675
        %v5893 = vunpack.c.l.b16 %v5676
        %v5894 = vunpack.c.l.b16 %v5677
        %v5895 = vunpack.c.l.b16 %v5678
        %v5896 = vunpack.c.l.b16 %v5679
        %v5897 = vunpack.c.l.b16 %v5680
        %v5898 = vunpack.c.l.b16 %v5681
        %v5899 = vunpack.c.l.b16 %v5682
        %v5900 = vunpack.c.l.b16 %v5683
        %v5901 = vunpack.c.l.b16 %v5684
        %v5902 = vunpack.c.l.b16 %v5685
        %v5903 = vunpack.c.l.b16 %v5686
        %v5904 = vunpack.c.l.b16 %v5687
        %v5905 = vunpack.c.l.b16 %v5688
        %v5906 = vunpack.c.l.b16 %v5689
        %v5907 = vunpack.c.l.b16 %v5690
        %v5908 = vunpack.c.l.b16 %v5691
        %v5909 = vunpack.c.l.b16 %v5692
        %v5910 = vunpack.c.l.b16 %v5693
        %v5911 = vunpack.c.l.b16 %v5694
        %v5912 = vunpack.c.l.b16 %v5695
        %v5913 = vunpack.c.l.b16 %v5696
        %v5914 = vunpack.c.l.b16 %v5697
        %v5915 = vunpack.c.l.b16 %v5698
        %v5916 = vunpack.c.l.b16 %v5699
        %v5917 = vunpack.c.l.b16 %v5700
        %v5918 = vunpack.c.l.b16 %v5701
        %v5919 = vunpack.c.l.b16 %v5702
        %v5920 = vunpack.c.l.b16 %v5703
        %v5921 = vunpack.c.l.b16 %v5704
        %v5922 = vunpack.c.l.b16 %v5705
        %v5923 = vunpack.c.l.b16 %v5706
        %v5924 = vunpack.c.l.b16 %v5707
        %v5925 = vunpack.c.l.b16 %v5708
        %v5926 = vunpack.c.l.b16 %v5709
        %v5927 = vunpack.c.l.b16 %v5710
        %v5928 = vunpack.c.l.b16 %v5711
        %v5929 = vunpack.c.l.b16 %v5712
        %v5930 = vunpack.c.l.b16 %v5713
        %v5931 = vunpack.c.l.b16 %v5714
        %v5932 = vunpack.c.l.b16 %v5715
        %v5933 = vunpack.c.l.b16 %v5716
        %v5934 = vunpack.c.l.b16 %v5717
        %v5935 = vunpack.c.l.b16 %v5718
        %v5936 = vunpack.c.l.b16 %v5719
        %v5937 = vunpack.c.l.b16 %v5720
        %v5938 = vpack.c.b16 %v5891, %v5890
        %v5939 = vpack.c.b16 %v5893, %v5892
        %v5940 = vpack.c.b16 %v5895, %v5894
        %v5941 = vpack.c.b16 %v5897, %v5896
        %v5942 = vpack.c.b16 %v5899, %v5898
        %v5943 = vpack.c.b16 %v5901, %v5900
        %v5944 = vpack.c.b16 %v5903, %v5902
        %v5945 = vpack.c.b16 %v5905, %v5904
        %v5946 = vpack.c.b16 %v5907, %v5906
        %v5947 = vpack.c.b16 %v5909, %v5908
        %v5948 = vpack.c.b16 %v5911, %v5910
        %v5949 = vpack.c.b16 %v5913, %v5912
        %v5950 = vpack.c.b16 %v5915, %v5914
        %v5951 = vpack.c.b16 %v5917, %v5916
        %v5952 = vpack.c.b16 %v5919, %v5918
        %v5953 = vpack.c.b16 %v5921, %v5920
        %v5954 = vpack.c.b16 %v5923, %v5922
        %v5955 = vpack.c.b16 %v5925, %v5924
        %v5956 = vpack.c.b16 %v5927, %v5926
        %v5957 = vpack.c.b16 %v5929, %v5928
        %v5958 = vpack.c.b16 %v5931, %v5930
        %v5959 = vpack.c.b16 %v5933, %v5932
        %v5960 = vpack.c.b16 %v5935, %v5934
        %v5961 = vpack.c.b16 %v5937, %v5936
        %5986 = vmatprep.subr.bf16.mxu0 0
        %5987 = vmatpush1.bf16.msra.mxu0 %v5945
        %5988 = vmatprep.subr.bf16.mxu0 0
        %5989 = vmatpush1.bf16.msra.mxu0 %v5944
        %5990 = vmatprep.subr.bf16.mxu0 0
        %5991 = vmatpush1.bf16.msra.mxu0 %v5943
        %5992 = vmatprep.subr.bf16.mxu0 0
        %5993 = vmatpush1.bf16.msra.mxu0 %v5942
        %5994 = vmatprep.subr.bf16.mxu0 0
        %5995 = vmatpush1.bf16.msra.mxu0 %v5941
        %5996 = vmatprep.subr.bf16.mxu0 0
        %5997 = vmatpush1.bf16.msra.mxu0 %v5940
        %5998 = vmatprep.subr.bf16.mxu0 0
        %5999 = vmatpush1.bf16.msra.mxu0 %v5939
        %6000 = vmatprep.subr.bf16.mxu0 0
        %6001 = vmatpush1.bf16.msra.mxu0 %v5938
        %6002 = vmatprep.subr.bf16.mxu0 0
        %6003 = vmatpush2.bf16.msra.mxu0 %v5953
        %6004 = vmatprep.subr.bf16.mxu0 0
        %6005 = vmatpush2.bf16.msra.mxu0 %v5952
        %6006 = vmatprep.subr.bf16.mxu0 0
        %6007 = vmatpush2.bf16.msra.mxu0 %v5951
        %6008 = vmatprep.subr.bf16.mxu0 0
        %6009 = vmatpush2.bf16.msra.mxu0 %v5950
        %6010 = vmatprep.subr.bf16.mxu0 0
        %6011 = vmatpush2.bf16.msra.mxu0 %v5949
        %6012 = vmatprep.subr.bf16.mxu0 0
        %6013 = vmatpush2.bf16.msra.mxu0 %v5948
        %6014 = vmatprep.subr.bf16.mxu0 0
        %6015 = vmatpush2.bf16.msra.mxu0 %v5947
        %6016 = vmatprep.subr.bf16.mxu0 0
        %6017 = vmatpush2.bf16.msra.mxu0 %v5946
        %6018 = vmatprep.mubr.bf16.mxu0 %v5819
        %6019 = vmatmul.mubr.bf16.gmra.mxu0 %v5818
        %v6020 = vpop.f32.mrf.mxu0
        %v6021 = vadd.f32 0.0, %v6020
        %v6022 = vpop.f32.mrf.mxu0
        %v6023 = vpop.f32.mrf.mxu0
        %v6024 = vadd.f32 0.0, %v6023
        %v6025 = vpop.f32.mrf.mxu0
        %6026 = vmatprep.mubr.bf16.mxu0 %v5822
        %6027 = vmatmul.mubr.bf16.gmra.mxu0 %v5821
        %v6028 = vpop.f32.mrf.mxu0
        %v6029 = vadd.f32 0.0, %v6028
        %v6030 = vpop.f32.mrf.mxu0
        %v6031 = vpop.f32.mrf.mxu0
        %v6032 = vadd.f32 0.0, %v6031
        %v6033 = vpop.f32.mrf.mxu0
        %6034 = vmatprep.mubr.bf16.mxu0 %v5825
        %6035 = vmatmul.mubr.bf16.gmra.mxu0 %v5824
        %v6036 = vpop.f32.mrf.mxu0
        %v6037 = vadd.f32 0.0, %v6036
        %v6038 = vpop.f32.mrf.mxu0
        %v6039 = vpop.f32.mrf.mxu0
        %v6040 = vadd.f32 0.0, %v6039
        %v6041 = vpop.f32.mrf.mxu0
        %6042 = vmatprep.mubr.bf16.mxu0 %v5828
        %6043 = vmatmul.mubr.bf16.gmra.mxu0 %v5827
        %v6044 = vpop.f32.mrf.mxu0
        %v6045 = vadd.f32 0.0, %v6044
        %v6046 = vpop.f32.mrf.mxu0
        %v6047 = vpop.f32.mrf.mxu0
        %v6048 = vadd.f32 0.0, %v6047
        %v6049 = vpop.f32.mrf.mxu0
        %6050 = vdwg.mxu0
        %6051 = vmatprep.subr.bf16.mxu0 0
        %6052 = vmatpush1.bf16.msra.mxu0 %v5961
        %6053 = vmatprep.subr.bf16.mxu0 0
        %6054 = vmatpush1.bf16.msra.mxu0 %v5960
        %6055 = vmatprep.subr.bf16.mxu0 0
        %6056 = vmatpush1.bf16.msra.mxu0 %v5959
        %6057 = vmatprep.subr.bf16.mxu0 0
        %6058 = vmatpush1.bf16.msra.mxu0 %v5958
        %6059 = vmatprep.subr.bf16.mxu0 0
        %6060 = vmatpush1.bf16.msra.mxu0 %v5957
        %6061 = vmatprep.subr.bf16.mxu0 0
        %6062 = vmatpush1.bf16.msra.mxu0 %v5956
        %6063 = vmatprep.subr.bf16.mxu0 0
        %6064 = vmatpush1.bf16.msra.mxu0 %v5955
        %6065 = vmatprep.subr.bf16.mxu0 0
        %6066 = vmatpush1.bf16.msra.mxu0 %v5954
        %6067 = vmatprep.subr.bf16.mxu0 0
        %6068 = vmatpush2.bf16.msra.mxu0 0
        %6069 = vmatprep.subr.bf16.mxu0 0
        %6070 = vmatpush2.bf16.msra.mxu0 0
        %6071 = vmatprep.subr.bf16.mxu0 0
        %6072 = vmatpush2.bf16.msra.mxu0 0
        %6073 = vmatprep.subr.bf16.mxu0 0
        %6074 = vmatpush2.bf16.msra.mxu0 0
        %6075 = vmatprep.subr.bf16.mxu0 0
        %6076 = vmatpush2.bf16.msra.mxu0 0
        %6077 = vmatprep.subr.bf16.mxu0 0
        %6078 = vmatpush2.bf16.msra.mxu0 0
        %6079 = vmatprep.subr.bf16.mxu0 0
        %6080 = vmatpush2.bf16.msra.mxu0 0
        %6081 = vmatprep.subr.bf16.mxu0 0
        %6082 = vmatpush2.bf16.msra.mxu0 0
        %6083 = vmatprep.mubr.bf16.mxu0 0
        %6084 = vmatmul.mubr.bf16.gmra.mxu0 %v5820
        %v6085 = vpop.f32.mrf.mxu0
        %v6086 = vadd.f32 %v6021, %v6085
        %v6087 = vpop.f32.mrf.mxu0
        %v6088 = vpop.f32.mrf.mxu0
        %v6089 = vadd.f32 %v6024, %v6088
        %v6090 = vpop.f32.mrf.mxu0
        %6091 = vmatprep.mubr.bf16.mxu0 0
        %6092 = vmatmul.mubr.bf16.gmra.mxu0 %v5823
        %v6093 = vpop.f32.mrf.mxu0
        %v6094 = vadd.f32 %v6029, %v6093
        %v6095 = vpop.f32.mrf.mxu0
        %v6096 = vpop.f32.mrf.mxu0
        %v6097 = vadd.f32 %v6032, %v6096
        %v6098 = vpop.f32.mrf.mxu0
        %6099 = vmatprep.mubr.bf16.mxu0 0
        %6100 = vmatmul.mubr.bf16.gmra.mxu0 %v5826
        %v6101 = vpop.f32.mrf.mxu0
        %v6102 = vadd.f32 %v6037, %v6101
        %v6103 = vpop.f32.mrf.mxu0
        %v6104 = vpop.f32.mrf.mxu0
        %v6105 = vadd.f32 %v6040, %v6104
        %v6106 = vpop.f32.mrf.mxu0
        %6107 = vmatprep.mubr.bf16.mxu0 0
        %6108 = vmatmul.mubr.bf16.gmra.mxu0 %v5829
        %v6109 = vpop.f32.mrf.mxu0
        %v6110 = vadd.f32 %v6045, %v6109
        %v6111 = vpop.f32.mrf.mxu0
        %v6112 = vpop.f32.mrf.mxu0
        %v6113 = vadd.f32 %v6048, %v6112
        %v6114 = vpop.f32.mrf.mxu0
        %6115 = vdwg.mxu0
        %v6116 = vadd.f32 %v5642, %v6086
        %v6117 = vadd.f32 %v5645, %v6089
        %v6118 = vadd.f32 %v5650, %v6094
        %v6119 = vadd.f32 %v5653, %v6097
        %v6120 = vadd.f32 %v5658, %v6102
        %v6121 = vadd.f32 %v5661, %v6105
        %v6122 = vadd.f32 %v5666, %v6110
        %v6123 = vadd.f32 %v5669, %v6113
        %v6124 = vld [vmem:[%s10] sm:$0x1]
        %v6126 = vlaneseq
        %v6127 = vshrl.u32 %v6126, 7
        %v6128 = vsub.s32 0, %v6127
        %v6129 = vrot.slane %v6124, %v6128
        %v6131 = vadd.f32 %v6116, %v6129
        %v6132 = vadd.f32 %v6117, %v6129
        %v6133 = vadd.f32 %v6118, %v6129
        %v6134 = vadd.f32 %v6119, %v6129
        %v6135 = vadd.f32 %v6120, %v6129
        %v6136 = vadd.f32 %v6121, %v6129
        %v6137 = vadd.f32 %v6122, %v6129
        %v6138 = vadd.f32 %v6123, %v6129
        %6139 = vst [vmem:[%s379] sm:$0xff] %v6131
        %6140 = vst [vmem:[%s379 + $0x8] sm:$0xff] %v6132
        %6141 = vst [vmem:[%s379 + $0x10] sm:$0xff] %v6133
        %6142 = vst [vmem:[%s379 + $0x18] sm:$0xff] %v6134
        %6143 = vst [vmem:[%s379 + $0x20] sm:$0xff] %v6135
        %6144 = vst [vmem:[%s379 + $0x28] sm:$0xff] %v6136
        %6145 = vst [vmem:[%s379 + $0x30] sm:$0xff] %v6137
        %6146 = vst [vmem:[%s379 + $0x38] sm:$0xff] %v6138
        %s6147 = sand.u32 %s269, 1
        %s6148 = scalar_lea.sflag [#allocation6], %s6147
        %s6149 = sand.u32 %s269, 1
        %s6150 = smul.addr %s6149, 64
        %s6151 = scalar_lea.vmem [#allocation5], %s6150
        // Predicated region
        $region65: #{single_channel_vgg_forward.3} parent=63 // pred_check
          %p6152 = pneg %p279
        $region66: #{single_channel_vgg_forward.3} parent=63 // pred_check_branch
          %6154 = sbr.rel (%p6152) target = $region68
        $region67: #{single_channel_vgg_forward.3} parent=63 // pred_region
          %s6156 = ssub.s32 1024, 1024
          %6157 = vsyncadd %s6148, %s6156
          %s6158 = smul.addr %s25, 8
          %s6159 = smul.addr %s6158, 128
          %s6160 = scalar_lea.hbm %s11, %s6159
          %s6161 = sshll.u32 %s6151, 4
          %s6162 = int_to_ptr.vmem [resolvable:$true] %s6161
          %6167 = dma.vmem_to_hbm [thread:$0]  %s6162, 1024, %s6160, %s6148, 128, 128, 8
        $region68: #{single_channel_vgg_forward.3} parent=63 // pred_fallthru
          _
      $region64: #{single_channel_vgg_forward.3} parent=5 // pred_fallthru
        _
      %p6168 = scmp.le.s32.totalorder 2, %s20
      // Predicated region
      $region69: #{single_channel_vgg_forward.3} parent=5 // pred_check
        %p6169 = pneg %p6168
      $region70: #{single_channel_vgg_forward.3} parent=5 // pred_check_branch
        %6171 = sbr.rel (%p6169) target = $region72
      $region71: #{single_channel_vgg_forward.3} parent=5 // pred_region
        %s6172 = ssub.s32 %s20, 2
        // Predicated region
        $region73: #{single_channel_vgg_forward.3} parent=71 // pred_check
          %p6173 = pneg %p285
        $region74: #{single_channel_vgg_forward.3} parent=71 // pred_check_branch
          %6175 = sbr.rel (%p6173) target = $region76
        $region75: #{single_channel_vgg_forward.3} parent=71 // pred_region
          %s6176 = sand.u32 %s270, 1
          %s6177 = scalar_lea.sflag [#allocation6], %s6176
          %s6178 = sand.u32 %s270, 1
          %s6179 = smul.addr %s6178, 64
          %s6180 = scalar_lea.vmem [#allocation5], %s6179
          %6181 = dma.done %s6177, 1024
        $region76: #{single_channel_vgg_forward.3} parent=71 // pred_fallthru
          _
      $region72: #{single_channel_vgg_forward.3} parent=5 // pred_fallthru
        _
    $region6: #{single_channel_vgg_forward.3} parent=1 // loop_footer
      %s24 = sadd.s32 1, %s20
    $region7: #{single_channel_vgg_forward.3} parent=1 // loop_footer_branch
      %19 = sbr.rel target = $region3
    $region8: #{single_channel_vgg_forward.3} parent=1 // loop_exit
      _
    %6182 = vsyncpa [#allocation6], 1
    %s6183 = scalar_lea.sflag [#allocation6], 1
    %6184 = vsyncpa %s6183, 1

</llo_original>
